<compile_context>
chip_gen: v5e
topology: v5e:2x2
jax: 0.10.0
libtpu: 0.0.40
codegen_flags: <defaults>
</compile_context>

<pallas_src>
import functools

import jax
import jax.numpy as jnp
from jax import lax
from jax.experimental import pallas as pl
from jax.experimental.pallas import tpu as pltpu


def _round_up(x, m):
    return ((x + m - 1) // m) * m


def gmf_kernel(u_idx_ref, i_idx_ref, u_tab_ref, i_tab_ref, o_ref):
    """One grid step: one-hot MXU gather of TB user rows and TB item rows from
    the VMEM-resident embedding tables, elementwise multiply, and a single
    unmasked (TB, E) store."""
    tb = o_ref.shape[0]
    num_users = u_tab_ref.shape[0]
    num_items = i_tab_ref.shape[0]

    u_idx = u_idx_ref[...]                      # (tb, 1) int32, VMEM
    i_idx = i_idx_ref[...]                      # (tb, 1) int32, VMEM

    # --- user gather: (tb, num_users) one-hot @ (num_users, E) on the MXU ---
    u_iota = lax.broadcasted_iota(jnp.int32, (tb, num_users), 1)
    u_onehot = (u_iota == u_idx).astype(jnp.float32)
    u_rows = jnp.dot(u_onehot, u_tab_ref[...],
                     preferred_element_type=jnp.float32,
                     precision=lax.Precision.HIGHEST)     # (tb, E)

    # --- item gather: (tb, num_items) one-hot @ (num_items, E) on the MXU ---
    i_iota = lax.broadcasted_iota(jnp.int32, (tb, num_items), 1)
    i_onehot = (i_iota == i_idx).astype(jnp.float32)
    i_rows = jnp.dot(i_onehot, i_tab_ref[...],
                     preferred_element_type=jnp.float32,
                     precision=lax.Precision.HIGHEST)     # (tb, E)

    # Full-tile VPU multiply + one unmasked, lane/sublane-dense store.
    o_ref[...] = (u_rows * i_rows).astype(o_ref.dtype)


@functools.partial(jax.jit, static_argnames=("block_rows",))
def gmf_forward(user_indices, item_indices, user_emb_table, item_emb_table,
                block_rows=256):
    """Pallas GMF forward.

    user_indices:   (B,)  integer in [0, num_users)
    item_indices:   (B,)  integer in [0, num_items)
    user_emb_table: (num_users, E) float32
    item_emb_table: (num_items, E) float32
    returns:        (B, E) float32
    """
    B = user_indices.shape[0]
    num_users, E = user_emb_table.shape
    num_items, _ = item_emb_table.shape

    # --- choose a sublane-dense batch tile (multiple of 8 rows) ---
    if B <= block_rows:
        if B >= 16:
            # At least 2 balanced grid steps so the "parallel" batch axis can
            # shard across both TensorCores on v7x; neutral on v5e/v6e.
            tb = _round_up(-(-B // 2), 8)
        else:
            tb = _round_up(B, 8)
    else:
        tb = _round_up(block_rows, 8)
    b_pad = _round_up(B, tb)
    n_steps = b_pad // tb

    # Clamp (nn.Embedding would error on OOB; here OOB would silently zero a
    # row via the one-hot) and pad to a multiple of the tile with index 0.
    u_clamped = jnp.clip(user_indices.astype(jnp.int32), 0, num_users - 1)
    i_clamped = jnp.clip(item_indices.astype(jnp.int32), 0, num_items - 1)
    u_idx = jnp.zeros((b_pad, 1), jnp.int32).at[:B, 0].set(u_clamped)
    i_idx = jnp.zeros((b_pad, 1), jnp.int32).at[:B, 0].set(i_clamped)

    grid_spec = pltpu.PrefetchScalarGridSpec(
        num_scalar_prefetch=0,
        grid=(n_steps,),                         # one grid step per TB rows
        in_specs=[
            # Per-step index tiles (tiny VMEM blocks).
            pl.BlockSpec((tb, 1), lambda i: (i, 0)),
            pl.BlockSpec((tb, 1), lambda i: (i, 0)),
            # Whole tables resident in VMEM; constant block index means each
            # table is DMA'd from HBM exactly once and reused every step.
            # (They are small enough that default double-buffering is an
            # acceptable ~1.1 MiB overhead; use pl.Buffered(1) if tables grow.)
            pl.BlockSpec((num_users, E), lambda i: (0, 0)),
            pl.BlockSpec((num_items, E), lambda i: (0, 0)),
        ],
        out_specs=pl.BlockSpec((tb, E), lambda i: (i, 0)),
    )

    out = pl.pallas_call(
        gmf_kernel,
        out_shape=jax.ShapeDtypeStruct((b_pad, E), user_emb_table.dtype),
        grid_spec=grid_spec,
        compiler_params=pltpu.CompilerParams(
            # Batch tiles are fully independent -> shard across TCs on v7x.
            dimension_semantics=("parallel",)),
    )(u_idx, i_idx, user_emb_table, item_emb_table)

    return out[:B]


if __name__ == "__main__":
    num_users = 50
    num_items = 2090
    embedding_size = 128   # lane-aligned embedding dim
    batch = 37             # not a multiple of 8 (exercises padding + 2 steps)

    key = jax.random.PRNGKey(0)
    k_u, k_i, k_ui, k_ii = jax.random.split(key, 4)

    # nn.Embedding default init: N(0, 1) weights, float32.
    user_emb_table = jax.random.normal(
        k_u, (num_users, embedding_size), dtype=jnp.float32)
    item_emb_table = jax.random.normal(
        k_i, (num_items, embedding_size), dtype=jnp.float32)

    # PyTorch would use int64 indices; int32 is used here for TPU-friendliness.
    user_indices = jax.random.randint(
        k_ui, (batch,), 0, num_users, dtype=jnp.int32)
    item_indices = jax.random.randint(
        k_ii, (batch,), 0, num_items, dtype=jnp.int32)

    out = gmf_forward(user_indices, item_indices,
                      user_emb_table, item_emb_table)
    out = jax.block_until_ready(out)

    # Reference check (plain JAX gather + multiply).
    ref = user_emb_table[user_indices] * item_emb_table[item_indices]
    assert out.shape == (batch, embedding_size)
    assert jnp.allclose(out, ref, atol=1e-6, rtol=1e-6)

    print("KERNEL_OK")
</pallas_src>

<mosaic_0001>
module attributes {stable_mosaic.version = 11 : i64} {
  func.func @gmf_kernel(%arg0: i32, %arg1: memref<24x1xi32, #tpu.memory_space<vmem>>, %arg2: memref<24x1xi32, #tpu.memory_space<vmem>>, %arg3: memref<50x128xf32, #tpu.memory_space<vmem>>, %arg4: memref<2090x128xf32, #tpu.memory_space<vmem>>, %arg5: memref<24x128xf32, #tpu.memory_space<vmem>>) attributes {dimension_semantics = [#tpu.dimension_semantics<parallel>], iteration_bounds = array<i64: 2>, scalar_prefetch = 0 : i64, scratch_operands = 0 : i64, tpu.core_type = #tpu.core_type<tc>, window_params = [{transform_indices = @transform_0, window_bounds = array<i64: 24, 1>}, {transform_indices = @transform_1, window_bounds = array<i64: 24, 1>}, {pipeline_mode = #tpu.pipeline_mode<synchronous>, transform_indices = @transform_2, window_bounds = array<i64: 50, 128>}, {pipeline_mode = #tpu.pipeline_mode<synchronous>, transform_indices = @transform_3, window_bounds = array<i64: 2090, 128>}, {transform_indices = @transform_4, window_bounds = array<i64: 24, 128>}]} {
    %c0 = arith.constant 0 : index
    %c0_0 = arith.constant 0 : index
    %0 = vector.load %arg1[%c0, %c0_0] : memref<24x1xi32, #tpu.memory_space<vmem>>, vector<24x1xi32>
    %c0_1 = arith.constant 0 : index
    %c0_2 = arith.constant 0 : index
    %1 = vector.load %arg2[%c0_1, %c0_2] : memref<24x1xi32, #tpu.memory_space<vmem>>, vector<24x1xi32>
    %2 = tpu.iota {dimensions = array<i32: 1>} : vector<24x50xi32>
    %3 = vector.broadcast %0 : vector<24x1xi32> to vector<24x50xi32>
    %4 = arith.cmpi eq, %2, %3 : vector<24x50xi32>
    %5 = arith.extui %4 : vector<24x50xi1> to vector<24x50xi32>
    %6 = arith.sitofp %5 : vector<24x50xi32> to vector<24x50xf32>
    %c0_3 = arith.constant 0 : index
    %c0_4 = arith.constant 0 : index
    %7 = vector.load %arg3[%c0_3, %c0_4] : memref<50x128xf32, #tpu.memory_space<vmem>>, vector<50x128xf32>
    %cst = arith.constant dense<0.000000e+00> : vector<24x128xf32>
    %8 = tpu.matmul %6, %7, %cst {dimension_numbers = #tpu.dot_dimension_numbers<[1], [0], [0], [1], [0, 0, 1, 1], [], []>, precision = #tpu.contract_precision<fp32>} : vector<24x50xf32>, vector<50x128xf32>, vector<24x128xf32> -> vector<24x128xf32>
    %9 = tpu.iota {dimensions = array<i32: 1>} : vector<24x2090xi32>
    %10 = vector.broadcast %1 : vector<24x1xi32> to vector<24x2090xi32>
    %11 = arith.cmpi eq, %9, %10 : vector<24x2090xi32>
    %12 = arith.extui %11 : vector<24x2090xi1> to vector<24x2090xi32>
    %13 = arith.sitofp %12 : vector<24x2090xi32> to vector<24x2090xf32>
    %c0_5 = arith.constant 0 : index
    %c0_6 = arith.constant 0 : index
    %14 = vector.load %arg4[%c0_5, %c0_6] : memref<2090x128xf32, #tpu.memory_space<vmem>>, vector<2090x128xf32>
    %cst_7 = arith.constant dense<0.000000e+00> : vector<24x128xf32>
    %15 = tpu.matmul %13, %14, %cst_7 {dimension_numbers = #tpu.dot_dimension_numbers<[1], [0], [0], [1], [0, 0, 1, 1], [], []>, precision = #tpu.contract_precision<fp32>} : vector<24x2090xf32>, vector<2090x128xf32>, vector<24x128xf32> -> vector<24x128xf32>
    %16 = arith.mulf %8, %15 : vector<24x128xf32>
    %c0_8 = arith.constant 0 : index
    %c0_9 = arith.constant 0 : index
    %17 = vector.load %arg5[%c0_8, %c0_9] : memref<24x128xf32, #tpu.memory_space<vmem>>, vector<24x128xf32>
    tpu.vector_store %arg5[%c0_8, %c0_9], %16 {strides = array<i32>} : memref<24x128xf32, #tpu.memory_space<vmem>>, vector<24x128xf32>,
    return
  }
  func.func @transform_0(%arg0: i32) -> (i32, i32) {
    %c0_i32 = arith.constant 0 : i32
    %c0_i32_0 = arith.constant 0 : i32
    return %arg0, %c0_i32 : i32, i32
  }
  func.func @transform_1(%arg0: i32) -> (i32, i32) {
    %c0_i32 = arith.constant 0 : i32
    %c0_i32_0 = arith.constant 0 : i32
    return %arg0, %c0_i32 : i32, i32
  }
  func.func @transform_2(%arg0: i32) -> (i32, i32) {
    %c0_i32 = arith.constant 0 : i32
    %c0_i32_0 = arith.constant 0 : i32
    %c0_i32_1 = arith.constant 0 : i32
    return %c0_i32, %c0_i32_0 : i32, i32
  }
  func.func @transform_3(%arg0: i32) -> (i32, i32) {
    %c0_i32 = arith.constant 0 : i32
    %c0_i32_0 = arith.constant 0 : i32
    %c0_i32_1 = arith.constant 0 : i32
    return %c0_i32, %c0_i32_0 : i32, i32
  }
  func.func @transform_4(%arg0: i32) -> (i32, i32) {
    %c0_i32 = arith.constant 0 : i32
    %c0_i32_0 = arith.constant 0 : i32
    return %arg0, %c0_i32 : i32, i32
  }
}

</mosaic_0001>

<llo_original>
// kernel: gmf_forward.1
$region0: #{gmf_forward.1}
  #allocation0 [shape = 'u32[]', space=smem, size = 0x4, offset = 0x4, fixed_abs, tag = 'smem constant byte address 0x4 - core index']
  #allocation1 [shape = 'u32[72,128]{1,0:T(1,128)}', space=vmem, size = 0x9000, scoped, tag = 'internal scratch']
  %s0 = inlined_call_operand.vmem [shape: s32[48,1], index: 0, kind: input, shape index: {}]
  %s1 = inlined_call_operand.vmem [shape: s32[48,1], index: 1, kind: input, shape index: {}]
  %s2 = inlined_call_operand.hbm [shape: f32[50,128], index: 2, kind: input, shape index: {}]
  %s3 = inlined_call_operand.hbm [shape: f32[2090,128], index: 3, kind: input, shape index: {}]
  %s4 = inlined_call_operand.vmem [shape: f32[48,128], index: 4, kind: output, shape index: {}]
  %s5 = sld [smem:[#allocation0]]
  $region57: #{gmf_forward.1} parent=0
    _
  %s7 = ssub.s32 1, %s5
  %s8 = scalar_select 0, %s7, %s5
  $region1: #{gmf_forward.1} parent=0
    #allocation2 [shape = 'u8[28672]{0}', space=vmem, size = 0x7000, scoped, tag = 'input window, operand 2, single buffered']
    #allocation3 [shape = 's32[2]{0}', space=sflag, size = 0x8, scoped, tag = 'scoped memory for gmf_forward.1']
    #allocation4 [shape = 'u8[1073152]{0}', space=vmem, size = 0x106000, scoped, tag = 'input window, operand 3, single buffered']
    #allocation5 [shape = 's32[1]{0}', space=sflag, size = 0x4, scoped, tag = 'scoped memory for gmf_forward.1']
    %9 = vsyncpa [#allocation3], 0
    %10 = vsyncpa [#allocation5], 0
    loop: start=0, step=1, limit=4
    $region2: #{gmf_forward.1} parent=1 // loop_pre_header
      _
    $region3: #{gmf_forward.1} parent=1 // loop_header
      %s12 = sphi 0, %s16
      %p13 = scmp.ge.s32.totalorder %s12, 4
      %s22 = sphi 0, %s24
      %s25 = sphi 0, %s22
      %s26 = sphi 0, %s25
      %s42 = sphi 0, %s26
      %s48 = sphi 0, %s50
      %s51 = sphi 0, %s48
      %s52 = sphi 0, %s51
      %s68 = sphi 0, %s52
      %s72 = sphi 0, %s72
      %s74 = sphi 0, %s72
      %s75 = sphi 0, %s74
      %s89 = sphi 0, %s75
      %s93 = sphi 0, %s93
      %s95 = sphi 0, %s93
      %s96 = sphi 0, %s95
      %s110 = sphi 0, %s96
      %s116 = sphi 0, %s118
      %s119 = sphi 0, %s116
      %s120 = sphi 0, %s119
      %s136 = sphi 0, %s120
    $region4: #{gmf_forward.1} parent=1 // loop_header_branch
      %15 = sbr.rel (%p13) target = $region8
    $region5: #{gmf_forward.1} parent=1 // loop_body
      %s17 = ssub.s32 %s12, 1
      %s18 = ssub.s32 %s12, 2
      %s19 = sadd.s32 %s12, 1
      %s20 = ssub.s32 %s12, %s19
      %p21 = scmp.eq.s32.totalorder %s20, 0
      %s23 = sadd.s32 %s22, 1
      %s24 = scalar_select %p21, %s22, %s23
      %p27 = pneg %p21
      %p28 = scmp.eq.s32.totalorder %s12, 1
      %p29 = por %p27, %p28
      %p30 = scmp.ne.s32.totalorder %s22, %s25
      %p31 = scmp.eq.s32.totalorder %s12, 0
      %p32 = por %p30, %p31
      %p33 = scmp.ne.s32.totalorder %s22, %s25
      %p34 = scmp.eq.s32.totalorder %s17, 1
      %p35 = por %p33, %p34
      %p36 = scmp.ne.s32.totalorder %s25, %s26
      %p37 = scmp.eq.s32.totalorder %s17, 0
      %p38 = por %p36, %p37
      %p39 = scmp.ne.s32.totalorder %s25, %s26
      %p40 = scmp.eq.s32.totalorder %s18, 1
      %p41 = por %p39, %p40
      %p43 = scmp.ne.s32.totalorder %s26, %s42
      %p44 = scmp.eq.s32.totalorder %s18, 0
      %p45 = por %p43, %p44
      %s46 = ssub.s32 %s12, %s19
      %p47 = scmp.eq.s32.totalorder %s46, 0
      %s49 = sadd.s32 %s48, 1
      %s50 = scalar_select %p47, %s48, %s49
      %p53 = pneg %p47
      %p54 = scmp.eq.s32.totalorder %s12, 1
      %p55 = por %p53, %p54
      %p56 = scmp.ne.s32.totalorder %s48, %s51
      %p57 = scmp.eq.s32.totalorder %s12, 0
      %p58 = por %p56, %p57
      %p59 = scmp.ne.s32.totalorder %s48, %s51
      %p60 = scmp.eq.s32.totalorder %s17, 1
      %p61 = por %p59, %p60
      %p62 = scmp.ne.s32.totalorder %s51, %s52
      %p63 = scmp.eq.s32.totalorder %s17, 0
      %p64 = por %p62, %p63
      %p65 = scmp.ne.s32.totalorder %s51, %s52
      %p66 = scmp.eq.s32.totalorder %s18, 1
      %p67 = por %p65, %p66
      %p69 = scmp.ne.s32.totalorder %s52, %s68
      %p70 = scmp.eq.s32.totalorder %s18, 0
      %p71 = por %p69, %p70
      %s73 = sadd.s32 %s72, 1
      %p76 = scmp.eq.s32.totalorder %s12, 1
      %p77 = scmp.ne.s32.totalorder %s72, %s74
      %p78 = scmp.eq.s32.totalorder %s12, 0
      %p79 = por %p77, %p78
      %p80 = scmp.ne.s32.totalorder %s72, %s74
      %p81 = scmp.eq.s32.totalorder %s17, 1
      %p82 = por %p80, %p81
      %p83 = scmp.ne.s32.totalorder %s74, %s75
      %p84 = scmp.eq.s32.totalorder %s17, 0
      %p85 = por %p83, %p84
      %p86 = scmp.ne.s32.totalorder %s74, %s75
      %p87 = scmp.eq.s32.totalorder %s18, 1
      %p88 = por %p86, %p87
      %p90 = scmp.ne.s32.totalorder %s75, %s89
      %p91 = scmp.eq.s32.totalorder %s18, 0
      %p92 = por %p90, %p91
      %s94 = sadd.s32 %s93, 1
      %p97 = scmp.eq.s32.totalorder %s12, 1
      %p98 = scmp.ne.s32.totalorder %s93, %s95
      %p99 = scmp.eq.s32.totalorder %s12, 0
      %p100 = por %p98, %p99
      %p101 = scmp.ne.s32.totalorder %s93, %s95
      %p102 = scmp.eq.s32.totalorder %s17, 1
      %p103 = por %p101, %p102
      %p104 = scmp.ne.s32.totalorder %s95, %s96
      %p105 = scmp.eq.s32.totalorder %s17, 0
      %p106 = por %p104, %p105
      %p107 = scmp.ne.s32.totalorder %s95, %s96
      %p108 = scmp.eq.s32.totalorder %s18, 1
      %p109 = por %p107, %p108
      %p111 = scmp.ne.s32.totalorder %s96, %s110
      %p112 = scmp.eq.s32.totalorder %s18, 0
      %p113 = por %p111, %p112
      %s114 = ssub.s32 %s12, %s19
      %p115 = scmp.eq.s32.totalorder %s114, 0
      %s117 = sadd.s32 %s116, 1
      %s118 = scalar_select %p115, %s116, %s117
      %p121 = pneg %p115
      %p122 = scmp.eq.s32.totalorder %s12, 1
      %p123 = por %p121, %p122
      %p124 = scmp.ne.s32.totalorder %s116, %s119
      %p125 = scmp.eq.s32.totalorder %s12, 0
      %p126 = por %p124, %p125
      %p127 = scmp.ne.s32.totalorder %s116, %s119
      %p128 = scmp.eq.s32.totalorder %s17, 1
      %p129 = por %p127, %p128
      %p130 = scmp.ne.s32.totalorder %s119, %s120
      %p131 = scmp.eq.s32.totalorder %s17, 0
      %p132 = por %p130, %p131
      %p133 = scmp.ne.s32.totalorder %s119, %s120
      %p134 = scmp.eq.s32.totalorder %s18, 1
      %p135 = por %p133, %p134
      %p137 = scmp.ne.s32.totalorder %s120, %s136
      %p138 = scmp.eq.s32.totalorder %s18, 0
      %p139 = por %p137, %p138
      %p140 = scmp.le.s32.totalorder 1, %s12
      %p141 = scmp.lt.s32.totalorder %s12, 3
      %p142 = pnand %p140, %p141
      %p143 = pneg %p142
      // Predicated region
      $region9: #{gmf_forward.1} parent=5 // pred_check
        _
      $region10: #{gmf_forward.1} parent=5 // pred_check_branch
        %145 = sbr.rel (%p142) target = $region12
      $region11: #{gmf_forward.1} parent=5 // pred_region
        %s146 = ssub.s32 %s12, 1
        // Predicated region
        $region13: #{gmf_forward.1} parent=11 // pred_check
          %p147 = pneg %p85
        $region14: #{gmf_forward.1} parent=11 // pred_check_branch
          %149 = sbr.rel (%p147) target = $region16
        $region15: #{gmf_forward.1} parent=11 // pred_region
          %151 = vsyncadd [#allocation3], 0
          %s152 = sshll.u32 %s2, 4
          %s153 = int_to_ptr.hbm [resolvable:$true] %s152
          %s154 = sshll.u32 [#allocation2], 4
          %s155 = int_to_ptr.vmem [resolvable:$true] %s154
          %160 = dma.hbm_to_vmem [thread:$0]  %s153, 896, %s155, [#allocation3], 128, 128, 8
        $region16: #{gmf_forward.1} parent=11 // pred_fallthru
          _
        // Predicated region
        $region17: #{gmf_forward.1} parent=11 // pred_check
          %p161 = pneg %p106
        $region18: #{gmf_forward.1} parent=11 // pred_check_branch
          %163 = sbr.rel (%p161) target = $region20
        $region19: #{gmf_forward.1} parent=11 // pred_region
          %165 = vsyncadd [#allocation5], 0
          %s166 = sshll.u32 %s3, 4
          %s167 = int_to_ptr.hbm [resolvable:$true] %s166
          %s168 = sshll.u32 [#allocation4], 4
          %s169 = int_to_ptr.vmem [resolvable:$true] %s168
          %174 = dma.hbm_to_vmem [thread:$0]  %s167, 33536, %s169, [#allocation5], 128, 128, 8
        $region20: #{gmf_forward.1} parent=11 // pred_fallthru
          _
      $region12: #{gmf_forward.1} parent=5 // pred_fallthru
        _
      %p175 = scmp.lt.s32.totalorder %s12, 2
      // Predicated region
      $region21: #{gmf_forward.1} parent=5 // pred_check
        %p176 = pneg %p175
      $region22: #{gmf_forward.1} parent=5 // pred_check_branch
        %178 = sbr.rel (%p176) target = $region24
      $region23: #{gmf_forward.1} parent=5 // pred_region
        // Predicated region
        $region25: #{gmf_forward.1} parent=23 // pred_check
          %p179 = pneg %p32
        $region26: #{gmf_forward.1} parent=23 // pred_check_branch
          %181 = sbr.rel (%p179) target = $region28
        $region27: #{gmf_forward.1} parent=23 // pred_region
          %s182 = smul.u32 3, %s12
          %p183 = scmp.lt.s32.totalorder %s182, 5
          %s184 = scalar_select %p183, %s182, 5
          %s185 = smul.addr %s184, 8
          %s186 = scalar_lea.vmem %s0, %s185
          %s187 = smul.u32 3, %s12
        $region28: #{gmf_forward.1} parent=23 // pred_fallthru
          _
        // Predicated region
        $region29: #{gmf_forward.1} parent=23 // pred_check
          %p188 = pneg %p58
        $region30: #{gmf_forward.1} parent=23 // pred_check_branch
          %190 = sbr.rel (%p188) target = $region32
        $region31: #{gmf_forward.1} parent=23 // pred_region
          %s191 = smul.u32 3, %s12
          %p192 = scmp.lt.s32.totalorder %s191, 5
          %s193 = scalar_select %p192, %s191, 5
          %s194 = smul.addr %s193, 8
          %s195 = scalar_lea.vmem %s1, %s194
          %s196 = smul.u32 3, %s12
        $region32: #{gmf_forward.1} parent=23 // pred_fallthru
          _
      $region24: #{gmf_forward.1} parent=5 // pred_fallthru
        _
      %p197 = scmp.le.s32.totalorder 1, %s12
      %p198 = scmp.lt.s32.totalorder %s12, 3
      %p199 = pnand %p197, %p198
      %p200 = pneg %p199
      // Predicated region
      $region33: #{gmf_forward.1} parent=5 // pred_check
        _
      $region34: #{gmf_forward.1} parent=5 // pred_check_branch
        %202 = sbr.rel (%p199) target = $region36
      $region35: #{gmf_forward.1} parent=5 // pred_region
        %s203 = ssub.s32 %s12, 1
        // Predicated region
        $region37: #{gmf_forward.1} parent=35 // pred_check
          %p204 = pneg %p85
        $region38: #{gmf_forward.1} parent=35 // pred_check_branch
          %206 = sbr.rel (%p204) target = $region40
        $region39: #{gmf_forward.1} parent=35 // pred_region
          %208 = dma.done [#allocation3], 896
        $region40: #{gmf_forward.1} parent=35 // pred_fallthru
          _
        // Predicated region
        $region41: #{gmf_forward.1} parent=35 // pred_check
          %p209 = pneg %p106
        $region42: #{gmf_forward.1} parent=35 // pred_check_branch
          %211 = sbr.rel (%p209) target = $region44
        $region43: #{gmf_forward.1} parent=35 // pred_region
          %213 = dma.done [#allocation5], 33536
        $region44: #{gmf_forward.1} parent=35 // pred_fallthru
          _
        %s214 = smul.u32 3, %s17
        %p215 = scmp.lt.s32.totalorder %s214, 5
        %s216 = scalar_select %p215, %s214, 5
        %s217 = smul.addr %s216, 8
        %s218 = scalar_lea.vmem %s0, %s217
        %p219 = pneg %p38
        %p220 = pneg %p35
        %s221 = smul.u32 3, %s17
        %p222 = scmp.lt.s32.totalorder %s221, 5
        %s223 = scalar_select %p222, %s221, 5
        %s224 = smul.addr %s223, 8
        %s225 = scalar_lea.vmem %s1, %s224
        %p226 = pneg %p64
        %p227 = pneg %p61
        %p228 = pneg %p85
        %p229 = pneg %p82
        %p230 = pneg %p106
        %p231 = pneg %p103
        %p232 = pneg %p132
        %p233 = pneg %p129
        %s234 = smul.u32 3, %s17
        %p235 = scmp.lt.s32.totalorder %s234, 5
        %s236 = scalar_select %p235, %s234, 5
        %s237 = smul.addr %s236, 8
        %s238 = scalar_lea.vmem %s4, %s237
        %s239 = smul.u32 3, %s17
        %p240 = scmp.lt.s32.totalorder %s239, 5
        %s241 = scalar_select %p240, %s239, 5
        %s242 = smul.addr %s241, 8
        %s243 = scalar_lea.vmem %s0, %s242
        %s244 = smul.u32 3, %s17
        %s245 = smul.u32 3, %s17
        %p246 = scmp.lt.s32.totalorder %s245, 5
        %s247 = scalar_select %p246, %s245, 5
        %s248 = smul.addr %s247, 8
        %s249 = scalar_lea.vmem %s1, %s248
        %s250 = smul.u32 3, %s17
        %s251 = smul.u32 3, %s17
        %p252 = scmp.lt.s32.totalorder %s251, 5
        %s253 = scalar_select %p252, %s251, 5
        %s254 = smul.addr %s253, 8
        %s255 = scalar_lea.vmem %s4, %s254
        %s256 = smul.u32 3, %s17
        %v257 = vld [vmem:[%s243] sm:$0xff]
        %v258 = vld [vmem:[%s243 + $0x8] sm:$0xff]
        %v259 = vld [vmem:[%s243 + $0x10] sm:$0xff]
        %v260 = vld [vmem:[%s249] sm:$0xff]
        %v261 = vld [vmem:[%s249 + $0x8] sm:$0xff]
        %v262 = vld [vmem:[%s249 + $0x10] sm:$0xff]
        %v263 = vlaneseq
        %v264 = vand.u32 %v263, 127
        %265 = vset.pattern.permute.xlu0 0
        %266 = vperm.xlu0 %265, %v257
        %v267 = vpop.permute.xlu0 %266
        %268 = vset.pattern.permute.xlu0 0
        %269 = vperm.xlu0 %268, %v258
        %v270 = vpop.permute.xlu0 %269
        %271 = vset.pattern.permute.xlu0 0
        %272 = vperm.xlu0 %271, %v259
        %v273 = vpop.permute.xlu0 %272
        %vm274 = vcmp.eq.s32.totalorder %v264, %v267
        %vm275 = vcmp.eq.s32.totalorder %v264, %v270
        %vm276 = vcmp.eq.s32.totalorder %v264, %v273
        %v277 = vsel %vm274, 1, 0
        %v278 = vsel %vm275, 1, 0
        %v279 = vsel %vm276, 1, 0
        %v280 = vcvt.s32.f32 %v277
        %v281 = vcvt.s32.f32 %v278
        %v282 = vcvt.s32.f32 %v279
        %v283 = vld [vmem:[#allocation2] sm:$0xff]
        %v284 = vld [vmem:[#allocation2 + $0x8] sm:$0xff]
        %v285 = vld [vmem:[#allocation2 + $0x10] sm:$0xff]
        %v286 = vld [vmem:[#allocation2 + $0x18] sm:$0xff]
        %v287 = vld [vmem:[#allocation2 + $0x20] sm:$0xff]
        %v288 = vld [vmem:[#allocation2 + $0x28] sm:$0xff]
        %v289 = vld [vmem:[#allocation2 + $0x30] sm:$0x3]
        %vm290 = vcmask 408576
        %v292 = vsel %vm290, %v280, 0
        %v295 = vsel %vm290, %v281, 0
        %v298 = vsel %vm290, %v282, 0
        %vm300 = vcmask 1041408
        %v302 = vsel %vm300, %v289, 0
        %304 = vmatpush.msra.mxu0 0.0
        %305 = vmatpush.msra.mxu0 0.0
        %306 = vmatpush.msra.mxu0 0.0
        %307 = vmatpush.msra.mxu0 0.0
        %308 = vmatpush.msra.mxu0 0.0
        %309 = vmatpush.msra.mxu0 0.0
        %310 = vmatpush.msra.mxu0 0.0
        %311 = vmatpush.msra.mxu0 0.0
        %312 = vmatpush.msra.mxu0 0.0
        %v313 = vand.u32 %v302, 4294901760
        %314 = vmatpush.msra.mxu0 %v313
        %v315 = vand.u32 %v288, 4294901760
        %316 = vmatpush.msra.mxu0 %v315
        %v317 = vand.u32 %v287, 4294901760
        %318 = vmatpush.msra.mxu0 %v317
        %v319 = vand.u32 %v286, 4294901760
        %320 = vmatpush.msra.mxu0 %v319
        %v321 = vand.u32 %v285, 4294901760
        %322 = vmatpush.msra.mxu0 %v321
        %v323 = vand.u32 %v284, 4294901760
        %324 = vmatpush.msra.mxu0 %v323
        %v325 = vand.u32 %v283, 4294901760
        %326 = vmatpush.msra.mxu0 %v325
        %v327 = vand.u32 %v292, 4294901760
        %v328 = vsub.f32 %v292, %v327
        %v329 = vand.u32 %v328, 4294901760
        %v330 = vsub.f32 %v328, %v329
        %v331 = vand.u32 %v330, 4294901760
        %332 = vmatmul.f32.gmra.mxu0 %v331
        %v333 = vpop.f32.mrf.mxu0
        %v334 = vadd.f32 0.0, %v333
        %v335 = vand.u32 %v295, 4294901760
        %v336 = vsub.f32 %v295, %v335
        %v337 = vand.u32 %v336, 4294901760
        %v338 = vsub.f32 %v336, %v337
        %v339 = vand.u32 %v338, 4294901760
        %340 = vmatmul.f32.gmra.mxu0 %v339
        %v341 = vpop.f32.mrf.mxu0
        %v342 = vadd.f32 0.0, %v341
        %v343 = vand.u32 %v298, 4294901760
        %v344 = vsub.f32 %v298, %v343
        %v345 = vand.u32 %v344, 4294901760
        %v346 = vsub.f32 %v344, %v345
        %v347 = vand.u32 %v346, 4294901760
        %348 = vmatmul.f32.gmra.mxu0 %v347
        %v349 = vpop.f32.mrf.mxu0
        %v350 = vadd.f32 0.0, %v349
        %351 = vdwg.mxu0
        %352 = vmatpush.msra.mxu0 0.0
        %353 = vmatpush.msra.mxu0 0.0
        %354 = vmatpush.msra.mxu0 0.0
        %355 = vmatpush.msra.mxu0 0.0
        %356 = vmatpush.msra.mxu0 0.0
        %357 = vmatpush.msra.mxu0 0.0
        %358 = vmatpush.msra.mxu0 0.0
        %359 = vmatpush.msra.mxu0 0.0
        %360 = vmatpush.msra.mxu0 0.0
        %v361 = vand.u32 %v302, 4294901760
        %v362 = vsub.f32 %v302, %v361
        %v363 = vand.u32 %v362, 4294901760
        %v364 = vsub.f32 %v362, %v363
        %v365 = vand.u32 %v364, 4294901760
        %366 = vmatpush.msra.mxu0 %v365
        %v367 = vand.u32 %v288, 4294901760
        %v368 = vsub.f32 %v288, %v367
        %v369 = vand.u32 %v368, 4294901760
        %v370 = vsub.f32 %v368, %v369
        %v371 = vand.u32 %v370, 4294901760
        %372 = vmatpush.msra.mxu0 %v371
        %v373 = vand.u32 %v287, 4294901760
        %v374 = vsub.f32 %v287, %v373
        %v375 = vand.u32 %v374, 4294901760
        %v376 = vsub.f32 %v374, %v375
        %v377 = vand.u32 %v376, 4294901760
        %378 = vmatpush.msra.mxu0 %v377
        %v379 = vand.u32 %v286, 4294901760
        %v380 = vsub.f32 %v286, %v379
        %v381 = vand.u32 %v380, 4294901760
        %v382 = vsub.f32 %v380, %v381
        %v383 = vand.u32 %v382, 4294901760
        %384 = vmatpush.msra.mxu0 %v383
        %v385 = vand.u32 %v285, 4294901760
        %v386 = vsub.f32 %v285, %v385
        %v387 = vand.u32 %v386, 4294901760
        %v388 = vsub.f32 %v386, %v387
        %v389 = vand.u32 %v388, 4294901760
        %390 = vmatpush.msra.mxu0 %v389
        %v391 = vand.u32 %v284, 4294901760
        %v392 = vsub.f32 %v284, %v391
        %v393 = vand.u32 %v392, 4294901760
        %v394 = vsub.f32 %v392, %v393
        %v395 = vand.u32 %v394, 4294901760
        %396 = vmatpush.msra.mxu0 %v395
        %v397 = vand.u32 %v283, 4294901760
        %v398 = vsub.f32 %v283, %v397
        %v399 = vand.u32 %v398, 4294901760
        %v400 = vsub.f32 %v398, %v399
        %v401 = vand.u32 %v400, 4294901760
        %402 = vmatpush.msra.mxu0 %v401
        %v403 = vand.u32 %v292, 4294901760
        %404 = vmatmul.f32.gmra.mxu0 %v403
        %v405 = vpop.f32.mrf.mxu0
        %v406 = vadd.f32 %v334, %v405
        %v407 = vand.u32 %v295, 4294901760
        %408 = vmatmul.f32.gmra.mxu0 %v407
        %v409 = vpop.f32.mrf.mxu0
        %v410 = vadd.f32 %v342, %v409
        %v411 = vand.u32 %v298, 4294901760
        %412 = vmatmul.f32.gmra.mxu0 %v411
        %v413 = vpop.f32.mrf.mxu0
        %v414 = vadd.f32 %v350, %v413
        %415 = vdwg.mxu0
        %416 = vmatpush.msra.mxu0 0.0
        %417 = vmatpush.msra.mxu0 0.0
        %418 = vmatpush.msra.mxu0 0.0
        %419 = vmatpush.msra.mxu0 0.0
        %420 = vmatpush.msra.mxu0 0.0
        %421 = vmatpush.msra.mxu0 0.0
        %422 = vmatpush.msra.mxu0 0.0
        %423 = vmatpush.msra.mxu0 0.0
        %424 = vmatpush.msra.mxu0 0.0
        %v425 = vand.u32 %v302, 4294901760
        %v426 = vsub.f32 %v302, %v425
        %427 = vmatpush.msra.mxu0 %v426
        %v428 = vand.u32 %v288, 4294901760
        %v429 = vsub.f32 %v288, %v428
        %430 = vmatpush.msra.mxu0 %v429
        %v431 = vand.u32 %v287, 4294901760
        %v432 = vsub.f32 %v287, %v431
        %433 = vmatpush.msra.mxu0 %v432
        %v434 = vand.u32 %v286, 4294901760
        %v435 = vsub.f32 %v286, %v434
        %436 = vmatpush.msra.mxu0 %v435
        %v437 = vand.u32 %v285, 4294901760
        %v438 = vsub.f32 %v285, %v437
        %439 = vmatpush.msra.mxu0 %v438
        %v440 = vand.u32 %v284, 4294901760
        %v441 = vsub.f32 %v284, %v440
        %442 = vmatpush.msra.mxu0 %v441
        %v443 = vand.u32 %v283, 4294901760
        %v444 = vsub.f32 %v283, %v443
        %445 = vmatpush.msra.mxu0 %v444
        %v446 = vand.u32 %v292, 4294901760
        %v447 = vsub.f32 %v292, %v446
        %448 = vmatmul.f32.gmra.mxu0 %v447
        %v449 = vpop.f32.mrf.mxu0
        %v450 = vadd.f32 %v406, %v449
        %v451 = vand.u32 %v295, 4294901760
        %v452 = vsub.f32 %v295, %v451
        %453 = vmatmul.f32.gmra.mxu0 %v452
        %v454 = vpop.f32.mrf.mxu0
        %v455 = vadd.f32 %v410, %v454
        %v456 = vand.u32 %v298, 4294901760
        %v457 = vsub.f32 %v298, %v456
        %458 = vmatmul.f32.gmra.mxu0 %v457
        %v459 = vpop.f32.mrf.mxu0
        %v460 = vadd.f32 %v414, %v459
        %461 = vdwg.mxu0
        %462 = vmatpush.msra.mxu0 0.0
        %463 = vmatpush.msra.mxu0 0.0
        %464 = vmatpush.msra.mxu0 0.0
        %465 = vmatpush.msra.mxu0 0.0
        %466 = vmatpush.msra.mxu0 0.0
        %467 = vmatpush.msra.mxu0 0.0
        %468 = vmatpush.msra.mxu0 0.0
        %469 = vmatpush.msra.mxu0 0.0
        %470 = vmatpush.msra.mxu0 0.0
        %v471 = vand.u32 %v302, 4294901760
        %472 = vmatpush.msra.mxu0 %v471
        %v473 = vand.u32 %v288, 4294901760
        %474 = vmatpush.msra.mxu0 %v473
        %v475 = vand.u32 %v287, 4294901760
        %476 = vmatpush.msra.mxu0 %v475
        %v477 = vand.u32 %v286, 4294901760
        %478 = vmatpush.msra.mxu0 %v477
        %v479 = vand.u32 %v285, 4294901760
        %480 = vmatpush.msra.mxu0 %v479
        %v481 = vand.u32 %v284, 4294901760
        %482 = vmatpush.msra.mxu0 %v481
        %v483 = vand.u32 %v283, 4294901760
        %484 = vmatpush.msra.mxu0 %v483
        %v485 = vand.u32 %v292, 4294901760
        %v486 = vsub.f32 %v292, %v485
        %v487 = vand.u32 %v486, 4294901760
        %488 = vmatmul.f32.gmra.mxu0 %v487
        %v489 = vpop.f32.mrf.mxu0
        %v490 = vadd.f32 %v450, %v489
        %v491 = vand.u32 %v295, 4294901760
        %v492 = vsub.f32 %v295, %v491
        %v493 = vand.u32 %v492, 4294901760
        %494 = vmatmul.f32.gmra.mxu0 %v493
        %v495 = vpop.f32.mrf.mxu0
        %v496 = vadd.f32 %v455, %v495
        %v497 = vand.u32 %v298, 4294901760
        %v498 = vsub.f32 %v298, %v497
        %v499 = vand.u32 %v498, 4294901760
        %500 = vmatmul.f32.gmra.mxu0 %v499
        %v501 = vpop.f32.mrf.mxu0
        %v502 = vadd.f32 %v460, %v501
        %503 = vdwg.mxu0
        %504 = vmatpush.msra.mxu0 0.0
        %505 = vmatpush.msra.mxu0 0.0
        %506 = vmatpush.msra.mxu0 0.0
        %507 = vmatpush.msra.mxu0 0.0
        %508 = vmatpush.msra.mxu0 0.0
        %509 = vmatpush.msra.mxu0 0.0
        %510 = vmatpush.msra.mxu0 0.0
        %511 = vmatpush.msra.mxu0 0.0
        %512 = vmatpush.msra.mxu0 0.0
        %v513 = vand.u32 %v302, 4294901760
        %v514 = vsub.f32 %v302, %v513
        %v515 = vand.u32 %v514, 4294901760
        %516 = vmatpush.msra.mxu0 %v515
        %v517 = vand.u32 %v288, 4294901760
        %v518 = vsub.f32 %v288, %v517
        %v519 = vand.u32 %v518, 4294901760
        %520 = vmatpush.msra.mxu0 %v519
        %v521 = vand.u32 %v287, 4294901760
        %v522 = vsub.f32 %v287, %v521
        %v523 = vand.u32 %v522, 4294901760
        %524 = vmatpush.msra.mxu0 %v523
        %v525 = vand.u32 %v286, 4294901760
        %v526 = vsub.f32 %v286, %v525
        %v527 = vand.u32 %v526, 4294901760
        %528 = vmatpush.msra.mxu0 %v527
        %v529 = vand.u32 %v285, 4294901760
        %v530 = vsub.f32 %v285, %v529
        %v531 = vand.u32 %v530, 4294901760
        %532 = vmatpush.msra.mxu0 %v531
        %v533 = vand.u32 %v284, 4294901760
        %v534 = vsub.f32 %v284, %v533
        %v535 = vand.u32 %v534, 4294901760
        %536 = vmatpush.msra.mxu0 %v535
        %v537 = vand.u32 %v283, 4294901760
        %v538 = vsub.f32 %v283, %v537
        %v539 = vand.u32 %v538, 4294901760
        %540 = vmatpush.msra.mxu0 %v539
        %v541 = vand.u32 %v292, 4294901760
        %542 = vmatmul.f32.gmra.mxu0 %v541
        %v543 = vpop.f32.mrf.mxu0
        %v544 = vadd.f32 %v490, %v543
        %v545 = vand.u32 %v295, 4294901760
        %546 = vmatmul.f32.gmra.mxu0 %v545
        %v547 = vpop.f32.mrf.mxu0
        %v548 = vadd.f32 %v496, %v547
        %v549 = vand.u32 %v298, 4294901760
        %550 = vmatmul.f32.gmra.mxu0 %v549
        %v551 = vpop.f32.mrf.mxu0
        %v552 = vadd.f32 %v502, %v551
        %553 = vdwg.mxu0
        %554 = vmatpush.msra.mxu0 0.0
        %555 = vmatpush.msra.mxu0 0.0
        %556 = vmatpush.msra.mxu0 0.0
        %557 = vmatpush.msra.mxu0 0.0
        %558 = vmatpush.msra.mxu0 0.0
        %559 = vmatpush.msra.mxu0 0.0
        %560 = vmatpush.msra.mxu0 0.0
        %561 = vmatpush.msra.mxu0 0.0
        %562 = vmatpush.msra.mxu0 0.0
        %v563 = vand.u32 %v302, 4294901760
        %564 = vmatpush.msra.mxu0 %v563
        %v565 = vand.u32 %v288, 4294901760
        %566 = vmatpush.msra.mxu0 %v565
        %v567 = vand.u32 %v287, 4294901760
        %568 = vmatpush.msra.mxu0 %v567
        %v569 = vand.u32 %v286, 4294901760
        %570 = vmatpush.msra.mxu0 %v569
        %v571 = vand.u32 %v285, 4294901760
        %572 = vmatpush.msra.mxu0 %v571
        %v573 = vand.u32 %v284, 4294901760
        %574 = vmatpush.msra.mxu0 %v573
        %v575 = vand.u32 %v283, 4294901760
        %576 = vmatpush.msra.mxu0 %v575
        %v577 = vand.u32 %v292, 4294901760
        %578 = vmatmul.f32.gmra.mxu0 %v577
        %v579 = vpop.f32.mrf.mxu0
        %v580 = vadd.f32 %v544, %v579
        %v581 = vand.u32 %v295, 4294901760
        %582 = vmatmul.f32.gmra.mxu0 %v581
        %v583 = vpop.f32.mrf.mxu0
        %v584 = vadd.f32 %v548, %v583
        %v585 = vand.u32 %v298, 4294901760
        %586 = vmatmul.f32.gmra.mxu0 %v585
        %v587 = vpop.f32.mrf.mxu0
        %v588 = vadd.f32 %v552, %v587
        %589 = vdwg.mxu0
        %v590 = vadd.s32 %v264, 128
        %v591 = vadd.s32 %v264, 256
        %v592 = vadd.s32 %v264, 384
        %v593 = vadd.s32 %v264, 512
        %v594 = vadd.s32 %v264, 640
        %v595 = vadd.s32 %v264, 768
        %v596 = vadd.s32 %v264, 896
        %v597 = vadd.s32 %v264, 1024
        %v598 = vadd.s32 %v264, 1152
        %v599 = vadd.s32 %v264, 1280
        %v600 = vadd.s32 %v264, 1408
        %v601 = vadd.s32 %v264, 1536
        %v602 = vadd.s32 %v264, 1664
        %v603 = vadd.s32 %v264, 1792
        %v604 = vadd.s32 %v264, 1920
        %v605 = vadd.s32 %v264, 2048
        %606 = vset.pattern.permute.xlu0 0
        %607 = vperm.xlu0 %606, %v260
        %v608 = vpop.permute.xlu0 %607
        %609 = vset.pattern.permute.xlu0 0
        %610 = vperm.xlu0 %609, %v261
        %v611 = vpop.permute.xlu0 %610
        %612 = vset.pattern.permute.xlu0 0
        %613 = vperm.xlu0 %612, %v262
        %v614 = vpop.permute.xlu0 %613
        %vm615 = vcmp.eq.s32.totalorder %v264, %v608
        %vm616 = vcmp.eq.s32.totalorder %v590, %v608
        %vm617 = vcmp.eq.s32.totalorder %v591, %v608
        %vm618 = vcmp.eq.s32.totalorder %v592, %v608
        %vm619 = vcmp.eq.s32.totalorder %v593, %v608
        %vm620 = vcmp.eq.s32.totalorder %v594, %v608
        %vm621 = vcmp.eq.s32.totalorder %v595, %v608
        %vm622 = vcmp.eq.s32.totalorder %v596, %v608
        %vm623 = vcmp.eq.s32.totalorder %v597, %v608
        %vm624 = vcmp.eq.s32.totalorder %v598, %v608
        %vm625 = vcmp.eq.s32.totalorder %v599, %v608
        %vm626 = vcmp.eq.s32.totalorder %v600, %v608
        %vm627 = vcmp.eq.s32.totalorder %v601, %v608
        %vm628 = vcmp.eq.s32.totalorder %v602, %v608
        %vm629 = vcmp.eq.s32.totalorder %v603, %v608
        %vm630 = vcmp.eq.s32.totalorder %v604, %v608
        %vm631 = vcmp.eq.s32.totalorder %v605, %v608
        %vm632 = vcmp.eq.s32.totalorder %v264, %v611
        %vm633 = vcmp.eq.s32.totalorder %v590, %v611
        %vm634 = vcmp.eq.s32.totalorder %v591, %v611
        %vm635 = vcmp.eq.s32.totalorder %v592, %v611
        %vm636 = vcmp.eq.s32.totalorder %v593, %v611
        %vm637 = vcmp.eq.s32.totalorder %v594, %v611
        %vm638 = vcmp.eq.s32.totalorder %v595, %v611
        %vm639 = vcmp.eq.s32.totalorder %v596, %v611
        %vm640 = vcmp.eq.s32.totalorder %v597, %v611
        %vm641 = vcmp.eq.s32.totalorder %v598, %v611
        %vm642 = vcmp.eq.s32.totalorder %v599, %v611
        %vm643 = vcmp.eq.s32.totalorder %v600, %v611
        %vm644 = vcmp.eq.s32.totalorder %v601, %v611
        %vm645 = vcmp.eq.s32.totalorder %v602, %v611
        %vm646 = vcmp.eq.s32.totalorder %v603, %v611
        %vm647 = vcmp.eq.s32.totalorder %v604, %v611
        %vm648 = vcmp.eq.s32.totalorder %v605, %v611
        %vm649 = vcmp.eq.s32.totalorder %v264, %v614
        %vm650 = vcmp.eq.s32.totalorder %v590, %v614
        %vm651 = vcmp.eq.s32.totalorder %v591, %v614
        %vm652 = vcmp.eq.s32.totalorder %v592, %v614
        %vm653 = vcmp.eq.s32.totalorder %v593, %v614
        %vm654 = vcmp.eq.s32.totalorder %v594, %v614
        %vm655 = vcmp.eq.s32.totalorder %v595, %v614
        %vm656 = vcmp.eq.s32.totalorder %v596, %v614
        %vm657 = vcmp.eq.s32.totalorder %v597, %v614
        %vm658 = vcmp.eq.s32.totalorder %v598, %v614
        %vm659 = vcmp.eq.s32.totalorder %v599, %v614
        %vm660 = vcmp.eq.s32.totalorder %v600, %v614
        %vm661 = vcmp.eq.s32.totalorder %v601, %v614
        %vm662 = vcmp.eq.s32.totalorder %v602, %v614
        %vm663 = vcmp.eq.s32.totalorder %v603, %v614
        %vm664 = vcmp.eq.s32.totalorder %v604, %v614
        %vm665 = vcmp.eq.s32.totalorder %v605, %v614
        %v666 = vsel %vm615, 1, 0
        %v667 = vsel %vm616, 1, 0
        %v668 = vsel %vm617, 1, 0
        %v669 = vsel %vm618, 1, 0
        %v670 = vsel %vm619, 1, 0
        %v671 = vsel %vm620, 1, 0
        %v672 = vsel %vm621, 1, 0
        %v673 = vsel %vm622, 1, 0
        %v674 = vsel %vm623, 1, 0
        %v675 = vsel %vm624, 1, 0
        %v676 = vsel %vm625, 1, 0
        %v677 = vsel %vm626, 1, 0
        %v678 = vsel %vm627, 1, 0
        %v679 = vsel %vm628, 1, 0
        %v680 = vsel %vm629, 1, 0
        %v681 = vsel %vm630, 1, 0
        %v682 = vsel %vm631, 1, 0
        %v683 = vsel %vm632, 1, 0
        %v684 = vsel %vm633, 1, 0
        %v685 = vsel %vm634, 1, 0
        %v686 = vsel %vm635, 1, 0
        %v687 = vsel %vm636, 1, 0
        %v688 = vsel %vm637, 1, 0
        %v689 = vsel %vm638, 1, 0
        %v690 = vsel %vm639, 1, 0
        %v691 = vsel %vm640, 1, 0
        %v692 = vsel %vm641, 1, 0
        %v693 = vsel %vm642, 1, 0
        %v694 = vsel %vm643, 1, 0
        %v695 = vsel %vm644, 1, 0
        %v696 = vsel %vm645, 1, 0
        %v697 = vsel %vm646, 1, 0
        %v698 = vsel %vm647, 1, 0
        %v699 = vsel %vm648, 1, 0
        %v700 = vsel %vm649, 1, 0
        %v701 = vsel %vm650, 1, 0
        %v702 = vsel %vm651, 1, 0
        %v703 = vsel %vm652, 1, 0
        %v704 = vsel %vm653, 1, 0
        %v705 = vsel %vm654, 1, 0
        %v706 = vsel %vm655, 1, 0
        %v707 = vsel %vm656, 1, 0
        %v708 = vsel %vm657, 1, 0
        %v709 = vsel %vm658, 1, 0
        %v710 = vsel %vm659, 1, 0
        %v711 = vsel %vm660, 1, 0
        %v712 = vsel %vm661, 1, 0
        %v713 = vsel %vm662, 1, 0
        %v714 = vsel %vm663, 1, 0
        %v715 = vsel %vm664, 1, 0
        %v716 = vsel %vm665, 1, 0
        %v717 = vcvt.s32.f32 %v666
        %v718 = vcvt.s32.f32 %v667
        %v719 = vcvt.s32.f32 %v668
        %v720 = vcvt.s32.f32 %v669
        %v721 = vcvt.s32.f32 %v670
        %v722 = vcvt.s32.f32 %v671
        %v723 = vcvt.s32.f32 %v672
        %v724 = vcvt.s32.f32 %v673
        %v725 = vcvt.s32.f32 %v674
        %v726 = vcvt.s32.f32 %v675
        %v727 = vcvt.s32.f32 %v676
        %v728 = vcvt.s32.f32 %v677
        %v729 = vcvt.s32.f32 %v678
        %v730 = vcvt.s32.f32 %v679
        %v731 = vcvt.s32.f32 %v680
        %v732 = vcvt.s32.f32 %v681
        %v733 = vcvt.s32.f32 %v682
        %v734 = vcvt.s32.f32 %v683
        %v735 = vcvt.s32.f32 %v684
        %v736 = vcvt.s32.f32 %v685
        %v737 = vcvt.s32.f32 %v686
        %v738 = vcvt.s32.f32 %v687
        %v739 = vcvt.s32.f32 %v688
        %v740 = vcvt.s32.f32 %v689
        %v741 = vcvt.s32.f32 %v690
        %v742 = vcvt.s32.f32 %v691
        %v743 = vcvt.s32.f32 %v692
        %v744 = vcvt.s32.f32 %v693
        %v745 = vcvt.s32.f32 %v694
        %v746 = vcvt.s32.f32 %v695
        %v747 = vcvt.s32.f32 %v696
        %v748 = vcvt.s32.f32 %v697
        %v749 = vcvt.s32.f32 %v698
        %v750 = vcvt.s32.f32 %v699
        %v751 = vcvt.s32.f32 %v700
        %v752 = vcvt.s32.f32 %v701
        %v753 = vcvt.s32.f32 %v702
        %v754 = vcvt.s32.f32 %v703
        %v755 = vcvt.s32.f32 %v704
        %v756 = vcvt.s32.f32 %v705
        %v757 = vcvt.s32.f32 %v706
        %v758 = vcvt.s32.f32 %v707
        %v759 = vcvt.s32.f32 %v708
        %v760 = vcvt.s32.f32 %v709
        %v761 = vcvt.s32.f32 %v710
        %v762 = vcvt.s32.f32 %v711
        %v763 = vcvt.s32.f32 %v712
        %v764 = vcvt.s32.f32 %v713
        %v765 = vcvt.s32.f32 %v714
        %v766 = vcvt.s32.f32 %v715
        %v767 = vcvt.s32.f32 %v716
        %v768 = vld [vmem:[#allocation4] sm:$0xff]
        %v769 = vld [vmem:[#allocation4 + $0x8] sm:$0xff]
        %v770 = vld [vmem:[#allocation4 + $0x10] sm:$0xff]
        %v771 = vld [vmem:[#allocation4 + $0x18] sm:$0xff]
        %v772 = vld [vmem:[#allocation4 + $0x20] sm:$0xff]
        %v773 = vld [vmem:[#allocation4 + $0x28] sm:$0xff]
        %v774 = vld [vmem:[#allocation4 + $0x30] sm:$0xff]
        %v775 = vld [vmem:[#allocation4 + $0x38] sm:$0xff]
        %v776 = vld [vmem:[#allocation4 + $0x40] sm:$0xff]
        %v777 = vld [vmem:[#allocation4 + $0x48] sm:$0xff]
        %v778 = vld [vmem:[#allocation4 + $0x50] sm:$0xff]
        %v779 = vld [vmem:[#allocation4 + $0x58] sm:$0xff]
        %v780 = vld [vmem:[#allocation4 + $0x60] sm:$0xff]
        %v781 = vld [vmem:[#allocation4 + $0x68] sm:$0xff]
        %v782 = vld [vmem:[#allocation4 + $0x70] sm:$0xff]
        %v783 = vld [vmem:[#allocation4 + $0x78] sm:$0xff]
        %v784 = vld [vmem:[#allocation4 + $0x80] sm:$0xff]
        %v785 = vld [vmem:[#allocation4 + $0x88] sm:$0xff]
        %v786 = vld [vmem:[#allocation4 + $0x90] sm:$0xff]
        %v787 = vld [vmem:[#allocation4 + $0x98] sm:$0xff]
        %v788 = vld [vmem:[#allocation4 + $0xa0] sm:$0xff]
        %v789 = vld [vmem:[#allocation4 + $0xa8] sm:$0xff]
        %v790 = vld [vmem:[#allocation4 + $0xb0] sm:$0xff]
        %v791 = vld [vmem:[#allocation4 + $0xb8] sm:$0xff]
        %v792 = vld [vmem:[#allocation4 + $0xc0] sm:$0xff]
        %v793 = vld [vmem:[#allocation4 + $0xc8] sm:$0xff]
        %v794 = vld [vmem:[#allocation4 + $0xd0] sm:$0xff]
        %v795 = vld [vmem:[#allocation4 + $0xd8] sm:$0xff]
        %v796 = vld [vmem:[#allocation4 + $0xe0] sm:$0xff]
        %v797 = vld [vmem:[#allocation4 + $0xe8] sm:$0xff]
        %v798 = vld [vmem:[#allocation4 + $0xf0] sm:$0xff]
        %v799 = vld [vmem:[#allocation4 + $0xf8] sm:$0xff]
        %v800 = vld [vmem:[#allocation4 + $0x100] sm:$0xff]
        %v801 = vld [vmem:[#allocation4 + $0x108] sm:$0xff]
        %v802 = vld [vmem:[#allocation4 + $0x110] sm:$0xff]
        %v803 = vld [vmem:[#allocation4 + $0x118] sm:$0xff]
        %v804 = vld [vmem:[#allocation4 + $0x120] sm:$0xff]
        %v805 = vld [vmem:[#allocation4 + $0x128] sm:$0xff]
        %v806 = vld [vmem:[#allocation4 + $0x130] sm:$0xff]
        %v807 = vld [vmem:[#allocation4 + $0x138] sm:$0xff]
        %v808 = vld [vmem:[#allocation4 + $0x140] sm:$0xff]
        %v809 = vld [vmem:[#allocation4 + $0x148] sm:$0xff]
        %v810 = vld [vmem:[#allocation4 + $0x150] sm:$0xff]
        %v811 = vld [vmem:[#allocation4 + $0x158] sm:$0xff]
        %v812 = vld [vmem:[#allocation4 + $0x160] sm:$0xff]
        %v813 = vld [vmem:[#allocation4 + $0x168] sm:$0xff]
        %v814 = vld [vmem:[#allocation4 + $0x170] sm:$0xff]
        %v815 = vld [vmem:[#allocation4 + $0x178] sm:$0xff]
        %v816 = vld [vmem:[#allocation4 + $0x180] sm:$0xff]
        %v817 = vld [vmem:[#allocation4 + $0x188] sm:$0xff]
        %v818 = vld [vmem:[#allocation4 + $0x190] sm:$0xff]
        %v819 = vld [vmem:[#allocation4 + $0x198] sm:$0xff]
        %v820 = vld [vmem:[#allocation4 + $0x1a0] sm:$0xff]
        %v821 = vld [vmem:[#allocation4 + $0x1a8] sm:$0xff]
        %v822 = vld [vmem:[#allocation4 + $0x1b0] sm:$0xff]
        %v823 = vld [vmem:[#allocation4 + $0x1b8] sm:$0xff]
        %v824 = vld [vmem:[#allocation4 + $0x1c0] sm:$0xff]
        %v825 = vld [vmem:[#allocation4 + $0x1c8] sm:$0xff]
        %v826 = vld [vmem:[#allocation4 + $0x1d0] sm:$0xff]
        %v827 = vld [vmem:[#allocation4 + $0x1d8] sm:$0xff]
        %v828 = vld [vmem:[#allocation4 + $0x1e0] sm:$0xff]
        %v829 = vld [vmem:[#allocation4 + $0x1e8] sm:$0xff]
        %v830 = vld [vmem:[#allocation4 + $0x1f0] sm:$0xff]
        %v831 = vld [vmem:[#allocation4 + $0x1f8] sm:$0xff]
        %v832 = vld [vmem:[#allocation4 + $0x200] sm:$0xff]
        %v833 = vld [vmem:[#allocation4 + $0x208] sm:$0xff]
        %v834 = vld [vmem:[#allocation4 + $0x210] sm:$0xff]
        %v835 = vld [vmem:[#allocation4 + $0x218] sm:$0xff]
        %v836 = vld [vmem:[#allocation4 + $0x220] sm:$0xff]
        %v837 = vld [vmem:[#allocation4 + $0x228] sm:$0xff]
        %v838 = vld [vmem:[#allocation4 + $0x230] sm:$0xff]
        %v839 = vld [vmem:[#allocation4 + $0x238] sm:$0xff]
        %v840 = vld [vmem:[#allocation4 + $0x240] sm:$0xff]
        %v841 = vld [vmem:[#allocation4 + $0x248] sm:$0xff]
        %v842 = vld [vmem:[#allocation4 + $0x250] sm:$0xff]
        %v843 = vld [vmem:[#allocation4 + $0x258] sm:$0xff]
        %v844 = vld [vmem:[#allocation4 + $0x260] sm:$0xff]
        %v845 = vld [vmem:[#allocation4 + $0x268] sm:$0xff]
        %v846 = vld [vmem:[#allocation4 + $0x270] sm:$0xff]
        %v847 = vld [vmem:[#allocation4 + $0x278] sm:$0xff]
        %v848 = vld [vmem:[#allocation4 + $0x280] sm:$0xff]
        %v849 = vld [vmem:[#allocation4 + $0x288] sm:$0xff]
        %v850 = vld [vmem:[#allocation4 + $0x290] sm:$0xff]
        %v851 = vld [vmem:[#allocation4 + $0x298] sm:$0xff]
        %v852 = vld [vmem:[#allocation4 + $0x2a0] sm:$0xff]
        %v853 = vld [vmem:[#allocation4 + $0x2a8] sm:$0xff]
        %v854 = vld [vmem:[#allocation4 + $0x2b0] sm:$0xff]
        %v855 = vld [vmem:[#allocation4 + $0x2b8] sm:$0xff]
        %v856 = vld [vmem:[#allocation4 + $0x2c0] sm:$0xff]
        %v857 = vld [vmem:[#allocation4 + $0x2c8] sm:$0xff]
        %v858 = vld [vmem:[#allocation4 + $0x2d0] sm:$0xff]
        %v859 = vld [vmem:[#allocation4 + $0x2d8] sm:$0xff]
        %v860 = vld [vmem:[#allocation4 + $0x2e0] sm:$0xff]
        %v861 = vld [vmem:[#allocation4 + $0x2e8] sm:$0xff]
        %v862 = vld [vmem:[#allocation4 + $0x2f0] sm:$0xff]
        %v863 = vld [vmem:[#allocation4 + $0x2f8] sm:$0xff]
        %v864 = vld [vmem:[#allocation4 + $0x300] sm:$0xff]
        %v865 = vld [vmem:[#allocation4 + $0x308] sm:$0xff]
        %v866 = vld [vmem:[#allocation4 + $0x310] sm:$0xff]
        %v867 = vld [vmem:[#allocation4 + $0x318] sm:$0xff]
        %v868 = vld [vmem:[#allocation4 + $0x320] sm:$0xff]
        %v869 = vld [vmem:[#allocation4 + $0x328] sm:$0xff]
        %v870 = vld [vmem:[#allocation4 + $0x330] sm:$0xff]
        %v871 = vld [vmem:[#allocation4 + $0x338] sm:$0xff]
        %v872 = vld [vmem:[#allocation4 + $0x340] sm:$0xff]
        %v873 = vld [vmem:[#allocation4 + $0x348] sm:$0xff]
        %v874 = vld [vmem:[#allocation4 + $0x350] sm:$0xff]
        %v875 = vld [vmem:[#allocation4 + $0x358] sm:$0xff]
        %v876 = vld [vmem:[#allocation4 + $0x360] sm:$0xff]
        %v877 = vld [vmem:[#allocation4 + $0x368] sm:$0xff]
        %v878 = vld [vmem:[#allocation4 + $0x370] sm:$0xff]
        %v879 = vld [vmem:[#allocation4 + $0x378] sm:$0xff]
        %v880 = vld [vmem:[#allocation4 + $0x380] sm:$0xff]
        %v881 = vld [vmem:[#allocation4 + $0x388] sm:$0xff]
        %v882 = vld [vmem:[#allocation4 + $0x390] sm:$0xff]
        %v883 = vld [vmem:[#allocation4 + $0x398] sm:$0xff]
        %v884 = vld [vmem:[#allocation4 + $0x3a0] sm:$0xff]
        %v885 = vld [vmem:[#allocation4 + $0x3a8] sm:$0xff]
        %v886 = vld [vmem:[#allocation4 + $0x3b0] sm:$0xff]
        %v887 = vld [vmem:[#allocation4 + $0x3b8] sm:$0xff]
        %v888 = vld [vmem:[#allocation4 + $0x3c0] sm:$0xff]
        %v889 = vld [vmem:[#allocation4 + $0x3c8] sm:$0xff]
        %v890 = vld [vmem:[#allocation4 + $0x3d0] sm:$0xff]
        %v891 = vld [vmem:[#allocation4 + $0x3d8] sm:$0xff]
        %v892 = vld [vmem:[#allocation4 + $0x3e0] sm:$0xff]
        %v893 = vld [vmem:[#allocation4 + $0x3e8] sm:$0xff]
        %v894 = vld [vmem:[#allocation4 + $0x3f0] sm:$0xff]
        %v895 = vld [vmem:[#allocation4 + $0x3f8] sm:$0xff]
        %v896 = vld [vmem:[#allocation4 + $0x400] sm:$0xff]
        %v897 = vld [vmem:[#allocation4 + $0x408] sm:$0xff]
        %v898 = vld [vmem:[#allocation4 + $0x410] sm:$0xff]
        %v899 = vld [vmem:[#allocation4 + $0x418] sm:$0xff]
        %v900 = vld [vmem:[#allocation4 + $0x420] sm:$0xff]
        %v901 = vld [vmem:[#allocation4 + $0x428] sm:$0xff]
        %v902 = vld [vmem:[#allocation4 + $0x430] sm:$0xff]
        %v903 = vld [vmem:[#allocation4 + $0x438] sm:$0xff]
        %v904 = vld [vmem:[#allocation4 + $0x440] sm:$0xff]
        %v905 = vld [vmem:[#allocation4 + $0x448] sm:$0xff]
        %v906 = vld [vmem:[#allocation4 + $0x450] sm:$0xff]
        %v907 = vld [vmem:[#allocation4 + $0x458] sm:$0xff]
        %v908 = vld [vmem:[#allocation4 + $0x460] sm:$0xff]
        %v909 = vld [vmem:[#allocation4 + $0x468] sm:$0xff]
        %v910 = vld [vmem:[#allocation4 + $0x470] sm:$0xff]
        %v911 = vld [vmem:[#allocation4 + $0x478] sm:$0xff]
        %v912 = vld [vmem:[#allocation4 + $0x480] sm:$0xff]
        %v913 = vld [vmem:[#allocation4 + $0x488] sm:$0xff]
        %v914 = vld [vmem:[#allocation4 + $0x490] sm:$0xff]
        %v915 = vld [vmem:[#allocation4 + $0x498] sm:$0xff]
        %v916 = vld [vmem:[#allocation4 + $0x4a0] sm:$0xff]
        %v917 = vld [vmem:[#allocation4 + $0x4a8] sm:$0xff]
        %v918 = vld [vmem:[#allocation4 + $0x4b0] sm:$0xff]
        %v919 = vld [vmem:[#allocation4 + $0x4b8] sm:$0xff]
        %v920 = vld [vmem:[#allocation4 + $0x4c0] sm:$0xff]
        %v921 = vld [vmem:[#allocation4 + $0x4c8] sm:$0xff]
        %v922 = vld [vmem:[#allocation4 + $0x4d0] sm:$0xff]
        %v923 = vld [vmem:[#allocation4 + $0x4d8] sm:$0xff]
        %v924 = vld [vmem:[#allocation4 + $0x4e0] sm:$0xff]
        %v925 = vld [vmem:[#allocation4 + $0x4e8] sm:$0xff]
        %v926 = vld [vmem:[#allocation4 + $0x4f0] sm:$0xff]
        %v927 = vld [vmem:[#allocation4 + $0x4f8] sm:$0xff]
        %v928 = vld [vmem:[#allocation4 + $0x500] sm:$0xff]
        %v929 = vld [vmem:[#allocation4 + $0x508] sm:$0xff]
        %v930 = vld [vmem:[#allocation4 + $0x510] sm:$0xff]
        %v931 = vld [vmem:[#allocation4 + $0x518] sm:$0xff]
        %v932 = vld [vmem:[#allocation4 + $0x520] sm:$0xff]
        %v933 = vld [vmem:[#allocation4 + $0x528] sm:$0xff]
        %v934 = vld [vmem:[#allocation4 + $0x530] sm:$0xff]
        %v935 = vld [vmem:[#allocation4 + $0x538] sm:$0xff]
        %v936 = vld [vmem:[#allocation4 + $0x540] sm:$0xff]
        %v937 = vld [vmem:[#allocation4 + $0x548] sm:$0xff]
        %v938 = vld [vmem:[#allocation4 + $0x550] sm:$0xff]
        %v939 = vld [vmem:[#allocation4 + $0x558] sm:$0xff]
        %v940 = vld [vmem:[#allocation4 + $0x560] sm:$0xff]
        %v941 = vld [vmem:[#allocation4 + $0x568] sm:$0xff]
        %v942 = vld [vmem:[#allocation4 + $0x570] sm:$0xff]
        %v943 = vld [vmem:[#allocation4 + $0x578] sm:$0xff]
        %v944 = vld [vmem:[#allocation4 + $0x580] sm:$0xff]
        %v945 = vld [vmem:[#allocation4 + $0x588] sm:$0xff]
        %v946 = vld [vmem:[#allocation4 + $0x590] sm:$0xff]
        %v947 = vld [vmem:[#allocation4 + $0x598] sm:$0xff]
        %v948 = vld [vmem:[#allocation4 + $0x5a0] sm:$0xff]
        %v949 = vld [vmem:[#allocation4 + $0x5a8] sm:$0xff]
        %v950 = vld [vmem:[#allocation4 + $0x5b0] sm:$0xff]
        %v951 = vld [vmem:[#allocation4 + $0x5b8] sm:$0xff]
        %v952 = vld [vmem:[#allocation4 + $0x5c0] sm:$0xff]
        %v953 = vld [vmem:[#allocation4 + $0x5c8] sm:$0xff]
        %v954 = vld [vmem:[#allocation4 + $0x5d0] sm:$0xff]
        %v955 = vld [vmem:[#allocation4 + $0x5d8] sm:$0xff]
        %v956 = vld [vmem:[#allocation4 + $0x5e0] sm:$0xff]
        %v957 = vld [vmem:[#allocation4 + $0x5e8] sm:$0xff]
        %v958 = vld [vmem:[#allocation4 + $0x5f0] sm:$0xff]
        %v959 = vld [vmem:[#allocation4 + $0x5f8] sm:$0xff]
        %v960 = vld [vmem:[#allocation4 + $0x600] sm:$0xff]
        %v961 = vld [vmem:[#allocation4 + $0x608] sm:$0xff]
        %v962 = vld [vmem:[#allocation4 + $0x610] sm:$0xff]
        %v963 = vld [vmem:[#allocation4 + $0x618] sm:$0xff]
        %v964 = vld [vmem:[#allocation4 + $0x620] sm:$0xff]
        %v965 = vld [vmem:[#allocation4 + $0x628] sm:$0xff]
        %v966 = vld [vmem:[#allocation4 + $0x630] sm:$0xff]
        %v967 = vld [vmem:[#allocation4 + $0x638] sm:$0xff]
        %v968 = vld [vmem:[#allocation4 + $0x640] sm:$0xff]
        %v969 = vld [vmem:[#allocation4 + $0x648] sm:$0xff]
        %v970 = vld [vmem:[#allocation4 + $0x650] sm:$0xff]
        %v971 = vld [vmem:[#allocation4 + $0x658] sm:$0xff]
        %v972 = vld [vmem:[#allocation4 + $0x660] sm:$0xff]
        %v973 = vld [vmem:[#allocation4 + $0x668] sm:$0xff]
        %v974 = vld [vmem:[#allocation4 + $0x670] sm:$0xff]
        %v975 = vld [vmem:[#allocation4 + $0x678] sm:$0xff]
        %v976 = vld [vmem:[#allocation4 + $0x680] sm:$0xff]
        %v977 = vld [vmem:[#allocation4 + $0x688] sm:$0xff]
        %v978 = vld [vmem:[#allocation4 + $0x690] sm:$0xff]
        %v979 = vld [vmem:[#allocation4 + $0x698] sm:$0xff]
        %v980 = vld [vmem:[#allocation4 + $0x6a0] sm:$0xff]
        %v981 = vld [vmem:[#allocation4 + $0x6a8] sm:$0xff]
        %v982 = vld [vmem:[#allocation4 + $0x6b0] sm:$0xff]
        %v983 = vld [vmem:[#allocation4 + $0x6b8] sm:$0xff]
        %v984 = vld [vmem:[#allocation4 + $0x6c0] sm:$0xff]
        %v985 = vld [vmem:[#allocation4 + $0x6c8] sm:$0xff]
        %v986 = vld [vmem:[#allocation4 + $0x6d0] sm:$0xff]
        %v987 = vld [vmem:[#allocation4 + $0x6d8] sm:$0xff]
        %v988 = vld [vmem:[#allocation4 + $0x6e0] sm:$0xff]
        %v989 = vld [vmem:[#allocation4 + $0x6e8] sm:$0xff]
        %v990 = vld [vmem:[#allocation4 + $0x6f0] sm:$0xff]
        %v991 = vld [vmem:[#allocation4 + $0x6f8] sm:$0xff]
        %v992 = vld [vmem:[#allocation4 + $0x700] sm:$0xff]
        %v993 = vld [vmem:[#allocation4 + $0x708] sm:$0xff]
        %v994 = vld [vmem:[#allocation4 + $0x710] sm:$0xff]
        %v995 = vld [vmem:[#allocation4 + $0x718] sm:$0xff]
        %v996 = vld [vmem:[#allocation4 + $0x720] sm:$0xff]
        %v997 = vld [vmem:[#allocation4 + $0x728] sm:$0xff]
        %v998 = vld [vmem:[#allocation4 + $0x730] sm:$0xff]
        %v999 = vld [vmem:[#allocation4 + $0x738] sm:$0xff]
        %v1000 = vld [vmem:[#allocation4 + $0x740] sm:$0xff]
        %v1001 = vld [vmem:[#allocation4 + $0x748] sm:$0xff]
        %v1002 = vld [vmem:[#allocation4 + $0x750] sm:$0xff]
        %v1003 = vld [vmem:[#allocation4 + $0x758] sm:$0xff]
        %v1004 = vld [vmem:[#allocation4 + $0x760] sm:$0xff]
        %v1005 = vld [vmem:[#allocation4 + $0x768] sm:$0xff]
        %v1006 = vld [vmem:[#allocation4 + $0x770] sm:$0xff]
        %v1007 = vld [vmem:[#allocation4 + $0x778] sm:$0xff]
        %v1008 = vld [vmem:[#allocation4 + $0x780] sm:$0xff]
        %v1009 = vld [vmem:[#allocation4 + $0x788] sm:$0xff]
        %v1010 = vld [vmem:[#allocation4 + $0x790] sm:$0xff]
        %v1011 = vld [vmem:[#allocation4 + $0x798] sm:$0xff]
        %v1012 = vld [vmem:[#allocation4 + $0x7a0] sm:$0xff]
        %v1013 = vld [vmem:[#allocation4 + $0x7a8] sm:$0xff]
        %v1014 = vld [vmem:[#allocation4 + $0x7b0] sm:$0xff]
        %v1015 = vld [vmem:[#allocation4 + $0x7b8] sm:$0xff]
        %v1016 = vld [vmem:[#allocation4 + $0x7c0] sm:$0xff]
        %v1017 = vld [vmem:[#allocation4 + $0x7c8] sm:$0xff]
        %v1018 = vld [vmem:[#allocation4 + $0x7d0] sm:$0xff]
        %v1019 = vld [vmem:[#allocation4 + $0x7d8] sm:$0xff]
        %v1020 = vld [vmem:[#allocation4 + $0x7e0] sm:$0xff]
        %v1021 = vld [vmem:[#allocation4 + $0x7e8] sm:$0xff]
        %v1022 = vld [vmem:[#allocation4 + $0x7f0] sm:$0xff]
        %v1023 = vld [vmem:[#allocation4 + $0x7f8] sm:$0xff]
        %v1024 = vld [vmem:[#allocation4 + $0x800] sm:$0xff]
        %v1025 = vld [vmem:[#allocation4 + $0x808] sm:$0xff]
        %v1026 = vld [vmem:[#allocation4 + $0x810] sm:$0xff]
        %v1027 = vld [vmem:[#allocation4 + $0x818] sm:$0xff]
        %v1028 = vld [vmem:[#allocation4 + $0x820] sm:$0xff]
        %v1029 = vld [vmem:[#allocation4 + $0x828] sm:$0x3]
        %vm1030 = vcmask 343040
        %v1032 = vsel %vm1030, %v733, 0
        %v1035 = vsel %vm1030, %v750, 0
        %v1038 = vsel %vm1030, %v767, 0
        %v1041 = vsel %vm300, %v1029, 0
        %v1043 = vand.u32 %v783, 4294901760
        %1044 = vmatpush.msra.mxu0 %v1043
        %v1045 = vand.u32 %v782, 4294901760
        %1046 = vmatpush.msra.mxu0 %v1045
        %v1047 = vand.u32 %v781, 4294901760
        %1048 = vmatpush.msra.mxu0 %v1047
        %v1049 = vand.u32 %v780, 4294901760
        %1050 = vmatpush.msra.mxu0 %v1049
        %v1051 = vand.u32 %v779, 4294901760
        %1052 = vmatpush.msra.mxu0 %v1051
        %v1053 = vand.u32 %v778, 4294901760
        %1054 = vmatpush.msra.mxu0 %v1053
        %v1055 = vand.u32 %v777, 4294901760
        %1056 = vmatpush.msra.mxu0 %v1055
        %v1057 = vand.u32 %v776, 4294901760
        %1058 = vmatpush.msra.mxu0 %v1057
        %v1059 = vand.u32 %v775, 4294901760
        %1060 = vmatpush.msra.mxu0 %v1059
        %v1061 = vand.u32 %v774, 4294901760
        %1062 = vmatpush.msra.mxu0 %v1061
        %v1063 = vand.u32 %v773, 4294901760
        %1064 = vmatpush.msra.mxu0 %v1063
        %v1065 = vand.u32 %v772, 4294901760
        %1066 = vmatpush.msra.mxu0 %v1065
        %v1067 = vand.u32 %v771, 4294901760
        %1068 = vmatpush.msra.mxu0 %v1067
        %v1069 = vand.u32 %v770, 4294901760
        %1070 = vmatpush.msra.mxu0 %v1069
        %v1071 = vand.u32 %v769, 4294901760
        %1072 = vmatpush.msra.mxu0 %v1071
        %v1073 = vand.u32 %v768, 4294901760
        %1074 = vmatpush.msra.mxu0 %v1073
        %v1075 = vand.u32 %v717, 4294901760
        %v1076 = vsub.f32 %v717, %v1075
        %v1077 = vand.u32 %v1076, 4294901760
        %v1078 = vsub.f32 %v1076, %v1077
        %v1079 = vand.u32 %v1078, 4294901760
        %1080 = vmatmul.f32.gmra.mxu0 %v1079
        %v1081 = vpop.f32.mrf.mxu0
        %v1082 = vadd.f32 0.0, %v1081
        %v1083 = vand.u32 %v734, 4294901760
        %v1084 = vsub.f32 %v734, %v1083
        %v1085 = vand.u32 %v1084, 4294901760
        %v1086 = vsub.f32 %v1084, %v1085
        %v1087 = vand.u32 %v1086, 4294901760
        %1088 = vmatmul.f32.gmra.mxu0 %v1087
        %v1089 = vpop.f32.mrf.mxu0
        %v1090 = vadd.f32 0.0, %v1089
        %v1091 = vand.u32 %v751, 4294901760
        %v1092 = vsub.f32 %v751, %v1091
        %v1093 = vand.u32 %v1092, 4294901760
        %v1094 = vsub.f32 %v1092, %v1093
        %v1095 = vand.u32 %v1094, 4294901760
        %1096 = vmatmul.f32.gmra.mxu0 %v1095
        %v1097 = vpop.f32.mrf.mxu0
        %v1098 = vadd.f32 0.0, %v1097
        %1099 = vdwg.mxu0
        %v1100 = vand.u32 %v783, 4294901760
        %v1101 = vsub.f32 %v783, %v1100
        %v1102 = vand.u32 %v1101, 4294901760
        %v1103 = vsub.f32 %v1101, %v1102
        %v1104 = vand.u32 %v1103, 4294901760
        %1105 = vmatpush.msra.mxu0 %v1104
        %v1106 = vand.u32 %v782, 4294901760
        %v1107 = vsub.f32 %v782, %v1106
        %v1108 = vand.u32 %v1107, 4294901760
        %v1109 = vsub.f32 %v1107, %v1108
        %v1110 = vand.u32 %v1109, 4294901760
        %1111 = vmatpush.msra.mxu0 %v1110
        %v1112 = vand.u32 %v781, 4294901760
        %v1113 = vsub.f32 %v781, %v1112
        %v1114 = vand.u32 %v1113, 4294901760
        %v1115 = vsub.f32 %v1113, %v1114
        %v1116 = vand.u32 %v1115, 4294901760
        %1117 = vmatpush.msra.mxu0 %v1116
        %v1118 = vand.u32 %v780, 4294901760
        %v1119 = vsub.f32 %v780, %v1118
        %v1120 = vand.u32 %v1119, 4294901760
        %v1121 = vsub.f32 %v1119, %v1120
        %v1122 = vand.u32 %v1121, 4294901760
        %1123 = vmatpush.msra.mxu0 %v1122
        %v1124 = vand.u32 %v779, 4294901760
        %v1125 = vsub.f32 %v779, %v1124
        %v1126 = vand.u32 %v1125, 4294901760
        %v1127 = vsub.f32 %v1125, %v1126
        %v1128 = vand.u32 %v1127, 4294901760
        %1129 = vmatpush.msra.mxu0 %v1128
        %v1130 = vand.u32 %v778, 4294901760
        %v1131 = vsub.f32 %v778, %v1130
        %v1132 = vand.u32 %v1131, 4294901760
        %v1133 = vsub.f32 %v1131, %v1132
        %v1134 = vand.u32 %v1133, 4294901760
        %1135 = vmatpush.msra.mxu0 %v1134
        %v1136 = vand.u32 %v777, 4294901760
        %v1137 = vsub.f32 %v777, %v1136
        %v1138 = vand.u32 %v1137, 4294901760
        %v1139 = vsub.f32 %v1137, %v1138
        %v1140 = vand.u32 %v1139, 4294901760
        %1141 = vmatpush.msra.mxu0 %v1140
        %v1142 = vand.u32 %v776, 4294901760
        %v1143 = vsub.f32 %v776, %v1142
        %v1144 = vand.u32 %v1143, 4294901760
        %v1145 = vsub.f32 %v1143, %v1144
        %v1146 = vand.u32 %v1145, 4294901760
        %1147 = vmatpush.msra.mxu0 %v1146
        %v1148 = vand.u32 %v775, 4294901760
        %v1149 = vsub.f32 %v775, %v1148
        %v1150 = vand.u32 %v1149, 4294901760
        %v1151 = vsub.f32 %v1149, %v1150
        %v1152 = vand.u32 %v1151, 4294901760
        %1153 = vmatpush.msra.mxu0 %v1152
        %v1154 = vand.u32 %v774, 4294901760
        %v1155 = vsub.f32 %v774, %v1154
        %v1156 = vand.u32 %v1155, 4294901760
        %v1157 = vsub.f32 %v1155, %v1156
        %v1158 = vand.u32 %v1157, 4294901760
        %1159 = vmatpush.msra.mxu0 %v1158
        %v1160 = vand.u32 %v773, 4294901760
        %v1161 = vsub.f32 %v773, %v1160
        %v1162 = vand.u32 %v1161, 4294901760
        %v1163 = vsub.f32 %v1161, %v1162
        %v1164 = vand.u32 %v1163, 4294901760
        %1165 = vmatpush.msra.mxu0 %v1164
        %v1166 = vand.u32 %v772, 4294901760
        %v1167 = vsub.f32 %v772, %v1166
        %v1168 = vand.u32 %v1167, 4294901760
        %v1169 = vsub.f32 %v1167, %v1168
        %v1170 = vand.u32 %v1169, 4294901760
        %1171 = vmatpush.msra.mxu0 %v1170
        %v1172 = vand.u32 %v771, 4294901760
        %v1173 = vsub.f32 %v771, %v1172
        %v1174 = vand.u32 %v1173, 4294901760
        %v1175 = vsub.f32 %v1173, %v1174
        %v1176 = vand.u32 %v1175, 4294901760
        %1177 = vmatpush.msra.mxu0 %v1176
        %v1178 = vand.u32 %v770, 4294901760
        %v1179 = vsub.f32 %v770, %v1178
        %v1180 = vand.u32 %v1179, 4294901760
        %v1181 = vsub.f32 %v1179, %v1180
        %v1182 = vand.u32 %v1181, 4294901760
        %1183 = vmatpush.msra.mxu0 %v1182
        %v1184 = vand.u32 %v769, 4294901760
        %v1185 = vsub.f32 %v769, %v1184
        %v1186 = vand.u32 %v1185, 4294901760
        %v1187 = vsub.f32 %v1185, %v1186
        %v1188 = vand.u32 %v1187, 4294901760
        %1189 = vmatpush.msra.mxu0 %v1188
        %v1190 = vand.u32 %v768, 4294901760
        %v1191 = vsub.f32 %v768, %v1190
        %v1192 = vand.u32 %v1191, 4294901760
        %v1193 = vsub.f32 %v1191, %v1192
        %v1194 = vand.u32 %v1193, 4294901760
        %1195 = vmatpush.msra.mxu0 %v1194
        %v1196 = vand.u32 %v717, 4294901760
        %1197 = vmatmul.f32.gmra.mxu0 %v1196
        %v1198 = vpop.f32.mrf.mxu0
        %v1199 = vadd.f32 %v1082, %v1198
        %v1200 = vand.u32 %v734, 4294901760
        %1201 = vmatmul.f32.gmra.mxu0 %v1200
        %v1202 = vpop.f32.mrf.mxu0
        %v1203 = vadd.f32 %v1090, %v1202
        %v1204 = vand.u32 %v751, 4294901760
        %1205 = vmatmul.f32.gmra.mxu0 %v1204
        %v1206 = vpop.f32.mrf.mxu0
        %v1207 = vadd.f32 %v1098, %v1206
        %1208 = vdwg.mxu0
        %v1209 = vand.u32 %v783, 4294901760
        %v1210 = vsub.f32 %v783, %v1209
        %1211 = vmatpush.msra.mxu0 %v1210
        %v1212 = vand.u32 %v782, 4294901760
        %v1213 = vsub.f32 %v782, %v1212
        %1214 = vmatpush.msra.mxu0 %v1213
        %v1215 = vand.u32 %v781, 4294901760
        %v1216 = vsub.f32 %v781, %v1215
        %1217 = vmatpush.msra.mxu0 %v1216
        %v1218 = vand.u32 %v780, 4294901760
        %v1219 = vsub.f32 %v780, %v1218
        %1220 = vmatpush.msra.mxu0 %v1219
        %v1221 = vand.u32 %v779, 4294901760
        %v1222 = vsub.f32 %v779, %v1221
        %1223 = vmatpush.msra.mxu0 %v1222
        %v1224 = vand.u32 %v778, 4294901760
        %v1225 = vsub.f32 %v778, %v1224
        %1226 = vmatpush.msra.mxu0 %v1225
        %v1227 = vand.u32 %v777, 4294901760
        %v1228 = vsub.f32 %v777, %v1227
        %1229 = vmatpush.msra.mxu0 %v1228
        %v1230 = vand.u32 %v776, 4294901760
        %v1231 = vsub.f32 %v776, %v1230
        %1232 = vmatpush.msra.mxu0 %v1231
        %v1233 = vand.u32 %v775, 4294901760
        %v1234 = vsub.f32 %v775, %v1233
        %1235 = vmatpush.msra.mxu0 %v1234
        %v1236 = vand.u32 %v774, 4294901760
        %v1237 = vsub.f32 %v774, %v1236
        %1238 = vmatpush.msra.mxu0 %v1237
        %v1239 = vand.u32 %v773, 4294901760
        %v1240 = vsub.f32 %v773, %v1239
        %1241 = vmatpush.msra.mxu0 %v1240
        %v1242 = vand.u32 %v772, 4294901760
        %v1243 = vsub.f32 %v772, %v1242
        %1244 = vmatpush.msra.mxu0 %v1243
        %v1245 = vand.u32 %v771, 4294901760
        %v1246 = vsub.f32 %v771, %v1245
        %1247 = vmatpush.msra.mxu0 %v1246
        %v1248 = vand.u32 %v770, 4294901760
        %v1249 = vsub.f32 %v770, %v1248
        %1250 = vmatpush.msra.mxu0 %v1249
        %v1251 = vand.u32 %v769, 4294901760
        %v1252 = vsub.f32 %v769, %v1251
        %1253 = vmatpush.msra.mxu0 %v1252
        %v1254 = vand.u32 %v768, 4294901760
        %v1255 = vsub.f32 %v768, %v1254
        %1256 = vmatpush.msra.mxu0 %v1255
        %v1257 = vand.u32 %v717, 4294901760
        %v1258 = vsub.f32 %v717, %v1257
        %1259 = vmatmul.f32.gmra.mxu0 %v1258
        %v1260 = vpop.f32.mrf.mxu0
        %v1261 = vadd.f32 %v1199, %v1260
        %v1262 = vand.u32 %v734, 4294901760
        %v1263 = vsub.f32 %v734, %v1262
        %1264 = vmatmul.f32.gmra.mxu0 %v1263
        %v1265 = vpop.f32.mrf.mxu0
        %v1266 = vadd.f32 %v1203, %v1265
        %v1267 = vand.u32 %v751, 4294901760
        %v1268 = vsub.f32 %v751, %v1267
        %1269 = vmatmul.f32.gmra.mxu0 %v1268
        %v1270 = vpop.f32.mrf.mxu0
        %v1271 = vadd.f32 %v1207, %v1270
        %1272 = vdwg.mxu0
        %v1273 = vand.u32 %v783, 4294901760
        %1274 = vmatpush.msra.mxu0 %v1273
        %v1275 = vand.u32 %v782, 4294901760
        %1276 = vmatpush.msra.mxu0 %v1275
        %v1277 = vand.u32 %v781, 4294901760
        %1278 = vmatpush.msra.mxu0 %v1277
        %v1279 = vand.u32 %v780, 4294901760
        %1280 = vmatpush.msra.mxu0 %v1279
        %v1281 = vand.u32 %v779, 4294901760
        %1282 = vmatpush.msra.mxu0 %v1281
        %v1283 = vand.u32 %v778, 4294901760
        %1284 = vmatpush.msra.mxu0 %v1283
        %v1285 = vand.u32 %v777, 4294901760
        %1286 = vmatpush.msra.mxu0 %v1285
        %v1287 = vand.u32 %v776, 4294901760
        %1288 = vmatpush.msra.mxu0 %v1287
        %v1289 = vand.u32 %v775, 4294901760
        %1290 = vmatpush.msra.mxu0 %v1289
        %v1291 = vand.u32 %v774, 4294901760
        %1292 = vmatpush.msra.mxu0 %v1291
        %v1293 = vand.u32 %v773, 4294901760
        %1294 = vmatpush.msra.mxu0 %v1293
        %v1295 = vand.u32 %v772, 4294901760
        %1296 = vmatpush.msra.mxu0 %v1295
        %v1297 = vand.u32 %v771, 4294901760
        %1298 = vmatpush.msra.mxu0 %v1297
        %v1299 = vand.u32 %v770, 4294901760
        %1300 = vmatpush.msra.mxu0 %v1299
        %v1301 = vand.u32 %v769, 4294901760
        %1302 = vmatpush.msra.mxu0 %v1301
        %v1303 = vand.u32 %v768, 4294901760
        %1304 = vmatpush.msra.mxu0 %v1303
        %v1305 = vand.u32 %v717, 4294901760
        %v1306 = vsub.f32 %v717, %v1305
        %v1307 = vand.u32 %v1306, 4294901760
        %1308 = vmatmul.f32.gmra.mxu0 %v1307
        %v1309 = vpop.f32.mrf.mxu0
        %v1310 = vadd.f32 %v1261, %v1309
        %v1311 = vand.u32 %v734, 4294901760
        %v1312 = vsub.f32 %v734, %v1311
        %v1313 = vand.u32 %v1312, 4294901760
        %1314 = vmatmul.f32.gmra.mxu0 %v1313
        %v1315 = vpop.f32.mrf.mxu0
        %v1316 = vadd.f32 %v1266, %v1315
        %v1317 = vand.u32 %v751, 4294901760
        %v1318 = vsub.f32 %v751, %v1317
        %v1319 = vand.u32 %v1318, 4294901760
        %1320 = vmatmul.f32.gmra.mxu0 %v1319
        %v1321 = vpop.f32.mrf.mxu0
        %v1322 = vadd.f32 %v1271, %v1321
        %1323 = vdwg.mxu0
        %v1324 = vand.u32 %v783, 4294901760
        %v1325 = vsub.f32 %v783, %v1324
        %v1326 = vand.u32 %v1325, 4294901760
        %1327 = vmatpush.msra.mxu0 %v1326
        %v1328 = vand.u32 %v782, 4294901760
        %v1329 = vsub.f32 %v782, %v1328
        %v1330 = vand.u32 %v1329, 4294901760
        %1331 = vmatpush.msra.mxu0 %v1330
        %v1332 = vand.u32 %v781, 4294901760
        %v1333 = vsub.f32 %v781, %v1332
        %v1334 = vand.u32 %v1333, 4294901760
        %1335 = vmatpush.msra.mxu0 %v1334
        %v1336 = vand.u32 %v780, 4294901760
        %v1337 = vsub.f32 %v780, %v1336
        %v1338 = vand.u32 %v1337, 4294901760
        %1339 = vmatpush.msra.mxu0 %v1338
        %v1340 = vand.u32 %v779, 4294901760
        %v1341 = vsub.f32 %v779, %v1340
        %v1342 = vand.u32 %v1341, 4294901760
        %1343 = vmatpush.msra.mxu0 %v1342
        %v1344 = vand.u32 %v778, 4294901760
        %v1345 = vsub.f32 %v778, %v1344
        %v1346 = vand.u32 %v1345, 4294901760
        %1347 = vmatpush.msra.mxu0 %v1346
        %v1348 = vand.u32 %v777, 4294901760
        %v1349 = vsub.f32 %v777, %v1348
        %v1350 = vand.u32 %v1349, 4294901760
        %1351 = vmatpush.msra.mxu0 %v1350
        %v1352 = vand.u32 %v776, 4294901760
        %v1353 = vsub.f32 %v776, %v1352
        %v1354 = vand.u32 %v1353, 4294901760
        %1355 = vmatpush.msra.mxu0 %v1354
        %v1356 = vand.u32 %v775, 4294901760
        %v1357 = vsub.f32 %v775, %v1356
        %v1358 = vand.u32 %v1357, 4294901760
        %1359 = vmatpush.msra.mxu0 %v1358
        %v1360 = vand.u32 %v774, 4294901760
        %v1361 = vsub.f32 %v774, %v1360
        %v1362 = vand.u32 %v1361, 4294901760
        %1363 = vmatpush.msra.mxu0 %v1362
        %v1364 = vand.u32 %v773, 4294901760
        %v1365 = vsub.f32 %v773, %v1364
        %v1366 = vand.u32 %v1365, 4294901760
        %1367 = vmatpush.msra.mxu0 %v1366
        %v1368 = vand.u32 %v772, 4294901760
        %v1369 = vsub.f32 %v772, %v1368
        %v1370 = vand.u32 %v1369, 4294901760
        %1371 = vmatpush.msra.mxu0 %v1370
        %v1372 = vand.u32 %v771, 4294901760
        %v1373 = vsub.f32 %v771, %v1372
        %v1374 = vand.u32 %v1373, 4294901760
        %1375 = vmatpush.msra.mxu0 %v1374
        %v1376 = vand.u32 %v770, 4294901760
        %v1377 = vsub.f32 %v770, %v1376
        %v1378 = vand.u32 %v1377, 4294901760
        %1379 = vmatpush.msra.mxu0 %v1378
        %v1380 = vand.u32 %v769, 4294901760
        %v1381 = vsub.f32 %v769, %v1380
        %v1382 = vand.u32 %v1381, 4294901760
        %1383 = vmatpush.msra.mxu0 %v1382
        %v1384 = vand.u32 %v768, 4294901760
        %v1385 = vsub.f32 %v768, %v1384
        %v1386 = vand.u32 %v1385, 4294901760
        %1387 = vmatpush.msra.mxu0 %v1386
        %v1388 = vand.u32 %v717, 4294901760
        %1389 = vmatmul.f32.gmra.mxu0 %v1388
        %v1390 = vpop.f32.mrf.mxu0
        %v1391 = vadd.f32 %v1310, %v1390
        %v1392 = vand.u32 %v734, 4294901760
        %1393 = vmatmul.f32.gmra.mxu0 %v1392
        %v1394 = vpop.f32.mrf.mxu0
        %v1395 = vadd.f32 %v1316, %v1394
        %v1396 = vand.u32 %v751, 4294901760
        %1397 = vmatmul.f32.gmra.mxu0 %v1396
        %v1398 = vpop.f32.mrf.mxu0
        %v1399 = vadd.f32 %v1322, %v1398
        %1400 = vdwg.mxu0
        %v1401 = vand.u32 %v783, 4294901760
        %1402 = vmatpush.msra.mxu0 %v1401
        %v1403 = vand.u32 %v782, 4294901760
        %1404 = vmatpush.msra.mxu0 %v1403
        %v1405 = vand.u32 %v781, 4294901760
        %1406 = vmatpush.msra.mxu0 %v1405
        %v1407 = vand.u32 %v780, 4294901760
        %1408 = vmatpush.msra.mxu0 %v1407
        %v1409 = vand.u32 %v779, 4294901760
        %1410 = vmatpush.msra.mxu0 %v1409
        %v1411 = vand.u32 %v778, 4294901760
        %1412 = vmatpush.msra.mxu0 %v1411
        %v1413 = vand.u32 %v777, 4294901760
        %1414 = vmatpush.msra.mxu0 %v1413
        %v1415 = vand.u32 %v776, 4294901760
        %1416 = vmatpush.msra.mxu0 %v1415
        %v1417 = vand.u32 %v775, 4294901760
        %1418 = vmatpush.msra.mxu0 %v1417
        %v1419 = vand.u32 %v774, 4294901760
        %1420 = vmatpush.msra.mxu0 %v1419
        %v1421 = vand.u32 %v773, 4294901760
        %1422 = vmatpush.msra.mxu0 %v1421
        %v1423 = vand.u32 %v772, 4294901760
        %1424 = vmatpush.msra.mxu0 %v1423
        %v1425 = vand.u32 %v771, 4294901760
        %1426 = vmatpush.msra.mxu0 %v1425
        %v1427 = vand.u32 %v770, 4294901760
        %1428 = vmatpush.msra.mxu0 %v1427
        %v1429 = vand.u32 %v769, 4294901760
        %1430 = vmatpush.msra.mxu0 %v1429
        %v1431 = vand.u32 %v768, 4294901760
        %1432 = vmatpush.msra.mxu0 %v1431
        %v1433 = vand.u32 %v717, 4294901760
        %1434 = vmatmul.f32.gmra.mxu0 %v1433
        %v1435 = vpop.f32.mrf.mxu0
        %v1436 = vadd.f32 %v1391, %v1435
        %v1437 = vand.u32 %v734, 4294901760
        %1438 = vmatmul.f32.gmra.mxu0 %v1437
        %v1439 = vpop.f32.mrf.mxu0
        %v1440 = vadd.f32 %v1395, %v1439
        %v1441 = vand.u32 %v751, 4294901760
        %1442 = vmatmul.f32.gmra.mxu0 %v1441
        %v1443 = vpop.f32.mrf.mxu0
        %v1444 = vadd.f32 %v1399, %v1443
        %1445 = vdwg.mxu0
        %v1446 = vand.u32 %v799, 4294901760
        %1447 = vmatpush.msra.mxu0 %v1446
        %v1448 = vand.u32 %v798, 4294901760
        %1449 = vmatpush.msra.mxu0 %v1448
        %v1450 = vand.u32 %v797, 4294901760
        %1451 = vmatpush.msra.mxu0 %v1450
        %v1452 = vand.u32 %v796, 4294901760
        %1453 = vmatpush.msra.mxu0 %v1452
        %v1454 = vand.u32 %v795, 4294901760
        %1455 = vmatpush.msra.mxu0 %v1454
        %v1456 = vand.u32 %v794, 4294901760
        %1457 = vmatpush.msra.mxu0 %v1456
        %v1458 = vand.u32 %v793, 4294901760
        %1459 = vmatpush.msra.mxu0 %v1458
        %v1460 = vand.u32 %v792, 4294901760
        %1461 = vmatpush.msra.mxu0 %v1460
        %v1462 = vand.u32 %v791, 4294901760
        %1463 = vmatpush.msra.mxu0 %v1462
        %v1464 = vand.u32 %v790, 4294901760
        %1465 = vmatpush.msra.mxu0 %v1464
        %v1466 = vand.u32 %v789, 4294901760
        %1467 = vmatpush.msra.mxu0 %v1466
        %v1468 = vand.u32 %v788, 4294901760
        %1469 = vmatpush.msra.mxu0 %v1468
        %v1470 = vand.u32 %v787, 4294901760
        %1471 = vmatpush.msra.mxu0 %v1470
        %v1472 = vand.u32 %v786, 4294901760
        %1473 = vmatpush.msra.mxu0 %v1472
        %v1474 = vand.u32 %v785, 4294901760
        %1475 = vmatpush.msra.mxu0 %v1474
        %v1476 = vand.u32 %v784, 4294901760
        %1477 = vmatpush.msra.mxu0 %v1476
        %v1478 = vand.u32 %v718, 4294901760
        %v1479 = vsub.f32 %v718, %v1478
        %v1480 = vand.u32 %v1479, 4294901760
        %v1481 = vsub.f32 %v1479, %v1480
        %v1482 = vand.u32 %v1481, 4294901760
        %1483 = vmatmul.f32.gmra.mxu0 %v1482
        %v1484 = vpop.f32.mrf.mxu0
        %v1485 = vadd.f32 %v1436, %v1484
        %v1486 = vand.u32 %v735, 4294901760
        %v1487 = vsub.f32 %v735, %v1486
        %v1488 = vand.u32 %v1487, 4294901760
        %v1489 = vsub.f32 %v1487, %v1488
        %v1490 = vand.u32 %v1489, 4294901760
        %1491 = vmatmul.f32.gmra.mxu0 %v1490
        %v1492 = vpop.f32.mrf.mxu0
        %v1493 = vadd.f32 %v1440, %v1492
        %v1494 = vand.u32 %v752, 4294901760
        %v1495 = vsub.f32 %v752, %v1494
        %v1496 = vand.u32 %v1495, 4294901760
        %v1497 = vsub.f32 %v1495, %v1496
        %v1498 = vand.u32 %v1497, 4294901760
        %1499 = vmatmul.f32.gmra.mxu0 %v1498
        %v1500 = vpop.f32.mrf.mxu0
        %v1501 = vadd.f32 %v1444, %v1500
        %1502 = vdwg.mxu0
        %v1503 = vand.u32 %v799, 4294901760
        %v1504 = vsub.f32 %v799, %v1503
        %v1505 = vand.u32 %v1504, 4294901760
        %v1506 = vsub.f32 %v1504, %v1505
        %v1507 = vand.u32 %v1506, 4294901760
        %1508 = vmatpush.msra.mxu0 %v1507
        %v1509 = vand.u32 %v798, 4294901760
        %v1510 = vsub.f32 %v798, %v1509
        %v1511 = vand.u32 %v1510, 4294901760
        %v1512 = vsub.f32 %v1510, %v1511
        %v1513 = vand.u32 %v1512, 4294901760
        %1514 = vmatpush.msra.mxu0 %v1513
        %v1515 = vand.u32 %v797, 4294901760
        %v1516 = vsub.f32 %v797, %v1515
        %v1517 = vand.u32 %v1516, 4294901760
        %v1518 = vsub.f32 %v1516, %v1517
        %v1519 = vand.u32 %v1518, 4294901760
        %1520 = vmatpush.msra.mxu0 %v1519
        %v1521 = vand.u32 %v796, 4294901760
        %v1522 = vsub.f32 %v796, %v1521
        %v1523 = vand.u32 %v1522, 4294901760
        %v1524 = vsub.f32 %v1522, %v1523
        %v1525 = vand.u32 %v1524, 4294901760
        %1526 = vmatpush.msra.mxu0 %v1525
        %v1527 = vand.u32 %v795, 4294901760
        %v1528 = vsub.f32 %v795, %v1527
        %v1529 = vand.u32 %v1528, 4294901760
        %v1530 = vsub.f32 %v1528, %v1529
        %v1531 = vand.u32 %v1530, 4294901760
        %1532 = vmatpush.msra.mxu0 %v1531
        %v1533 = vand.u32 %v794, 4294901760
        %v1534 = vsub.f32 %v794, %v1533
        %v1535 = vand.u32 %v1534, 4294901760
        %v1536 = vsub.f32 %v1534, %v1535
        %v1537 = vand.u32 %v1536, 4294901760
        %1538 = vmatpush.msra.mxu0 %v1537
        %v1539 = vand.u32 %v793, 4294901760
        %v1540 = vsub.f32 %v793, %v1539
        %v1541 = vand.u32 %v1540, 4294901760
        %v1542 = vsub.f32 %v1540, %v1541
        %v1543 = vand.u32 %v1542, 4294901760
        %1544 = vmatpush.msra.mxu0 %v1543
        %v1545 = vand.u32 %v792, 4294901760
        %v1546 = vsub.f32 %v792, %v1545
        %v1547 = vand.u32 %v1546, 4294901760
        %v1548 = vsub.f32 %v1546, %v1547
        %v1549 = vand.u32 %v1548, 4294901760
        %1550 = vmatpush.msra.mxu0 %v1549
        %v1551 = vand.u32 %v791, 4294901760
        %v1552 = vsub.f32 %v791, %v1551
        %v1553 = vand.u32 %v1552, 4294901760
        %v1554 = vsub.f32 %v1552, %v1553
        %v1555 = vand.u32 %v1554, 4294901760
        %1556 = vmatpush.msra.mxu0 %v1555
        %v1557 = vand.u32 %v790, 4294901760
        %v1558 = vsub.f32 %v790, %v1557
        %v1559 = vand.u32 %v1558, 4294901760
        %v1560 = vsub.f32 %v1558, %v1559
        %v1561 = vand.u32 %v1560, 4294901760
        %1562 = vmatpush.msra.mxu0 %v1561
        %v1563 = vand.u32 %v789, 4294901760
        %v1564 = vsub.f32 %v789, %v1563
        %v1565 = vand.u32 %v1564, 4294901760
        %v1566 = vsub.f32 %v1564, %v1565
        %v1567 = vand.u32 %v1566, 4294901760
        %1568 = vmatpush.msra.mxu0 %v1567
        %v1569 = vand.u32 %v788, 4294901760
        %v1570 = vsub.f32 %v788, %v1569
        %v1571 = vand.u32 %v1570, 4294901760
        %v1572 = vsub.f32 %v1570, %v1571
        %v1573 = vand.u32 %v1572, 4294901760
        %1574 = vmatpush.msra.mxu0 %v1573
        %v1575 = vand.u32 %v787, 4294901760
        %v1576 = vsub.f32 %v787, %v1575
        %v1577 = vand.u32 %v1576, 4294901760
        %v1578 = vsub.f32 %v1576, %v1577
        %v1579 = vand.u32 %v1578, 4294901760
        %1580 = vmatpush.msra.mxu0 %v1579
        %v1581 = vand.u32 %v786, 4294901760
        %v1582 = vsub.f32 %v786, %v1581
        %v1583 = vand.u32 %v1582, 4294901760
        %v1584 = vsub.f32 %v1582, %v1583
        %v1585 = vand.u32 %v1584, 4294901760
        %1586 = vmatpush.msra.mxu0 %v1585
        %v1587 = vand.u32 %v785, 4294901760
        %v1588 = vsub.f32 %v785, %v1587
        %v1589 = vand.u32 %v1588, 4294901760
        %v1590 = vsub.f32 %v1588, %v1589
        %v1591 = vand.u32 %v1590, 4294901760
        %1592 = vmatpush.msra.mxu0 %v1591
        %v1593 = vand.u32 %v784, 4294901760
        %v1594 = vsub.f32 %v784, %v1593
        %v1595 = vand.u32 %v1594, 4294901760
        %v1596 = vsub.f32 %v1594, %v1595
        %v1597 = vand.u32 %v1596, 4294901760
        %1598 = vmatpush.msra.mxu0 %v1597
        %v1599 = vand.u32 %v718, 4294901760
        %1600 = vmatmul.f32.gmra.mxu0 %v1599
        %v1601 = vpop.f32.mrf.mxu0
        %v1602 = vadd.f32 %v1485, %v1601
        %v1603 = vand.u32 %v735, 4294901760
        %1604 = vmatmul.f32.gmra.mxu0 %v1603
        %v1605 = vpop.f32.mrf.mxu0
        %v1606 = vadd.f32 %v1493, %v1605
        %v1607 = vand.u32 %v752, 4294901760
        %1608 = vmatmul.f32.gmra.mxu0 %v1607
        %v1609 = vpop.f32.mrf.mxu0
        %v1610 = vadd.f32 %v1501, %v1609
        %1611 = vdwg.mxu0
        %v1612 = vand.u32 %v799, 4294901760
        %v1613 = vsub.f32 %v799, %v1612
        %1614 = vmatpush.msra.mxu0 %v1613
        %v1615 = vand.u32 %v798, 4294901760
        %v1616 = vsub.f32 %v798, %v1615
        %1617 = vmatpush.msra.mxu0 %v1616
        %v1618 = vand.u32 %v797, 4294901760
        %v1619 = vsub.f32 %v797, %v1618
        %1620 = vmatpush.msra.mxu0 %v1619
        %v1621 = vand.u32 %v796, 4294901760
        %v1622 = vsub.f32 %v796, %v1621
        %1623 = vmatpush.msra.mxu0 %v1622
        %v1624 = vand.u32 %v795, 4294901760
        %v1625 = vsub.f32 %v795, %v1624
        %1626 = vmatpush.msra.mxu0 %v1625
        %v1627 = vand.u32 %v794, 4294901760
        %v1628 = vsub.f32 %v794, %v1627
        %1629 = vmatpush.msra.mxu0 %v1628
        %v1630 = vand.u32 %v793, 4294901760
        %v1631 = vsub.f32 %v793, %v1630
        %1632 = vmatpush.msra.mxu0 %v1631
        %v1633 = vand.u32 %v792, 4294901760
        %v1634 = vsub.f32 %v792, %v1633
        %1635 = vmatpush.msra.mxu0 %v1634
        %v1636 = vand.u32 %v791, 4294901760
        %v1637 = vsub.f32 %v791, %v1636
        %1638 = vmatpush.msra.mxu0 %v1637
        %v1639 = vand.u32 %v790, 4294901760
        %v1640 = vsub.f32 %v790, %v1639
        %1641 = vmatpush.msra.mxu0 %v1640
        %v1642 = vand.u32 %v789, 4294901760
        %v1643 = vsub.f32 %v789, %v1642
        %1644 = vmatpush.msra.mxu0 %v1643
        %v1645 = vand.u32 %v788, 4294901760
        %v1646 = vsub.f32 %v788, %v1645
        %1647 = vmatpush.msra.mxu0 %v1646
        %v1648 = vand.u32 %v787, 4294901760
        %v1649 = vsub.f32 %v787, %v1648
        %1650 = vmatpush.msra.mxu0 %v1649
        %v1651 = vand.u32 %v786, 4294901760
        %v1652 = vsub.f32 %v786, %v1651
        %1653 = vmatpush.msra.mxu0 %v1652
        %v1654 = vand.u32 %v785, 4294901760
        %v1655 = vsub.f32 %v785, %v1654
        %1656 = vmatpush.msra.mxu0 %v1655
        %v1657 = vand.u32 %v784, 4294901760
        %v1658 = vsub.f32 %v784, %v1657
        %1659 = vmatpush.msra.mxu0 %v1658
        %v1660 = vand.u32 %v718, 4294901760
        %v1661 = vsub.f32 %v718, %v1660
        %1662 = vmatmul.f32.gmra.mxu0 %v1661
        %v1663 = vpop.f32.mrf.mxu0
        %v1664 = vadd.f32 %v1602, %v1663
        %v1665 = vand.u32 %v735, 4294901760
        %v1666 = vsub.f32 %v735, %v1665
        %1667 = vmatmul.f32.gmra.mxu0 %v1666
        %v1668 = vpop.f32.mrf.mxu0
        %v1669 = vadd.f32 %v1606, %v1668
        %v1670 = vand.u32 %v752, 4294901760
        %v1671 = vsub.f32 %v752, %v1670
        %1672 = vmatmul.f32.gmra.mxu0 %v1671
        %v1673 = vpop.f32.mrf.mxu0
        %v1674 = vadd.f32 %v1610, %v1673
        %1675 = vdwg.mxu0
        %v1676 = vand.u32 %v799, 4294901760
        %1677 = vmatpush.msra.mxu0 %v1676
        %v1678 = vand.u32 %v798, 4294901760
        %1679 = vmatpush.msra.mxu0 %v1678
        %v1680 = vand.u32 %v797, 4294901760
        %1681 = vmatpush.msra.mxu0 %v1680
        %v1682 = vand.u32 %v796, 4294901760
        %1683 = vmatpush.msra.mxu0 %v1682
        %v1684 = vand.u32 %v795, 4294901760
        %1685 = vmatpush.msra.mxu0 %v1684
        %v1686 = vand.u32 %v794, 4294901760
        %1687 = vmatpush.msra.mxu0 %v1686
        %v1688 = vand.u32 %v793, 4294901760
        %1689 = vmatpush.msra.mxu0 %v1688
        %v1690 = vand.u32 %v792, 4294901760
        %1691 = vmatpush.msra.mxu0 %v1690
        %v1692 = vand.u32 %v791, 4294901760
        %1693 = vmatpush.msra.mxu0 %v1692
        %v1694 = vand.u32 %v790, 4294901760
        %1695 = vmatpush.msra.mxu0 %v1694
        %v1696 = vand.u32 %v789, 4294901760
        %1697 = vmatpush.msra.mxu0 %v1696
        %v1698 = vand.u32 %v788, 4294901760
        %1699 = vmatpush.msra.mxu0 %v1698
        %v1700 = vand.u32 %v787, 4294901760
        %1701 = vmatpush.msra.mxu0 %v1700
        %v1702 = vand.u32 %v786, 4294901760
        %1703 = vmatpush.msra.mxu0 %v1702
        %v1704 = vand.u32 %v785, 4294901760
        %1705 = vmatpush.msra.mxu0 %v1704
        %v1706 = vand.u32 %v784, 4294901760
        %1707 = vmatpush.msra.mxu0 %v1706
        %v1708 = vand.u32 %v718, 4294901760
        %v1709 = vsub.f32 %v718, %v1708
        %v1710 = vand.u32 %v1709, 4294901760
        %1711 = vmatmul.f32.gmra.mxu0 %v1710
        %v1712 = vpop.f32.mrf.mxu0
        %v1713 = vadd.f32 %v1664, %v1712
        %v1714 = vand.u32 %v735, 4294901760
        %v1715 = vsub.f32 %v735, %v1714
        %v1716 = vand.u32 %v1715, 4294901760
        %1717 = vmatmul.f32.gmra.mxu0 %v1716
        %v1718 = vpop.f32.mrf.mxu0
        %v1719 = vadd.f32 %v1669, %v1718
        %v1720 = vand.u32 %v752, 4294901760
        %v1721 = vsub.f32 %v752, %v1720
        %v1722 = vand.u32 %v1721, 4294901760
        %1723 = vmatmul.f32.gmra.mxu0 %v1722
        %v1724 = vpop.f32.mrf.mxu0
        %v1725 = vadd.f32 %v1674, %v1724
        %1726 = vdwg.mxu0
        %v1727 = vand.u32 %v799, 4294901760
        %v1728 = vsub.f32 %v799, %v1727
        %v1729 = vand.u32 %v1728, 4294901760
        %1730 = vmatpush.msra.mxu0 %v1729
        %v1731 = vand.u32 %v798, 4294901760
        %v1732 = vsub.f32 %v798, %v1731
        %v1733 = vand.u32 %v1732, 4294901760
        %1734 = vmatpush.msra.mxu0 %v1733
        %v1735 = vand.u32 %v797, 4294901760
        %v1736 = vsub.f32 %v797, %v1735
        %v1737 = vand.u32 %v1736, 4294901760
        %1738 = vmatpush.msra.mxu0 %v1737
        %v1739 = vand.u32 %v796, 4294901760
        %v1740 = vsub.f32 %v796, %v1739
        %v1741 = vand.u32 %v1740, 4294901760
        %1742 = vmatpush.msra.mxu0 %v1741
        %v1743 = vand.u32 %v795, 4294901760
        %v1744 = vsub.f32 %v795, %v1743
        %v1745 = vand.u32 %v1744, 4294901760
        %1746 = vmatpush.msra.mxu0 %v1745
        %v1747 = vand.u32 %v794, 4294901760
        %v1748 = vsub.f32 %v794, %v1747
        %v1749 = vand.u32 %v1748, 4294901760
        %1750 = vmatpush.msra.mxu0 %v1749
        %v1751 = vand.u32 %v793, 4294901760
        %v1752 = vsub.f32 %v793, %v1751
        %v1753 = vand.u32 %v1752, 4294901760
        %1754 = vmatpush.msra.mxu0 %v1753
        %v1755 = vand.u32 %v792, 4294901760
        %v1756 = vsub.f32 %v792, %v1755
        %v1757 = vand.u32 %v1756, 4294901760
        %1758 = vmatpush.msra.mxu0 %v1757
        %v1759 = vand.u32 %v791, 4294901760
        %v1760 = vsub.f32 %v791, %v1759
        %v1761 = vand.u32 %v1760, 4294901760
        %1762 = vmatpush.msra.mxu0 %v1761
        %v1763 = vand.u32 %v790, 4294901760
        %v1764 = vsub.f32 %v790, %v1763
        %v1765 = vand.u32 %v1764, 4294901760
        %1766 = vmatpush.msra.mxu0 %v1765
        %v1767 = vand.u32 %v789, 4294901760
        %v1768 = vsub.f32 %v789, %v1767
        %v1769 = vand.u32 %v1768, 4294901760
        %1770 = vmatpush.msra.mxu0 %v1769
        %v1771 = vand.u32 %v788, 4294901760
        %v1772 = vsub.f32 %v788, %v1771
        %v1773 = vand.u32 %v1772, 4294901760
        %1774 = vmatpush.msra.mxu0 %v1773
        %v1775 = vand.u32 %v787, 4294901760
        %v1776 = vsub.f32 %v787, %v1775
        %v1777 = vand.u32 %v1776, 4294901760
        %1778 = vmatpush.msra.mxu0 %v1777
        %v1779 = vand.u32 %v786, 4294901760
        %v1780 = vsub.f32 %v786, %v1779
        %v1781 = vand.u32 %v1780, 4294901760
        %1782 = vmatpush.msra.mxu0 %v1781
        %v1783 = vand.u32 %v785, 4294901760
        %v1784 = vsub.f32 %v785, %v1783
        %v1785 = vand.u32 %v1784, 4294901760
        %1786 = vmatpush.msra.mxu0 %v1785
        %v1787 = vand.u32 %v784, 4294901760
        %v1788 = vsub.f32 %v784, %v1787
        %v1789 = vand.u32 %v1788, 4294901760
        %1790 = vmatpush.msra.mxu0 %v1789
        %v1791 = vand.u32 %v718, 4294901760
        %1792 = vmatmul.f32.gmra.mxu0 %v1791
        %v1793 = vpop.f32.mrf.mxu0
        %v1794 = vadd.f32 %v1713, %v1793
        %v1795 = vand.u32 %v735, 4294901760
        %1796 = vmatmul.f32.gmra.mxu0 %v1795
        %v1797 = vpop.f32.mrf.mxu0
        %v1798 = vadd.f32 %v1719, %v1797
        %v1799 = vand.u32 %v752, 4294901760
        %1800 = vmatmul.f32.gmra.mxu0 %v1799
        %v1801 = vpop.f32.mrf.mxu0
        %v1802 = vadd.f32 %v1725, %v1801
        %1803 = vdwg.mxu0
        %v1804 = vand.u32 %v799, 4294901760
        %1805 = vmatpush.msra.mxu0 %v1804
        %v1806 = vand.u32 %v798, 4294901760
        %1807 = vmatpush.msra.mxu0 %v1806
        %v1808 = vand.u32 %v797, 4294901760
        %1809 = vmatpush.msra.mxu0 %v1808
        %v1810 = vand.u32 %v796, 4294901760
        %1811 = vmatpush.msra.mxu0 %v1810
        %v1812 = vand.u32 %v795, 4294901760
        %1813 = vmatpush.msra.mxu0 %v1812
        %v1814 = vand.u32 %v794, 4294901760
        %1815 = vmatpush.msra.mxu0 %v1814
        %v1816 = vand.u32 %v793, 4294901760
        %1817 = vmatpush.msra.mxu0 %v1816
        %v1818 = vand.u32 %v792, 4294901760
        %1819 = vmatpush.msra.mxu0 %v1818
        %v1820 = vand.u32 %v791, 4294901760
        %1821 = vmatpush.msra.mxu0 %v1820
        %v1822 = vand.u32 %v790, 4294901760
        %1823 = vmatpush.msra.mxu0 %v1822
        %v1824 = vand.u32 %v789, 4294901760
        %1825 = vmatpush.msra.mxu0 %v1824
        %v1826 = vand.u32 %v788, 4294901760
        %1827 = vmatpush.msra.mxu0 %v1826
        %v1828 = vand.u32 %v787, 4294901760
        %1829 = vmatpush.msra.mxu0 %v1828
        %v1830 = vand.u32 %v786, 4294901760
        %1831 = vmatpush.msra.mxu0 %v1830
        %v1832 = vand.u32 %v785, 4294901760
        %1833 = vmatpush.msra.mxu0 %v1832
        %v1834 = vand.u32 %v784, 4294901760
        %1835 = vmatpush.msra.mxu0 %v1834
        %v1836 = vand.u32 %v718, 4294901760
        %1837 = vmatmul.f32.gmra.mxu0 %v1836
        %v1838 = vpop.f32.mrf.mxu0
        %v1839 = vadd.f32 %v1794, %v1838
        %v1840 = vand.u32 %v735, 4294901760
        %1841 = vmatmul.f32.gmra.mxu0 %v1840
        %v1842 = vpop.f32.mrf.mxu0
        %v1843 = vadd.f32 %v1798, %v1842
        %v1844 = vand.u32 %v752, 4294901760
        %1845 = vmatmul.f32.gmra.mxu0 %v1844
        %v1846 = vpop.f32.mrf.mxu0
        %v1847 = vadd.f32 %v1802, %v1846
        %1848 = vdwg.mxu0
        %v1849 = vand.u32 %v815, 4294901760
        %1850 = vmatpush.msra.mxu0 %v1849
        %v1851 = vand.u32 %v814, 4294901760
        %1852 = vmatpush.msra.mxu0 %v1851
        %v1853 = vand.u32 %v813, 4294901760
        %1854 = vmatpush.msra.mxu0 %v1853
        %v1855 = vand.u32 %v812, 4294901760
        %1856 = vmatpush.msra.mxu0 %v1855
        %v1857 = vand.u32 %v811, 4294901760
        %1858 = vmatpush.msra.mxu0 %v1857
        %v1859 = vand.u32 %v810, 4294901760
        %1860 = vmatpush.msra.mxu0 %v1859
        %v1861 = vand.u32 %v809, 4294901760
        %1862 = vmatpush.msra.mxu0 %v1861
        %v1863 = vand.u32 %v808, 4294901760
        %1864 = vmatpush.msra.mxu0 %v1863
        %v1865 = vand.u32 %v807, 4294901760
        %1866 = vmatpush.msra.mxu0 %v1865
        %v1867 = vand.u32 %v806, 4294901760
        %1868 = vmatpush.msra.mxu0 %v1867
        %v1869 = vand.u32 %v805, 4294901760
        %1870 = vmatpush.msra.mxu0 %v1869
        %v1871 = vand.u32 %v804, 4294901760
        %1872 = vmatpush.msra.mxu0 %v1871
        %v1873 = vand.u32 %v803, 4294901760
        %1874 = vmatpush.msra.mxu0 %v1873
        %v1875 = vand.u32 %v802, 4294901760
        %1876 = vmatpush.msra.mxu0 %v1875
        %v1877 = vand.u32 %v801, 4294901760
        %1878 = vmatpush.msra.mxu0 %v1877
        %v1879 = vand.u32 %v800, 4294901760
        %1880 = vmatpush.msra.mxu0 %v1879
        %v1881 = vand.u32 %v719, 4294901760
        %v1882 = vsub.f32 %v719, %v1881
        %v1883 = vand.u32 %v1882, 4294901760
        %v1884 = vsub.f32 %v1882, %v1883
        %v1885 = vand.u32 %v1884, 4294901760
        %1886 = vmatmul.f32.gmra.mxu0 %v1885
        %v1887 = vpop.f32.mrf.mxu0
        %v1888 = vadd.f32 %v1839, %v1887
        %v1889 = vand.u32 %v736, 4294901760
        %v1890 = vsub.f32 %v736, %v1889
        %v1891 = vand.u32 %v1890, 4294901760
        %v1892 = vsub.f32 %v1890, %v1891
        %v1893 = vand.u32 %v1892, 4294901760
        %1894 = vmatmul.f32.gmra.mxu0 %v1893
        %v1895 = vpop.f32.mrf.mxu0
        %v1896 = vadd.f32 %v1843, %v1895
        %v1897 = vand.u32 %v753, 4294901760
        %v1898 = vsub.f32 %v753, %v1897
        %v1899 = vand.u32 %v1898, 4294901760
        %v1900 = vsub.f32 %v1898, %v1899
        %v1901 = vand.u32 %v1900, 4294901760
        %1902 = vmatmul.f32.gmra.mxu0 %v1901
        %v1903 = vpop.f32.mrf.mxu0
        %v1904 = vadd.f32 %v1847, %v1903
        %1905 = vdwg.mxu0
        %v1906 = vand.u32 %v815, 4294901760
        %v1907 = vsub.f32 %v815, %v1906
        %v1908 = vand.u32 %v1907, 4294901760
        %v1909 = vsub.f32 %v1907, %v1908
        %v1910 = vand.u32 %v1909, 4294901760
        %1911 = vmatpush.msra.mxu0 %v1910
        %v1912 = vand.u32 %v814, 4294901760
        %v1913 = vsub.f32 %v814, %v1912
        %v1914 = vand.u32 %v1913, 4294901760
        %v1915 = vsub.f32 %v1913, %v1914
        %v1916 = vand.u32 %v1915, 4294901760
        %1917 = vmatpush.msra.mxu0 %v1916
        %v1918 = vand.u32 %v813, 4294901760
        %v1919 = vsub.f32 %v813, %v1918
        %v1920 = vand.u32 %v1919, 4294901760
        %v1921 = vsub.f32 %v1919, %v1920
        %v1922 = vand.u32 %v1921, 4294901760
        %1923 = vmatpush.msra.mxu0 %v1922
        %v1924 = vand.u32 %v812, 4294901760
        %v1925 = vsub.f32 %v812, %v1924
        %v1926 = vand.u32 %v1925, 4294901760
        %v1927 = vsub.f32 %v1925, %v1926
        %v1928 = vand.u32 %v1927, 4294901760
        %1929 = vmatpush.msra.mxu0 %v1928
        %v1930 = vand.u32 %v811, 4294901760
        %v1931 = vsub.f32 %v811, %v1930
        %v1932 = vand.u32 %v1931, 4294901760
        %v1933 = vsub.f32 %v1931, %v1932
        %v1934 = vand.u32 %v1933, 4294901760
        %1935 = vmatpush.msra.mxu0 %v1934
        %v1936 = vand.u32 %v810, 4294901760
        %v1937 = vsub.f32 %v810, %v1936
        %v1938 = vand.u32 %v1937, 4294901760
        %v1939 = vsub.f32 %v1937, %v1938
        %v1940 = vand.u32 %v1939, 4294901760
        %1941 = vmatpush.msra.mxu0 %v1940
        %v1942 = vand.u32 %v809, 4294901760
        %v1943 = vsub.f32 %v809, %v1942
        %v1944 = vand.u32 %v1943, 4294901760
        %v1945 = vsub.f32 %v1943, %v1944
        %v1946 = vand.u32 %v1945, 4294901760
        %1947 = vmatpush.msra.mxu0 %v1946
        %v1948 = vand.u32 %v808, 4294901760
        %v1949 = vsub.f32 %v808, %v1948
        %v1950 = vand.u32 %v1949, 4294901760
        %v1951 = vsub.f32 %v1949, %v1950
        %v1952 = vand.u32 %v1951, 4294901760
        %1953 = vmatpush.msra.mxu0 %v1952
        %v1954 = vand.u32 %v807, 4294901760
        %v1955 = vsub.f32 %v807, %v1954
        %v1956 = vand.u32 %v1955, 4294901760
        %v1957 = vsub.f32 %v1955, %v1956
        %v1958 = vand.u32 %v1957, 4294901760
        %1959 = vmatpush.msra.mxu0 %v1958
        %v1960 = vand.u32 %v806, 4294901760
        %v1961 = vsub.f32 %v806, %v1960
        %v1962 = vand.u32 %v1961, 4294901760
        %v1963 = vsub.f32 %v1961, %v1962
        %v1964 = vand.u32 %v1963, 4294901760
        %1965 = vmatpush.msra.mxu0 %v1964
        %v1966 = vand.u32 %v805, 4294901760
        %v1967 = vsub.f32 %v805, %v1966
        %v1968 = vand.u32 %v1967, 4294901760
        %v1969 = vsub.f32 %v1967, %v1968
        %v1970 = vand.u32 %v1969, 4294901760
        %1971 = vmatpush.msra.mxu0 %v1970
        %v1972 = vand.u32 %v804, 4294901760
        %v1973 = vsub.f32 %v804, %v1972
        %v1974 = vand.u32 %v1973, 4294901760
        %v1975 = vsub.f32 %v1973, %v1974
        %v1976 = vand.u32 %v1975, 4294901760
        %1977 = vmatpush.msra.mxu0 %v1976
        %v1978 = vand.u32 %v803, 4294901760
        %v1979 = vsub.f32 %v803, %v1978
        %v1980 = vand.u32 %v1979, 4294901760
        %v1981 = vsub.f32 %v1979, %v1980
        %v1982 = vand.u32 %v1981, 4294901760
        %1983 = vmatpush.msra.mxu0 %v1982
        %v1984 = vand.u32 %v802, 4294901760
        %v1985 = vsub.f32 %v802, %v1984
        %v1986 = vand.u32 %v1985, 4294901760
        %v1987 = vsub.f32 %v1985, %v1986
        %v1988 = vand.u32 %v1987, 4294901760
        %1989 = vmatpush.msra.mxu0 %v1988
        %v1990 = vand.u32 %v801, 4294901760
        %v1991 = vsub.f32 %v801, %v1990
        %v1992 = vand.u32 %v1991, 4294901760
        %v1993 = vsub.f32 %v1991, %v1992
        %v1994 = vand.u32 %v1993, 4294901760
        %1995 = vmatpush.msra.mxu0 %v1994
        %v1996 = vand.u32 %v800, 4294901760
        %v1997 = vsub.f32 %v800, %v1996
        %v1998 = vand.u32 %v1997, 4294901760
        %v1999 = vsub.f32 %v1997, %v1998
        %v2000 = vand.u32 %v1999, 4294901760
        %2001 = vmatpush.msra.mxu0 %v2000
        %v2002 = vand.u32 %v719, 4294901760
        %2003 = vmatmul.f32.gmra.mxu0 %v2002
        %v2004 = vpop.f32.mrf.mxu0
        %v2005 = vadd.f32 %v1888, %v2004
        %v2006 = vand.u32 %v736, 4294901760
        %2007 = vmatmul.f32.gmra.mxu0 %v2006
        %v2008 = vpop.f32.mrf.mxu0
        %v2009 = vadd.f32 %v1896, %v2008
        %v2010 = vand.u32 %v753, 4294901760
        %2011 = vmatmul.f32.gmra.mxu0 %v2010
        %v2012 = vpop.f32.mrf.mxu0
        %v2013 = vadd.f32 %v1904, %v2012
        %2014 = vdwg.mxu0
        %v2015 = vand.u32 %v815, 4294901760
        %v2016 = vsub.f32 %v815, %v2015
        %2017 = vmatpush.msra.mxu0 %v2016
        %v2018 = vand.u32 %v814, 4294901760
        %v2019 = vsub.f32 %v814, %v2018
        %2020 = vmatpush.msra.mxu0 %v2019
        %v2021 = vand.u32 %v813, 4294901760
        %v2022 = vsub.f32 %v813, %v2021
        %2023 = vmatpush.msra.mxu0 %v2022
        %v2024 = vand.u32 %v812, 4294901760
        %v2025 = vsub.f32 %v812, %v2024
        %2026 = vmatpush.msra.mxu0 %v2025
        %v2027 = vand.u32 %v811, 4294901760
        %v2028 = vsub.f32 %v811, %v2027
        %2029 = vmatpush.msra.mxu0 %v2028
        %v2030 = vand.u32 %v810, 4294901760
        %v2031 = vsub.f32 %v810, %v2030
        %2032 = vmatpush.msra.mxu0 %v2031
        %v2033 = vand.u32 %v809, 4294901760
        %v2034 = vsub.f32 %v809, %v2033
        %2035 = vmatpush.msra.mxu0 %v2034
        %v2036 = vand.u32 %v808, 4294901760
        %v2037 = vsub.f32 %v808, %v2036
        %2038 = vmatpush.msra.mxu0 %v2037
        %v2039 = vand.u32 %v807, 4294901760
        %v2040 = vsub.f32 %v807, %v2039
        %2041 = vmatpush.msra.mxu0 %v2040
        %v2042 = vand.u32 %v806, 4294901760
        %v2043 = vsub.f32 %v806, %v2042
        %2044 = vmatpush.msra.mxu0 %v2043
        %v2045 = vand.u32 %v805, 4294901760
        %v2046 = vsub.f32 %v805, %v2045
        %2047 = vmatpush.msra.mxu0 %v2046
        %v2048 = vand.u32 %v804, 4294901760
        %v2049 = vsub.f32 %v804, %v2048
        %2050 = vmatpush.msra.mxu0 %v2049
        %v2051 = vand.u32 %v803, 4294901760
        %v2052 = vsub.f32 %v803, %v2051
        %2053 = vmatpush.msra.mxu0 %v2052
        %v2054 = vand.u32 %v802, 4294901760
        %v2055 = vsub.f32 %v802, %v2054
        %2056 = vmatpush.msra.mxu0 %v2055
        %v2057 = vand.u32 %v801, 4294901760
        %v2058 = vsub.f32 %v801, %v2057
        %2059 = vmatpush.msra.mxu0 %v2058
        %v2060 = vand.u32 %v800, 4294901760
        %v2061 = vsub.f32 %v800, %v2060
        %2062 = vmatpush.msra.mxu0 %v2061
        %v2063 = vand.u32 %v719, 4294901760
        %v2064 = vsub.f32 %v719, %v2063
        %2065 = vmatmul.f32.gmra.mxu0 %v2064
        %v2066 = vpop.f32.mrf.mxu0
        %v2067 = vadd.f32 %v2005, %v2066
        %v2068 = vand.u32 %v736, 4294901760
        %v2069 = vsub.f32 %v736, %v2068
        %2070 = vmatmul.f32.gmra.mxu0 %v2069
        %v2071 = vpop.f32.mrf.mxu0
        %v2072 = vadd.f32 %v2009, %v2071
        %v2073 = vand.u32 %v753, 4294901760
        %v2074 = vsub.f32 %v753, %v2073
        %2075 = vmatmul.f32.gmra.mxu0 %v2074
        %v2076 = vpop.f32.mrf.mxu0
        %v2077 = vadd.f32 %v2013, %v2076
        %2078 = vdwg.mxu0
        %v2079 = vand.u32 %v815, 4294901760
        %2080 = vmatpush.msra.mxu0 %v2079
        %v2081 = vand.u32 %v814, 4294901760
        %2082 = vmatpush.msra.mxu0 %v2081
        %v2083 = vand.u32 %v813, 4294901760
        %2084 = vmatpush.msra.mxu0 %v2083
        %v2085 = vand.u32 %v812, 4294901760
        %2086 = vmatpush.msra.mxu0 %v2085
        %v2087 = vand.u32 %v811, 4294901760
        %2088 = vmatpush.msra.mxu0 %v2087
        %v2089 = vand.u32 %v810, 4294901760
        %2090 = vmatpush.msra.mxu0 %v2089
        %v2091 = vand.u32 %v809, 4294901760
        %2092 = vmatpush.msra.mxu0 %v2091
        %v2093 = vand.u32 %v808, 4294901760
        %2094 = vmatpush.msra.mxu0 %v2093
        %v2095 = vand.u32 %v807, 4294901760
        %2096 = vmatpush.msra.mxu0 %v2095
        %v2097 = vand.u32 %v806, 4294901760
        %2098 = vmatpush.msra.mxu0 %v2097
        %v2099 = vand.u32 %v805, 4294901760
        %2100 = vmatpush.msra.mxu0 %v2099
        %v2101 = vand.u32 %v804, 4294901760
        %2102 = vmatpush.msra.mxu0 %v2101
        %v2103 = vand.u32 %v803, 4294901760
        %2104 = vmatpush.msra.mxu0 %v2103
        %v2105 = vand.u32 %v802, 4294901760
        %2106 = vmatpush.msra.mxu0 %v2105
        %v2107 = vand.u32 %v801, 4294901760
        %2108 = vmatpush.msra.mxu0 %v2107
        %v2109 = vand.u32 %v800, 4294901760
        %2110 = vmatpush.msra.mxu0 %v2109
        %v2111 = vand.u32 %v719, 4294901760
        %v2112 = vsub.f32 %v719, %v2111
        %v2113 = vand.u32 %v2112, 4294901760
        %2114 = vmatmul.f32.gmra.mxu0 %v2113
        %v2115 = vpop.f32.mrf.mxu0
        %v2116 = vadd.f32 %v2067, %v2115
        %v2117 = vand.u32 %v736, 4294901760
        %v2118 = vsub.f32 %v736, %v2117
        %v2119 = vand.u32 %v2118, 4294901760
        %2120 = vmatmul.f32.gmra.mxu0 %v2119
        %v2121 = vpop.f32.mrf.mxu0
        %v2122 = vadd.f32 %v2072, %v2121
        %v2123 = vand.u32 %v753, 4294901760
        %v2124 = vsub.f32 %v753, %v2123
        %v2125 = vand.u32 %v2124, 4294901760
        %2126 = vmatmul.f32.gmra.mxu0 %v2125
        %v2127 = vpop.f32.mrf.mxu0
        %v2128 = vadd.f32 %v2077, %v2127
        %2129 = vdwg.mxu0
        %v2130 = vand.u32 %v815, 4294901760
        %v2131 = vsub.f32 %v815, %v2130
        %v2132 = vand.u32 %v2131, 4294901760
        %2133 = vmatpush.msra.mxu0 %v2132
        %v2134 = vand.u32 %v814, 4294901760
        %v2135 = vsub.f32 %v814, %v2134
        %v2136 = vand.u32 %v2135, 4294901760
        %2137 = vmatpush.msra.mxu0 %v2136
        %v2138 = vand.u32 %v813, 4294901760
        %v2139 = vsub.f32 %v813, %v2138
        %v2140 = vand.u32 %v2139, 4294901760
        %2141 = vmatpush.msra.mxu0 %v2140
        %v2142 = vand.u32 %v812, 4294901760
        %v2143 = vsub.f32 %v812, %v2142
        %v2144 = vand.u32 %v2143, 4294901760
        %2145 = vmatpush.msra.mxu0 %v2144
        %v2146 = vand.u32 %v811, 4294901760
        %v2147 = vsub.f32 %v811, %v2146
        %v2148 = vand.u32 %v2147, 4294901760
        %2149 = vmatpush.msra.mxu0 %v2148
        %v2150 = vand.u32 %v810, 4294901760
        %v2151 = vsub.f32 %v810, %v2150
        %v2152 = vand.u32 %v2151, 4294901760
        %2153 = vmatpush.msra.mxu0 %v2152
        %v2154 = vand.u32 %v809, 4294901760
        %v2155 = vsub.f32 %v809, %v2154
        %v2156 = vand.u32 %v2155, 4294901760
        %2157 = vmatpush.msra.mxu0 %v2156
        %v2158 = vand.u32 %v808, 4294901760
        %v2159 = vsub.f32 %v808, %v2158
        %v2160 = vand.u32 %v2159, 4294901760
        %2161 = vmatpush.msra.mxu0 %v2160
        %v2162 = vand.u32 %v807, 4294901760
        %v2163 = vsub.f32 %v807, %v2162
        %v2164 = vand.u32 %v2163, 4294901760
        %2165 = vmatpush.msra.mxu0 %v2164
        %v2166 = vand.u32 %v806, 4294901760
        %v2167 = vsub.f32 %v806, %v2166
        %v2168 = vand.u32 %v2167, 4294901760
        %2169 = vmatpush.msra.mxu0 %v2168
        %v2170 = vand.u32 %v805, 4294901760
        %v2171 = vsub.f32 %v805, %v2170
        %v2172 = vand.u32 %v2171, 4294901760
        %2173 = vmatpush.msra.mxu0 %v2172
        %v2174 = vand.u32 %v804, 4294901760
        %v2175 = vsub.f32 %v804, %v2174
        %v2176 = vand.u32 %v2175, 4294901760
        %2177 = vmatpush.msra.mxu0 %v2176
        %v2178 = vand.u32 %v803, 4294901760
        %v2179 = vsub.f32 %v803, %v2178
        %v2180 = vand.u32 %v2179, 4294901760
        %2181 = vmatpush.msra.mxu0 %v2180
        %v2182 = vand.u32 %v802, 4294901760
        %v2183 = vsub.f32 %v802, %v2182
        %v2184 = vand.u32 %v2183, 4294901760
        %2185 = vmatpush.msra.mxu0 %v2184
        %v2186 = vand.u32 %v801, 4294901760
        %v2187 = vsub.f32 %v801, %v2186
        %v2188 = vand.u32 %v2187, 4294901760
        %2189 = vmatpush.msra.mxu0 %v2188
        %v2190 = vand.u32 %v800, 4294901760
        %v2191 = vsub.f32 %v800, %v2190
        %v2192 = vand.u32 %v2191, 4294901760
        %2193 = vmatpush.msra.mxu0 %v2192
        %v2194 = vand.u32 %v719, 4294901760
        %2195 = vmatmul.f32.gmra.mxu0 %v2194
        %v2196 = vpop.f32.mrf.mxu0
        %v2197 = vadd.f32 %v2116, %v2196
        %v2198 = vand.u32 %v736, 4294901760
        %2199 = vmatmul.f32.gmra.mxu0 %v2198
        %v2200 = vpop.f32.mrf.mxu0
        %v2201 = vadd.f32 %v2122, %v2200
        %v2202 = vand.u32 %v753, 4294901760
        %2203 = vmatmul.f32.gmra.mxu0 %v2202
        %v2204 = vpop.f32.mrf.mxu0
        %v2205 = vadd.f32 %v2128, %v2204
        %2206 = vdwg.mxu0
        %v2207 = vand.u32 %v815, 4294901760
        %2208 = vmatpush.msra.mxu0 %v2207
        %v2209 = vand.u32 %v814, 4294901760
        %2210 = vmatpush.msra.mxu0 %v2209
        %v2211 = vand.u32 %v813, 4294901760
        %2212 = vmatpush.msra.mxu0 %v2211
        %v2213 = vand.u32 %v812, 4294901760
        %2214 = vmatpush.msra.mxu0 %v2213
        %v2215 = vand.u32 %v811, 4294901760
        %2216 = vmatpush.msra.mxu0 %v2215
        %v2217 = vand.u32 %v810, 4294901760
        %2218 = vmatpush.msra.mxu0 %v2217
        %v2219 = vand.u32 %v809, 4294901760
        %2220 = vmatpush.msra.mxu0 %v2219
        %v2221 = vand.u32 %v808, 4294901760
        %2222 = vmatpush.msra.mxu0 %v2221
        %v2223 = vand.u32 %v807, 4294901760
        %2224 = vmatpush.msra.mxu0 %v2223
        %v2225 = vand.u32 %v806, 4294901760
        %2226 = vmatpush.msra.mxu0 %v2225
        %v2227 = vand.u32 %v805, 4294901760
        %2228 = vmatpush.msra.mxu0 %v2227
        %v2229 = vand.u32 %v804, 4294901760
        %2230 = vmatpush.msra.mxu0 %v2229
        %v2231 = vand.u32 %v803, 4294901760
        %2232 = vmatpush.msra.mxu0 %v2231
        %v2233 = vand.u32 %v802, 4294901760
        %2234 = vmatpush.msra.mxu0 %v2233
        %v2235 = vand.u32 %v801, 4294901760
        %2236 = vmatpush.msra.mxu0 %v2235
        %v2237 = vand.u32 %v800, 4294901760
        %2238 = vmatpush.msra.mxu0 %v2237
        %v2239 = vand.u32 %v719, 4294901760
        %2240 = vmatmul.f32.gmra.mxu0 %v2239
        %v2241 = vpop.f32.mrf.mxu0
        %v2242 = vadd.f32 %v2197, %v2241
        %v2243 = vand.u32 %v736, 4294901760
        %2244 = vmatmul.f32.gmra.mxu0 %v2243
        %v2245 = vpop.f32.mrf.mxu0
        %v2246 = vadd.f32 %v2201, %v2245
        %v2247 = vand.u32 %v753, 4294901760
        %2248 = vmatmul.f32.gmra.mxu0 %v2247
        %v2249 = vpop.f32.mrf.mxu0
        %v2250 = vadd.f32 %v2205, %v2249
        %2251 = vdwg.mxu0
        %v2252 = vand.u32 %v831, 4294901760
        %2253 = vmatpush.msra.mxu0 %v2252
        %v2254 = vand.u32 %v830, 4294901760
        %2255 = vmatpush.msra.mxu0 %v2254
        %v2256 = vand.u32 %v829, 4294901760
        %2257 = vmatpush.msra.mxu0 %v2256
        %v2258 = vand.u32 %v828, 4294901760
        %2259 = vmatpush.msra.mxu0 %v2258
        %v2260 = vand.u32 %v827, 4294901760
        %2261 = vmatpush.msra.mxu0 %v2260
        %v2262 = vand.u32 %v826, 4294901760
        %2263 = vmatpush.msra.mxu0 %v2262
        %v2264 = vand.u32 %v825, 4294901760
        %2265 = vmatpush.msra.mxu0 %v2264
        %v2266 = vand.u32 %v824, 4294901760
        %2267 = vmatpush.msra.mxu0 %v2266
        %v2268 = vand.u32 %v823, 4294901760
        %2269 = vmatpush.msra.mxu0 %v2268
        %v2270 = vand.u32 %v822, 4294901760
        %2271 = vmatpush.msra.mxu0 %v2270
        %v2272 = vand.u32 %v821, 4294901760
        %2273 = vmatpush.msra.mxu0 %v2272
        %v2274 = vand.u32 %v820, 4294901760
        %2275 = vmatpush.msra.mxu0 %v2274
        %v2276 = vand.u32 %v819, 4294901760
        %2277 = vmatpush.msra.mxu0 %v2276
        %v2278 = vand.u32 %v818, 4294901760
        %2279 = vmatpush.msra.mxu0 %v2278
        %v2280 = vand.u32 %v817, 4294901760
        %2281 = vmatpush.msra.mxu0 %v2280
        %v2282 = vand.u32 %v816, 4294901760
        %2283 = vmatpush.msra.mxu0 %v2282
        %v2284 = vand.u32 %v720, 4294901760
        %v2285 = vsub.f32 %v720, %v2284
        %v2286 = vand.u32 %v2285, 4294901760
        %v2287 = vsub.f32 %v2285, %v2286
        %v2288 = vand.u32 %v2287, 4294901760
        %2289 = vmatmul.f32.gmra.mxu0 %v2288
        %v2290 = vpop.f32.mrf.mxu0
        %v2291 = vadd.f32 %v2242, %v2290
        %v2292 = vand.u32 %v737, 4294901760
        %v2293 = vsub.f32 %v737, %v2292
        %v2294 = vand.u32 %v2293, 4294901760
        %v2295 = vsub.f32 %v2293, %v2294
        %v2296 = vand.u32 %v2295, 4294901760
        %2297 = vmatmul.f32.gmra.mxu0 %v2296
        %v2298 = vpop.f32.mrf.mxu0
        %v2299 = vadd.f32 %v2246, %v2298
        %v2300 = vand.u32 %v754, 4294901760
        %v2301 = vsub.f32 %v754, %v2300
        %v2302 = vand.u32 %v2301, 4294901760
        %v2303 = vsub.f32 %v2301, %v2302
        %v2304 = vand.u32 %v2303, 4294901760
        %2305 = vmatmul.f32.gmra.mxu0 %v2304
        %v2306 = vpop.f32.mrf.mxu0
        %v2307 = vadd.f32 %v2250, %v2306
        %2308 = vdwg.mxu0
        %v2309 = vand.u32 %v831, 4294901760
        %v2310 = vsub.f32 %v831, %v2309
        %v2311 = vand.u32 %v2310, 4294901760
        %v2312 = vsub.f32 %v2310, %v2311
        %v2313 = vand.u32 %v2312, 4294901760
        %2314 = vmatpush.msra.mxu0 %v2313
        %v2315 = vand.u32 %v830, 4294901760
        %v2316 = vsub.f32 %v830, %v2315
        %v2317 = vand.u32 %v2316, 4294901760
        %v2318 = vsub.f32 %v2316, %v2317
        %v2319 = vand.u32 %v2318, 4294901760
        %2320 = vmatpush.msra.mxu0 %v2319
        %v2321 = vand.u32 %v829, 4294901760
        %v2322 = vsub.f32 %v829, %v2321
        %v2323 = vand.u32 %v2322, 4294901760
        %v2324 = vsub.f32 %v2322, %v2323
        %v2325 = vand.u32 %v2324, 4294901760
        %2326 = vmatpush.msra.mxu0 %v2325
        %v2327 = vand.u32 %v828, 4294901760
        %v2328 = vsub.f32 %v828, %v2327
        %v2329 = vand.u32 %v2328, 4294901760
        %v2330 = vsub.f32 %v2328, %v2329
        %v2331 = vand.u32 %v2330, 4294901760
        %2332 = vmatpush.msra.mxu0 %v2331
        %v2333 = vand.u32 %v827, 4294901760
        %v2334 = vsub.f32 %v827, %v2333
        %v2335 = vand.u32 %v2334, 4294901760
        %v2336 = vsub.f32 %v2334, %v2335
        %v2337 = vand.u32 %v2336, 4294901760
        %2338 = vmatpush.msra.mxu0 %v2337
        %v2339 = vand.u32 %v826, 4294901760
        %v2340 = vsub.f32 %v826, %v2339
        %v2341 = vand.u32 %v2340, 4294901760
        %v2342 = vsub.f32 %v2340, %v2341
        %v2343 = vand.u32 %v2342, 4294901760
        %2344 = vmatpush.msra.mxu0 %v2343
        %v2345 = vand.u32 %v825, 4294901760
        %v2346 = vsub.f32 %v825, %v2345
        %v2347 = vand.u32 %v2346, 4294901760
        %v2348 = vsub.f32 %v2346, %v2347
        %v2349 = vand.u32 %v2348, 4294901760
        %2350 = vmatpush.msra.mxu0 %v2349
        %v2351 = vand.u32 %v824, 4294901760
        %v2352 = vsub.f32 %v824, %v2351
        %v2353 = vand.u32 %v2352, 4294901760
        %v2354 = vsub.f32 %v2352, %v2353
        %v2355 = vand.u32 %v2354, 4294901760
        %2356 = vmatpush.msra.mxu0 %v2355
        %v2357 = vand.u32 %v823, 4294901760
        %v2358 = vsub.f32 %v823, %v2357
        %v2359 = vand.u32 %v2358, 4294901760
        %v2360 = vsub.f32 %v2358, %v2359
        %v2361 = vand.u32 %v2360, 4294901760
        %2362 = vmatpush.msra.mxu0 %v2361
        %v2363 = vand.u32 %v822, 4294901760
        %v2364 = vsub.f32 %v822, %v2363
        %v2365 = vand.u32 %v2364, 4294901760
        %v2366 = vsub.f32 %v2364, %v2365
        %v2367 = vand.u32 %v2366, 4294901760
        %2368 = vmatpush.msra.mxu0 %v2367
        %v2369 = vand.u32 %v821, 4294901760
        %v2370 = vsub.f32 %v821, %v2369
        %v2371 = vand.u32 %v2370, 4294901760
        %v2372 = vsub.f32 %v2370, %v2371
        %v2373 = vand.u32 %v2372, 4294901760
        %2374 = vmatpush.msra.mxu0 %v2373
        %v2375 = vand.u32 %v820, 4294901760
        %v2376 = vsub.f32 %v820, %v2375
        %v2377 = vand.u32 %v2376, 4294901760
        %v2378 = vsub.f32 %v2376, %v2377
        %v2379 = vand.u32 %v2378, 4294901760
        %2380 = vmatpush.msra.mxu0 %v2379
        %v2381 = vand.u32 %v819, 4294901760
        %v2382 = vsub.f32 %v819, %v2381
        %v2383 = vand.u32 %v2382, 4294901760
        %v2384 = vsub.f32 %v2382, %v2383
        %v2385 = vand.u32 %v2384, 4294901760
        %2386 = vmatpush.msra.mxu0 %v2385
        %v2387 = vand.u32 %v818, 4294901760
        %v2388 = vsub.f32 %v818, %v2387
        %v2389 = vand.u32 %v2388, 4294901760
        %v2390 = vsub.f32 %v2388, %v2389
        %v2391 = vand.u32 %v2390, 4294901760
        %2392 = vmatpush.msra.mxu0 %v2391
        %v2393 = vand.u32 %v817, 4294901760
        %v2394 = vsub.f32 %v817, %v2393
        %v2395 = vand.u32 %v2394, 4294901760
        %v2396 = vsub.f32 %v2394, %v2395
        %v2397 = vand.u32 %v2396, 4294901760
        %2398 = vmatpush.msra.mxu0 %v2397
        %v2399 = vand.u32 %v816, 4294901760
        %v2400 = vsub.f32 %v816, %v2399
        %v2401 = vand.u32 %v2400, 4294901760
        %v2402 = vsub.f32 %v2400, %v2401
        %v2403 = vand.u32 %v2402, 4294901760
        %2404 = vmatpush.msra.mxu0 %v2403
        %v2405 = vand.u32 %v720, 4294901760
        %2406 = vmatmul.f32.gmra.mxu0 %v2405
        %v2407 = vpop.f32.mrf.mxu0
        %v2408 = vadd.f32 %v2291, %v2407
        %v2409 = vand.u32 %v737, 4294901760
        %2410 = vmatmul.f32.gmra.mxu0 %v2409
        %v2411 = vpop.f32.mrf.mxu0
        %v2412 = vadd.f32 %v2299, %v2411
        %v2413 = vand.u32 %v754, 4294901760
        %2414 = vmatmul.f32.gmra.mxu0 %v2413
        %v2415 = vpop.f32.mrf.mxu0
        %v2416 = vadd.f32 %v2307, %v2415
        %2417 = vdwg.mxu0
        %v2418 = vand.u32 %v831, 4294901760
        %v2419 = vsub.f32 %v831, %v2418
        %2420 = vmatpush.msra.mxu0 %v2419
        %v2421 = vand.u32 %v830, 4294901760
        %v2422 = vsub.f32 %v830, %v2421
        %2423 = vmatpush.msra.mxu0 %v2422
        %v2424 = vand.u32 %v829, 4294901760
        %v2425 = vsub.f32 %v829, %v2424
        %2426 = vmatpush.msra.mxu0 %v2425
        %v2427 = vand.u32 %v828, 4294901760
        %v2428 = vsub.f32 %v828, %v2427
        %2429 = vmatpush.msra.mxu0 %v2428
        %v2430 = vand.u32 %v827, 4294901760
        %v2431 = vsub.f32 %v827, %v2430
        %2432 = vmatpush.msra.mxu0 %v2431
        %v2433 = vand.u32 %v826, 4294901760
        %v2434 = vsub.f32 %v826, %v2433
        %2435 = vmatpush.msra.mxu0 %v2434
        %v2436 = vand.u32 %v825, 4294901760
        %v2437 = vsub.f32 %v825, %v2436
        %2438 = vmatpush.msra.mxu0 %v2437
        %v2439 = vand.u32 %v824, 4294901760
        %v2440 = vsub.f32 %v824, %v2439
        %2441 = vmatpush.msra.mxu0 %v2440
        %v2442 = vand.u32 %v823, 4294901760
        %v2443 = vsub.f32 %v823, %v2442
        %2444 = vmatpush.msra.mxu0 %v2443
        %v2445 = vand.u32 %v822, 4294901760
        %v2446 = vsub.f32 %v822, %v2445
        %2447 = vmatpush.msra.mxu0 %v2446
        %v2448 = vand.u32 %v821, 4294901760
        %v2449 = vsub.f32 %v821, %v2448
        %2450 = vmatpush.msra.mxu0 %v2449
        %v2451 = vand.u32 %v820, 4294901760
        %v2452 = vsub.f32 %v820, %v2451
        %2453 = vmatpush.msra.mxu0 %v2452
        %v2454 = vand.u32 %v819, 4294901760
        %v2455 = vsub.f32 %v819, %v2454
        %2456 = vmatpush.msra.mxu0 %v2455
        %v2457 = vand.u32 %v818, 4294901760
        %v2458 = vsub.f32 %v818, %v2457
        %2459 = vmatpush.msra.mxu0 %v2458
        %v2460 = vand.u32 %v817, 4294901760
        %v2461 = vsub.f32 %v817, %v2460
        %2462 = vmatpush.msra.mxu0 %v2461
        %v2463 = vand.u32 %v816, 4294901760
        %v2464 = vsub.f32 %v816, %v2463
        %2465 = vmatpush.msra.mxu0 %v2464
        %v2466 = vand.u32 %v720, 4294901760
        %v2467 = vsub.f32 %v720, %v2466
        %2468 = vmatmul.f32.gmra.mxu0 %v2467
        %v2469 = vpop.f32.mrf.mxu0
        %v2470 = vadd.f32 %v2408, %v2469
        %v2471 = vand.u32 %v737, 4294901760
        %v2472 = vsub.f32 %v737, %v2471
        %2473 = vmatmul.f32.gmra.mxu0 %v2472
        %v2474 = vpop.f32.mrf.mxu0
        %v2475 = vadd.f32 %v2412, %v2474
        %v2476 = vand.u32 %v754, 4294901760
        %v2477 = vsub.f32 %v754, %v2476
        %2478 = vmatmul.f32.gmra.mxu0 %v2477
        %v2479 = vpop.f32.mrf.mxu0
        %v2480 = vadd.f32 %v2416, %v2479
        %2481 = vdwg.mxu0
        %v2482 = vand.u32 %v831, 4294901760
        %2483 = vmatpush.msra.mxu0 %v2482
        %v2484 = vand.u32 %v830, 4294901760
        %2485 = vmatpush.msra.mxu0 %v2484
        %v2486 = vand.u32 %v829, 4294901760
        %2487 = vmatpush.msra.mxu0 %v2486
        %v2488 = vand.u32 %v828, 4294901760
        %2489 = vmatpush.msra.mxu0 %v2488
        %v2490 = vand.u32 %v827, 4294901760
        %2491 = vmatpush.msra.mxu0 %v2490
        %v2492 = vand.u32 %v826, 4294901760
        %2493 = vmatpush.msra.mxu0 %v2492
        %v2494 = vand.u32 %v825, 4294901760
        %2495 = vmatpush.msra.mxu0 %v2494
        %v2496 = vand.u32 %v824, 4294901760
        %2497 = vmatpush.msra.mxu0 %v2496
        %v2498 = vand.u32 %v823, 4294901760
        %2499 = vmatpush.msra.mxu0 %v2498
        %v2500 = vand.u32 %v822, 4294901760
        %2501 = vmatpush.msra.mxu0 %v2500
        %v2502 = vand.u32 %v821, 4294901760
        %2503 = vmatpush.msra.mxu0 %v2502
        %v2504 = vand.u32 %v820, 4294901760
        %2505 = vmatpush.msra.mxu0 %v2504
        %v2506 = vand.u32 %v819, 4294901760
        %2507 = vmatpush.msra.mxu0 %v2506
        %v2508 = vand.u32 %v818, 4294901760
        %2509 = vmatpush.msra.mxu0 %v2508
        %v2510 = vand.u32 %v817, 4294901760
        %2511 = vmatpush.msra.mxu0 %v2510
        %v2512 = vand.u32 %v816, 4294901760
        %2513 = vmatpush.msra.mxu0 %v2512
        %v2514 = vand.u32 %v720, 4294901760
        %v2515 = vsub.f32 %v720, %v2514
        %v2516 = vand.u32 %v2515, 4294901760
        %2517 = vmatmul.f32.gmra.mxu0 %v2516
        %v2518 = vpop.f32.mrf.mxu0
        %v2519 = vadd.f32 %v2470, %v2518
        %v2520 = vand.u32 %v737, 4294901760
        %v2521 = vsub.f32 %v737, %v2520
        %v2522 = vand.u32 %v2521, 4294901760
        %2523 = vmatmul.f32.gmra.mxu0 %v2522
        %v2524 = vpop.f32.mrf.mxu0
        %v2525 = vadd.f32 %v2475, %v2524
        %v2526 = vand.u32 %v754, 4294901760
        %v2527 = vsub.f32 %v754, %v2526
        %v2528 = vand.u32 %v2527, 4294901760
        %2529 = vmatmul.f32.gmra.mxu0 %v2528
        %v2530 = vpop.f32.mrf.mxu0
        %v2531 = vadd.f32 %v2480, %v2530
        %2532 = vdwg.mxu0
        %v2533 = vand.u32 %v831, 4294901760
        %v2534 = vsub.f32 %v831, %v2533
        %v2535 = vand.u32 %v2534, 4294901760
        %2536 = vmatpush.msra.mxu0 %v2535
        %v2537 = vand.u32 %v830, 4294901760
        %v2538 = vsub.f32 %v830, %v2537
        %v2539 = vand.u32 %v2538, 4294901760
        %2540 = vmatpush.msra.mxu0 %v2539
        %v2541 = vand.u32 %v829, 4294901760
        %v2542 = vsub.f32 %v829, %v2541
        %v2543 = vand.u32 %v2542, 4294901760
        %2544 = vmatpush.msra.mxu0 %v2543
        %v2545 = vand.u32 %v828, 4294901760
        %v2546 = vsub.f32 %v828, %v2545
        %v2547 = vand.u32 %v2546, 4294901760
        %2548 = vmatpush.msra.mxu0 %v2547
        %v2549 = vand.u32 %v827, 4294901760
        %v2550 = vsub.f32 %v827, %v2549
        %v2551 = vand.u32 %v2550, 4294901760
        %2552 = vmatpush.msra.mxu0 %v2551
        %v2553 = vand.u32 %v826, 4294901760
        %v2554 = vsub.f32 %v826, %v2553
        %v2555 = vand.u32 %v2554, 4294901760
        %2556 = vmatpush.msra.mxu0 %v2555
        %v2557 = vand.u32 %v825, 4294901760
        %v2558 = vsub.f32 %v825, %v2557
        %v2559 = vand.u32 %v2558, 4294901760
        %2560 = vmatpush.msra.mxu0 %v2559
        %v2561 = vand.u32 %v824, 4294901760
        %v2562 = vsub.f32 %v824, %v2561
        %v2563 = vand.u32 %v2562, 4294901760
        %2564 = vmatpush.msra.mxu0 %v2563
        %v2565 = vand.u32 %v823, 4294901760
        %v2566 = vsub.f32 %v823, %v2565
        %v2567 = vand.u32 %v2566, 4294901760
        %2568 = vmatpush.msra.mxu0 %v2567
        %v2569 = vand.u32 %v822, 4294901760
        %v2570 = vsub.f32 %v822, %v2569
        %v2571 = vand.u32 %v2570, 4294901760
        %2572 = vmatpush.msra.mxu0 %v2571
        %v2573 = vand.u32 %v821, 4294901760
        %v2574 = vsub.f32 %v821, %v2573
        %v2575 = vand.u32 %v2574, 4294901760
        %2576 = vmatpush.msra.mxu0 %v2575
        %v2577 = vand.u32 %v820, 4294901760
        %v2578 = vsub.f32 %v820, %v2577
        %v2579 = vand.u32 %v2578, 4294901760
        %2580 = vmatpush.msra.mxu0 %v2579
        %v2581 = vand.u32 %v819, 4294901760
        %v2582 = vsub.f32 %v819, %v2581
        %v2583 = vand.u32 %v2582, 4294901760
        %2584 = vmatpush.msra.mxu0 %v2583
        %v2585 = vand.u32 %v818, 4294901760
        %v2586 = vsub.f32 %v818, %v2585
        %v2587 = vand.u32 %v2586, 4294901760
        %2588 = vmatpush.msra.mxu0 %v2587
        %v2589 = vand.u32 %v817, 4294901760
        %v2590 = vsub.f32 %v817, %v2589
        %v2591 = vand.u32 %v2590, 4294901760
        %2592 = vmatpush.msra.mxu0 %v2591
        %v2593 = vand.u32 %v816, 4294901760
        %v2594 = vsub.f32 %v816, %v2593
        %v2595 = vand.u32 %v2594, 4294901760
        %2596 = vmatpush.msra.mxu0 %v2595
        %v2597 = vand.u32 %v720, 4294901760
        %2598 = vmatmul.f32.gmra.mxu0 %v2597
        %v2599 = vpop.f32.mrf.mxu0
        %v2600 = vadd.f32 %v2519, %v2599
        %v2601 = vand.u32 %v737, 4294901760
        %2602 = vmatmul.f32.gmra.mxu0 %v2601
        %v2603 = vpop.f32.mrf.mxu0
        %v2604 = vadd.f32 %v2525, %v2603
        %v2605 = vand.u32 %v754, 4294901760
        %2606 = vmatmul.f32.gmra.mxu0 %v2605
        %v2607 = vpop.f32.mrf.mxu0
        %v2608 = vadd.f32 %v2531, %v2607
        %2609 = vdwg.mxu0
        %v2610 = vand.u32 %v831, 4294901760
        %2611 = vmatpush.msra.mxu0 %v2610
        %v2612 = vand.u32 %v830, 4294901760
        %2613 = vmatpush.msra.mxu0 %v2612
        %v2614 = vand.u32 %v829, 4294901760
        %2615 = vmatpush.msra.mxu0 %v2614
        %v2616 = vand.u32 %v828, 4294901760
        %2617 = vmatpush.msra.mxu0 %v2616
        %v2618 = vand.u32 %v827, 4294901760
        %2619 = vmatpush.msra.mxu0 %v2618
        %v2620 = vand.u32 %v826, 4294901760
        %2621 = vmatpush.msra.mxu0 %v2620
        %v2622 = vand.u32 %v825, 4294901760
        %2623 = vmatpush.msra.mxu0 %v2622
        %v2624 = vand.u32 %v824, 4294901760
        %2625 = vmatpush.msra.mxu0 %v2624
        %v2626 = vand.u32 %v823, 4294901760
        %2627 = vmatpush.msra.mxu0 %v2626
        %v2628 = vand.u32 %v822, 4294901760
        %2629 = vmatpush.msra.mxu0 %v2628
        %v2630 = vand.u32 %v821, 4294901760
        %2631 = vmatpush.msra.mxu0 %v2630
        %v2632 = vand.u32 %v820, 4294901760
        %2633 = vmatpush.msra.mxu0 %v2632
        %v2634 = vand.u32 %v819, 4294901760
        %2635 = vmatpush.msra.mxu0 %v2634
        %v2636 = vand.u32 %v818, 4294901760
        %2637 = vmatpush.msra.mxu0 %v2636
        %v2638 = vand.u32 %v817, 4294901760
        %2639 = vmatpush.msra.mxu0 %v2638
        %v2640 = vand.u32 %v816, 4294901760
        %2641 = vmatpush.msra.mxu0 %v2640
        %v2642 = vand.u32 %v720, 4294901760
        %2643 = vmatmul.f32.gmra.mxu0 %v2642
        %v2644 = vpop.f32.mrf.mxu0
        %v2645 = vadd.f32 %v2600, %v2644
        %v2646 = vand.u32 %v737, 4294901760
        %2647 = vmatmul.f32.gmra.mxu0 %v2646
        %v2648 = vpop.f32.mrf.mxu0
        %v2649 = vadd.f32 %v2604, %v2648
        %v2650 = vand.u32 %v754, 4294901760
        %2651 = vmatmul.f32.gmra.mxu0 %v2650
        %v2652 = vpop.f32.mrf.mxu0
        %v2653 = vadd.f32 %v2608, %v2652
        %2654 = vdwg.mxu0
        %v2655 = vand.u32 %v847, 4294901760
        %2656 = vmatpush.msra.mxu0 %v2655
        %v2657 = vand.u32 %v846, 4294901760
        %2658 = vmatpush.msra.mxu0 %v2657
        %v2659 = vand.u32 %v845, 4294901760
        %2660 = vmatpush.msra.mxu0 %v2659
        %v2661 = vand.u32 %v844, 4294901760
        %2662 = vmatpush.msra.mxu0 %v2661
        %v2663 = vand.u32 %v843, 4294901760
        %2664 = vmatpush.msra.mxu0 %v2663
        %v2665 = vand.u32 %v842, 4294901760
        %2666 = vmatpush.msra.mxu0 %v2665
        %v2667 = vand.u32 %v841, 4294901760
        %2668 = vmatpush.msra.mxu0 %v2667
        %v2669 = vand.u32 %v840, 4294901760
        %2670 = vmatpush.msra.mxu0 %v2669
        %v2671 = vand.u32 %v839, 4294901760
        %2672 = vmatpush.msra.mxu0 %v2671
        %v2673 = vand.u32 %v838, 4294901760
        %2674 = vmatpush.msra.mxu0 %v2673
        %v2675 = vand.u32 %v837, 4294901760
        %2676 = vmatpush.msra.mxu0 %v2675
        %v2677 = vand.u32 %v836, 4294901760
        %2678 = vmatpush.msra.mxu0 %v2677
        %v2679 = vand.u32 %v835, 4294901760
        %2680 = vmatpush.msra.mxu0 %v2679
        %v2681 = vand.u32 %v834, 4294901760
        %2682 = vmatpush.msra.mxu0 %v2681
        %v2683 = vand.u32 %v833, 4294901760
        %2684 = vmatpush.msra.mxu0 %v2683
        %v2685 = vand.u32 %v832, 4294901760
        %2686 = vmatpush.msra.mxu0 %v2685
        %v2687 = vand.u32 %v721, 4294901760
        %v2688 = vsub.f32 %v721, %v2687
        %v2689 = vand.u32 %v2688, 4294901760
        %v2690 = vsub.f32 %v2688, %v2689
        %v2691 = vand.u32 %v2690, 4294901760
        %2692 = vmatmul.f32.gmra.mxu0 %v2691
        %v2693 = vpop.f32.mrf.mxu0
        %v2694 = vadd.f32 %v2645, %v2693
        %v2695 = vand.u32 %v738, 4294901760
        %v2696 = vsub.f32 %v738, %v2695
        %v2697 = vand.u32 %v2696, 4294901760
        %v2698 = vsub.f32 %v2696, %v2697
        %v2699 = vand.u32 %v2698, 4294901760
        %2700 = vmatmul.f32.gmra.mxu0 %v2699
        %v2701 = vpop.f32.mrf.mxu0
        %v2702 = vadd.f32 %v2649, %v2701
        %v2703 = vand.u32 %v755, 4294901760
        %v2704 = vsub.f32 %v755, %v2703
        %v2705 = vand.u32 %v2704, 4294901760
        %v2706 = vsub.f32 %v2704, %v2705
        %v2707 = vand.u32 %v2706, 4294901760
        %2708 = vmatmul.f32.gmra.mxu0 %v2707
        %v2709 = vpop.f32.mrf.mxu0
        %v2710 = vadd.f32 %v2653, %v2709
        %2711 = vdwg.mxu0
        %v2712 = vand.u32 %v847, 4294901760
        %v2713 = vsub.f32 %v847, %v2712
        %v2714 = vand.u32 %v2713, 4294901760
        %v2715 = vsub.f32 %v2713, %v2714
        %v2716 = vand.u32 %v2715, 4294901760
        %2717 = vmatpush.msra.mxu0 %v2716
        %v2718 = vand.u32 %v846, 4294901760
        %v2719 = vsub.f32 %v846, %v2718
        %v2720 = vand.u32 %v2719, 4294901760
        %v2721 = vsub.f32 %v2719, %v2720
        %v2722 = vand.u32 %v2721, 4294901760
        %2723 = vmatpush.msra.mxu0 %v2722
        %v2724 = vand.u32 %v845, 4294901760
        %v2725 = vsub.f32 %v845, %v2724
        %v2726 = vand.u32 %v2725, 4294901760
        %v2727 = vsub.f32 %v2725, %v2726
        %v2728 = vand.u32 %v2727, 4294901760
        %2729 = vmatpush.msra.mxu0 %v2728
        %v2730 = vand.u32 %v844, 4294901760
        %v2731 = vsub.f32 %v844, %v2730
        %v2732 = vand.u32 %v2731, 4294901760
        %v2733 = vsub.f32 %v2731, %v2732
        %v2734 = vand.u32 %v2733, 4294901760
        %2735 = vmatpush.msra.mxu0 %v2734
        %v2736 = vand.u32 %v843, 4294901760
        %v2737 = vsub.f32 %v843, %v2736
        %v2738 = vand.u32 %v2737, 4294901760
        %v2739 = vsub.f32 %v2737, %v2738
        %v2740 = vand.u32 %v2739, 4294901760
        %2741 = vmatpush.msra.mxu0 %v2740
        %v2742 = vand.u32 %v842, 4294901760
        %v2743 = vsub.f32 %v842, %v2742
        %v2744 = vand.u32 %v2743, 4294901760
        %v2745 = vsub.f32 %v2743, %v2744
        %v2746 = vand.u32 %v2745, 4294901760
        %2747 = vmatpush.msra.mxu0 %v2746
        %v2748 = vand.u32 %v841, 4294901760
        %v2749 = vsub.f32 %v841, %v2748
        %v2750 = vand.u32 %v2749, 4294901760
        %v2751 = vsub.f32 %v2749, %v2750
        %v2752 = vand.u32 %v2751, 4294901760
        %2753 = vmatpush.msra.mxu0 %v2752
        %v2754 = vand.u32 %v840, 4294901760
        %v2755 = vsub.f32 %v840, %v2754
        %v2756 = vand.u32 %v2755, 4294901760
        %v2757 = vsub.f32 %v2755, %v2756
        %v2758 = vand.u32 %v2757, 4294901760
        %2759 = vmatpush.msra.mxu0 %v2758
        %v2760 = vand.u32 %v839, 4294901760
        %v2761 = vsub.f32 %v839, %v2760
        %v2762 = vand.u32 %v2761, 4294901760
        %v2763 = vsub.f32 %v2761, %v2762
        %v2764 = vand.u32 %v2763, 4294901760
        %2765 = vmatpush.msra.mxu0 %v2764
        %v2766 = vand.u32 %v838, 4294901760
        %v2767 = vsub.f32 %v838, %v2766
        %v2768 = vand.u32 %v2767, 4294901760
        %v2769 = vsub.f32 %v2767, %v2768
        %v2770 = vand.u32 %v2769, 4294901760
        %2771 = vmatpush.msra.mxu0 %v2770
        %v2772 = vand.u32 %v837, 4294901760
        %v2773 = vsub.f32 %v837, %v2772
        %v2774 = vand.u32 %v2773, 4294901760
        %v2775 = vsub.f32 %v2773, %v2774
        %v2776 = vand.u32 %v2775, 4294901760
        %2777 = vmatpush.msra.mxu0 %v2776
        %v2778 = vand.u32 %v836, 4294901760
        %v2779 = vsub.f32 %v836, %v2778
        %v2780 = vand.u32 %v2779, 4294901760
        %v2781 = vsub.f32 %v2779, %v2780
        %v2782 = vand.u32 %v2781, 4294901760
        %2783 = vmatpush.msra.mxu0 %v2782
        %v2784 = vand.u32 %v835, 4294901760
        %v2785 = vsub.f32 %v835, %v2784
        %v2786 = vand.u32 %v2785, 4294901760
        %v2787 = vsub.f32 %v2785, %v2786
        %v2788 = vand.u32 %v2787, 4294901760
        %2789 = vmatpush.msra.mxu0 %v2788
        %v2790 = vand.u32 %v834, 4294901760
        %v2791 = vsub.f32 %v834, %v2790
        %v2792 = vand.u32 %v2791, 4294901760
        %v2793 = vsub.f32 %v2791, %v2792
        %v2794 = vand.u32 %v2793, 4294901760
        %2795 = vmatpush.msra.mxu0 %v2794
        %v2796 = vand.u32 %v833, 4294901760
        %v2797 = vsub.f32 %v833, %v2796
        %v2798 = vand.u32 %v2797, 4294901760
        %v2799 = vsub.f32 %v2797, %v2798
        %v2800 = vand.u32 %v2799, 4294901760
        %2801 = vmatpush.msra.mxu0 %v2800
        %v2802 = vand.u32 %v832, 4294901760
        %v2803 = vsub.f32 %v832, %v2802
        %v2804 = vand.u32 %v2803, 4294901760
        %v2805 = vsub.f32 %v2803, %v2804
        %v2806 = vand.u32 %v2805, 4294901760
        %2807 = vmatpush.msra.mxu0 %v2806
        %v2808 = vand.u32 %v721, 4294901760
        %2809 = vmatmul.f32.gmra.mxu0 %v2808
        %v2810 = vpop.f32.mrf.mxu0
        %v2811 = vadd.f32 %v2694, %v2810
        %v2812 = vand.u32 %v738, 4294901760
        %2813 = vmatmul.f32.gmra.mxu0 %v2812
        %v2814 = vpop.f32.mrf.mxu0
        %v2815 = vadd.f32 %v2702, %v2814
        %v2816 = vand.u32 %v755, 4294901760
        %2817 = vmatmul.f32.gmra.mxu0 %v2816
        %v2818 = vpop.f32.mrf.mxu0
        %v2819 = vadd.f32 %v2710, %v2818
        %2820 = vdwg.mxu0
        %v2821 = vand.u32 %v847, 4294901760
        %v2822 = vsub.f32 %v847, %v2821
        %2823 = vmatpush.msra.mxu0 %v2822
        %v2824 = vand.u32 %v846, 4294901760
        %v2825 = vsub.f32 %v846, %v2824
        %2826 = vmatpush.msra.mxu0 %v2825
        %v2827 = vand.u32 %v845, 4294901760
        %v2828 = vsub.f32 %v845, %v2827
        %2829 = vmatpush.msra.mxu0 %v2828
        %v2830 = vand.u32 %v844, 4294901760
        %v2831 = vsub.f32 %v844, %v2830
        %2832 = vmatpush.msra.mxu0 %v2831
        %v2833 = vand.u32 %v843, 4294901760
        %v2834 = vsub.f32 %v843, %v2833
        %2835 = vmatpush.msra.mxu0 %v2834
        %v2836 = vand.u32 %v842, 4294901760
        %v2837 = vsub.f32 %v842, %v2836
        %2838 = vmatpush.msra.mxu0 %v2837
        %v2839 = vand.u32 %v841, 4294901760
        %v2840 = vsub.f32 %v841, %v2839
        %2841 = vmatpush.msra.mxu0 %v2840
        %v2842 = vand.u32 %v840, 4294901760
        %v2843 = vsub.f32 %v840, %v2842
        %2844 = vmatpush.msra.mxu0 %v2843
        %v2845 = vand.u32 %v839, 4294901760
        %v2846 = vsub.f32 %v839, %v2845
        %2847 = vmatpush.msra.mxu0 %v2846
        %v2848 = vand.u32 %v838, 4294901760
        %v2849 = vsub.f32 %v838, %v2848
        %2850 = vmatpush.msra.mxu0 %v2849
        %v2851 = vand.u32 %v837, 4294901760
        %v2852 = vsub.f32 %v837, %v2851
        %2853 = vmatpush.msra.mxu0 %v2852
        %v2854 = vand.u32 %v836, 4294901760
        %v2855 = vsub.f32 %v836, %v2854
        %2856 = vmatpush.msra.mxu0 %v2855
        %v2857 = vand.u32 %v835, 4294901760
        %v2858 = vsub.f32 %v835, %v2857
        %2859 = vmatpush.msra.mxu0 %v2858
        %v2860 = vand.u32 %v834, 4294901760
        %v2861 = vsub.f32 %v834, %v2860
        %2862 = vmatpush.msra.mxu0 %v2861
        %v2863 = vand.u32 %v833, 4294901760
        %v2864 = vsub.f32 %v833, %v2863
        %2865 = vmatpush.msra.mxu0 %v2864
        %v2866 = vand.u32 %v832, 4294901760
        %v2867 = vsub.f32 %v832, %v2866
        %2868 = vmatpush.msra.mxu0 %v2867
        %v2869 = vand.u32 %v721, 4294901760
        %v2870 = vsub.f32 %v721, %v2869
        %2871 = vmatmul.f32.gmra.mxu0 %v2870
        %v2872 = vpop.f32.mrf.mxu0
        %v2873 = vadd.f32 %v2811, %v2872
        %v2874 = vand.u32 %v738, 4294901760
        %v2875 = vsub.f32 %v738, %v2874
        %2876 = vmatmul.f32.gmra.mxu0 %v2875
        %v2877 = vpop.f32.mrf.mxu0
        %v2878 = vadd.f32 %v2815, %v2877
        %v2879 = vand.u32 %v755, 4294901760
        %v2880 = vsub.f32 %v755, %v2879
        %2881 = vmatmul.f32.gmra.mxu0 %v2880
        %v2882 = vpop.f32.mrf.mxu0
        %v2883 = vadd.f32 %v2819, %v2882
        %2884 = vdwg.mxu0
        %v2885 = vand.u32 %v847, 4294901760
        %2886 = vmatpush.msra.mxu0 %v2885
        %v2887 = vand.u32 %v846, 4294901760
        %2888 = vmatpush.msra.mxu0 %v2887
        %v2889 = vand.u32 %v845, 4294901760
        %2890 = vmatpush.msra.mxu0 %v2889
        %v2891 = vand.u32 %v844, 4294901760
        %2892 = vmatpush.msra.mxu0 %v2891
        %v2893 = vand.u32 %v843, 4294901760
        %2894 = vmatpush.msra.mxu0 %v2893
        %v2895 = vand.u32 %v842, 4294901760
        %2896 = vmatpush.msra.mxu0 %v2895
        %v2897 = vand.u32 %v841, 4294901760
        %2898 = vmatpush.msra.mxu0 %v2897
        %v2899 = vand.u32 %v840, 4294901760
        %2900 = vmatpush.msra.mxu0 %v2899
        %v2901 = vand.u32 %v839, 4294901760
        %2902 = vmatpush.msra.mxu0 %v2901
        %v2903 = vand.u32 %v838, 4294901760
        %2904 = vmatpush.msra.mxu0 %v2903
        %v2905 = vand.u32 %v837, 4294901760
        %2906 = vmatpush.msra.mxu0 %v2905
        %v2907 = vand.u32 %v836, 4294901760
        %2908 = vmatpush.msra.mxu0 %v2907
        %v2909 = vand.u32 %v835, 4294901760
        %2910 = vmatpush.msra.mxu0 %v2909
        %v2911 = vand.u32 %v834, 4294901760
        %2912 = vmatpush.msra.mxu0 %v2911
        %v2913 = vand.u32 %v833, 4294901760
        %2914 = vmatpush.msra.mxu0 %v2913
        %v2915 = vand.u32 %v832, 4294901760
        %2916 = vmatpush.msra.mxu0 %v2915
        %v2917 = vand.u32 %v721, 4294901760
        %v2918 = vsub.f32 %v721, %v2917
        %v2919 = vand.u32 %v2918, 4294901760
        %2920 = vmatmul.f32.gmra.mxu0 %v2919
        %v2921 = vpop.f32.mrf.mxu0
        %v2922 = vadd.f32 %v2873, %v2921
        %v2923 = vand.u32 %v738, 4294901760
        %v2924 = vsub.f32 %v738, %v2923
        %v2925 = vand.u32 %v2924, 4294901760
        %2926 = vmatmul.f32.gmra.mxu0 %v2925
        %v2927 = vpop.f32.mrf.mxu0
        %v2928 = vadd.f32 %v2878, %v2927
        %v2929 = vand.u32 %v755, 4294901760
        %v2930 = vsub.f32 %v755, %v2929
        %v2931 = vand.u32 %v2930, 4294901760
        %2932 = vmatmul.f32.gmra.mxu0 %v2931
        %v2933 = vpop.f32.mrf.mxu0
        %v2934 = vadd.f32 %v2883, %v2933
        %2935 = vdwg.mxu0
        %v2936 = vand.u32 %v847, 4294901760
        %v2937 = vsub.f32 %v847, %v2936
        %v2938 = vand.u32 %v2937, 4294901760
        %2939 = vmatpush.msra.mxu0 %v2938
        %v2940 = vand.u32 %v846, 4294901760
        %v2941 = vsub.f32 %v846, %v2940
        %v2942 = vand.u32 %v2941, 4294901760
        %2943 = vmatpush.msra.mxu0 %v2942
        %v2944 = vand.u32 %v845, 4294901760
        %v2945 = vsub.f32 %v845, %v2944
        %v2946 = vand.u32 %v2945, 4294901760
        %2947 = vmatpush.msra.mxu0 %v2946
        %v2948 = vand.u32 %v844, 4294901760
        %v2949 = vsub.f32 %v844, %v2948
        %v2950 = vand.u32 %v2949, 4294901760
        %2951 = vmatpush.msra.mxu0 %v2950
        %v2952 = vand.u32 %v843, 4294901760
        %v2953 = vsub.f32 %v843, %v2952
        %v2954 = vand.u32 %v2953, 4294901760
        %2955 = vmatpush.msra.mxu0 %v2954
        %v2956 = vand.u32 %v842, 4294901760
        %v2957 = vsub.f32 %v842, %v2956
        %v2958 = vand.u32 %v2957, 4294901760
        %2959 = vmatpush.msra.mxu0 %v2958
        %v2960 = vand.u32 %v841, 4294901760
        %v2961 = vsub.f32 %v841, %v2960
        %v2962 = vand.u32 %v2961, 4294901760
        %2963 = vmatpush.msra.mxu0 %v2962
        %v2964 = vand.u32 %v840, 4294901760
        %v2965 = vsub.f32 %v840, %v2964
        %v2966 = vand.u32 %v2965, 4294901760
        %2967 = vmatpush.msra.mxu0 %v2966
        %v2968 = vand.u32 %v839, 4294901760
        %v2969 = vsub.f32 %v839, %v2968
        %v2970 = vand.u32 %v2969, 4294901760
        %2971 = vmatpush.msra.mxu0 %v2970
        %v2972 = vand.u32 %v838, 4294901760
        %v2973 = vsub.f32 %v838, %v2972
        %v2974 = vand.u32 %v2973, 4294901760
        %2975 = vmatpush.msra.mxu0 %v2974
        %v2976 = vand.u32 %v837, 4294901760
        %v2977 = vsub.f32 %v837, %v2976
        %v2978 = vand.u32 %v2977, 4294901760
        %2979 = vmatpush.msra.mxu0 %v2978
        %v2980 = vand.u32 %v836, 4294901760
        %v2981 = vsub.f32 %v836, %v2980
        %v2982 = vand.u32 %v2981, 4294901760
        %2983 = vmatpush.msra.mxu0 %v2982
        %v2984 = vand.u32 %v835, 4294901760
        %v2985 = vsub.f32 %v835, %v2984
        %v2986 = vand.u32 %v2985, 4294901760
        %2987 = vmatpush.msra.mxu0 %v2986
        %v2988 = vand.u32 %v834, 4294901760
        %v2989 = vsub.f32 %v834, %v2988
        %v2990 = vand.u32 %v2989, 4294901760
        %2991 = vmatpush.msra.mxu0 %v2990
        %v2992 = vand.u32 %v833, 4294901760
        %v2993 = vsub.f32 %v833, %v2992
        %v2994 = vand.u32 %v2993, 4294901760
        %2995 = vmatpush.msra.mxu0 %v2994
        %v2996 = vand.u32 %v832, 4294901760
        %v2997 = vsub.f32 %v832, %v2996
        %v2998 = vand.u32 %v2997, 4294901760
        %2999 = vmatpush.msra.mxu0 %v2998
        %v3000 = vand.u32 %v721, 4294901760
        %3001 = vmatmul.f32.gmra.mxu0 %v3000
        %v3002 = vpop.f32.mrf.mxu0
        %v3003 = vadd.f32 %v2922, %v3002
        %v3004 = vand.u32 %v738, 4294901760
        %3005 = vmatmul.f32.gmra.mxu0 %v3004
        %v3006 = vpop.f32.mrf.mxu0
        %v3007 = vadd.f32 %v2928, %v3006
        %v3008 = vand.u32 %v755, 4294901760
        %3009 = vmatmul.f32.gmra.mxu0 %v3008
        %v3010 = vpop.f32.mrf.mxu0
        %v3011 = vadd.f32 %v2934, %v3010
        %3012 = vdwg.mxu0
        %v3013 = vand.u32 %v847, 4294901760
        %3014 = vmatpush.msra.mxu0 %v3013
        %v3015 = vand.u32 %v846, 4294901760
        %3016 = vmatpush.msra.mxu0 %v3015
        %v3017 = vand.u32 %v845, 4294901760
        %3018 = vmatpush.msra.mxu0 %v3017
        %v3019 = vand.u32 %v844, 4294901760
        %3020 = vmatpush.msra.mxu0 %v3019
        %v3021 = vand.u32 %v843, 4294901760
        %3022 = vmatpush.msra.mxu0 %v3021
        %v3023 = vand.u32 %v842, 4294901760
        %3024 = vmatpush.msra.mxu0 %v3023
        %v3025 = vand.u32 %v841, 4294901760
        %3026 = vmatpush.msra.mxu0 %v3025
        %v3027 = vand.u32 %v840, 4294901760
        %3028 = vmatpush.msra.mxu0 %v3027
        %v3029 = vand.u32 %v839, 4294901760
        %3030 = vmatpush.msra.mxu0 %v3029
        %v3031 = vand.u32 %v838, 4294901760
        %3032 = vmatpush.msra.mxu0 %v3031
        %v3033 = vand.u32 %v837, 4294901760
        %3034 = vmatpush.msra.mxu0 %v3033
        %v3035 = vand.u32 %v836, 4294901760
        %3036 = vmatpush.msra.mxu0 %v3035
        %v3037 = vand.u32 %v835, 4294901760
        %3038 = vmatpush.msra.mxu0 %v3037
        %v3039 = vand.u32 %v834, 4294901760
        %3040 = vmatpush.msra.mxu0 %v3039
        %v3041 = vand.u32 %v833, 4294901760
        %3042 = vmatpush.msra.mxu0 %v3041
        %v3043 = vand.u32 %v832, 4294901760
        %3044 = vmatpush.msra.mxu0 %v3043
        %v3045 = vand.u32 %v721, 4294901760
        %3046 = vmatmul.f32.gmra.mxu0 %v3045
        %v3047 = vpop.f32.mrf.mxu0
        %v3048 = vadd.f32 %v3003, %v3047
        %v3049 = vand.u32 %v738, 4294901760
        %3050 = vmatmul.f32.gmra.mxu0 %v3049
        %v3051 = vpop.f32.mrf.mxu0
        %v3052 = vadd.f32 %v3007, %v3051
        %v3053 = vand.u32 %v755, 4294901760
        %3054 = vmatmul.f32.gmra.mxu0 %v3053
        %v3055 = vpop.f32.mrf.mxu0
        %v3056 = vadd.f32 %v3011, %v3055
        %3057 = vdwg.mxu0
        %v3058 = vand.u32 %v863, 4294901760
        %3059 = vmatpush.msra.mxu0 %v3058
        %v3060 = vand.u32 %v862, 4294901760
        %3061 = vmatpush.msra.mxu0 %v3060
        %v3062 = vand.u32 %v861, 4294901760
        %3063 = vmatpush.msra.mxu0 %v3062
        %v3064 = vand.u32 %v860, 4294901760
        %3065 = vmatpush.msra.mxu0 %v3064
        %v3066 = vand.u32 %v859, 4294901760
        %3067 = vmatpush.msra.mxu0 %v3066
        %v3068 = vand.u32 %v858, 4294901760
        %3069 = vmatpush.msra.mxu0 %v3068
        %v3070 = vand.u32 %v857, 4294901760
        %3071 = vmatpush.msra.mxu0 %v3070
        %v3072 = vand.u32 %v856, 4294901760
        %3073 = vmatpush.msra.mxu0 %v3072
        %v3074 = vand.u32 %v855, 4294901760
        %3075 = vmatpush.msra.mxu0 %v3074
        %v3076 = vand.u32 %v854, 4294901760
        %3077 = vmatpush.msra.mxu0 %v3076
        %v3078 = vand.u32 %v853, 4294901760
        %3079 = vmatpush.msra.mxu0 %v3078
        %v3080 = vand.u32 %v852, 4294901760
        %3081 = vmatpush.msra.mxu0 %v3080
        %v3082 = vand.u32 %v851, 4294901760
        %3083 = vmatpush.msra.mxu0 %v3082
        %v3084 = vand.u32 %v850, 4294901760
        %3085 = vmatpush.msra.mxu0 %v3084
        %v3086 = vand.u32 %v849, 4294901760
        %3087 = vmatpush.msra.mxu0 %v3086
        %v3088 = vand.u32 %v848, 4294901760
        %3089 = vmatpush.msra.mxu0 %v3088
        %v3090 = vand.u32 %v722, 4294901760
        %v3091 = vsub.f32 %v722, %v3090
        %v3092 = vand.u32 %v3091, 4294901760
        %v3093 = vsub.f32 %v3091, %v3092
        %v3094 = vand.u32 %v3093, 4294901760
        %3095 = vmatmul.f32.gmra.mxu0 %v3094
        %v3096 = vpop.f32.mrf.mxu0
        %v3097 = vadd.f32 %v3048, %v3096
        %v3098 = vand.u32 %v739, 4294901760
        %v3099 = vsub.f32 %v739, %v3098
        %v3100 = vand.u32 %v3099, 4294901760
        %v3101 = vsub.f32 %v3099, %v3100
        %v3102 = vand.u32 %v3101, 4294901760
        %3103 = vmatmul.f32.gmra.mxu0 %v3102
        %v3104 = vpop.f32.mrf.mxu0
        %v3105 = vadd.f32 %v3052, %v3104
        %v3106 = vand.u32 %v756, 4294901760
        %v3107 = vsub.f32 %v756, %v3106
        %v3108 = vand.u32 %v3107, 4294901760
        %v3109 = vsub.f32 %v3107, %v3108
        %v3110 = vand.u32 %v3109, 4294901760
        %3111 = vmatmul.f32.gmra.mxu0 %v3110
        %v3112 = vpop.f32.mrf.mxu0
        %v3113 = vadd.f32 %v3056, %v3112
        %3114 = vdwg.mxu0
        %v3115 = vand.u32 %v863, 4294901760
        %v3116 = vsub.f32 %v863, %v3115
        %v3117 = vand.u32 %v3116, 4294901760
        %v3118 = vsub.f32 %v3116, %v3117
        %v3119 = vand.u32 %v3118, 4294901760
        %3120 = vmatpush.msra.mxu0 %v3119
        %v3121 = vand.u32 %v862, 4294901760
        %v3122 = vsub.f32 %v862, %v3121
        %v3123 = vand.u32 %v3122, 4294901760
        %v3124 = vsub.f32 %v3122, %v3123
        %v3125 = vand.u32 %v3124, 4294901760
        %3126 = vmatpush.msra.mxu0 %v3125
        %v3127 = vand.u32 %v861, 4294901760
        %v3128 = vsub.f32 %v861, %v3127
        %v3129 = vand.u32 %v3128, 4294901760
        %v3130 = vsub.f32 %v3128, %v3129
        %v3131 = vand.u32 %v3130, 4294901760
        %3132 = vmatpush.msra.mxu0 %v3131
        %v3133 = vand.u32 %v860, 4294901760
        %v3134 = vsub.f32 %v860, %v3133
        %v3135 = vand.u32 %v3134, 4294901760
        %v3136 = vsub.f32 %v3134, %v3135
        %v3137 = vand.u32 %v3136, 4294901760
        %3138 = vmatpush.msra.mxu0 %v3137
        %v3139 = vand.u32 %v859, 4294901760
        %v3140 = vsub.f32 %v859, %v3139
        %v3141 = vand.u32 %v3140, 4294901760
        %v3142 = vsub.f32 %v3140, %v3141
        %v3143 = vand.u32 %v3142, 4294901760
        %3144 = vmatpush.msra.mxu0 %v3143
        %v3145 = vand.u32 %v858, 4294901760
        %v3146 = vsub.f32 %v858, %v3145
        %v3147 = vand.u32 %v3146, 4294901760
        %v3148 = vsub.f32 %v3146, %v3147
        %v3149 = vand.u32 %v3148, 4294901760
        %3150 = vmatpush.msra.mxu0 %v3149
        %v3151 = vand.u32 %v857, 4294901760
        %v3152 = vsub.f32 %v857, %v3151
        %v3153 = vand.u32 %v3152, 4294901760
        %v3154 = vsub.f32 %v3152, %v3153
        %v3155 = vand.u32 %v3154, 4294901760
        %3156 = vmatpush.msra.mxu0 %v3155
        %v3157 = vand.u32 %v856, 4294901760
        %v3158 = vsub.f32 %v856, %v3157
        %v3159 = vand.u32 %v3158, 4294901760
        %v3160 = vsub.f32 %v3158, %v3159
        %v3161 = vand.u32 %v3160, 4294901760
        %3162 = vmatpush.msra.mxu0 %v3161
        %v3163 = vand.u32 %v855, 4294901760
        %v3164 = vsub.f32 %v855, %v3163
        %v3165 = vand.u32 %v3164, 4294901760
        %v3166 = vsub.f32 %v3164, %v3165
        %v3167 = vand.u32 %v3166, 4294901760
        %3168 = vmatpush.msra.mxu0 %v3167
        %v3169 = vand.u32 %v854, 4294901760
        %v3170 = vsub.f32 %v854, %v3169
        %v3171 = vand.u32 %v3170, 4294901760
        %v3172 = vsub.f32 %v3170, %v3171
        %v3173 = vand.u32 %v3172, 4294901760
        %3174 = vmatpush.msra.mxu0 %v3173
        %v3175 = vand.u32 %v853, 4294901760
        %v3176 = vsub.f32 %v853, %v3175
        %v3177 = vand.u32 %v3176, 4294901760
        %v3178 = vsub.f32 %v3176, %v3177
        %v3179 = vand.u32 %v3178, 4294901760
        %3180 = vmatpush.msra.mxu0 %v3179
        %v3181 = vand.u32 %v852, 4294901760
        %v3182 = vsub.f32 %v852, %v3181
        %v3183 = vand.u32 %v3182, 4294901760
        %v3184 = vsub.f32 %v3182, %v3183
        %v3185 = vand.u32 %v3184, 4294901760
        %3186 = vmatpush.msra.mxu0 %v3185
        %v3187 = vand.u32 %v851, 4294901760
        %v3188 = vsub.f32 %v851, %v3187
        %v3189 = vand.u32 %v3188, 4294901760
        %v3190 = vsub.f32 %v3188, %v3189
        %v3191 = vand.u32 %v3190, 4294901760
        %3192 = vmatpush.msra.mxu0 %v3191
        %v3193 = vand.u32 %v850, 4294901760
        %v3194 = vsub.f32 %v850, %v3193
        %v3195 = vand.u32 %v3194, 4294901760
        %v3196 = vsub.f32 %v3194, %v3195
        %v3197 = vand.u32 %v3196, 4294901760
        %3198 = vmatpush.msra.mxu0 %v3197
        %v3199 = vand.u32 %v849, 4294901760
        %v3200 = vsub.f32 %v849, %v3199
        %v3201 = vand.u32 %v3200, 4294901760
        %v3202 = vsub.f32 %v3200, %v3201
        %v3203 = vand.u32 %v3202, 4294901760
        %3204 = vmatpush.msra.mxu0 %v3203
        %v3205 = vand.u32 %v848, 4294901760
        %v3206 = vsub.f32 %v848, %v3205
        %v3207 = vand.u32 %v3206, 4294901760
        %v3208 = vsub.f32 %v3206, %v3207
        %v3209 = vand.u32 %v3208, 4294901760
        %3210 = vmatpush.msra.mxu0 %v3209
        %v3211 = vand.u32 %v722, 4294901760
        %3212 = vmatmul.f32.gmra.mxu0 %v3211
        %v3213 = vpop.f32.mrf.mxu0
        %v3214 = vadd.f32 %v3097, %v3213
        %v3215 = vand.u32 %v739, 4294901760
        %3216 = vmatmul.f32.gmra.mxu0 %v3215
        %v3217 = vpop.f32.mrf.mxu0
        %v3218 = vadd.f32 %v3105, %v3217
        %v3219 = vand.u32 %v756, 4294901760
        %3220 = vmatmul.f32.gmra.mxu0 %v3219
        %v3221 = vpop.f32.mrf.mxu0
        %v3222 = vadd.f32 %v3113, %v3221
        %3223 = vdwg.mxu0
        %v3224 = vand.u32 %v863, 4294901760
        %v3225 = vsub.f32 %v863, %v3224
        %3226 = vmatpush.msra.mxu0 %v3225
        %v3227 = vand.u32 %v862, 4294901760
        %v3228 = vsub.f32 %v862, %v3227
        %3229 = vmatpush.msra.mxu0 %v3228
        %v3230 = vand.u32 %v861, 4294901760
        %v3231 = vsub.f32 %v861, %v3230
        %3232 = vmatpush.msra.mxu0 %v3231
        %v3233 = vand.u32 %v860, 4294901760
        %v3234 = vsub.f32 %v860, %v3233
        %3235 = vmatpush.msra.mxu0 %v3234
        %v3236 = vand.u32 %v859, 4294901760
        %v3237 = vsub.f32 %v859, %v3236
        %3238 = vmatpush.msra.mxu0 %v3237
        %v3239 = vand.u32 %v858, 4294901760
        %v3240 = vsub.f32 %v858, %v3239
        %3241 = vmatpush.msra.mxu0 %v3240
        %v3242 = vand.u32 %v857, 4294901760
        %v3243 = vsub.f32 %v857, %v3242
        %3244 = vmatpush.msra.mxu0 %v3243
        %v3245 = vand.u32 %v856, 4294901760
        %v3246 = vsub.f32 %v856, %v3245
        %3247 = vmatpush.msra.mxu0 %v3246
        %v3248 = vand.u32 %v855, 4294901760
        %v3249 = vsub.f32 %v855, %v3248
        %3250 = vmatpush.msra.mxu0 %v3249
        %v3251 = vand.u32 %v854, 4294901760
        %v3252 = vsub.f32 %v854, %v3251
        %3253 = vmatpush.msra.mxu0 %v3252
        %v3254 = vand.u32 %v853, 4294901760
        %v3255 = vsub.f32 %v853, %v3254
        %3256 = vmatpush.msra.mxu0 %v3255
        %v3257 = vand.u32 %v852, 4294901760
        %v3258 = vsub.f32 %v852, %v3257
        %3259 = vmatpush.msra.mxu0 %v3258
        %v3260 = vand.u32 %v851, 4294901760
        %v3261 = vsub.f32 %v851, %v3260
        %3262 = vmatpush.msra.mxu0 %v3261
        %v3263 = vand.u32 %v850, 4294901760
        %v3264 = vsub.f32 %v850, %v3263
        %3265 = vmatpush.msra.mxu0 %v3264
        %v3266 = vand.u32 %v849, 4294901760
        %v3267 = vsub.f32 %v849, %v3266
        %3268 = vmatpush.msra.mxu0 %v3267
        %v3269 = vand.u32 %v848, 4294901760
        %v3270 = vsub.f32 %v848, %v3269
        %3271 = vmatpush.msra.mxu0 %v3270
        %v3272 = vand.u32 %v722, 4294901760
        %v3273 = vsub.f32 %v722, %v3272
        %3274 = vmatmul.f32.gmra.mxu0 %v3273
        %v3275 = vpop.f32.mrf.mxu0
        %v3276 = vadd.f32 %v3214, %v3275
        %v3277 = vand.u32 %v739, 4294901760
        %v3278 = vsub.f32 %v739, %v3277
        %3279 = vmatmul.f32.gmra.mxu0 %v3278
        %v3280 = vpop.f32.mrf.mxu0
        %v3281 = vadd.f32 %v3218, %v3280
        %v3282 = vand.u32 %v756, 4294901760
        %v3283 = vsub.f32 %v756, %v3282
        %3284 = vmatmul.f32.gmra.mxu0 %v3283
        %v3285 = vpop.f32.mrf.mxu0
        %v3286 = vadd.f32 %v3222, %v3285
        %3287 = vdwg.mxu0
        %v3288 = vand.u32 %v863, 4294901760
        %3289 = vmatpush.msra.mxu0 %v3288
        %v3290 = vand.u32 %v862, 4294901760
        %3291 = vmatpush.msra.mxu0 %v3290
        %v3292 = vand.u32 %v861, 4294901760
        %3293 = vmatpush.msra.mxu0 %v3292
        %v3294 = vand.u32 %v860, 4294901760
        %3295 = vmatpush.msra.mxu0 %v3294
        %v3296 = vand.u32 %v859, 4294901760
        %3297 = vmatpush.msra.mxu0 %v3296
        %v3298 = vand.u32 %v858, 4294901760
        %3299 = vmatpush.msra.mxu0 %v3298
        %v3300 = vand.u32 %v857, 4294901760
        %3301 = vmatpush.msra.mxu0 %v3300
        %v3302 = vand.u32 %v856, 4294901760
        %3303 = vmatpush.msra.mxu0 %v3302
        %v3304 = vand.u32 %v855, 4294901760
        %3305 = vmatpush.msra.mxu0 %v3304
        %v3306 = vand.u32 %v854, 4294901760
        %3307 = vmatpush.msra.mxu0 %v3306
        %v3308 = vand.u32 %v853, 4294901760
        %3309 = vmatpush.msra.mxu0 %v3308
        %v3310 = vand.u32 %v852, 4294901760
        %3311 = vmatpush.msra.mxu0 %v3310
        %v3312 = vand.u32 %v851, 4294901760
        %3313 = vmatpush.msra.mxu0 %v3312
        %v3314 = vand.u32 %v850, 4294901760
        %3315 = vmatpush.msra.mxu0 %v3314
        %v3316 = vand.u32 %v849, 4294901760
        %3317 = vmatpush.msra.mxu0 %v3316
        %v3318 = vand.u32 %v848, 4294901760
        %3319 = vmatpush.msra.mxu0 %v3318
        %v3320 = vand.u32 %v722, 4294901760
        %v3321 = vsub.f32 %v722, %v3320
        %v3322 = vand.u32 %v3321, 4294901760
        %3323 = vmatmul.f32.gmra.mxu0 %v3322
        %v3324 = vpop.f32.mrf.mxu0
        %v3325 = vadd.f32 %v3276, %v3324
        %v3326 = vand.u32 %v739, 4294901760
        %v3327 = vsub.f32 %v739, %v3326
        %v3328 = vand.u32 %v3327, 4294901760
        %3329 = vmatmul.f32.gmra.mxu0 %v3328
        %v3330 = vpop.f32.mrf.mxu0
        %v3331 = vadd.f32 %v3281, %v3330
        %v3332 = vand.u32 %v756, 4294901760
        %v3333 = vsub.f32 %v756, %v3332
        %v3334 = vand.u32 %v3333, 4294901760
        %3335 = vmatmul.f32.gmra.mxu0 %v3334
        %v3336 = vpop.f32.mrf.mxu0
        %v3337 = vadd.f32 %v3286, %v3336
        %3338 = vdwg.mxu0
        %v3339 = vand.u32 %v863, 4294901760
        %v3340 = vsub.f32 %v863, %v3339
        %v3341 = vand.u32 %v3340, 4294901760
        %3342 = vmatpush.msra.mxu0 %v3341
        %v3343 = vand.u32 %v862, 4294901760
        %v3344 = vsub.f32 %v862, %v3343
        %v3345 = vand.u32 %v3344, 4294901760
        %3346 = vmatpush.msra.mxu0 %v3345
        %v3347 = vand.u32 %v861, 4294901760
        %v3348 = vsub.f32 %v861, %v3347
        %v3349 = vand.u32 %v3348, 4294901760
        %3350 = vmatpush.msra.mxu0 %v3349
        %v3351 = vand.u32 %v860, 4294901760
        %v3352 = vsub.f32 %v860, %v3351
        %v3353 = vand.u32 %v3352, 4294901760
        %3354 = vmatpush.msra.mxu0 %v3353
        %v3355 = vand.u32 %v859, 4294901760
        %v3356 = vsub.f32 %v859, %v3355
        %v3357 = vand.u32 %v3356, 4294901760
        %3358 = vmatpush.msra.mxu0 %v3357
        %v3359 = vand.u32 %v858, 4294901760
        %v3360 = vsub.f32 %v858, %v3359
        %v3361 = vand.u32 %v3360, 4294901760
        %3362 = vmatpush.msra.mxu0 %v3361
        %v3363 = vand.u32 %v857, 4294901760
        %v3364 = vsub.f32 %v857, %v3363
        %v3365 = vand.u32 %v3364, 4294901760
        %3366 = vmatpush.msra.mxu0 %v3365
        %v3367 = vand.u32 %v856, 4294901760
        %v3368 = vsub.f32 %v856, %v3367
        %v3369 = vand.u32 %v3368, 4294901760
        %3370 = vmatpush.msra.mxu0 %v3369
        %v3371 = vand.u32 %v855, 4294901760
        %v3372 = vsub.f32 %v855, %v3371
        %v3373 = vand.u32 %v3372, 4294901760
        %3374 = vmatpush.msra.mxu0 %v3373
        %v3375 = vand.u32 %v854, 4294901760
        %v3376 = vsub.f32 %v854, %v3375
        %v3377 = vand.u32 %v3376, 4294901760
        %3378 = vmatpush.msra.mxu0 %v3377
        %v3379 = vand.u32 %v853, 4294901760
        %v3380 = vsub.f32 %v853, %v3379
        %v3381 = vand.u32 %v3380, 4294901760
        %3382 = vmatpush.msra.mxu0 %v3381
        %v3383 = vand.u32 %v852, 4294901760
        %v3384 = vsub.f32 %v852, %v3383
        %v3385 = vand.u32 %v3384, 4294901760
        %3386 = vmatpush.msra.mxu0 %v3385
        %v3387 = vand.u32 %v851, 4294901760
        %v3388 = vsub.f32 %v851, %v3387
        %v3389 = vand.u32 %v3388, 4294901760
        %3390 = vmatpush.msra.mxu0 %v3389
        %v3391 = vand.u32 %v850, 4294901760
        %v3392 = vsub.f32 %v850, %v3391
        %v3393 = vand.u32 %v3392, 4294901760
        %3394 = vmatpush.msra.mxu0 %v3393
        %v3395 = vand.u32 %v849, 4294901760
        %v3396 = vsub.f32 %v849, %v3395
        %v3397 = vand.u32 %v3396, 4294901760
        %3398 = vmatpush.msra.mxu0 %v3397
        %v3399 = vand.u32 %v848, 4294901760
        %v3400 = vsub.f32 %v848, %v3399
        %v3401 = vand.u32 %v3400, 4294901760
        %3402 = vmatpush.msra.mxu0 %v3401
        %v3403 = vand.u32 %v722, 4294901760
        %3404 = vmatmul.f32.gmra.mxu0 %v3403
        %v3405 = vpop.f32.mrf.mxu0
        %v3406 = vadd.f32 %v3325, %v3405
        %v3407 = vand.u32 %v739, 4294901760
        %3408 = vmatmul.f32.gmra.mxu0 %v3407
        %v3409 = vpop.f32.mrf.mxu0
        %v3410 = vadd.f32 %v3331, %v3409
        %v3411 = vand.u32 %v756, 4294901760
        %3412 = vmatmul.f32.gmra.mxu0 %v3411
        %v3413 = vpop.f32.mrf.mxu0
        %v3414 = vadd.f32 %v3337, %v3413
        %3415 = vdwg.mxu0
        %v3416 = vand.u32 %v863, 4294901760
        %3417 = vmatpush.msra.mxu0 %v3416
        %v3418 = vand.u32 %v862, 4294901760
        %3419 = vmatpush.msra.mxu0 %v3418
        %v3420 = vand.u32 %v861, 4294901760
        %3421 = vmatpush.msra.mxu0 %v3420
        %v3422 = vand.u32 %v860, 4294901760
        %3423 = vmatpush.msra.mxu0 %v3422
        %v3424 = vand.u32 %v859, 4294901760
        %3425 = vmatpush.msra.mxu0 %v3424
        %v3426 = vand.u32 %v858, 4294901760
        %3427 = vmatpush.msra.mxu0 %v3426
        %v3428 = vand.u32 %v857, 4294901760
        %3429 = vmatpush.msra.mxu0 %v3428
        %v3430 = vand.u32 %v856, 4294901760
        %3431 = vmatpush.msra.mxu0 %v3430
        %v3432 = vand.u32 %v855, 4294901760
        %3433 = vmatpush.msra.mxu0 %v3432
        %v3434 = vand.u32 %v854, 4294901760
        %3435 = vmatpush.msra.mxu0 %v3434
        %v3436 = vand.u32 %v853, 4294901760
        %3437 = vmatpush.msra.mxu0 %v3436
        %v3438 = vand.u32 %v852, 4294901760
        %3439 = vmatpush.msra.mxu0 %v3438
        %v3440 = vand.u32 %v851, 4294901760
        %3441 = vmatpush.msra.mxu0 %v3440
        %v3442 = vand.u32 %v850, 4294901760
        %3443 = vmatpush.msra.mxu0 %v3442
        %v3444 = vand.u32 %v849, 4294901760
        %3445 = vmatpush.msra.mxu0 %v3444
        %v3446 = vand.u32 %v848, 4294901760
        %3447 = vmatpush.msra.mxu0 %v3446
        %v3448 = vand.u32 %v722, 4294901760
        %3449 = vmatmul.f32.gmra.mxu0 %v3448
        %v3450 = vpop.f32.mrf.mxu0
        %v3451 = vadd.f32 %v3406, %v3450
        %v3452 = vand.u32 %v739, 4294901760
        %3453 = vmatmul.f32.gmra.mxu0 %v3452
        %v3454 = vpop.f32.mrf.mxu0
        %v3455 = vadd.f32 %v3410, %v3454
        %v3456 = vand.u32 %v756, 4294901760
        %3457 = vmatmul.f32.gmra.mxu0 %v3456
        %v3458 = vpop.f32.mrf.mxu0
        %v3459 = vadd.f32 %v3414, %v3458
        %3460 = vdwg.mxu0
        %v3461 = vand.u32 %v879, 4294901760
        %3462 = vmatpush.msra.mxu0 %v3461
        %v3463 = vand.u32 %v878, 4294901760
        %3464 = vmatpush.msra.mxu0 %v3463
        %v3465 = vand.u32 %v877, 4294901760
        %3466 = vmatpush.msra.mxu0 %v3465
        %v3467 = vand.u32 %v876, 4294901760
        %3468 = vmatpush.msra.mxu0 %v3467
        %v3469 = vand.u32 %v875, 4294901760
        %3470 = vmatpush.msra.mxu0 %v3469
        %v3471 = vand.u32 %v874, 4294901760
        %3472 = vmatpush.msra.mxu0 %v3471
        %v3473 = vand.u32 %v873, 4294901760
        %3474 = vmatpush.msra.mxu0 %v3473
        %v3475 = vand.u32 %v872, 4294901760
        %3476 = vmatpush.msra.mxu0 %v3475
        %v3477 = vand.u32 %v871, 4294901760
        %3478 = vmatpush.msra.mxu0 %v3477
        %v3479 = vand.u32 %v870, 4294901760
        %3480 = vmatpush.msra.mxu0 %v3479
        %v3481 = vand.u32 %v869, 4294901760
        %3482 = vmatpush.msra.mxu0 %v3481
        %v3483 = vand.u32 %v868, 4294901760
        %3484 = vmatpush.msra.mxu0 %v3483
        %v3485 = vand.u32 %v867, 4294901760
        %3486 = vmatpush.msra.mxu0 %v3485
        %v3487 = vand.u32 %v866, 4294901760
        %3488 = vmatpush.msra.mxu0 %v3487
        %v3489 = vand.u32 %v865, 4294901760
        %3490 = vmatpush.msra.mxu0 %v3489
        %v3491 = vand.u32 %v864, 4294901760
        %3492 = vmatpush.msra.mxu0 %v3491
        %v3493 = vand.u32 %v723, 4294901760
        %v3494 = vsub.f32 %v723, %v3493
        %v3495 = vand.u32 %v3494, 4294901760
        %v3496 = vsub.f32 %v3494, %v3495
        %v3497 = vand.u32 %v3496, 4294901760
        %3498 = vmatmul.f32.gmra.mxu0 %v3497
        %v3499 = vpop.f32.mrf.mxu0
        %v3500 = vadd.f32 %v3451, %v3499
        %v3501 = vand.u32 %v740, 4294901760
        %v3502 = vsub.f32 %v740, %v3501
        %v3503 = vand.u32 %v3502, 4294901760
        %v3504 = vsub.f32 %v3502, %v3503
        %v3505 = vand.u32 %v3504, 4294901760
        %3506 = vmatmul.f32.gmra.mxu0 %v3505
        %v3507 = vpop.f32.mrf.mxu0
        %v3508 = vadd.f32 %v3455, %v3507
        %v3509 = vand.u32 %v757, 4294901760
        %v3510 = vsub.f32 %v757, %v3509
        %v3511 = vand.u32 %v3510, 4294901760
        %v3512 = vsub.f32 %v3510, %v3511
        %v3513 = vand.u32 %v3512, 4294901760
        %3514 = vmatmul.f32.gmra.mxu0 %v3513
        %v3515 = vpop.f32.mrf.mxu0
        %v3516 = vadd.f32 %v3459, %v3515
        %3517 = vdwg.mxu0
        %v3518 = vand.u32 %v879, 4294901760
        %v3519 = vsub.f32 %v879, %v3518
        %v3520 = vand.u32 %v3519, 4294901760
        %v3521 = vsub.f32 %v3519, %v3520
        %v3522 = vand.u32 %v3521, 4294901760
        %3523 = vmatpush.msra.mxu0 %v3522
        %v3524 = vand.u32 %v878, 4294901760
        %v3525 = vsub.f32 %v878, %v3524
        %v3526 = vand.u32 %v3525, 4294901760
        %v3527 = vsub.f32 %v3525, %v3526
        %v3528 = vand.u32 %v3527, 4294901760
        %3529 = vmatpush.msra.mxu0 %v3528
        %v3530 = vand.u32 %v877, 4294901760
        %v3531 = vsub.f32 %v877, %v3530
        %v3532 = vand.u32 %v3531, 4294901760
        %v3533 = vsub.f32 %v3531, %v3532
        %v3534 = vand.u32 %v3533, 4294901760
        %3535 = vmatpush.msra.mxu0 %v3534
        %v3536 = vand.u32 %v876, 4294901760
        %v3537 = vsub.f32 %v876, %v3536
        %v3538 = vand.u32 %v3537, 4294901760
        %v3539 = vsub.f32 %v3537, %v3538
        %v3540 = vand.u32 %v3539, 4294901760
        %3541 = vmatpush.msra.mxu0 %v3540
        %v3542 = vand.u32 %v875, 4294901760
        %v3543 = vsub.f32 %v875, %v3542
        %v3544 = vand.u32 %v3543, 4294901760
        %v3545 = vsub.f32 %v3543, %v3544
        %v3546 = vand.u32 %v3545, 4294901760
        %3547 = vmatpush.msra.mxu0 %v3546
        %v3548 = vand.u32 %v874, 4294901760
        %v3549 = vsub.f32 %v874, %v3548
        %v3550 = vand.u32 %v3549, 4294901760
        %v3551 = vsub.f32 %v3549, %v3550
        %v3552 = vand.u32 %v3551, 4294901760
        %3553 = vmatpush.msra.mxu0 %v3552
        %v3554 = vand.u32 %v873, 4294901760
        %v3555 = vsub.f32 %v873, %v3554
        %v3556 = vand.u32 %v3555, 4294901760
        %v3557 = vsub.f32 %v3555, %v3556
        %v3558 = vand.u32 %v3557, 4294901760
        %3559 = vmatpush.msra.mxu0 %v3558
        %v3560 = vand.u32 %v872, 4294901760
        %v3561 = vsub.f32 %v872, %v3560
        %v3562 = vand.u32 %v3561, 4294901760
        %v3563 = vsub.f32 %v3561, %v3562
        %v3564 = vand.u32 %v3563, 4294901760
        %3565 = vmatpush.msra.mxu0 %v3564
        %v3566 = vand.u32 %v871, 4294901760
        %v3567 = vsub.f32 %v871, %v3566
        %v3568 = vand.u32 %v3567, 4294901760
        %v3569 = vsub.f32 %v3567, %v3568
        %v3570 = vand.u32 %v3569, 4294901760
        %3571 = vmatpush.msra.mxu0 %v3570
        %v3572 = vand.u32 %v870, 4294901760
        %v3573 = vsub.f32 %v870, %v3572
        %v3574 = vand.u32 %v3573, 4294901760
        %v3575 = vsub.f32 %v3573, %v3574
        %v3576 = vand.u32 %v3575, 4294901760
        %3577 = vmatpush.msra.mxu0 %v3576
        %v3578 = vand.u32 %v869, 4294901760
        %v3579 = vsub.f32 %v869, %v3578
        %v3580 = vand.u32 %v3579, 4294901760
        %v3581 = vsub.f32 %v3579, %v3580
        %v3582 = vand.u32 %v3581, 4294901760
        %3583 = vmatpush.msra.mxu0 %v3582
        %v3584 = vand.u32 %v868, 4294901760
        %v3585 = vsub.f32 %v868, %v3584
        %v3586 = vand.u32 %v3585, 4294901760
        %v3587 = vsub.f32 %v3585, %v3586
        %v3588 = vand.u32 %v3587, 4294901760
        %3589 = vmatpush.msra.mxu0 %v3588
        %v3590 = vand.u32 %v867, 4294901760
        %v3591 = vsub.f32 %v867, %v3590
        %v3592 = vand.u32 %v3591, 4294901760
        %v3593 = vsub.f32 %v3591, %v3592
        %v3594 = vand.u32 %v3593, 4294901760
        %3595 = vmatpush.msra.mxu0 %v3594
        %v3596 = vand.u32 %v866, 4294901760
        %v3597 = vsub.f32 %v866, %v3596
        %v3598 = vand.u32 %v3597, 4294901760
        %v3599 = vsub.f32 %v3597, %v3598
        %v3600 = vand.u32 %v3599, 4294901760
        %3601 = vmatpush.msra.mxu0 %v3600
        %v3602 = vand.u32 %v865, 4294901760
        %v3603 = vsub.f32 %v865, %v3602
        %v3604 = vand.u32 %v3603, 4294901760
        %v3605 = vsub.f32 %v3603, %v3604
        %v3606 = vand.u32 %v3605, 4294901760
        %3607 = vmatpush.msra.mxu0 %v3606
        %v3608 = vand.u32 %v864, 4294901760
        %v3609 = vsub.f32 %v864, %v3608
        %v3610 = vand.u32 %v3609, 4294901760
        %v3611 = vsub.f32 %v3609, %v3610
        %v3612 = vand.u32 %v3611, 4294901760
        %3613 = vmatpush.msra.mxu0 %v3612
        %v3614 = vand.u32 %v723, 4294901760
        %3615 = vmatmul.f32.gmra.mxu0 %v3614
        %v3616 = vpop.f32.mrf.mxu0
        %v3617 = vadd.f32 %v3500, %v3616
        %v3618 = vand.u32 %v740, 4294901760
        %3619 = vmatmul.f32.gmra.mxu0 %v3618
        %v3620 = vpop.f32.mrf.mxu0
        %v3621 = vadd.f32 %v3508, %v3620
        %v3622 = vand.u32 %v757, 4294901760
        %3623 = vmatmul.f32.gmra.mxu0 %v3622
        %v3624 = vpop.f32.mrf.mxu0
        %v3625 = vadd.f32 %v3516, %v3624
        %3626 = vdwg.mxu0
        %v3627 = vand.u32 %v879, 4294901760
        %v3628 = vsub.f32 %v879, %v3627
        %3629 = vmatpush.msra.mxu0 %v3628
        %v3630 = vand.u32 %v878, 4294901760
        %v3631 = vsub.f32 %v878, %v3630
        %3632 = vmatpush.msra.mxu0 %v3631
        %v3633 = vand.u32 %v877, 4294901760
        %v3634 = vsub.f32 %v877, %v3633
        %3635 = vmatpush.msra.mxu0 %v3634
        %v3636 = vand.u32 %v876, 4294901760
        %v3637 = vsub.f32 %v876, %v3636
        %3638 = vmatpush.msra.mxu0 %v3637
        %v3639 = vand.u32 %v875, 4294901760
        %v3640 = vsub.f32 %v875, %v3639
        %3641 = vmatpush.msra.mxu0 %v3640
        %v3642 = vand.u32 %v874, 4294901760
        %v3643 = vsub.f32 %v874, %v3642
        %3644 = vmatpush.msra.mxu0 %v3643
        %v3645 = vand.u32 %v873, 4294901760
        %v3646 = vsub.f32 %v873, %v3645
        %3647 = vmatpush.msra.mxu0 %v3646
        %v3648 = vand.u32 %v872, 4294901760
        %v3649 = vsub.f32 %v872, %v3648
        %3650 = vmatpush.msra.mxu0 %v3649
        %v3651 = vand.u32 %v871, 4294901760
        %v3652 = vsub.f32 %v871, %v3651
        %3653 = vmatpush.msra.mxu0 %v3652
        %v3654 = vand.u32 %v870, 4294901760
        %v3655 = vsub.f32 %v870, %v3654
        %3656 = vmatpush.msra.mxu0 %v3655
        %v3657 = vand.u32 %v869, 4294901760
        %v3658 = vsub.f32 %v869, %v3657
        %3659 = vmatpush.msra.mxu0 %v3658
        %v3660 = vand.u32 %v868, 4294901760
        %v3661 = vsub.f32 %v868, %v3660
        %3662 = vmatpush.msra.mxu0 %v3661
        %v3663 = vand.u32 %v867, 4294901760
        %v3664 = vsub.f32 %v867, %v3663
        %3665 = vmatpush.msra.mxu0 %v3664
        %v3666 = vand.u32 %v866, 4294901760
        %v3667 = vsub.f32 %v866, %v3666
        %3668 = vmatpush.msra.mxu0 %v3667
        %v3669 = vand.u32 %v865, 4294901760
        %v3670 = vsub.f32 %v865, %v3669
        %3671 = vmatpush.msra.mxu0 %v3670
        %v3672 = vand.u32 %v864, 4294901760
        %v3673 = vsub.f32 %v864, %v3672
        %3674 = vmatpush.msra.mxu0 %v3673
        %v3675 = vand.u32 %v723, 4294901760
        %v3676 = vsub.f32 %v723, %v3675
        %3677 = vmatmul.f32.gmra.mxu0 %v3676
        %v3678 = vpop.f32.mrf.mxu0
        %v3679 = vadd.f32 %v3617, %v3678
        %v3680 = vand.u32 %v740, 4294901760
        %v3681 = vsub.f32 %v740, %v3680
        %3682 = vmatmul.f32.gmra.mxu0 %v3681
        %v3683 = vpop.f32.mrf.mxu0
        %v3684 = vadd.f32 %v3621, %v3683
        %v3685 = vand.u32 %v757, 4294901760
        %v3686 = vsub.f32 %v757, %v3685
        %3687 = vmatmul.f32.gmra.mxu0 %v3686
        %v3688 = vpop.f32.mrf.mxu0
        %v3689 = vadd.f32 %v3625, %v3688
        %3690 = vdwg.mxu0
        %v3691 = vand.u32 %v879, 4294901760
        %3692 = vmatpush.msra.mxu0 %v3691
        %v3693 = vand.u32 %v878, 4294901760
        %3694 = vmatpush.msra.mxu0 %v3693
        %v3695 = vand.u32 %v877, 4294901760
        %3696 = vmatpush.msra.mxu0 %v3695
        %v3697 = vand.u32 %v876, 4294901760
        %3698 = vmatpush.msra.mxu0 %v3697
        %v3699 = vand.u32 %v875, 4294901760
        %3700 = vmatpush.msra.mxu0 %v3699
        %v3701 = vand.u32 %v874, 4294901760
        %3702 = vmatpush.msra.mxu0 %v3701
        %v3703 = vand.u32 %v873, 4294901760
        %3704 = vmatpush.msra.mxu0 %v3703
        %v3705 = vand.u32 %v872, 4294901760
        %3706 = vmatpush.msra.mxu0 %v3705
        %v3707 = vand.u32 %v871, 4294901760
        %3708 = vmatpush.msra.mxu0 %v3707
        %v3709 = vand.u32 %v870, 4294901760
        %3710 = vmatpush.msra.mxu0 %v3709
        %v3711 = vand.u32 %v869, 4294901760
        %3712 = vmatpush.msra.mxu0 %v3711
        %v3713 = vand.u32 %v868, 4294901760
        %3714 = vmatpush.msra.mxu0 %v3713
        %v3715 = vand.u32 %v867, 4294901760
        %3716 = vmatpush.msra.mxu0 %v3715
        %v3717 = vand.u32 %v866, 4294901760
        %3718 = vmatpush.msra.mxu0 %v3717
        %v3719 = vand.u32 %v865, 4294901760
        %3720 = vmatpush.msra.mxu0 %v3719
        %v3721 = vand.u32 %v864, 4294901760
        %3722 = vmatpush.msra.mxu0 %v3721
        %v3723 = vand.u32 %v723, 4294901760
        %v3724 = vsub.f32 %v723, %v3723
        %v3725 = vand.u32 %v3724, 4294901760
        %3726 = vmatmul.f32.gmra.mxu0 %v3725
        %v3727 = vpop.f32.mrf.mxu0
        %v3728 = vadd.f32 %v3679, %v3727
        %v3729 = vand.u32 %v740, 4294901760
        %v3730 = vsub.f32 %v740, %v3729
        %v3731 = vand.u32 %v3730, 4294901760
        %3732 = vmatmul.f32.gmra.mxu0 %v3731
        %v3733 = vpop.f32.mrf.mxu0
        %v3734 = vadd.f32 %v3684, %v3733
        %v3735 = vand.u32 %v757, 4294901760
        %v3736 = vsub.f32 %v757, %v3735
        %v3737 = vand.u32 %v3736, 4294901760
        %3738 = vmatmul.f32.gmra.mxu0 %v3737
        %v3739 = vpop.f32.mrf.mxu0
        %v3740 = vadd.f32 %v3689, %v3739
        %3741 = vdwg.mxu0
        %v3742 = vand.u32 %v879, 4294901760
        %v3743 = vsub.f32 %v879, %v3742
        %v3744 = vand.u32 %v3743, 4294901760
        %3745 = vmatpush.msra.mxu0 %v3744
        %v3746 = vand.u32 %v878, 4294901760
        %v3747 = vsub.f32 %v878, %v3746
        %v3748 = vand.u32 %v3747, 4294901760
        %3749 = vmatpush.msra.mxu0 %v3748
        %v3750 = vand.u32 %v877, 4294901760
        %v3751 = vsub.f32 %v877, %v3750
        %v3752 = vand.u32 %v3751, 4294901760
        %3753 = vmatpush.msra.mxu0 %v3752
        %v3754 = vand.u32 %v876, 4294901760
        %v3755 = vsub.f32 %v876, %v3754
        %v3756 = vand.u32 %v3755, 4294901760
        %3757 = vmatpush.msra.mxu0 %v3756
        %v3758 = vand.u32 %v875, 4294901760
        %v3759 = vsub.f32 %v875, %v3758
        %v3760 = vand.u32 %v3759, 4294901760
        %3761 = vmatpush.msra.mxu0 %v3760
        %v3762 = vand.u32 %v874, 4294901760
        %v3763 = vsub.f32 %v874, %v3762
        %v3764 = vand.u32 %v3763, 4294901760
        %3765 = vmatpush.msra.mxu0 %v3764
        %v3766 = vand.u32 %v873, 4294901760
        %v3767 = vsub.f32 %v873, %v3766
        %v3768 = vand.u32 %v3767, 4294901760
        %3769 = vmatpush.msra.mxu0 %v3768
        %v3770 = vand.u32 %v872, 4294901760
        %v3771 = vsub.f32 %v872, %v3770
        %v3772 = vand.u32 %v3771, 4294901760
        %3773 = vmatpush.msra.mxu0 %v3772
        %v3774 = vand.u32 %v871, 4294901760
        %v3775 = vsub.f32 %v871, %v3774
        %v3776 = vand.u32 %v3775, 4294901760
        %3777 = vmatpush.msra.mxu0 %v3776
        %v3778 = vand.u32 %v870, 4294901760
        %v3779 = vsub.f32 %v870, %v3778
        %v3780 = vand.u32 %v3779, 4294901760
        %3781 = vmatpush.msra.mxu0 %v3780
        %v3782 = vand.u32 %v869, 4294901760
        %v3783 = vsub.f32 %v869, %v3782
        %v3784 = vand.u32 %v3783, 4294901760
        %3785 = vmatpush.msra.mxu0 %v3784
        %v3786 = vand.u32 %v868, 4294901760
        %v3787 = vsub.f32 %v868, %v3786
        %v3788 = vand.u32 %v3787, 4294901760
        %3789 = vmatpush.msra.mxu0 %v3788
        %v3790 = vand.u32 %v867, 4294901760
        %v3791 = vsub.f32 %v867, %v3790
        %v3792 = vand.u32 %v3791, 4294901760
        %3793 = vmatpush.msra.mxu0 %v3792
        %v3794 = vand.u32 %v866, 4294901760
        %v3795 = vsub.f32 %v866, %v3794
        %v3796 = vand.u32 %v3795, 4294901760
        %3797 = vmatpush.msra.mxu0 %v3796
        %v3798 = vand.u32 %v865, 4294901760
        %v3799 = vsub.f32 %v865, %v3798
        %v3800 = vand.u32 %v3799, 4294901760
        %3801 = vmatpush.msra.mxu0 %v3800
        %v3802 = vand.u32 %v864, 4294901760
        %v3803 = vsub.f32 %v864, %v3802
        %v3804 = vand.u32 %v3803, 4294901760
        %3805 = vmatpush.msra.mxu0 %v3804
        %v3806 = vand.u32 %v723, 4294901760
        %3807 = vmatmul.f32.gmra.mxu0 %v3806
        %v3808 = vpop.f32.mrf.mxu0
        %v3809 = vadd.f32 %v3728, %v3808
        %v3810 = vand.u32 %v740, 4294901760
        %3811 = vmatmul.f32.gmra.mxu0 %v3810
        %v3812 = vpop.f32.mrf.mxu0
        %v3813 = vadd.f32 %v3734, %v3812
        %v3814 = vand.u32 %v757, 4294901760
        %3815 = vmatmul.f32.gmra.mxu0 %v3814
        %v3816 = vpop.f32.mrf.mxu0
        %v3817 = vadd.f32 %v3740, %v3816
        %3818 = vdwg.mxu0
        %v3819 = vand.u32 %v879, 4294901760
        %3820 = vmatpush.msra.mxu0 %v3819
        %v3821 = vand.u32 %v878, 4294901760
        %3822 = vmatpush.msra.mxu0 %v3821
        %v3823 = vand.u32 %v877, 4294901760
        %3824 = vmatpush.msra.mxu0 %v3823
        %v3825 = vand.u32 %v876, 4294901760
        %3826 = vmatpush.msra.mxu0 %v3825
        %v3827 = vand.u32 %v875, 4294901760
        %3828 = vmatpush.msra.mxu0 %v3827
        %v3829 = vand.u32 %v874, 4294901760
        %3830 = vmatpush.msra.mxu0 %v3829
        %v3831 = vand.u32 %v873, 4294901760
        %3832 = vmatpush.msra.mxu0 %v3831
        %v3833 = vand.u32 %v872, 4294901760
        %3834 = vmatpush.msra.mxu0 %v3833
        %v3835 = vand.u32 %v871, 4294901760
        %3836 = vmatpush.msra.mxu0 %v3835
        %v3837 = vand.u32 %v870, 4294901760
        %3838 = vmatpush.msra.mxu0 %v3837
        %v3839 = vand.u32 %v869, 4294901760
        %3840 = vmatpush.msra.mxu0 %v3839
        %v3841 = vand.u32 %v868, 4294901760
        %3842 = vmatpush.msra.mxu0 %v3841
        %v3843 = vand.u32 %v867, 4294901760
        %3844 = vmatpush.msra.mxu0 %v3843
        %v3845 = vand.u32 %v866, 4294901760
        %3846 = vmatpush.msra.mxu0 %v3845
        %v3847 = vand.u32 %v865, 4294901760
        %3848 = vmatpush.msra.mxu0 %v3847
        %v3849 = vand.u32 %v864, 4294901760
        %3850 = vmatpush.msra.mxu0 %v3849
        %v3851 = vand.u32 %v723, 4294901760
        %3852 = vmatmul.f32.gmra.mxu0 %v3851
        %v3853 = vpop.f32.mrf.mxu0
        %v3854 = vadd.f32 %v3809, %v3853
        %v3855 = vand.u32 %v740, 4294901760
        %3856 = vmatmul.f32.gmra.mxu0 %v3855
        %v3857 = vpop.f32.mrf.mxu0
        %v3858 = vadd.f32 %v3813, %v3857
        %v3859 = vand.u32 %v757, 4294901760
        %3860 = vmatmul.f32.gmra.mxu0 %v3859
        %v3861 = vpop.f32.mrf.mxu0
        %v3862 = vadd.f32 %v3817, %v3861
        %3863 = vdwg.mxu0
        %v3864 = vand.u32 %v895, 4294901760
        %3865 = vmatpush.msra.mxu0 %v3864
        %v3866 = vand.u32 %v894, 4294901760
        %3867 = vmatpush.msra.mxu0 %v3866
        %v3868 = vand.u32 %v893, 4294901760
        %3869 = vmatpush.msra.mxu0 %v3868
        %v3870 = vand.u32 %v892, 4294901760
        %3871 = vmatpush.msra.mxu0 %v3870
        %v3872 = vand.u32 %v891, 4294901760
        %3873 = vmatpush.msra.mxu0 %v3872
        %v3874 = vand.u32 %v890, 4294901760
        %3875 = vmatpush.msra.mxu0 %v3874
        %v3876 = vand.u32 %v889, 4294901760
        %3877 = vmatpush.msra.mxu0 %v3876
        %v3878 = vand.u32 %v888, 4294901760
        %3879 = vmatpush.msra.mxu0 %v3878
        %v3880 = vand.u32 %v887, 4294901760
        %3881 = vmatpush.msra.mxu0 %v3880
        %v3882 = vand.u32 %v886, 4294901760
        %3883 = vmatpush.msra.mxu0 %v3882
        %v3884 = vand.u32 %v885, 4294901760
        %3885 = vmatpush.msra.mxu0 %v3884
        %v3886 = vand.u32 %v884, 4294901760
        %3887 = vmatpush.msra.mxu0 %v3886
        %v3888 = vand.u32 %v883, 4294901760
        %3889 = vmatpush.msra.mxu0 %v3888
        %v3890 = vand.u32 %v882, 4294901760
        %3891 = vmatpush.msra.mxu0 %v3890
        %v3892 = vand.u32 %v881, 4294901760
        %3893 = vmatpush.msra.mxu0 %v3892
        %v3894 = vand.u32 %v880, 4294901760
        %3895 = vmatpush.msra.mxu0 %v3894
        %v3896 = vand.u32 %v724, 4294901760
        %v3897 = vsub.f32 %v724, %v3896
        %v3898 = vand.u32 %v3897, 4294901760
        %v3899 = vsub.f32 %v3897, %v3898
        %v3900 = vand.u32 %v3899, 4294901760
        %3901 = vmatmul.f32.gmra.mxu0 %v3900
        %v3902 = vpop.f32.mrf.mxu0
        %v3903 = vadd.f32 %v3854, %v3902
        %v3904 = vand.u32 %v741, 4294901760
        %v3905 = vsub.f32 %v741, %v3904
        %v3906 = vand.u32 %v3905, 4294901760
        %v3907 = vsub.f32 %v3905, %v3906
        %v3908 = vand.u32 %v3907, 4294901760
        %3909 = vmatmul.f32.gmra.mxu0 %v3908
        %v3910 = vpop.f32.mrf.mxu0
        %v3911 = vadd.f32 %v3858, %v3910
        %v3912 = vand.u32 %v758, 4294901760
        %v3913 = vsub.f32 %v758, %v3912
        %v3914 = vand.u32 %v3913, 4294901760
        %v3915 = vsub.f32 %v3913, %v3914
        %v3916 = vand.u32 %v3915, 4294901760
        %3917 = vmatmul.f32.gmra.mxu0 %v3916
        %v3918 = vpop.f32.mrf.mxu0
        %v3919 = vadd.f32 %v3862, %v3918
        %3920 = vdwg.mxu0
        %v3921 = vand.u32 %v895, 4294901760
        %v3922 = vsub.f32 %v895, %v3921
        %v3923 = vand.u32 %v3922, 4294901760
        %v3924 = vsub.f32 %v3922, %v3923
        %v3925 = vand.u32 %v3924, 4294901760
        %3926 = vmatpush.msra.mxu0 %v3925
        %v3927 = vand.u32 %v894, 4294901760
        %v3928 = vsub.f32 %v894, %v3927
        %v3929 = vand.u32 %v3928, 4294901760
        %v3930 = vsub.f32 %v3928, %v3929
        %v3931 = vand.u32 %v3930, 4294901760
        %3932 = vmatpush.msra.mxu0 %v3931
        %v3933 = vand.u32 %v893, 4294901760
        %v3934 = vsub.f32 %v893, %v3933
        %v3935 = vand.u32 %v3934, 4294901760
        %v3936 = vsub.f32 %v3934, %v3935
        %v3937 = vand.u32 %v3936, 4294901760
        %3938 = vmatpush.msra.mxu0 %v3937
        %v3939 = vand.u32 %v892, 4294901760
        %v3940 = vsub.f32 %v892, %v3939
        %v3941 = vand.u32 %v3940, 4294901760
        %v3942 = vsub.f32 %v3940, %v3941
        %v3943 = vand.u32 %v3942, 4294901760
        %3944 = vmatpush.msra.mxu0 %v3943
        %v3945 = vand.u32 %v891, 4294901760
        %v3946 = vsub.f32 %v891, %v3945
        %v3947 = vand.u32 %v3946, 4294901760
        %v3948 = vsub.f32 %v3946, %v3947
        %v3949 = vand.u32 %v3948, 4294901760
        %3950 = vmatpush.msra.mxu0 %v3949
        %v3951 = vand.u32 %v890, 4294901760
        %v3952 = vsub.f32 %v890, %v3951
        %v3953 = vand.u32 %v3952, 4294901760
        %v3954 = vsub.f32 %v3952, %v3953
        %v3955 = vand.u32 %v3954, 4294901760
        %3956 = vmatpush.msra.mxu0 %v3955
        %v3957 = vand.u32 %v889, 4294901760
        %v3958 = vsub.f32 %v889, %v3957
        %v3959 = vand.u32 %v3958, 4294901760
        %v3960 = vsub.f32 %v3958, %v3959
        %v3961 = vand.u32 %v3960, 4294901760
        %3962 = vmatpush.msra.mxu0 %v3961
        %v3963 = vand.u32 %v888, 4294901760
        %v3964 = vsub.f32 %v888, %v3963
        %v3965 = vand.u32 %v3964, 4294901760
        %v3966 = vsub.f32 %v3964, %v3965
        %v3967 = vand.u32 %v3966, 4294901760
        %3968 = vmatpush.msra.mxu0 %v3967
        %v3969 = vand.u32 %v887, 4294901760
        %v3970 = vsub.f32 %v887, %v3969
        %v3971 = vand.u32 %v3970, 4294901760
        %v3972 = vsub.f32 %v3970, %v3971
        %v3973 = vand.u32 %v3972, 4294901760
        %3974 = vmatpush.msra.mxu0 %v3973
        %v3975 = vand.u32 %v886, 4294901760
        %v3976 = vsub.f32 %v886, %v3975
        %v3977 = vand.u32 %v3976, 4294901760
        %v3978 = vsub.f32 %v3976, %v3977
        %v3979 = vand.u32 %v3978, 4294901760
        %3980 = vmatpush.msra.mxu0 %v3979
        %v3981 = vand.u32 %v885, 4294901760
        %v3982 = vsub.f32 %v885, %v3981
        %v3983 = vand.u32 %v3982, 4294901760
        %v3984 = vsub.f32 %v3982, %v3983
        %v3985 = vand.u32 %v3984, 4294901760
        %3986 = vmatpush.msra.mxu0 %v3985
        %v3987 = vand.u32 %v884, 4294901760
        %v3988 = vsub.f32 %v884, %v3987
        %v3989 = vand.u32 %v3988, 4294901760
        %v3990 = vsub.f32 %v3988, %v3989
        %v3991 = vand.u32 %v3990, 4294901760
        %3992 = vmatpush.msra.mxu0 %v3991
        %v3993 = vand.u32 %v883, 4294901760
        %v3994 = vsub.f32 %v883, %v3993
        %v3995 = vand.u32 %v3994, 4294901760
        %v3996 = vsub.f32 %v3994, %v3995
        %v3997 = vand.u32 %v3996, 4294901760
        %3998 = vmatpush.msra.mxu0 %v3997
        %v3999 = vand.u32 %v882, 4294901760
        %v4000 = vsub.f32 %v882, %v3999
        %v4001 = vand.u32 %v4000, 4294901760
        %v4002 = vsub.f32 %v4000, %v4001
        %v4003 = vand.u32 %v4002, 4294901760
        %4004 = vmatpush.msra.mxu0 %v4003
        %v4005 = vand.u32 %v881, 4294901760
        %v4006 = vsub.f32 %v881, %v4005
        %v4007 = vand.u32 %v4006, 4294901760
        %v4008 = vsub.f32 %v4006, %v4007
        %v4009 = vand.u32 %v4008, 4294901760
        %4010 = vmatpush.msra.mxu0 %v4009
        %v4011 = vand.u32 %v880, 4294901760
        %v4012 = vsub.f32 %v880, %v4011
        %v4013 = vand.u32 %v4012, 4294901760
        %v4014 = vsub.f32 %v4012, %v4013
        %v4015 = vand.u32 %v4014, 4294901760
        %4016 = vmatpush.msra.mxu0 %v4015
        %v4017 = vand.u32 %v724, 4294901760
        %4018 = vmatmul.f32.gmra.mxu0 %v4017
        %v4019 = vpop.f32.mrf.mxu0
        %v4020 = vadd.f32 %v3903, %v4019
        %v4021 = vand.u32 %v741, 4294901760
        %4022 = vmatmul.f32.gmra.mxu0 %v4021
        %v4023 = vpop.f32.mrf.mxu0
        %v4024 = vadd.f32 %v3911, %v4023
        %v4025 = vand.u32 %v758, 4294901760
        %4026 = vmatmul.f32.gmra.mxu0 %v4025
        %v4027 = vpop.f32.mrf.mxu0
        %v4028 = vadd.f32 %v3919, %v4027
        %4029 = vdwg.mxu0
        %v4030 = vand.u32 %v895, 4294901760
        %v4031 = vsub.f32 %v895, %v4030
        %4032 = vmatpush.msra.mxu0 %v4031
        %v4033 = vand.u32 %v894, 4294901760
        %v4034 = vsub.f32 %v894, %v4033
        %4035 = vmatpush.msra.mxu0 %v4034
        %v4036 = vand.u32 %v893, 4294901760
        %v4037 = vsub.f32 %v893, %v4036
        %4038 = vmatpush.msra.mxu0 %v4037
        %v4039 = vand.u32 %v892, 4294901760
        %v4040 = vsub.f32 %v892, %v4039
        %4041 = vmatpush.msra.mxu0 %v4040
        %v4042 = vand.u32 %v891, 4294901760
        %v4043 = vsub.f32 %v891, %v4042
        %4044 = vmatpush.msra.mxu0 %v4043
        %v4045 = vand.u32 %v890, 4294901760
        %v4046 = vsub.f32 %v890, %v4045
        %4047 = vmatpush.msra.mxu0 %v4046
        %v4048 = vand.u32 %v889, 4294901760
        %v4049 = vsub.f32 %v889, %v4048
        %4050 = vmatpush.msra.mxu0 %v4049
        %v4051 = vand.u32 %v888, 4294901760
        %v4052 = vsub.f32 %v888, %v4051
        %4053 = vmatpush.msra.mxu0 %v4052
        %v4054 = vand.u32 %v887, 4294901760
        %v4055 = vsub.f32 %v887, %v4054
        %4056 = vmatpush.msra.mxu0 %v4055
        %v4057 = vand.u32 %v886, 4294901760
        %v4058 = vsub.f32 %v886, %v4057
        %4059 = vmatpush.msra.mxu0 %v4058
        %v4060 = vand.u32 %v885, 4294901760
        %v4061 = vsub.f32 %v885, %v4060
        %4062 = vmatpush.msra.mxu0 %v4061
        %v4063 = vand.u32 %v884, 4294901760
        %v4064 = vsub.f32 %v884, %v4063
        %4065 = vmatpush.msra.mxu0 %v4064
        %v4066 = vand.u32 %v883, 4294901760
        %v4067 = vsub.f32 %v883, %v4066
        %4068 = vmatpush.msra.mxu0 %v4067
        %v4069 = vand.u32 %v882, 4294901760
        %v4070 = vsub.f32 %v882, %v4069
        %4071 = vmatpush.msra.mxu0 %v4070
        %v4072 = vand.u32 %v881, 4294901760
        %v4073 = vsub.f32 %v881, %v4072
        %4074 = vmatpush.msra.mxu0 %v4073
        %v4075 = vand.u32 %v880, 4294901760
        %v4076 = vsub.f32 %v880, %v4075
        %4077 = vmatpush.msra.mxu0 %v4076
        %v4078 = vand.u32 %v724, 4294901760
        %v4079 = vsub.f32 %v724, %v4078
        %4080 = vmatmul.f32.gmra.mxu0 %v4079
        %v4081 = vpop.f32.mrf.mxu0
        %v4082 = vadd.f32 %v4020, %v4081
        %v4083 = vand.u32 %v741, 4294901760
        %v4084 = vsub.f32 %v741, %v4083
        %4085 = vmatmul.f32.gmra.mxu0 %v4084
        %v4086 = vpop.f32.mrf.mxu0
        %v4087 = vadd.f32 %v4024, %v4086
        %v4088 = vand.u32 %v758, 4294901760
        %v4089 = vsub.f32 %v758, %v4088
        %4090 = vmatmul.f32.gmra.mxu0 %v4089
        %v4091 = vpop.f32.mrf.mxu0
        %v4092 = vadd.f32 %v4028, %v4091
        %4093 = vdwg.mxu0
        %v4094 = vand.u32 %v895, 4294901760
        %4095 = vmatpush.msra.mxu0 %v4094
        %v4096 = vand.u32 %v894, 4294901760
        %4097 = vmatpush.msra.mxu0 %v4096
        %v4098 = vand.u32 %v893, 4294901760
        %4099 = vmatpush.msra.mxu0 %v4098
        %v4100 = vand.u32 %v892, 4294901760
        %4101 = vmatpush.msra.mxu0 %v4100
        %v4102 = vand.u32 %v891, 4294901760
        %4103 = vmatpush.msra.mxu0 %v4102
        %v4104 = vand.u32 %v890, 4294901760
        %4105 = vmatpush.msra.mxu0 %v4104
        %v4106 = vand.u32 %v889, 4294901760
        %4107 = vmatpush.msra.mxu0 %v4106
        %v4108 = vand.u32 %v888, 4294901760
        %4109 = vmatpush.msra.mxu0 %v4108
        %v4110 = vand.u32 %v887, 4294901760
        %4111 = vmatpush.msra.mxu0 %v4110
        %v4112 = vand.u32 %v886, 4294901760
        %4113 = vmatpush.msra.mxu0 %v4112
        %v4114 = vand.u32 %v885, 4294901760
        %4115 = vmatpush.msra.mxu0 %v4114
        %v4116 = vand.u32 %v884, 4294901760
        %4117 = vmatpush.msra.mxu0 %v4116
        %v4118 = vand.u32 %v883, 4294901760
        %4119 = vmatpush.msra.mxu0 %v4118
        %v4120 = vand.u32 %v882, 4294901760
        %4121 = vmatpush.msra.mxu0 %v4120
        %v4122 = vand.u32 %v881, 4294901760
        %4123 = vmatpush.msra.mxu0 %v4122
        %v4124 = vand.u32 %v880, 4294901760
        %4125 = vmatpush.msra.mxu0 %v4124
        %v4126 = vand.u32 %v724, 4294901760
        %v4127 = vsub.f32 %v724, %v4126
        %v4128 = vand.u32 %v4127, 4294901760
        %4129 = vmatmul.f32.gmra.mxu0 %v4128
        %v4130 = vpop.f32.mrf.mxu0
        %v4131 = vadd.f32 %v4082, %v4130
        %v4132 = vand.u32 %v741, 4294901760
        %v4133 = vsub.f32 %v741, %v4132
        %v4134 = vand.u32 %v4133, 4294901760
        %4135 = vmatmul.f32.gmra.mxu0 %v4134
        %v4136 = vpop.f32.mrf.mxu0
        %v4137 = vadd.f32 %v4087, %v4136
        %v4138 = vand.u32 %v758, 4294901760
        %v4139 = vsub.f32 %v758, %v4138
        %v4140 = vand.u32 %v4139, 4294901760
        %4141 = vmatmul.f32.gmra.mxu0 %v4140
        %v4142 = vpop.f32.mrf.mxu0
        %v4143 = vadd.f32 %v4092, %v4142
        %4144 = vdwg.mxu0
        %v4145 = vand.u32 %v895, 4294901760
        %v4146 = vsub.f32 %v895, %v4145
        %v4147 = vand.u32 %v4146, 4294901760
        %4148 = vmatpush.msra.mxu0 %v4147
        %v4149 = vand.u32 %v894, 4294901760
        %v4150 = vsub.f32 %v894, %v4149
        %v4151 = vand.u32 %v4150, 4294901760
        %4152 = vmatpush.msra.mxu0 %v4151
        %v4153 = vand.u32 %v893, 4294901760
        %v4154 = vsub.f32 %v893, %v4153
        %v4155 = vand.u32 %v4154, 4294901760
        %4156 = vmatpush.msra.mxu0 %v4155
        %v4157 = vand.u32 %v892, 4294901760
        %v4158 = vsub.f32 %v892, %v4157
        %v4159 = vand.u32 %v4158, 4294901760
        %4160 = vmatpush.msra.mxu0 %v4159
        %v4161 = vand.u32 %v891, 4294901760
        %v4162 = vsub.f32 %v891, %v4161
        %v4163 = vand.u32 %v4162, 4294901760
        %4164 = vmatpush.msra.mxu0 %v4163
        %v4165 = vand.u32 %v890, 4294901760
        %v4166 = vsub.f32 %v890, %v4165
        %v4167 = vand.u32 %v4166, 4294901760
        %4168 = vmatpush.msra.mxu0 %v4167
        %v4169 = vand.u32 %v889, 4294901760
        %v4170 = vsub.f32 %v889, %v4169
        %v4171 = vand.u32 %v4170, 4294901760
        %4172 = vmatpush.msra.mxu0 %v4171
        %v4173 = vand.u32 %v888, 4294901760
        %v4174 = vsub.f32 %v888, %v4173
        %v4175 = vand.u32 %v4174, 4294901760
        %4176 = vmatpush.msra.mxu0 %v4175
        %v4177 = vand.u32 %v887, 4294901760
        %v4178 = vsub.f32 %v887, %v4177
        %v4179 = vand.u32 %v4178, 4294901760
        %4180 = vmatpush.msra.mxu0 %v4179
        %v4181 = vand.u32 %v886, 4294901760
        %v4182 = vsub.f32 %v886, %v4181
        %v4183 = vand.u32 %v4182, 4294901760
        %4184 = vmatpush.msra.mxu0 %v4183
        %v4185 = vand.u32 %v885, 4294901760
        %v4186 = vsub.f32 %v885, %v4185
        %v4187 = vand.u32 %v4186, 4294901760
        %4188 = vmatpush.msra.mxu0 %v4187
        %v4189 = vand.u32 %v884, 4294901760
        %v4190 = vsub.f32 %v884, %v4189
        %v4191 = vand.u32 %v4190, 4294901760
        %4192 = vmatpush.msra.mxu0 %v4191
        %v4193 = vand.u32 %v883, 4294901760
        %v4194 = vsub.f32 %v883, %v4193
        %v4195 = vand.u32 %v4194, 4294901760
        %4196 = vmatpush.msra.mxu0 %v4195
        %v4197 = vand.u32 %v882, 4294901760
        %v4198 = vsub.f32 %v882, %v4197
        %v4199 = vand.u32 %v4198, 4294901760
        %4200 = vmatpush.msra.mxu0 %v4199
        %v4201 = vand.u32 %v881, 4294901760
        %v4202 = vsub.f32 %v881, %v4201
        %v4203 = vand.u32 %v4202, 4294901760
        %4204 = vmatpush.msra.mxu0 %v4203
        %v4205 = vand.u32 %v880, 4294901760
        %v4206 = vsub.f32 %v880, %v4205
        %v4207 = vand.u32 %v4206, 4294901760
        %4208 = vmatpush.msra.mxu0 %v4207
        %v4209 = vand.u32 %v724, 4294901760
        %4210 = vmatmul.f32.gmra.mxu0 %v4209
        %v4211 = vpop.f32.mrf.mxu0
        %v4212 = vadd.f32 %v4131, %v4211
        %v4213 = vand.u32 %v741, 4294901760
        %4214 = vmatmul.f32.gmra.mxu0 %v4213
        %v4215 = vpop.f32.mrf.mxu0
        %v4216 = vadd.f32 %v4137, %v4215
        %v4217 = vand.u32 %v758, 4294901760
        %4218 = vmatmul.f32.gmra.mxu0 %v4217
        %v4219 = vpop.f32.mrf.mxu0
        %v4220 = vadd.f32 %v4143, %v4219
        %4221 = vdwg.mxu0
        %v4222 = vand.u32 %v895, 4294901760
        %4223 = vmatpush.msra.mxu0 %v4222
        %v4224 = vand.u32 %v894, 4294901760
        %4225 = vmatpush.msra.mxu0 %v4224
        %v4226 = vand.u32 %v893, 4294901760
        %4227 = vmatpush.msra.mxu0 %v4226
        %v4228 = vand.u32 %v892, 4294901760
        %4229 = vmatpush.msra.mxu0 %v4228
        %v4230 = vand.u32 %v891, 4294901760
        %4231 = vmatpush.msra.mxu0 %v4230
        %v4232 = vand.u32 %v890, 4294901760
        %4233 = vmatpush.msra.mxu0 %v4232
        %v4234 = vand.u32 %v889, 4294901760
        %4235 = vmatpush.msra.mxu0 %v4234
        %v4236 = vand.u32 %v888, 4294901760
        %4237 = vmatpush.msra.mxu0 %v4236
        %v4238 = vand.u32 %v887, 4294901760
        %4239 = vmatpush.msra.mxu0 %v4238
        %v4240 = vand.u32 %v886, 4294901760
        %4241 = vmatpush.msra.mxu0 %v4240
        %v4242 = vand.u32 %v885, 4294901760
        %4243 = vmatpush.msra.mxu0 %v4242
        %v4244 = vand.u32 %v884, 4294901760
        %4245 = vmatpush.msra.mxu0 %v4244
        %v4246 = vand.u32 %v883, 4294901760
        %4247 = vmatpush.msra.mxu0 %v4246
        %v4248 = vand.u32 %v882, 4294901760
        %4249 = vmatpush.msra.mxu0 %v4248
        %v4250 = vand.u32 %v881, 4294901760
        %4251 = vmatpush.msra.mxu0 %v4250
        %v4252 = vand.u32 %v880, 4294901760
        %4253 = vmatpush.msra.mxu0 %v4252
        %v4254 = vand.u32 %v724, 4294901760
        %4255 = vmatmul.f32.gmra.mxu0 %v4254
        %v4256 = vpop.f32.mrf.mxu0
        %v4257 = vadd.f32 %v4212, %v4256
        %v4258 = vand.u32 %v741, 4294901760
        %4259 = vmatmul.f32.gmra.mxu0 %v4258
        %v4260 = vpop.f32.mrf.mxu0
        %v4261 = vadd.f32 %v4216, %v4260
        %v4262 = vand.u32 %v758, 4294901760
        %4263 = vmatmul.f32.gmra.mxu0 %v4262
        %v4264 = vpop.f32.mrf.mxu0
        %v4265 = vadd.f32 %v4220, %v4264
        %4266 = vdwg.mxu0
        %v4267 = vand.u32 %v911, 4294901760
        %4268 = vmatpush.msra.mxu0 %v4267
        %v4269 = vand.u32 %v910, 4294901760
        %4270 = vmatpush.msra.mxu0 %v4269
        %v4271 = vand.u32 %v909, 4294901760
        %4272 = vmatpush.msra.mxu0 %v4271
        %v4273 = vand.u32 %v908, 4294901760
        %4274 = vmatpush.msra.mxu0 %v4273
        %v4275 = vand.u32 %v907, 4294901760
        %4276 = vmatpush.msra.mxu0 %v4275
        %v4277 = vand.u32 %v906, 4294901760
        %4278 = vmatpush.msra.mxu0 %v4277
        %v4279 = vand.u32 %v905, 4294901760
        %4280 = vmatpush.msra.mxu0 %v4279
        %v4281 = vand.u32 %v904, 4294901760
        %4282 = vmatpush.msra.mxu0 %v4281
        %v4283 = vand.u32 %v903, 4294901760
        %4284 = vmatpush.msra.mxu0 %v4283
        %v4285 = vand.u32 %v902, 4294901760
        %4286 = vmatpush.msra.mxu0 %v4285
        %v4287 = vand.u32 %v901, 4294901760
        %4288 = vmatpush.msra.mxu0 %v4287
        %v4289 = vand.u32 %v900, 4294901760
        %4290 = vmatpush.msra.mxu0 %v4289
        %v4291 = vand.u32 %v899, 4294901760
        %4292 = vmatpush.msra.mxu0 %v4291
        %v4293 = vand.u32 %v898, 4294901760
        %4294 = vmatpush.msra.mxu0 %v4293
        %v4295 = vand.u32 %v897, 4294901760
        %4296 = vmatpush.msra.mxu0 %v4295
        %v4297 = vand.u32 %v896, 4294901760
        %4298 = vmatpush.msra.mxu0 %v4297
        %v4299 = vand.u32 %v725, 4294901760
        %v4300 = vsub.f32 %v725, %v4299
        %v4301 = vand.u32 %v4300, 4294901760
        %v4302 = vsub.f32 %v4300, %v4301
        %v4303 = vand.u32 %v4302, 4294901760
        %4304 = vmatmul.f32.gmra.mxu0 %v4303
        %v4305 = vpop.f32.mrf.mxu0
        %v4306 = vadd.f32 %v4257, %v4305
        %v4307 = vand.u32 %v742, 4294901760
        %v4308 = vsub.f32 %v742, %v4307
        %v4309 = vand.u32 %v4308, 4294901760
        %v4310 = vsub.f32 %v4308, %v4309
        %v4311 = vand.u32 %v4310, 4294901760
        %4312 = vmatmul.f32.gmra.mxu0 %v4311
        %v4313 = vpop.f32.mrf.mxu0
        %v4314 = vadd.f32 %v4261, %v4313
        %v4315 = vand.u32 %v759, 4294901760
        %v4316 = vsub.f32 %v759, %v4315
        %v4317 = vand.u32 %v4316, 4294901760
        %v4318 = vsub.f32 %v4316, %v4317
        %v4319 = vand.u32 %v4318, 4294901760
        %4320 = vmatmul.f32.gmra.mxu0 %v4319
        %v4321 = vpop.f32.mrf.mxu0
        %v4322 = vadd.f32 %v4265, %v4321
        %4323 = vdwg.mxu0
        %v4324 = vand.u32 %v911, 4294901760
        %v4325 = vsub.f32 %v911, %v4324
        %v4326 = vand.u32 %v4325, 4294901760
        %v4327 = vsub.f32 %v4325, %v4326
        %v4328 = vand.u32 %v4327, 4294901760
        %4329 = vmatpush.msra.mxu0 %v4328
        %v4330 = vand.u32 %v910, 4294901760
        %v4331 = vsub.f32 %v910, %v4330
        %v4332 = vand.u32 %v4331, 4294901760
        %v4333 = vsub.f32 %v4331, %v4332
        %v4334 = vand.u32 %v4333, 4294901760
        %4335 = vmatpush.msra.mxu0 %v4334
        %v4336 = vand.u32 %v909, 4294901760
        %v4337 = vsub.f32 %v909, %v4336
        %v4338 = vand.u32 %v4337, 4294901760
        %v4339 = vsub.f32 %v4337, %v4338
        %v4340 = vand.u32 %v4339, 4294901760
        %4341 = vmatpush.msra.mxu0 %v4340
        %v4342 = vand.u32 %v908, 4294901760
        %v4343 = vsub.f32 %v908, %v4342
        %v4344 = vand.u32 %v4343, 4294901760
        %v4345 = vsub.f32 %v4343, %v4344
        %v4346 = vand.u32 %v4345, 4294901760
        %4347 = vmatpush.msra.mxu0 %v4346
        %v4348 = vand.u32 %v907, 4294901760
        %v4349 = vsub.f32 %v907, %v4348
        %v4350 = vand.u32 %v4349, 4294901760
        %v4351 = vsub.f32 %v4349, %v4350
        %v4352 = vand.u32 %v4351, 4294901760
        %4353 = vmatpush.msra.mxu0 %v4352
        %v4354 = vand.u32 %v906, 4294901760
        %v4355 = vsub.f32 %v906, %v4354
        %v4356 = vand.u32 %v4355, 4294901760
        %v4357 = vsub.f32 %v4355, %v4356
        %v4358 = vand.u32 %v4357, 4294901760
        %4359 = vmatpush.msra.mxu0 %v4358
        %v4360 = vand.u32 %v905, 4294901760
        %v4361 = vsub.f32 %v905, %v4360
        %v4362 = vand.u32 %v4361, 4294901760
        %v4363 = vsub.f32 %v4361, %v4362
        %v4364 = vand.u32 %v4363, 4294901760
        %4365 = vmatpush.msra.mxu0 %v4364
        %v4366 = vand.u32 %v904, 4294901760
        %v4367 = vsub.f32 %v904, %v4366
        %v4368 = vand.u32 %v4367, 4294901760
        %v4369 = vsub.f32 %v4367, %v4368
        %v4370 = vand.u32 %v4369, 4294901760
        %4371 = vmatpush.msra.mxu0 %v4370
        %v4372 = vand.u32 %v903, 4294901760
        %v4373 = vsub.f32 %v903, %v4372
        %v4374 = vand.u32 %v4373, 4294901760
        %v4375 = vsub.f32 %v4373, %v4374
        %v4376 = vand.u32 %v4375, 4294901760
        %4377 = vmatpush.msra.mxu0 %v4376
        %v4378 = vand.u32 %v902, 4294901760
        %v4379 = vsub.f32 %v902, %v4378
        %v4380 = vand.u32 %v4379, 4294901760
        %v4381 = vsub.f32 %v4379, %v4380
        %v4382 = vand.u32 %v4381, 4294901760
        %4383 = vmatpush.msra.mxu0 %v4382
        %v4384 = vand.u32 %v901, 4294901760
        %v4385 = vsub.f32 %v901, %v4384
        %v4386 = vand.u32 %v4385, 4294901760
        %v4387 = vsub.f32 %v4385, %v4386
        %v4388 = vand.u32 %v4387, 4294901760
        %4389 = vmatpush.msra.mxu0 %v4388
        %v4390 = vand.u32 %v900, 4294901760
        %v4391 = vsub.f32 %v900, %v4390
        %v4392 = vand.u32 %v4391, 4294901760
        %v4393 = vsub.f32 %v4391, %v4392
        %v4394 = vand.u32 %v4393, 4294901760
        %4395 = vmatpush.msra.mxu0 %v4394
        %v4396 = vand.u32 %v899, 4294901760
        %v4397 = vsub.f32 %v899, %v4396
        %v4398 = vand.u32 %v4397, 4294901760
        %v4399 = vsub.f32 %v4397, %v4398
        %v4400 = vand.u32 %v4399, 4294901760
        %4401 = vmatpush.msra.mxu0 %v4400
        %v4402 = vand.u32 %v898, 4294901760
        %v4403 = vsub.f32 %v898, %v4402
        %v4404 = vand.u32 %v4403, 4294901760
        %v4405 = vsub.f32 %v4403, %v4404
        %v4406 = vand.u32 %v4405, 4294901760
        %4407 = vmatpush.msra.mxu0 %v4406
        %v4408 = vand.u32 %v897, 4294901760
        %v4409 = vsub.f32 %v897, %v4408
        %v4410 = vand.u32 %v4409, 4294901760
        %v4411 = vsub.f32 %v4409, %v4410
        %v4412 = vand.u32 %v4411, 4294901760
        %4413 = vmatpush.msra.mxu0 %v4412
        %v4414 = vand.u32 %v896, 4294901760
        %v4415 = vsub.f32 %v896, %v4414
        %v4416 = vand.u32 %v4415, 4294901760
        %v4417 = vsub.f32 %v4415, %v4416
        %v4418 = vand.u32 %v4417, 4294901760
        %4419 = vmatpush.msra.mxu0 %v4418
        %v4420 = vand.u32 %v725, 4294901760
        %4421 = vmatmul.f32.gmra.mxu0 %v4420
        %v4422 = vpop.f32.mrf.mxu0
        %v4423 = vadd.f32 %v4306, %v4422
        %v4424 = vand.u32 %v742, 4294901760
        %4425 = vmatmul.f32.gmra.mxu0 %v4424
        %v4426 = vpop.f32.mrf.mxu0
        %v4427 = vadd.f32 %v4314, %v4426
        %v4428 = vand.u32 %v759, 4294901760
        %4429 = vmatmul.f32.gmra.mxu0 %v4428
        %v4430 = vpop.f32.mrf.mxu0
        %v4431 = vadd.f32 %v4322, %v4430
        %4432 = vdwg.mxu0
        %v4433 = vand.u32 %v911, 4294901760
        %v4434 = vsub.f32 %v911, %v4433
        %4435 = vmatpush.msra.mxu0 %v4434
        %v4436 = vand.u32 %v910, 4294901760
        %v4437 = vsub.f32 %v910, %v4436
        %4438 = vmatpush.msra.mxu0 %v4437
        %v4439 = vand.u32 %v909, 4294901760
        %v4440 = vsub.f32 %v909, %v4439
        %4441 = vmatpush.msra.mxu0 %v4440
        %v4442 = vand.u32 %v908, 4294901760
        %v4443 = vsub.f32 %v908, %v4442
        %4444 = vmatpush.msra.mxu0 %v4443
        %v4445 = vand.u32 %v907, 4294901760
        %v4446 = vsub.f32 %v907, %v4445
        %4447 = vmatpush.msra.mxu0 %v4446
        %v4448 = vand.u32 %v906, 4294901760
        %v4449 = vsub.f32 %v906, %v4448
        %4450 = vmatpush.msra.mxu0 %v4449
        %v4451 = vand.u32 %v905, 4294901760
        %v4452 = vsub.f32 %v905, %v4451
        %4453 = vmatpush.msra.mxu0 %v4452
        %v4454 = vand.u32 %v904, 4294901760
        %v4455 = vsub.f32 %v904, %v4454
        %4456 = vmatpush.msra.mxu0 %v4455
        %v4457 = vand.u32 %v903, 4294901760
        %v4458 = vsub.f32 %v903, %v4457
        %4459 = vmatpush.msra.mxu0 %v4458
        %v4460 = vand.u32 %v902, 4294901760
        %v4461 = vsub.f32 %v902, %v4460
        %4462 = vmatpush.msra.mxu0 %v4461
        %v4463 = vand.u32 %v901, 4294901760
        %v4464 = vsub.f32 %v901, %v4463
        %4465 = vmatpush.msra.mxu0 %v4464
        %v4466 = vand.u32 %v900, 4294901760
        %v4467 = vsub.f32 %v900, %v4466
        %4468 = vmatpush.msra.mxu0 %v4467
        %v4469 = vand.u32 %v899, 4294901760
        %v4470 = vsub.f32 %v899, %v4469
        %4471 = vmatpush.msra.mxu0 %v4470
        %v4472 = vand.u32 %v898, 4294901760
        %v4473 = vsub.f32 %v898, %v4472
        %4474 = vmatpush.msra.mxu0 %v4473
        %v4475 = vand.u32 %v897, 4294901760
        %v4476 = vsub.f32 %v897, %v4475
        %4477 = vmatpush.msra.mxu0 %v4476
        %v4478 = vand.u32 %v896, 4294901760
        %v4479 = vsub.f32 %v896, %v4478
        %4480 = vmatpush.msra.mxu0 %v4479
        %v4481 = vand.u32 %v725, 4294901760
        %v4482 = vsub.f32 %v725, %v4481
        %4483 = vmatmul.f32.gmra.mxu0 %v4482
        %v4484 = vpop.f32.mrf.mxu0
        %v4485 = vadd.f32 %v4423, %v4484
        %v4486 = vand.u32 %v742, 4294901760
        %v4487 = vsub.f32 %v742, %v4486
        %4488 = vmatmul.f32.gmra.mxu0 %v4487
        %v4489 = vpop.f32.mrf.mxu0
        %v4490 = vadd.f32 %v4427, %v4489
        %v4491 = vand.u32 %v759, 4294901760
        %v4492 = vsub.f32 %v759, %v4491
        %4493 = vmatmul.f32.gmra.mxu0 %v4492
        %v4494 = vpop.f32.mrf.mxu0
        %v4495 = vadd.f32 %v4431, %v4494
        %4496 = vdwg.mxu0
        %v4497 = vand.u32 %v911, 4294901760
        %4498 = vmatpush.msra.mxu0 %v4497
        %v4499 = vand.u32 %v910, 4294901760
        %4500 = vmatpush.msra.mxu0 %v4499
        %v4501 = vand.u32 %v909, 4294901760
        %4502 = vmatpush.msra.mxu0 %v4501
        %v4503 = vand.u32 %v908, 4294901760
        %4504 = vmatpush.msra.mxu0 %v4503
        %v4505 = vand.u32 %v907, 4294901760
        %4506 = vmatpush.msra.mxu0 %v4505
        %v4507 = vand.u32 %v906, 4294901760
        %4508 = vmatpush.msra.mxu0 %v4507
        %v4509 = vand.u32 %v905, 4294901760
        %4510 = vmatpush.msra.mxu0 %v4509
        %v4511 = vand.u32 %v904, 4294901760
        %4512 = vmatpush.msra.mxu0 %v4511
        %v4513 = vand.u32 %v903, 4294901760
        %4514 = vmatpush.msra.mxu0 %v4513
        %v4515 = vand.u32 %v902, 4294901760
        %4516 = vmatpush.msra.mxu0 %v4515
        %v4517 = vand.u32 %v901, 4294901760
        %4518 = vmatpush.msra.mxu0 %v4517
        %v4519 = vand.u32 %v900, 4294901760
        %4520 = vmatpush.msra.mxu0 %v4519
        %v4521 = vand.u32 %v899, 4294901760
        %4522 = vmatpush.msra.mxu0 %v4521
        %v4523 = vand.u32 %v898, 4294901760
        %4524 = vmatpush.msra.mxu0 %v4523
        %v4525 = vand.u32 %v897, 4294901760
        %4526 = vmatpush.msra.mxu0 %v4525
        %v4527 = vand.u32 %v896, 4294901760
        %4528 = vmatpush.msra.mxu0 %v4527
        %v4529 = vand.u32 %v725, 4294901760
        %v4530 = vsub.f32 %v725, %v4529
        %v4531 = vand.u32 %v4530, 4294901760
        %4532 = vmatmul.f32.gmra.mxu0 %v4531
        %v4533 = vpop.f32.mrf.mxu0
        %v4534 = vadd.f32 %v4485, %v4533
        %v4535 = vand.u32 %v742, 4294901760
        %v4536 = vsub.f32 %v742, %v4535
        %v4537 = vand.u32 %v4536, 4294901760
        %4538 = vmatmul.f32.gmra.mxu0 %v4537
        %v4539 = vpop.f32.mrf.mxu0
        %v4540 = vadd.f32 %v4490, %v4539
        %v4541 = vand.u32 %v759, 4294901760
        %v4542 = vsub.f32 %v759, %v4541
        %v4543 = vand.u32 %v4542, 4294901760
        %4544 = vmatmul.f32.gmra.mxu0 %v4543
        %v4545 = vpop.f32.mrf.mxu0
        %v4546 = vadd.f32 %v4495, %v4545
        %4547 = vdwg.mxu0
        %v4548 = vand.u32 %v911, 4294901760
        %v4549 = vsub.f32 %v911, %v4548
        %v4550 = vand.u32 %v4549, 4294901760
        %4551 = vmatpush.msra.mxu0 %v4550
        %v4552 = vand.u32 %v910, 4294901760
        %v4553 = vsub.f32 %v910, %v4552
        %v4554 = vand.u32 %v4553, 4294901760
        %4555 = vmatpush.msra.mxu0 %v4554
        %v4556 = vand.u32 %v909, 4294901760
        %v4557 = vsub.f32 %v909, %v4556
        %v4558 = vand.u32 %v4557, 4294901760
        %4559 = vmatpush.msra.mxu0 %v4558
        %v4560 = vand.u32 %v908, 4294901760
        %v4561 = vsub.f32 %v908, %v4560
        %v4562 = vand.u32 %v4561, 4294901760
        %4563 = vmatpush.msra.mxu0 %v4562
        %v4564 = vand.u32 %v907, 4294901760
        %v4565 = vsub.f32 %v907, %v4564
        %v4566 = vand.u32 %v4565, 4294901760
        %4567 = vmatpush.msra.mxu0 %v4566
        %v4568 = vand.u32 %v906, 4294901760
        %v4569 = vsub.f32 %v906, %v4568
        %v4570 = vand.u32 %v4569, 4294901760
        %4571 = vmatpush.msra.mxu0 %v4570
        %v4572 = vand.u32 %v905, 4294901760
        %v4573 = vsub.f32 %v905, %v4572
        %v4574 = vand.u32 %v4573, 4294901760
        %4575 = vmatpush.msra.mxu0 %v4574
        %v4576 = vand.u32 %v904, 4294901760
        %v4577 = vsub.f32 %v904, %v4576
        %v4578 = vand.u32 %v4577, 4294901760
        %4579 = vmatpush.msra.mxu0 %v4578
        %v4580 = vand.u32 %v903, 4294901760
        %v4581 = vsub.f32 %v903, %v4580
        %v4582 = vand.u32 %v4581, 4294901760
        %4583 = vmatpush.msra.mxu0 %v4582
        %v4584 = vand.u32 %v902, 4294901760
        %v4585 = vsub.f32 %v902, %v4584
        %v4586 = vand.u32 %v4585, 4294901760
        %4587 = vmatpush.msra.mxu0 %v4586
        %v4588 = vand.u32 %v901, 4294901760
        %v4589 = vsub.f32 %v901, %v4588
        %v4590 = vand.u32 %v4589, 4294901760
        %4591 = vmatpush.msra.mxu0 %v4590
        %v4592 = vand.u32 %v900, 4294901760
        %v4593 = vsub.f32 %v900, %v4592
        %v4594 = vand.u32 %v4593, 4294901760
        %4595 = vmatpush.msra.mxu0 %v4594
        %v4596 = vand.u32 %v899, 4294901760
        %v4597 = vsub.f32 %v899, %v4596
        %v4598 = vand.u32 %v4597, 4294901760
        %4599 = vmatpush.msra.mxu0 %v4598
        %v4600 = vand.u32 %v898, 4294901760
        %v4601 = vsub.f32 %v898, %v4600
        %v4602 = vand.u32 %v4601, 4294901760
        %4603 = vmatpush.msra.mxu0 %v4602
        %v4604 = vand.u32 %v897, 4294901760
        %v4605 = vsub.f32 %v897, %v4604
        %v4606 = vand.u32 %v4605, 4294901760
        %4607 = vmatpush.msra.mxu0 %v4606
        %v4608 = vand.u32 %v896, 4294901760
        %v4609 = vsub.f32 %v896, %v4608
        %v4610 = vand.u32 %v4609, 4294901760
        %4611 = vmatpush.msra.mxu0 %v4610
        %v4612 = vand.u32 %v725, 4294901760
        %4613 = vmatmul.f32.gmra.mxu0 %v4612
        %v4614 = vpop.f32.mrf.mxu0
        %v4615 = vadd.f32 %v4534, %v4614
        %v4616 = vand.u32 %v742, 4294901760
        %4617 = vmatmul.f32.gmra.mxu0 %v4616
        %v4618 = vpop.f32.mrf.mxu0
        %v4619 = vadd.f32 %v4540, %v4618
        %v4620 = vand.u32 %v759, 4294901760
        %4621 = vmatmul.f32.gmra.mxu0 %v4620
        %v4622 = vpop.f32.mrf.mxu0
        %v4623 = vadd.f32 %v4546, %v4622
        %4624 = vdwg.mxu0
        %v4625 = vand.u32 %v911, 4294901760
        %4626 = vmatpush.msra.mxu0 %v4625
        %v4627 = vand.u32 %v910, 4294901760
        %4628 = vmatpush.msra.mxu0 %v4627
        %v4629 = vand.u32 %v909, 4294901760
        %4630 = vmatpush.msra.mxu0 %v4629
        %v4631 = vand.u32 %v908, 4294901760
        %4632 = vmatpush.msra.mxu0 %v4631
        %v4633 = vand.u32 %v907, 4294901760
        %4634 = vmatpush.msra.mxu0 %v4633
        %v4635 = vand.u32 %v906, 4294901760
        %4636 = vmatpush.msra.mxu0 %v4635
        %v4637 = vand.u32 %v905, 4294901760
        %4638 = vmatpush.msra.mxu0 %v4637
        %v4639 = vand.u32 %v904, 4294901760
        %4640 = vmatpush.msra.mxu0 %v4639
        %v4641 = vand.u32 %v903, 4294901760
        %4642 = vmatpush.msra.mxu0 %v4641
        %v4643 = vand.u32 %v902, 4294901760
        %4644 = vmatpush.msra.mxu0 %v4643
        %v4645 = vand.u32 %v901, 4294901760
        %4646 = vmatpush.msra.mxu0 %v4645
        %v4647 = vand.u32 %v900, 4294901760
        %4648 = vmatpush.msra.mxu0 %v4647
        %v4649 = vand.u32 %v899, 4294901760
        %4650 = vmatpush.msra.mxu0 %v4649
        %v4651 = vand.u32 %v898, 4294901760
        %4652 = vmatpush.msra.mxu0 %v4651
        %v4653 = vand.u32 %v897, 4294901760
        %4654 = vmatpush.msra.mxu0 %v4653
        %v4655 = vand.u32 %v896, 4294901760
        %4656 = vmatpush.msra.mxu0 %v4655
        %v4657 = vand.u32 %v725, 4294901760
        %4658 = vmatmul.f32.gmra.mxu0 %v4657
        %v4659 = vpop.f32.mrf.mxu0
        %v4660 = vadd.f32 %v4615, %v4659
        %v4661 = vand.u32 %v742, 4294901760
        %4662 = vmatmul.f32.gmra.mxu0 %v4661
        %v4663 = vpop.f32.mrf.mxu0
        %v4664 = vadd.f32 %v4619, %v4663
        %v4665 = vand.u32 %v759, 4294901760
        %4666 = vmatmul.f32.gmra.mxu0 %v4665
        %v4667 = vpop.f32.mrf.mxu0
        %v4668 = vadd.f32 %v4623, %v4667
        %4669 = vdwg.mxu0
        %v4670 = vand.u32 %v927, 4294901760
        %4671 = vmatpush.msra.mxu0 %v4670
        %v4672 = vand.u32 %v926, 4294901760
        %4673 = vmatpush.msra.mxu0 %v4672
        %v4674 = vand.u32 %v925, 4294901760
        %4675 = vmatpush.msra.mxu0 %v4674
        %v4676 = vand.u32 %v924, 4294901760
        %4677 = vmatpush.msra.mxu0 %v4676
        %v4678 = vand.u32 %v923, 4294901760
        %4679 = vmatpush.msra.mxu0 %v4678
        %v4680 = vand.u32 %v922, 4294901760
        %4681 = vmatpush.msra.mxu0 %v4680
        %v4682 = vand.u32 %v921, 4294901760
        %4683 = vmatpush.msra.mxu0 %v4682
        %v4684 = vand.u32 %v920, 4294901760
        %4685 = vmatpush.msra.mxu0 %v4684
        %v4686 = vand.u32 %v919, 4294901760
        %4687 = vmatpush.msra.mxu0 %v4686
        %v4688 = vand.u32 %v918, 4294901760
        %4689 = vmatpush.msra.mxu0 %v4688
        %v4690 = vand.u32 %v917, 4294901760
        %4691 = vmatpush.msra.mxu0 %v4690
        %v4692 = vand.u32 %v916, 4294901760
        %4693 = vmatpush.msra.mxu0 %v4692
        %v4694 = vand.u32 %v915, 4294901760
        %4695 = vmatpush.msra.mxu0 %v4694
        %v4696 = vand.u32 %v914, 4294901760
        %4697 = vmatpush.msra.mxu0 %v4696
        %v4698 = vand.u32 %v913, 4294901760
        %4699 = vmatpush.msra.mxu0 %v4698
        %v4700 = vand.u32 %v912, 4294901760
        %4701 = vmatpush.msra.mxu0 %v4700
        %v4702 = vand.u32 %v726, 4294901760
        %v4703 = vsub.f32 %v726, %v4702
        %v4704 = vand.u32 %v4703, 4294901760
        %v4705 = vsub.f32 %v4703, %v4704
        %v4706 = vand.u32 %v4705, 4294901760
        %4707 = vmatmul.f32.gmra.mxu0 %v4706
        %v4708 = vpop.f32.mrf.mxu0
        %v4709 = vadd.f32 %v4660, %v4708
        %v4710 = vand.u32 %v743, 4294901760
        %v4711 = vsub.f32 %v743, %v4710
        %v4712 = vand.u32 %v4711, 4294901760
        %v4713 = vsub.f32 %v4711, %v4712
        %v4714 = vand.u32 %v4713, 4294901760
        %4715 = vmatmul.f32.gmra.mxu0 %v4714
        %v4716 = vpop.f32.mrf.mxu0
        %v4717 = vadd.f32 %v4664, %v4716
        %v4718 = vand.u32 %v760, 4294901760
        %v4719 = vsub.f32 %v760, %v4718
        %v4720 = vand.u32 %v4719, 4294901760
        %v4721 = vsub.f32 %v4719, %v4720
        %v4722 = vand.u32 %v4721, 4294901760
        %4723 = vmatmul.f32.gmra.mxu0 %v4722
        %v4724 = vpop.f32.mrf.mxu0
        %v4725 = vadd.f32 %v4668, %v4724
        %4726 = vdwg.mxu0
        %v4727 = vand.u32 %v927, 4294901760
        %v4728 = vsub.f32 %v927, %v4727
        %v4729 = vand.u32 %v4728, 4294901760
        %v4730 = vsub.f32 %v4728, %v4729
        %v4731 = vand.u32 %v4730, 4294901760
        %4732 = vmatpush.msra.mxu0 %v4731
        %v4733 = vand.u32 %v926, 4294901760
        %v4734 = vsub.f32 %v926, %v4733
        %v4735 = vand.u32 %v4734, 4294901760
        %v4736 = vsub.f32 %v4734, %v4735
        %v4737 = vand.u32 %v4736, 4294901760
        %4738 = vmatpush.msra.mxu0 %v4737
        %v4739 = vand.u32 %v925, 4294901760
        %v4740 = vsub.f32 %v925, %v4739
        %v4741 = vand.u32 %v4740, 4294901760
        %v4742 = vsub.f32 %v4740, %v4741
        %v4743 = vand.u32 %v4742, 4294901760
        %4744 = vmatpush.msra.mxu0 %v4743
        %v4745 = vand.u32 %v924, 4294901760
        %v4746 = vsub.f32 %v924, %v4745
        %v4747 = vand.u32 %v4746, 4294901760
        %v4748 = vsub.f32 %v4746, %v4747
        %v4749 = vand.u32 %v4748, 4294901760
        %4750 = vmatpush.msra.mxu0 %v4749
        %v4751 = vand.u32 %v923, 4294901760
        %v4752 = vsub.f32 %v923, %v4751
        %v4753 = vand.u32 %v4752, 4294901760
        %v4754 = vsub.f32 %v4752, %v4753
        %v4755 = vand.u32 %v4754, 4294901760
        %4756 = vmatpush.msra.mxu0 %v4755
        %v4757 = vand.u32 %v922, 4294901760
        %v4758 = vsub.f32 %v922, %v4757
        %v4759 = vand.u32 %v4758, 4294901760
        %v4760 = vsub.f32 %v4758, %v4759
        %v4761 = vand.u32 %v4760, 4294901760
        %4762 = vmatpush.msra.mxu0 %v4761
        %v4763 = vand.u32 %v921, 4294901760
        %v4764 = vsub.f32 %v921, %v4763
        %v4765 = vand.u32 %v4764, 4294901760
        %v4766 = vsub.f32 %v4764, %v4765
        %v4767 = vand.u32 %v4766, 4294901760
        %4768 = vmatpush.msra.mxu0 %v4767
        %v4769 = vand.u32 %v920, 4294901760
        %v4770 = vsub.f32 %v920, %v4769
        %v4771 = vand.u32 %v4770, 4294901760
        %v4772 = vsub.f32 %v4770, %v4771
        %v4773 = vand.u32 %v4772, 4294901760
        %4774 = vmatpush.msra.mxu0 %v4773
        %v4775 = vand.u32 %v919, 4294901760
        %v4776 = vsub.f32 %v919, %v4775
        %v4777 = vand.u32 %v4776, 4294901760
        %v4778 = vsub.f32 %v4776, %v4777
        %v4779 = vand.u32 %v4778, 4294901760
        %4780 = vmatpush.msra.mxu0 %v4779
        %v4781 = vand.u32 %v918, 4294901760
        %v4782 = vsub.f32 %v918, %v4781
        %v4783 = vand.u32 %v4782, 4294901760
        %v4784 = vsub.f32 %v4782, %v4783
        %v4785 = vand.u32 %v4784, 4294901760
        %4786 = vmatpush.msra.mxu0 %v4785
        %v4787 = vand.u32 %v917, 4294901760
        %v4788 = vsub.f32 %v917, %v4787
        %v4789 = vand.u32 %v4788, 4294901760
        %v4790 = vsub.f32 %v4788, %v4789
        %v4791 = vand.u32 %v4790, 4294901760
        %4792 = vmatpush.msra.mxu0 %v4791
        %v4793 = vand.u32 %v916, 4294901760
        %v4794 = vsub.f32 %v916, %v4793
        %v4795 = vand.u32 %v4794, 4294901760
        %v4796 = vsub.f32 %v4794, %v4795
        %v4797 = vand.u32 %v4796, 4294901760
        %4798 = vmatpush.msra.mxu0 %v4797
        %v4799 = vand.u32 %v915, 4294901760
        %v4800 = vsub.f32 %v915, %v4799
        %v4801 = vand.u32 %v4800, 4294901760
        %v4802 = vsub.f32 %v4800, %v4801
        %v4803 = vand.u32 %v4802, 4294901760
        %4804 = vmatpush.msra.mxu0 %v4803
        %v4805 = vand.u32 %v914, 4294901760
        %v4806 = vsub.f32 %v914, %v4805
        %v4807 = vand.u32 %v4806, 4294901760
        %v4808 = vsub.f32 %v4806, %v4807
        %v4809 = vand.u32 %v4808, 4294901760
        %4810 = vmatpush.msra.mxu0 %v4809
        %v4811 = vand.u32 %v913, 4294901760
        %v4812 = vsub.f32 %v913, %v4811
        %v4813 = vand.u32 %v4812, 4294901760
        %v4814 = vsub.f32 %v4812, %v4813
        %v4815 = vand.u32 %v4814, 4294901760
        %4816 = vmatpush.msra.mxu0 %v4815
        %v4817 = vand.u32 %v912, 4294901760
        %v4818 = vsub.f32 %v912, %v4817
        %v4819 = vand.u32 %v4818, 4294901760
        %v4820 = vsub.f32 %v4818, %v4819
        %v4821 = vand.u32 %v4820, 4294901760
        %4822 = vmatpush.msra.mxu0 %v4821
        %v4823 = vand.u32 %v726, 4294901760
        %4824 = vmatmul.f32.gmra.mxu0 %v4823
        %v4825 = vpop.f32.mrf.mxu0
        %v4826 = vadd.f32 %v4709, %v4825
        %v4827 = vand.u32 %v743, 4294901760
        %4828 = vmatmul.f32.gmra.mxu0 %v4827
        %v4829 = vpop.f32.mrf.mxu0
        %v4830 = vadd.f32 %v4717, %v4829
        %v4831 = vand.u32 %v760, 4294901760
        %4832 = vmatmul.f32.gmra.mxu0 %v4831
        %v4833 = vpop.f32.mrf.mxu0
        %v4834 = vadd.f32 %v4725, %v4833
        %4835 = vdwg.mxu0
        %v4836 = vand.u32 %v927, 4294901760
        %v4837 = vsub.f32 %v927, %v4836
        %4838 = vmatpush.msra.mxu0 %v4837
        %v4839 = vand.u32 %v926, 4294901760
        %v4840 = vsub.f32 %v926, %v4839
        %4841 = vmatpush.msra.mxu0 %v4840
        %v4842 = vand.u32 %v925, 4294901760
        %v4843 = vsub.f32 %v925, %v4842
        %4844 = vmatpush.msra.mxu0 %v4843
        %v4845 = vand.u32 %v924, 4294901760
        %v4846 = vsub.f32 %v924, %v4845
        %4847 = vmatpush.msra.mxu0 %v4846
        %v4848 = vand.u32 %v923, 4294901760
        %v4849 = vsub.f32 %v923, %v4848
        %4850 = vmatpush.msra.mxu0 %v4849
        %v4851 = vand.u32 %v922, 4294901760
        %v4852 = vsub.f32 %v922, %v4851
        %4853 = vmatpush.msra.mxu0 %v4852
        %v4854 = vand.u32 %v921, 4294901760
        %v4855 = vsub.f32 %v921, %v4854
        %4856 = vmatpush.msra.mxu0 %v4855
        %v4857 = vand.u32 %v920, 4294901760
        %v4858 = vsub.f32 %v920, %v4857
        %4859 = vmatpush.msra.mxu0 %v4858
        %v4860 = vand.u32 %v919, 4294901760
        %v4861 = vsub.f32 %v919, %v4860
        %4862 = vmatpush.msra.mxu0 %v4861
        %v4863 = vand.u32 %v918, 4294901760
        %v4864 = vsub.f32 %v918, %v4863
        %4865 = vmatpush.msra.mxu0 %v4864
        %v4866 = vand.u32 %v917, 4294901760
        %v4867 = vsub.f32 %v917, %v4866
        %4868 = vmatpush.msra.mxu0 %v4867
        %v4869 = vand.u32 %v916, 4294901760
        %v4870 = vsub.f32 %v916, %v4869
        %4871 = vmatpush.msra.mxu0 %v4870
        %v4872 = vand.u32 %v915, 4294901760
        %v4873 = vsub.f32 %v915, %v4872
        %4874 = vmatpush.msra.mxu0 %v4873
        %v4875 = vand.u32 %v914, 4294901760
        %v4876 = vsub.f32 %v914, %v4875
        %4877 = vmatpush.msra.mxu0 %v4876
        %v4878 = vand.u32 %v913, 4294901760
        %v4879 = vsub.f32 %v913, %v4878
        %4880 = vmatpush.msra.mxu0 %v4879
        %v4881 = vand.u32 %v912, 4294901760
        %v4882 = vsub.f32 %v912, %v4881
        %4883 = vmatpush.msra.mxu0 %v4882
        %v4884 = vand.u32 %v726, 4294901760
        %v4885 = vsub.f32 %v726, %v4884
        %4886 = vmatmul.f32.gmra.mxu0 %v4885
        %v4887 = vpop.f32.mrf.mxu0
        %v4888 = vadd.f32 %v4826, %v4887
        %v4889 = vand.u32 %v743, 4294901760
        %v4890 = vsub.f32 %v743, %v4889
        %4891 = vmatmul.f32.gmra.mxu0 %v4890
        %v4892 = vpop.f32.mrf.mxu0
        %v4893 = vadd.f32 %v4830, %v4892
        %v4894 = vand.u32 %v760, 4294901760
        %v4895 = vsub.f32 %v760, %v4894
        %4896 = vmatmul.f32.gmra.mxu0 %v4895
        %v4897 = vpop.f32.mrf.mxu0
        %v4898 = vadd.f32 %v4834, %v4897
        %4899 = vdwg.mxu0
        %v4900 = vand.u32 %v927, 4294901760
        %4901 = vmatpush.msra.mxu0 %v4900
        %v4902 = vand.u32 %v926, 4294901760
        %4903 = vmatpush.msra.mxu0 %v4902
        %v4904 = vand.u32 %v925, 4294901760
        %4905 = vmatpush.msra.mxu0 %v4904
        %v4906 = vand.u32 %v924, 4294901760
        %4907 = vmatpush.msra.mxu0 %v4906
        %v4908 = vand.u32 %v923, 4294901760
        %4909 = vmatpush.msra.mxu0 %v4908
        %v4910 = vand.u32 %v922, 4294901760
        %4911 = vmatpush.msra.mxu0 %v4910
        %v4912 = vand.u32 %v921, 4294901760
        %4913 = vmatpush.msra.mxu0 %v4912
        %v4914 = vand.u32 %v920, 4294901760
        %4915 = vmatpush.msra.mxu0 %v4914
        %v4916 = vand.u32 %v919, 4294901760
        %4917 = vmatpush.msra.mxu0 %v4916
        %v4918 = vand.u32 %v918, 4294901760
        %4919 = vmatpush.msra.mxu0 %v4918
        %v4920 = vand.u32 %v917, 4294901760
        %4921 = vmatpush.msra.mxu0 %v4920
        %v4922 = vand.u32 %v916, 4294901760
        %4923 = vmatpush.msra.mxu0 %v4922
        %v4924 = vand.u32 %v915, 4294901760
        %4925 = vmatpush.msra.mxu0 %v4924
        %v4926 = vand.u32 %v914, 4294901760
        %4927 = vmatpush.msra.mxu0 %v4926
        %v4928 = vand.u32 %v913, 4294901760
        %4929 = vmatpush.msra.mxu0 %v4928
        %v4930 = vand.u32 %v912, 4294901760
        %4931 = vmatpush.msra.mxu0 %v4930
        %v4932 = vand.u32 %v726, 4294901760
        %v4933 = vsub.f32 %v726, %v4932
        %v4934 = vand.u32 %v4933, 4294901760
        %4935 = vmatmul.f32.gmra.mxu0 %v4934
        %v4936 = vpop.f32.mrf.mxu0
        %v4937 = vadd.f32 %v4888, %v4936
        %v4938 = vand.u32 %v743, 4294901760
        %v4939 = vsub.f32 %v743, %v4938
        %v4940 = vand.u32 %v4939, 4294901760
        %4941 = vmatmul.f32.gmra.mxu0 %v4940
        %v4942 = vpop.f32.mrf.mxu0
        %v4943 = vadd.f32 %v4893, %v4942
        %v4944 = vand.u32 %v760, 4294901760
        %v4945 = vsub.f32 %v760, %v4944
        %v4946 = vand.u32 %v4945, 4294901760
        %4947 = vmatmul.f32.gmra.mxu0 %v4946
        %v4948 = vpop.f32.mrf.mxu0
        %v4949 = vadd.f32 %v4898, %v4948
        %4950 = vdwg.mxu0
        %v4951 = vand.u32 %v927, 4294901760
        %v4952 = vsub.f32 %v927, %v4951
        %v4953 = vand.u32 %v4952, 4294901760
        %4954 = vmatpush.msra.mxu0 %v4953
        %v4955 = vand.u32 %v926, 4294901760
        %v4956 = vsub.f32 %v926, %v4955
        %v4957 = vand.u32 %v4956, 4294901760
        %4958 = vmatpush.msra.mxu0 %v4957
        %v4959 = vand.u32 %v925, 4294901760
        %v4960 = vsub.f32 %v925, %v4959
        %v4961 = vand.u32 %v4960, 4294901760
        %4962 = vmatpush.msra.mxu0 %v4961
        %v4963 = vand.u32 %v924, 4294901760
        %v4964 = vsub.f32 %v924, %v4963
        %v4965 = vand.u32 %v4964, 4294901760
        %4966 = vmatpush.msra.mxu0 %v4965
        %v4967 = vand.u32 %v923, 4294901760
        %v4968 = vsub.f32 %v923, %v4967
        %v4969 = vand.u32 %v4968, 4294901760
        %4970 = vmatpush.msra.mxu0 %v4969
        %v4971 = vand.u32 %v922, 4294901760
        %v4972 = vsub.f32 %v922, %v4971
        %v4973 = vand.u32 %v4972, 4294901760
        %4974 = vmatpush.msra.mxu0 %v4973
        %v4975 = vand.u32 %v921, 4294901760
        %v4976 = vsub.f32 %v921, %v4975
        %v4977 = vand.u32 %v4976, 4294901760
        %4978 = vmatpush.msra.mxu0 %v4977
        %v4979 = vand.u32 %v920, 4294901760
        %v4980 = vsub.f32 %v920, %v4979
        %v4981 = vand.u32 %v4980, 4294901760
        %4982 = vmatpush.msra.mxu0 %v4981
        %v4983 = vand.u32 %v919, 4294901760
        %v4984 = vsub.f32 %v919, %v4983
        %v4985 = vand.u32 %v4984, 4294901760
        %4986 = vmatpush.msra.mxu0 %v4985
        %v4987 = vand.u32 %v918, 4294901760
        %v4988 = vsub.f32 %v918, %v4987
        %v4989 = vand.u32 %v4988, 4294901760
        %4990 = vmatpush.msra.mxu0 %v4989
        %v4991 = vand.u32 %v917, 4294901760
        %v4992 = vsub.f32 %v917, %v4991
        %v4993 = vand.u32 %v4992, 4294901760
        %4994 = vmatpush.msra.mxu0 %v4993
        %v4995 = vand.u32 %v916, 4294901760
        %v4996 = vsub.f32 %v916, %v4995
        %v4997 = vand.u32 %v4996, 4294901760
        %4998 = vmatpush.msra.mxu0 %v4997
        %v4999 = vand.u32 %v915, 4294901760
        %v5000 = vsub.f32 %v915, %v4999
        %v5001 = vand.u32 %v5000, 4294901760
        %5002 = vmatpush.msra.mxu0 %v5001
        %v5003 = vand.u32 %v914, 4294901760
        %v5004 = vsub.f32 %v914, %v5003
        %v5005 = vand.u32 %v5004, 4294901760
        %5006 = vmatpush.msra.mxu0 %v5005
        %v5007 = vand.u32 %v913, 4294901760
        %v5008 = vsub.f32 %v913, %v5007
        %v5009 = vand.u32 %v5008, 4294901760
        %5010 = vmatpush.msra.mxu0 %v5009
        %v5011 = vand.u32 %v912, 4294901760
        %v5012 = vsub.f32 %v912, %v5011
        %v5013 = vand.u32 %v5012, 4294901760
        %5014 = vmatpush.msra.mxu0 %v5013
        %v5015 = vand.u32 %v726, 4294901760
        %5016 = vmatmul.f32.gmra.mxu0 %v5015
        %v5017 = vpop.f32.mrf.mxu0
        %v5018 = vadd.f32 %v4937, %v5017
        %v5019 = vand.u32 %v743, 4294901760
        %5020 = vmatmul.f32.gmra.mxu0 %v5019
        %v5021 = vpop.f32.mrf.mxu0
        %v5022 = vadd.f32 %v4943, %v5021
        %v5023 = vand.u32 %v760, 4294901760
        %5024 = vmatmul.f32.gmra.mxu0 %v5023
        %v5025 = vpop.f32.mrf.mxu0
        %v5026 = vadd.f32 %v4949, %v5025
        %5027 = vdwg.mxu0
        %v5028 = vand.u32 %v927, 4294901760
        %5029 = vmatpush.msra.mxu0 %v5028
        %v5030 = vand.u32 %v926, 4294901760
        %5031 = vmatpush.msra.mxu0 %v5030
        %v5032 = vand.u32 %v925, 4294901760
        %5033 = vmatpush.msra.mxu0 %v5032
        %v5034 = vand.u32 %v924, 4294901760
        %5035 = vmatpush.msra.mxu0 %v5034
        %v5036 = vand.u32 %v923, 4294901760
        %5037 = vmatpush.msra.mxu0 %v5036
        %v5038 = vand.u32 %v922, 4294901760
        %5039 = vmatpush.msra.mxu0 %v5038
        %v5040 = vand.u32 %v921, 4294901760
        %5041 = vmatpush.msra.mxu0 %v5040
        %v5042 = vand.u32 %v920, 4294901760
        %5043 = vmatpush.msra.mxu0 %v5042
        %v5044 = vand.u32 %v919, 4294901760
        %5045 = vmatpush.msra.mxu0 %v5044
        %v5046 = vand.u32 %v918, 4294901760
        %5047 = vmatpush.msra.mxu0 %v5046
        %v5048 = vand.u32 %v917, 4294901760
        %5049 = vmatpush.msra.mxu0 %v5048
        %v5050 = vand.u32 %v916, 4294901760
        %5051 = vmatpush.msra.mxu0 %v5050
        %v5052 = vand.u32 %v915, 4294901760
        %5053 = vmatpush.msra.mxu0 %v5052
        %v5054 = vand.u32 %v914, 4294901760
        %5055 = vmatpush.msra.mxu0 %v5054
        %v5056 = vand.u32 %v913, 4294901760
        %5057 = vmatpush.msra.mxu0 %v5056
        %v5058 = vand.u32 %v912, 4294901760
        %5059 = vmatpush.msra.mxu0 %v5058
        %v5060 = vand.u32 %v726, 4294901760
        %5061 = vmatmul.f32.gmra.mxu0 %v5060
        %v5062 = vpop.f32.mrf.mxu0
        %v5063 = vadd.f32 %v5018, %v5062
        %v5064 = vand.u32 %v743, 4294901760
        %5065 = vmatmul.f32.gmra.mxu0 %v5064
        %v5066 = vpop.f32.mrf.mxu0
        %v5067 = vadd.f32 %v5022, %v5066
        %v5068 = vand.u32 %v760, 4294901760
        %5069 = vmatmul.f32.gmra.mxu0 %v5068
        %v5070 = vpop.f32.mrf.mxu0
        %v5071 = vadd.f32 %v5026, %v5070
        %5072 = vdwg.mxu0
        %v5073 = vand.u32 %v943, 4294901760
        %5074 = vmatpush.msra.mxu0 %v5073
        %v5075 = vand.u32 %v942, 4294901760
        %5076 = vmatpush.msra.mxu0 %v5075
        %v5077 = vand.u32 %v941, 4294901760
        %5078 = vmatpush.msra.mxu0 %v5077
        %v5079 = vand.u32 %v940, 4294901760
        %5080 = vmatpush.msra.mxu0 %v5079
        %v5081 = vand.u32 %v939, 4294901760
        %5082 = vmatpush.msra.mxu0 %v5081
        %v5083 = vand.u32 %v938, 4294901760
        %5084 = vmatpush.msra.mxu0 %v5083
        %v5085 = vand.u32 %v937, 4294901760
        %5086 = vmatpush.msra.mxu0 %v5085
        %v5087 = vand.u32 %v936, 4294901760
        %5088 = vmatpush.msra.mxu0 %v5087
        %v5089 = vand.u32 %v935, 4294901760
        %5090 = vmatpush.msra.mxu0 %v5089
        %v5091 = vand.u32 %v934, 4294901760
        %5092 = vmatpush.msra.mxu0 %v5091
        %v5093 = vand.u32 %v933, 4294901760
        %5094 = vmatpush.msra.mxu0 %v5093
        %v5095 = vand.u32 %v932, 4294901760
        %5096 = vmatpush.msra.mxu0 %v5095
        %v5097 = vand.u32 %v931, 4294901760
        %5098 = vmatpush.msra.mxu0 %v5097
        %v5099 = vand.u32 %v930, 4294901760
        %5100 = vmatpush.msra.mxu0 %v5099
        %v5101 = vand.u32 %v929, 4294901760
        %5102 = vmatpush.msra.mxu0 %v5101
        %v5103 = vand.u32 %v928, 4294901760
        %5104 = vmatpush.msra.mxu0 %v5103
        %v5105 = vand.u32 %v727, 4294901760
        %v5106 = vsub.f32 %v727, %v5105
        %v5107 = vand.u32 %v5106, 4294901760
        %v5108 = vsub.f32 %v5106, %v5107
        %v5109 = vand.u32 %v5108, 4294901760
        %5110 = vmatmul.f32.gmra.mxu0 %v5109
        %v5111 = vpop.f32.mrf.mxu0
        %v5112 = vadd.f32 %v5063, %v5111
        %v5113 = vand.u32 %v744, 4294901760
        %v5114 = vsub.f32 %v744, %v5113
        %v5115 = vand.u32 %v5114, 4294901760
        %v5116 = vsub.f32 %v5114, %v5115
        %v5117 = vand.u32 %v5116, 4294901760
        %5118 = vmatmul.f32.gmra.mxu0 %v5117
        %v5119 = vpop.f32.mrf.mxu0
        %v5120 = vadd.f32 %v5067, %v5119
        %v5121 = vand.u32 %v761, 4294901760
        %v5122 = vsub.f32 %v761, %v5121
        %v5123 = vand.u32 %v5122, 4294901760
        %v5124 = vsub.f32 %v5122, %v5123
        %v5125 = vand.u32 %v5124, 4294901760
        %5126 = vmatmul.f32.gmra.mxu0 %v5125
        %v5127 = vpop.f32.mrf.mxu0
        %v5128 = vadd.f32 %v5071, %v5127
        %5129 = vdwg.mxu0
        %v5130 = vand.u32 %v943, 4294901760
        %v5131 = vsub.f32 %v943, %v5130
        %v5132 = vand.u32 %v5131, 4294901760
        %v5133 = vsub.f32 %v5131, %v5132
        %v5134 = vand.u32 %v5133, 4294901760
        %5135 = vmatpush.msra.mxu0 %v5134
        %v5136 = vand.u32 %v942, 4294901760
        %v5137 = vsub.f32 %v942, %v5136
        %v5138 = vand.u32 %v5137, 4294901760
        %v5139 = vsub.f32 %v5137, %v5138
        %v5140 = vand.u32 %v5139, 4294901760
        %5141 = vmatpush.msra.mxu0 %v5140
        %v5142 = vand.u32 %v941, 4294901760
        %v5143 = vsub.f32 %v941, %v5142
        %v5144 = vand.u32 %v5143, 4294901760
        %v5145 = vsub.f32 %v5143, %v5144
        %v5146 = vand.u32 %v5145, 4294901760
        %5147 = vmatpush.msra.mxu0 %v5146
        %v5148 = vand.u32 %v940, 4294901760
        %v5149 = vsub.f32 %v940, %v5148
        %v5150 = vand.u32 %v5149, 4294901760
        %v5151 = vsub.f32 %v5149, %v5150
        %v5152 = vand.u32 %v5151, 4294901760
        %5153 = vmatpush.msra.mxu0 %v5152
        %v5154 = vand.u32 %v939, 4294901760
        %v5155 = vsub.f32 %v939, %v5154
        %v5156 = vand.u32 %v5155, 4294901760
        %v5157 = vsub.f32 %v5155, %v5156
        %v5158 = vand.u32 %v5157, 4294901760
        %5159 = vmatpush.msra.mxu0 %v5158
        %v5160 = vand.u32 %v938, 4294901760
        %v5161 = vsub.f32 %v938, %v5160
        %v5162 = vand.u32 %v5161, 4294901760
        %v5163 = vsub.f32 %v5161, %v5162
        %v5164 = vand.u32 %v5163, 4294901760
        %5165 = vmatpush.msra.mxu0 %v5164
        %v5166 = vand.u32 %v937, 4294901760
        %v5167 = vsub.f32 %v937, %v5166
        %v5168 = vand.u32 %v5167, 4294901760
        %v5169 = vsub.f32 %v5167, %v5168
        %v5170 = vand.u32 %v5169, 4294901760
        %5171 = vmatpush.msra.mxu0 %v5170
        %v5172 = vand.u32 %v936, 4294901760
        %v5173 = vsub.f32 %v936, %v5172
        %v5174 = vand.u32 %v5173, 4294901760
        %v5175 = vsub.f32 %v5173, %v5174
        %v5176 = vand.u32 %v5175, 4294901760
        %5177 = vmatpush.msra.mxu0 %v5176
        %v5178 = vand.u32 %v935, 4294901760
        %v5179 = vsub.f32 %v935, %v5178
        %v5180 = vand.u32 %v5179, 4294901760
        %v5181 = vsub.f32 %v5179, %v5180
        %v5182 = vand.u32 %v5181, 4294901760
        %5183 = vmatpush.msra.mxu0 %v5182
        %v5184 = vand.u32 %v934, 4294901760
        %v5185 = vsub.f32 %v934, %v5184
        %v5186 = vand.u32 %v5185, 4294901760
        %v5187 = vsub.f32 %v5185, %v5186
        %v5188 = vand.u32 %v5187, 4294901760
        %5189 = vmatpush.msra.mxu0 %v5188
        %v5190 = vand.u32 %v933, 4294901760
        %v5191 = vsub.f32 %v933, %v5190
        %v5192 = vand.u32 %v5191, 4294901760
        %v5193 = vsub.f32 %v5191, %v5192
        %v5194 = vand.u32 %v5193, 4294901760
        %5195 = vmatpush.msra.mxu0 %v5194
        %v5196 = vand.u32 %v932, 4294901760
        %v5197 = vsub.f32 %v932, %v5196
        %v5198 = vand.u32 %v5197, 4294901760
        %v5199 = vsub.f32 %v5197, %v5198
        %v5200 = vand.u32 %v5199, 4294901760
        %5201 = vmatpush.msra.mxu0 %v5200
        %v5202 = vand.u32 %v931, 4294901760
        %v5203 = vsub.f32 %v931, %v5202
        %v5204 = vand.u32 %v5203, 4294901760
        %v5205 = vsub.f32 %v5203, %v5204
        %v5206 = vand.u32 %v5205, 4294901760
        %5207 = vmatpush.msra.mxu0 %v5206
        %v5208 = vand.u32 %v930, 4294901760
        %v5209 = vsub.f32 %v930, %v5208
        %v5210 = vand.u32 %v5209, 4294901760
        %v5211 = vsub.f32 %v5209, %v5210
        %v5212 = vand.u32 %v5211, 4294901760
        %5213 = vmatpush.msra.mxu0 %v5212
        %v5214 = vand.u32 %v929, 4294901760
        %v5215 = vsub.f32 %v929, %v5214
        %v5216 = vand.u32 %v5215, 4294901760
        %v5217 = vsub.f32 %v5215, %v5216
        %v5218 = vand.u32 %v5217, 4294901760
        %5219 = vmatpush.msra.mxu0 %v5218
        %v5220 = vand.u32 %v928, 4294901760
        %v5221 = vsub.f32 %v928, %v5220
        %v5222 = vand.u32 %v5221, 4294901760
        %v5223 = vsub.f32 %v5221, %v5222
        %v5224 = vand.u32 %v5223, 4294901760
        %5225 = vmatpush.msra.mxu0 %v5224
        %v5226 = vand.u32 %v727, 4294901760
        %5227 = vmatmul.f32.gmra.mxu0 %v5226
        %v5228 = vpop.f32.mrf.mxu0
        %v5229 = vadd.f32 %v5112, %v5228
        %v5230 = vand.u32 %v744, 4294901760
        %5231 = vmatmul.f32.gmra.mxu0 %v5230
        %v5232 = vpop.f32.mrf.mxu0
        %v5233 = vadd.f32 %v5120, %v5232
        %v5234 = vand.u32 %v761, 4294901760
        %5235 = vmatmul.f32.gmra.mxu0 %v5234
        %v5236 = vpop.f32.mrf.mxu0
        %v5237 = vadd.f32 %v5128, %v5236
        %5238 = vdwg.mxu0
        %v5239 = vand.u32 %v943, 4294901760
        %v5240 = vsub.f32 %v943, %v5239
        %5241 = vmatpush.msra.mxu0 %v5240
        %v5242 = vand.u32 %v942, 4294901760
        %v5243 = vsub.f32 %v942, %v5242
        %5244 = vmatpush.msra.mxu0 %v5243
        %v5245 = vand.u32 %v941, 4294901760
        %v5246 = vsub.f32 %v941, %v5245
        %5247 = vmatpush.msra.mxu0 %v5246
        %v5248 = vand.u32 %v940, 4294901760
        %v5249 = vsub.f32 %v940, %v5248
        %5250 = vmatpush.msra.mxu0 %v5249
        %v5251 = vand.u32 %v939, 4294901760
        %v5252 = vsub.f32 %v939, %v5251
        %5253 = vmatpush.msra.mxu0 %v5252
        %v5254 = vand.u32 %v938, 4294901760
        %v5255 = vsub.f32 %v938, %v5254
        %5256 = vmatpush.msra.mxu0 %v5255
        %v5257 = vand.u32 %v937, 4294901760
        %v5258 = vsub.f32 %v937, %v5257
        %5259 = vmatpush.msra.mxu0 %v5258
        %v5260 = vand.u32 %v936, 4294901760
        %v5261 = vsub.f32 %v936, %v5260
        %5262 = vmatpush.msra.mxu0 %v5261
        %v5263 = vand.u32 %v935, 4294901760
        %v5264 = vsub.f32 %v935, %v5263
        %5265 = vmatpush.msra.mxu0 %v5264
        %v5266 = vand.u32 %v934, 4294901760
        %v5267 = vsub.f32 %v934, %v5266
        %5268 = vmatpush.msra.mxu0 %v5267
        %v5269 = vand.u32 %v933, 4294901760
        %v5270 = vsub.f32 %v933, %v5269
        %5271 = vmatpush.msra.mxu0 %v5270
        %v5272 = vand.u32 %v932, 4294901760
        %v5273 = vsub.f32 %v932, %v5272
        %5274 = vmatpush.msra.mxu0 %v5273
        %v5275 = vand.u32 %v931, 4294901760
        %v5276 = vsub.f32 %v931, %v5275
        %5277 = vmatpush.msra.mxu0 %v5276
        %v5278 = vand.u32 %v930, 4294901760
        %v5279 = vsub.f32 %v930, %v5278
        %5280 = vmatpush.msra.mxu0 %v5279
        %v5281 = vand.u32 %v929, 4294901760
        %v5282 = vsub.f32 %v929, %v5281
        %5283 = vmatpush.msra.mxu0 %v5282
        %v5284 = vand.u32 %v928, 4294901760
        %v5285 = vsub.f32 %v928, %v5284
        %5286 = vmatpush.msra.mxu0 %v5285
        %v5287 = vand.u32 %v727, 4294901760
        %v5288 = vsub.f32 %v727, %v5287
        %5289 = vmatmul.f32.gmra.mxu0 %v5288
        %v5290 = vpop.f32.mrf.mxu0
        %v5291 = vadd.f32 %v5229, %v5290
        %v5292 = vand.u32 %v744, 4294901760
        %v5293 = vsub.f32 %v744, %v5292
        %5294 = vmatmul.f32.gmra.mxu0 %v5293
        %v5295 = vpop.f32.mrf.mxu0
        %v5296 = vadd.f32 %v5233, %v5295
        %v5297 = vand.u32 %v761, 4294901760
        %v5298 = vsub.f32 %v761, %v5297
        %5299 = vmatmul.f32.gmra.mxu0 %v5298
        %v5300 = vpop.f32.mrf.mxu0
        %v5301 = vadd.f32 %v5237, %v5300
        %5302 = vdwg.mxu0
        %v5303 = vand.u32 %v943, 4294901760
        %5304 = vmatpush.msra.mxu0 %v5303
        %v5305 = vand.u32 %v942, 4294901760
        %5306 = vmatpush.msra.mxu0 %v5305
        %v5307 = vand.u32 %v941, 4294901760
        %5308 = vmatpush.msra.mxu0 %v5307
        %v5309 = vand.u32 %v940, 4294901760
        %5310 = vmatpush.msra.mxu0 %v5309
        %v5311 = vand.u32 %v939, 4294901760
        %5312 = vmatpush.msra.mxu0 %v5311
        %v5313 = vand.u32 %v938, 4294901760
        %5314 = vmatpush.msra.mxu0 %v5313
        %v5315 = vand.u32 %v937, 4294901760
        %5316 = vmatpush.msra.mxu0 %v5315
        %v5317 = vand.u32 %v936, 4294901760
        %5318 = vmatpush.msra.mxu0 %v5317
        %v5319 = vand.u32 %v935, 4294901760
        %5320 = vmatpush.msra.mxu0 %v5319
        %v5321 = vand.u32 %v934, 4294901760
        %5322 = vmatpush.msra.mxu0 %v5321
        %v5323 = vand.u32 %v933, 4294901760
        %5324 = vmatpush.msra.mxu0 %v5323
        %v5325 = vand.u32 %v932, 4294901760
        %5326 = vmatpush.msra.mxu0 %v5325
        %v5327 = vand.u32 %v931, 4294901760
        %5328 = vmatpush.msra.mxu0 %v5327
        %v5329 = vand.u32 %v930, 4294901760
        %5330 = vmatpush.msra.mxu0 %v5329
        %v5331 = vand.u32 %v929, 4294901760
        %5332 = vmatpush.msra.mxu0 %v5331
        %v5333 = vand.u32 %v928, 4294901760
        %5334 = vmatpush.msra.mxu0 %v5333
        %v5335 = vand.u32 %v727, 4294901760
        %v5336 = vsub.f32 %v727, %v5335
        %v5337 = vand.u32 %v5336, 4294901760
        %5338 = vmatmul.f32.gmra.mxu0 %v5337
        %v5339 = vpop.f32.mrf.mxu0
        %v5340 = vadd.f32 %v5291, %v5339
        %v5341 = vand.u32 %v744, 4294901760
        %v5342 = vsub.f32 %v744, %v5341
        %v5343 = vand.u32 %v5342, 4294901760
        %5344 = vmatmul.f32.gmra.mxu0 %v5343
        %v5345 = vpop.f32.mrf.mxu0
        %v5346 = vadd.f32 %v5296, %v5345
        %v5347 = vand.u32 %v761, 4294901760
        %v5348 = vsub.f32 %v761, %v5347
        %v5349 = vand.u32 %v5348, 4294901760
        %5350 = vmatmul.f32.gmra.mxu0 %v5349
        %v5351 = vpop.f32.mrf.mxu0
        %v5352 = vadd.f32 %v5301, %v5351
        %5353 = vdwg.mxu0
        %v5354 = vand.u32 %v943, 4294901760
        %v5355 = vsub.f32 %v943, %v5354
        %v5356 = vand.u32 %v5355, 4294901760
        %5357 = vmatpush.msra.mxu0 %v5356
        %v5358 = vand.u32 %v942, 4294901760
        %v5359 = vsub.f32 %v942, %v5358
        %v5360 = vand.u32 %v5359, 4294901760
        %5361 = vmatpush.msra.mxu0 %v5360
        %v5362 = vand.u32 %v941, 4294901760
        %v5363 = vsub.f32 %v941, %v5362
        %v5364 = vand.u32 %v5363, 4294901760
        %5365 = vmatpush.msra.mxu0 %v5364
        %v5366 = vand.u32 %v940, 4294901760
        %v5367 = vsub.f32 %v940, %v5366
        %v5368 = vand.u32 %v5367, 4294901760
        %5369 = vmatpush.msra.mxu0 %v5368
        %v5370 = vand.u32 %v939, 4294901760
        %v5371 = vsub.f32 %v939, %v5370
        %v5372 = vand.u32 %v5371, 4294901760
        %5373 = vmatpush.msra.mxu0 %v5372
        %v5374 = vand.u32 %v938, 4294901760
        %v5375 = vsub.f32 %v938, %v5374
        %v5376 = vand.u32 %v5375, 4294901760
        %5377 = vmatpush.msra.mxu0 %v5376
        %v5378 = vand.u32 %v937, 4294901760
        %v5379 = vsub.f32 %v937, %v5378
        %v5380 = vand.u32 %v5379, 4294901760
        %5381 = vmatpush.msra.mxu0 %v5380
        %v5382 = vand.u32 %v936, 4294901760
        %v5383 = vsub.f32 %v936, %v5382
        %v5384 = vand.u32 %v5383, 4294901760
        %5385 = vmatpush.msra.mxu0 %v5384
        %v5386 = vand.u32 %v935, 4294901760
        %v5387 = vsub.f32 %v935, %v5386
        %v5388 = vand.u32 %v5387, 4294901760
        %5389 = vmatpush.msra.mxu0 %v5388
        %v5390 = vand.u32 %v934, 4294901760
        %v5391 = vsub.f32 %v934, %v5390
        %v5392 = vand.u32 %v5391, 4294901760
        %5393 = vmatpush.msra.mxu0 %v5392
        %v5394 = vand.u32 %v933, 4294901760
        %v5395 = vsub.f32 %v933, %v5394
        %v5396 = vand.u32 %v5395, 4294901760
        %5397 = vmatpush.msra.mxu0 %v5396
        %v5398 = vand.u32 %v932, 4294901760
        %v5399 = vsub.f32 %v932, %v5398
        %v5400 = vand.u32 %v5399, 4294901760
        %5401 = vmatpush.msra.mxu0 %v5400
        %v5402 = vand.u32 %v931, 4294901760
        %v5403 = vsub.f32 %v931, %v5402
        %v5404 = vand.u32 %v5403, 4294901760
        %5405 = vmatpush.msra.mxu0 %v5404
        %v5406 = vand.u32 %v930, 4294901760
        %v5407 = vsub.f32 %v930, %v5406
        %v5408 = vand.u32 %v5407, 4294901760
        %5409 = vmatpush.msra.mxu0 %v5408
        %v5410 = vand.u32 %v929, 4294901760
        %v5411 = vsub.f32 %v929, %v5410
        %v5412 = vand.u32 %v5411, 4294901760
        %5413 = vmatpush.msra.mxu0 %v5412
        %v5414 = vand.u32 %v928, 4294901760
        %v5415 = vsub.f32 %v928, %v5414
        %v5416 = vand.u32 %v5415, 4294901760
        %5417 = vmatpush.msra.mxu0 %v5416
        %v5418 = vand.u32 %v727, 4294901760
        %5419 = vmatmul.f32.gmra.mxu0 %v5418
        %v5420 = vpop.f32.mrf.mxu0
        %v5421 = vadd.f32 %v5340, %v5420
        %v5422 = vand.u32 %v744, 4294901760
        %5423 = vmatmul.f32.gmra.mxu0 %v5422
        %v5424 = vpop.f32.mrf.mxu0
        %v5425 = vadd.f32 %v5346, %v5424
        %v5426 = vand.u32 %v761, 4294901760
        %5427 = vmatmul.f32.gmra.mxu0 %v5426
        %v5428 = vpop.f32.mrf.mxu0
        %v5429 = vadd.f32 %v5352, %v5428
        %5430 = vdwg.mxu0
        %v5431 = vand.u32 %v943, 4294901760
        %5432 = vmatpush.msra.mxu0 %v5431
        %v5433 = vand.u32 %v942, 4294901760
        %5434 = vmatpush.msra.mxu0 %v5433
        %v5435 = vand.u32 %v941, 4294901760
        %5436 = vmatpush.msra.mxu0 %v5435
        %v5437 = vand.u32 %v940, 4294901760
        %5438 = vmatpush.msra.mxu0 %v5437
        %v5439 = vand.u32 %v939, 4294901760
        %5440 = vmatpush.msra.mxu0 %v5439
        %v5441 = vand.u32 %v938, 4294901760
        %5442 = vmatpush.msra.mxu0 %v5441
        %v5443 = vand.u32 %v937, 4294901760
        %5444 = vmatpush.msra.mxu0 %v5443
        %v5445 = vand.u32 %v936, 4294901760
        %5446 = vmatpush.msra.mxu0 %v5445
        %v5447 = vand.u32 %v935, 4294901760
        %5448 = vmatpush.msra.mxu0 %v5447
        %v5449 = vand.u32 %v934, 4294901760
        %5450 = vmatpush.msra.mxu0 %v5449
        %v5451 = vand.u32 %v933, 4294901760
        %5452 = vmatpush.msra.mxu0 %v5451
        %v5453 = vand.u32 %v932, 4294901760
        %5454 = vmatpush.msra.mxu0 %v5453
        %v5455 = vand.u32 %v931, 4294901760
        %5456 = vmatpush.msra.mxu0 %v5455
        %v5457 = vand.u32 %v930, 4294901760
        %5458 = vmatpush.msra.mxu0 %v5457
        %v5459 = vand.u32 %v929, 4294901760
        %5460 = vmatpush.msra.mxu0 %v5459
        %v5461 = vand.u32 %v928, 4294901760
        %5462 = vmatpush.msra.mxu0 %v5461
        %v5463 = vand.u32 %v727, 4294901760
        %5464 = vmatmul.f32.gmra.mxu0 %v5463
        %v5465 = vpop.f32.mrf.mxu0
        %v5466 = vadd.f32 %v5421, %v5465
        %v5467 = vand.u32 %v744, 4294901760
        %5468 = vmatmul.f32.gmra.mxu0 %v5467
        %v5469 = vpop.f32.mrf.mxu0
        %v5470 = vadd.f32 %v5425, %v5469
        %v5471 = vand.u32 %v761, 4294901760
        %5472 = vmatmul.f32.gmra.mxu0 %v5471
        %v5473 = vpop.f32.mrf.mxu0
        %v5474 = vadd.f32 %v5429, %v5473
        %5475 = vdwg.mxu0
        %v5476 = vand.u32 %v959, 4294901760
        %5477 = vmatpush.msra.mxu0 %v5476
        %v5478 = vand.u32 %v958, 4294901760
        %5479 = vmatpush.msra.mxu0 %v5478
        %v5480 = vand.u32 %v957, 4294901760
        %5481 = vmatpush.msra.mxu0 %v5480
        %v5482 = vand.u32 %v956, 4294901760
        %5483 = vmatpush.msra.mxu0 %v5482
        %v5484 = vand.u32 %v955, 4294901760
        %5485 = vmatpush.msra.mxu0 %v5484
        %v5486 = vand.u32 %v954, 4294901760
        %5487 = vmatpush.msra.mxu0 %v5486
        %v5488 = vand.u32 %v953, 4294901760
        %5489 = vmatpush.msra.mxu0 %v5488
        %v5490 = vand.u32 %v952, 4294901760
        %5491 = vmatpush.msra.mxu0 %v5490
        %v5492 = vand.u32 %v951, 4294901760
        %5493 = vmatpush.msra.mxu0 %v5492
        %v5494 = vand.u32 %v950, 4294901760
        %5495 = vmatpush.msra.mxu0 %v5494
        %v5496 = vand.u32 %v949, 4294901760
        %5497 = vmatpush.msra.mxu0 %v5496
        %v5498 = vand.u32 %v948, 4294901760
        %5499 = vmatpush.msra.mxu0 %v5498
        %v5500 = vand.u32 %v947, 4294901760
        %5501 = vmatpush.msra.mxu0 %v5500
        %v5502 = vand.u32 %v946, 4294901760
        %5503 = vmatpush.msra.mxu0 %v5502
        %v5504 = vand.u32 %v945, 4294901760
        %5505 = vmatpush.msra.mxu0 %v5504
        %v5506 = vand.u32 %v944, 4294901760
        %5507 = vmatpush.msra.mxu0 %v5506
        %v5508 = vand.u32 %v728, 4294901760
        %v5509 = vsub.f32 %v728, %v5508
        %v5510 = vand.u32 %v5509, 4294901760
        %v5511 = vsub.f32 %v5509, %v5510
        %v5512 = vand.u32 %v5511, 4294901760
        %5513 = vmatmul.f32.gmra.mxu0 %v5512
        %v5514 = vpop.f32.mrf.mxu0
        %v5515 = vadd.f32 %v5466, %v5514
        %v5516 = vand.u32 %v745, 4294901760
        %v5517 = vsub.f32 %v745, %v5516
        %v5518 = vand.u32 %v5517, 4294901760
        %v5519 = vsub.f32 %v5517, %v5518
        %v5520 = vand.u32 %v5519, 4294901760
        %5521 = vmatmul.f32.gmra.mxu0 %v5520
        %v5522 = vpop.f32.mrf.mxu0
        %v5523 = vadd.f32 %v5470, %v5522
        %v5524 = vand.u32 %v762, 4294901760
        %v5525 = vsub.f32 %v762, %v5524
        %v5526 = vand.u32 %v5525, 4294901760
        %v5527 = vsub.f32 %v5525, %v5526
        %v5528 = vand.u32 %v5527, 4294901760
        %5529 = vmatmul.f32.gmra.mxu0 %v5528
        %v5530 = vpop.f32.mrf.mxu0
        %v5531 = vadd.f32 %v5474, %v5530
        %5532 = vdwg.mxu0
        %v5533 = vand.u32 %v959, 4294901760
        %v5534 = vsub.f32 %v959, %v5533
        %v5535 = vand.u32 %v5534, 4294901760
        %v5536 = vsub.f32 %v5534, %v5535
        %v5537 = vand.u32 %v5536, 4294901760
        %5538 = vmatpush.msra.mxu0 %v5537
        %v5539 = vand.u32 %v958, 4294901760
        %v5540 = vsub.f32 %v958, %v5539
        %v5541 = vand.u32 %v5540, 4294901760
        %v5542 = vsub.f32 %v5540, %v5541
        %v5543 = vand.u32 %v5542, 4294901760
        %5544 = vmatpush.msra.mxu0 %v5543
        %v5545 = vand.u32 %v957, 4294901760
        %v5546 = vsub.f32 %v957, %v5545
        %v5547 = vand.u32 %v5546, 4294901760
        %v5548 = vsub.f32 %v5546, %v5547
        %v5549 = vand.u32 %v5548, 4294901760
        %5550 = vmatpush.msra.mxu0 %v5549
        %v5551 = vand.u32 %v956, 4294901760
        %v5552 = vsub.f32 %v956, %v5551
        %v5553 = vand.u32 %v5552, 4294901760
        %v5554 = vsub.f32 %v5552, %v5553
        %v5555 = vand.u32 %v5554, 4294901760
        %5556 = vmatpush.msra.mxu0 %v5555
        %v5557 = vand.u32 %v955, 4294901760
        %v5558 = vsub.f32 %v955, %v5557
        %v5559 = vand.u32 %v5558, 4294901760
        %v5560 = vsub.f32 %v5558, %v5559
        %v5561 = vand.u32 %v5560, 4294901760
        %5562 = vmatpush.msra.mxu0 %v5561
        %v5563 = vand.u32 %v954, 4294901760
        %v5564 = vsub.f32 %v954, %v5563
        %v5565 = vand.u32 %v5564, 4294901760
        %v5566 = vsub.f32 %v5564, %v5565
        %v5567 = vand.u32 %v5566, 4294901760
        %5568 = vmatpush.msra.mxu0 %v5567
        %v5569 = vand.u32 %v953, 4294901760
        %v5570 = vsub.f32 %v953, %v5569
        %v5571 = vand.u32 %v5570, 4294901760
        %v5572 = vsub.f32 %v5570, %v5571
        %v5573 = vand.u32 %v5572, 4294901760
        %5574 = vmatpush.msra.mxu0 %v5573
        %v5575 = vand.u32 %v952, 4294901760
        %v5576 = vsub.f32 %v952, %v5575
        %v5577 = vand.u32 %v5576, 4294901760
        %v5578 = vsub.f32 %v5576, %v5577
        %v5579 = vand.u32 %v5578, 4294901760
        %5580 = vmatpush.msra.mxu0 %v5579
        %v5581 = vand.u32 %v951, 4294901760
        %v5582 = vsub.f32 %v951, %v5581
        %v5583 = vand.u32 %v5582, 4294901760
        %v5584 = vsub.f32 %v5582, %v5583
        %v5585 = vand.u32 %v5584, 4294901760
        %5586 = vmatpush.msra.mxu0 %v5585
        %v5587 = vand.u32 %v950, 4294901760
        %v5588 = vsub.f32 %v950, %v5587
        %v5589 = vand.u32 %v5588, 4294901760
        %v5590 = vsub.f32 %v5588, %v5589
        %v5591 = vand.u32 %v5590, 4294901760
        %5592 = vmatpush.msra.mxu0 %v5591
        %v5593 = vand.u32 %v949, 4294901760
        %v5594 = vsub.f32 %v949, %v5593
        %v5595 = vand.u32 %v5594, 4294901760
        %v5596 = vsub.f32 %v5594, %v5595
        %v5597 = vand.u32 %v5596, 4294901760
        %5598 = vmatpush.msra.mxu0 %v5597
        %v5599 = vand.u32 %v948, 4294901760
        %v5600 = vsub.f32 %v948, %v5599
        %v5601 = vand.u32 %v5600, 4294901760
        %v5602 = vsub.f32 %v5600, %v5601
        %v5603 = vand.u32 %v5602, 4294901760
        %5604 = vmatpush.msra.mxu0 %v5603
        %v5605 = vand.u32 %v947, 4294901760
        %v5606 = vsub.f32 %v947, %v5605
        %v5607 = vand.u32 %v5606, 4294901760
        %v5608 = vsub.f32 %v5606, %v5607
        %v5609 = vand.u32 %v5608, 4294901760
        %5610 = vmatpush.msra.mxu0 %v5609
        %v5611 = vand.u32 %v946, 4294901760
        %v5612 = vsub.f32 %v946, %v5611
        %v5613 = vand.u32 %v5612, 4294901760
        %v5614 = vsub.f32 %v5612, %v5613
        %v5615 = vand.u32 %v5614, 4294901760
        %5616 = vmatpush.msra.mxu0 %v5615
        %v5617 = vand.u32 %v945, 4294901760
        %v5618 = vsub.f32 %v945, %v5617
        %v5619 = vand.u32 %v5618, 4294901760
        %v5620 = vsub.f32 %v5618, %v5619
        %v5621 = vand.u32 %v5620, 4294901760
        %5622 = vmatpush.msra.mxu0 %v5621
        %v5623 = vand.u32 %v944, 4294901760
        %v5624 = vsub.f32 %v944, %v5623
        %v5625 = vand.u32 %v5624, 4294901760
        %v5626 = vsub.f32 %v5624, %v5625
        %v5627 = vand.u32 %v5626, 4294901760
        %5628 = vmatpush.msra.mxu0 %v5627
        %v5629 = vand.u32 %v728, 4294901760
        %5630 = vmatmul.f32.gmra.mxu0 %v5629
        %v5631 = vpop.f32.mrf.mxu0
        %v5632 = vadd.f32 %v5515, %v5631
        %v5633 = vand.u32 %v745, 4294901760
        %5634 = vmatmul.f32.gmra.mxu0 %v5633
        %v5635 = vpop.f32.mrf.mxu0
        %v5636 = vadd.f32 %v5523, %v5635
        %v5637 = vand.u32 %v762, 4294901760
        %5638 = vmatmul.f32.gmra.mxu0 %v5637
        %v5639 = vpop.f32.mrf.mxu0
        %v5640 = vadd.f32 %v5531, %v5639
        %5641 = vdwg.mxu0
        %v5642 = vand.u32 %v959, 4294901760
        %v5643 = vsub.f32 %v959, %v5642
        %5644 = vmatpush.msra.mxu0 %v5643
        %v5645 = vand.u32 %v958, 4294901760
        %v5646 = vsub.f32 %v958, %v5645
        %5647 = vmatpush.msra.mxu0 %v5646
        %v5648 = vand.u32 %v957, 4294901760
        %v5649 = vsub.f32 %v957, %v5648
        %5650 = vmatpush.msra.mxu0 %v5649
        %v5651 = vand.u32 %v956, 4294901760
        %v5652 = vsub.f32 %v956, %v5651
        %5653 = vmatpush.msra.mxu0 %v5652
        %v5654 = vand.u32 %v955, 4294901760
        %v5655 = vsub.f32 %v955, %v5654
        %5656 = vmatpush.msra.mxu0 %v5655
        %v5657 = vand.u32 %v954, 4294901760
        %v5658 = vsub.f32 %v954, %v5657
        %5659 = vmatpush.msra.mxu0 %v5658
        %v5660 = vand.u32 %v953, 4294901760
        %v5661 = vsub.f32 %v953, %v5660
        %5662 = vmatpush.msra.mxu0 %v5661
        %v5663 = vand.u32 %v952, 4294901760
        %v5664 = vsub.f32 %v952, %v5663
        %5665 = vmatpush.msra.mxu0 %v5664
        %v5666 = vand.u32 %v951, 4294901760
        %v5667 = vsub.f32 %v951, %v5666
        %5668 = vmatpush.msra.mxu0 %v5667
        %v5669 = vand.u32 %v950, 4294901760
        %v5670 = vsub.f32 %v950, %v5669
        %5671 = vmatpush.msra.mxu0 %v5670
        %v5672 = vand.u32 %v949, 4294901760
        %v5673 = vsub.f32 %v949, %v5672
        %5674 = vmatpush.msra.mxu0 %v5673
        %v5675 = vand.u32 %v948, 4294901760
        %v5676 = vsub.f32 %v948, %v5675
        %5677 = vmatpush.msra.mxu0 %v5676
        %v5678 = vand.u32 %v947, 4294901760
        %v5679 = vsub.f32 %v947, %v5678
        %5680 = vmatpush.msra.mxu0 %v5679
        %v5681 = vand.u32 %v946, 4294901760
        %v5682 = vsub.f32 %v946, %v5681
        %5683 = vmatpush.msra.mxu0 %v5682
        %v5684 = vand.u32 %v945, 4294901760
        %v5685 = vsub.f32 %v945, %v5684
        %5686 = vmatpush.msra.mxu0 %v5685
        %v5687 = vand.u32 %v944, 4294901760
        %v5688 = vsub.f32 %v944, %v5687
        %5689 = vmatpush.msra.mxu0 %v5688
        %v5690 = vand.u32 %v728, 4294901760
        %v5691 = vsub.f32 %v728, %v5690
        %5692 = vmatmul.f32.gmra.mxu0 %v5691
        %v5693 = vpop.f32.mrf.mxu0
        %v5694 = vadd.f32 %v5632, %v5693
        %v5695 = vand.u32 %v745, 4294901760
        %v5696 = vsub.f32 %v745, %v5695
        %5697 = vmatmul.f32.gmra.mxu0 %v5696
        %v5698 = vpop.f32.mrf.mxu0
        %v5699 = vadd.f32 %v5636, %v5698
        %v5700 = vand.u32 %v762, 4294901760
        %v5701 = vsub.f32 %v762, %v5700
        %5702 = vmatmul.f32.gmra.mxu0 %v5701
        %v5703 = vpop.f32.mrf.mxu0
        %v5704 = vadd.f32 %v5640, %v5703
        %5705 = vdwg.mxu0
        %v5706 = vand.u32 %v959, 4294901760
        %5707 = vmatpush.msra.mxu0 %v5706
        %v5708 = vand.u32 %v958, 4294901760
        %5709 = vmatpush.msra.mxu0 %v5708
        %v5710 = vand.u32 %v957, 4294901760
        %5711 = vmatpush.msra.mxu0 %v5710
        %v5712 = vand.u32 %v956, 4294901760
        %5713 = vmatpush.msra.mxu0 %v5712
        %v5714 = vand.u32 %v955, 4294901760
        %5715 = vmatpush.msra.mxu0 %v5714
        %v5716 = vand.u32 %v954, 4294901760
        %5717 = vmatpush.msra.mxu0 %v5716
        %v5718 = vand.u32 %v953, 4294901760
        %5719 = vmatpush.msra.mxu0 %v5718
        %v5720 = vand.u32 %v952, 4294901760
        %5721 = vmatpush.msra.mxu0 %v5720
        %v5722 = vand.u32 %v951, 4294901760
        %5723 = vmatpush.msra.mxu0 %v5722
        %v5724 = vand.u32 %v950, 4294901760
        %5725 = vmatpush.msra.mxu0 %v5724
        %v5726 = vand.u32 %v949, 4294901760
        %5727 = vmatpush.msra.mxu0 %v5726
        %v5728 = vand.u32 %v948, 4294901760
        %5729 = vmatpush.msra.mxu0 %v5728
        %v5730 = vand.u32 %v947, 4294901760
        %5731 = vmatpush.msra.mxu0 %v5730
        %v5732 = vand.u32 %v946, 4294901760
        %5733 = vmatpush.msra.mxu0 %v5732
        %v5734 = vand.u32 %v945, 4294901760
        %5735 = vmatpush.msra.mxu0 %v5734
        %v5736 = vand.u32 %v944, 4294901760
        %5737 = vmatpush.msra.mxu0 %v5736
        %v5738 = vand.u32 %v728, 4294901760
        %v5739 = vsub.f32 %v728, %v5738
        %v5740 = vand.u32 %v5739, 4294901760
        %5741 = vmatmul.f32.gmra.mxu0 %v5740
        %v5742 = vpop.f32.mrf.mxu0
        %v5743 = vadd.f32 %v5694, %v5742
        %v5744 = vand.u32 %v745, 4294901760
        %v5745 = vsub.f32 %v745, %v5744
        %v5746 = vand.u32 %v5745, 4294901760
        %5747 = vmatmul.f32.gmra.mxu0 %v5746
        %v5748 = vpop.f32.mrf.mxu0
        %v5749 = vadd.f32 %v5699, %v5748
        %v5750 = vand.u32 %v762, 4294901760
        %v5751 = vsub.f32 %v762, %v5750
        %v5752 = vand.u32 %v5751, 4294901760
        %5753 = vmatmul.f32.gmra.mxu0 %v5752
        %v5754 = vpop.f32.mrf.mxu0
        %v5755 = vadd.f32 %v5704, %v5754
        %5756 = vdwg.mxu0
        %v5757 = vand.u32 %v959, 4294901760
        %v5758 = vsub.f32 %v959, %v5757
        %v5759 = vand.u32 %v5758, 4294901760
        %5760 = vmatpush.msra.mxu0 %v5759
        %v5761 = vand.u32 %v958, 4294901760
        %v5762 = vsub.f32 %v958, %v5761
        %v5763 = vand.u32 %v5762, 4294901760
        %5764 = vmatpush.msra.mxu0 %v5763
        %v5765 = vand.u32 %v957, 4294901760
        %v5766 = vsub.f32 %v957, %v5765
        %v5767 = vand.u32 %v5766, 4294901760
        %5768 = vmatpush.msra.mxu0 %v5767
        %v5769 = vand.u32 %v956, 4294901760
        %v5770 = vsub.f32 %v956, %v5769
        %v5771 = vand.u32 %v5770, 4294901760
        %5772 = vmatpush.msra.mxu0 %v5771
        %v5773 = vand.u32 %v955, 4294901760
        %v5774 = vsub.f32 %v955, %v5773
        %v5775 = vand.u32 %v5774, 4294901760
        %5776 = vmatpush.msra.mxu0 %v5775
        %v5777 = vand.u32 %v954, 4294901760
        %v5778 = vsub.f32 %v954, %v5777
        %v5779 = vand.u32 %v5778, 4294901760
        %5780 = vmatpush.msra.mxu0 %v5779
        %v5781 = vand.u32 %v953, 4294901760
        %v5782 = vsub.f32 %v953, %v5781
        %v5783 = vand.u32 %v5782, 4294901760
        %5784 = vmatpush.msra.mxu0 %v5783
        %v5785 = vand.u32 %v952, 4294901760
        %v5786 = vsub.f32 %v952, %v5785
        %v5787 = vand.u32 %v5786, 4294901760
        %5788 = vmatpush.msra.mxu0 %v5787
        %v5789 = vand.u32 %v951, 4294901760
        %v5790 = vsub.f32 %v951, %v5789
        %v5791 = vand.u32 %v5790, 4294901760
        %5792 = vmatpush.msra.mxu0 %v5791
        %v5793 = vand.u32 %v950, 4294901760
        %v5794 = vsub.f32 %v950, %v5793
        %v5795 = vand.u32 %v5794, 4294901760
        %5796 = vmatpush.msra.mxu0 %v5795
        %v5797 = vand.u32 %v949, 4294901760
        %v5798 = vsub.f32 %v949, %v5797
        %v5799 = vand.u32 %v5798, 4294901760
        %5800 = vmatpush.msra.mxu0 %v5799
        %v5801 = vand.u32 %v948, 4294901760
        %v5802 = vsub.f32 %v948, %v5801
        %v5803 = vand.u32 %v5802, 4294901760
        %5804 = vmatpush.msra.mxu0 %v5803
        %v5805 = vand.u32 %v947, 4294901760
        %v5806 = vsub.f32 %v947, %v5805
        %v5807 = vand.u32 %v5806, 4294901760
        %5808 = vmatpush.msra.mxu0 %v5807
        %v5809 = vand.u32 %v946, 4294901760
        %v5810 = vsub.f32 %v946, %v5809
        %v5811 = vand.u32 %v5810, 4294901760
        %5812 = vmatpush.msra.mxu0 %v5811
        %v5813 = vand.u32 %v945, 4294901760
        %v5814 = vsub.f32 %v945, %v5813
        %v5815 = vand.u32 %v5814, 4294901760
        %5816 = vmatpush.msra.mxu0 %v5815
        %v5817 = vand.u32 %v944, 4294901760
        %v5818 = vsub.f32 %v944, %v5817
        %v5819 = vand.u32 %v5818, 4294901760
        %5820 = vmatpush.msra.mxu0 %v5819
        %v5821 = vand.u32 %v728, 4294901760
        %5822 = vmatmul.f32.gmra.mxu0 %v5821
        %v5823 = vpop.f32.mrf.mxu0
        %v5824 = vadd.f32 %v5743, %v5823
        %v5825 = vand.u32 %v745, 4294901760
        %5826 = vmatmul.f32.gmra.mxu0 %v5825
        %v5827 = vpop.f32.mrf.mxu0
        %v5828 = vadd.f32 %v5749, %v5827
        %v5829 = vand.u32 %v762, 4294901760
        %5830 = vmatmul.f32.gmra.mxu0 %v5829
        %v5831 = vpop.f32.mrf.mxu0
        %v5832 = vadd.f32 %v5755, %v5831
        %5833 = vdwg.mxu0
        %v5834 = vand.u32 %v959, 4294901760
        %5835 = vmatpush.msra.mxu0 %v5834
        %v5836 = vand.u32 %v958, 4294901760
        %5837 = vmatpush.msra.mxu0 %v5836
        %v5838 = vand.u32 %v957, 4294901760
        %5839 = vmatpush.msra.mxu0 %v5838
        %v5840 = vand.u32 %v956, 4294901760
        %5841 = vmatpush.msra.mxu0 %v5840
        %v5842 = vand.u32 %v955, 4294901760
        %5843 = vmatpush.msra.mxu0 %v5842
        %v5844 = vand.u32 %v954, 4294901760
        %5845 = vmatpush.msra.mxu0 %v5844
        %v5846 = vand.u32 %v953, 4294901760
        %5847 = vmatpush.msra.mxu0 %v5846
        %v5848 = vand.u32 %v952, 4294901760
        %5849 = vmatpush.msra.mxu0 %v5848
        %v5850 = vand.u32 %v951, 4294901760
        %5851 = vmatpush.msra.mxu0 %v5850
        %v5852 = vand.u32 %v950, 4294901760
        %5853 = vmatpush.msra.mxu0 %v5852
        %v5854 = vand.u32 %v949, 4294901760
        %5855 = vmatpush.msra.mxu0 %v5854
        %v5856 = vand.u32 %v948, 4294901760
        %5857 = vmatpush.msra.mxu0 %v5856
        %v5858 = vand.u32 %v947, 4294901760
        %5859 = vmatpush.msra.mxu0 %v5858
        %v5860 = vand.u32 %v946, 4294901760
        %5861 = vmatpush.msra.mxu0 %v5860
        %v5862 = vand.u32 %v945, 4294901760
        %5863 = vmatpush.msra.mxu0 %v5862
        %v5864 = vand.u32 %v944, 4294901760
        %5865 = vmatpush.msra.mxu0 %v5864
        %v5866 = vand.u32 %v728, 4294901760
        %5867 = vmatmul.f32.gmra.mxu0 %v5866
        %v5868 = vpop.f32.mrf.mxu0
        %v5869 = vadd.f32 %v5824, %v5868
        %v5870 = vand.u32 %v745, 4294901760
        %5871 = vmatmul.f32.gmra.mxu0 %v5870
        %v5872 = vpop.f32.mrf.mxu0
        %v5873 = vadd.f32 %v5828, %v5872
        %v5874 = vand.u32 %v762, 4294901760
        %5875 = vmatmul.f32.gmra.mxu0 %v5874
        %v5876 = vpop.f32.mrf.mxu0
        %v5877 = vadd.f32 %v5832, %v5876
        %5878 = vdwg.mxu0
        %v5879 = vand.u32 %v975, 4294901760
        %5880 = vmatpush.msra.mxu0 %v5879
        %v5881 = vand.u32 %v974, 4294901760
        %5882 = vmatpush.msra.mxu0 %v5881
        %v5883 = vand.u32 %v973, 4294901760
        %5884 = vmatpush.msra.mxu0 %v5883
        %v5885 = vand.u32 %v972, 4294901760
        %5886 = vmatpush.msra.mxu0 %v5885
        %v5887 = vand.u32 %v971, 4294901760
        %5888 = vmatpush.msra.mxu0 %v5887
        %v5889 = vand.u32 %v970, 4294901760
        %5890 = vmatpush.msra.mxu0 %v5889
        %v5891 = vand.u32 %v969, 4294901760
        %5892 = vmatpush.msra.mxu0 %v5891
        %v5893 = vand.u32 %v968, 4294901760
        %5894 = vmatpush.msra.mxu0 %v5893
        %v5895 = vand.u32 %v967, 4294901760
        %5896 = vmatpush.msra.mxu0 %v5895
        %v5897 = vand.u32 %v966, 4294901760
        %5898 = vmatpush.msra.mxu0 %v5897
        %v5899 = vand.u32 %v965, 4294901760
        %5900 = vmatpush.msra.mxu0 %v5899
        %v5901 = vand.u32 %v964, 4294901760
        %5902 = vmatpush.msra.mxu0 %v5901
        %v5903 = vand.u32 %v963, 4294901760
        %5904 = vmatpush.msra.mxu0 %v5903
        %v5905 = vand.u32 %v962, 4294901760
        %5906 = vmatpush.msra.mxu0 %v5905
        %v5907 = vand.u32 %v961, 4294901760
        %5908 = vmatpush.msra.mxu0 %v5907
        %v5909 = vand.u32 %v960, 4294901760
        %5910 = vmatpush.msra.mxu0 %v5909
        %v5911 = vand.u32 %v729, 4294901760
        %v5912 = vsub.f32 %v729, %v5911
        %v5913 = vand.u32 %v5912, 4294901760
        %v5914 = vsub.f32 %v5912, %v5913
        %v5915 = vand.u32 %v5914, 4294901760
        %5916 = vmatmul.f32.gmra.mxu0 %v5915
        %v5917 = vpop.f32.mrf.mxu0
        %v5918 = vadd.f32 %v5869, %v5917
        %v5919 = vand.u32 %v746, 4294901760
        %v5920 = vsub.f32 %v746, %v5919
        %v5921 = vand.u32 %v5920, 4294901760
        %v5922 = vsub.f32 %v5920, %v5921
        %v5923 = vand.u32 %v5922, 4294901760
        %5924 = vmatmul.f32.gmra.mxu0 %v5923
        %v5925 = vpop.f32.mrf.mxu0
        %v5926 = vadd.f32 %v5873, %v5925
        %v5927 = vand.u32 %v763, 4294901760
        %v5928 = vsub.f32 %v763, %v5927
        %v5929 = vand.u32 %v5928, 4294901760
        %v5930 = vsub.f32 %v5928, %v5929
        %v5931 = vand.u32 %v5930, 4294901760
        %5932 = vmatmul.f32.gmra.mxu0 %v5931
        %v5933 = vpop.f32.mrf.mxu0
        %v5934 = vadd.f32 %v5877, %v5933
        %5935 = vdwg.mxu0
        %v5936 = vand.u32 %v975, 4294901760
        %v5937 = vsub.f32 %v975, %v5936
        %v5938 = vand.u32 %v5937, 4294901760
        %v5939 = vsub.f32 %v5937, %v5938
        %v5940 = vand.u32 %v5939, 4294901760
        %5941 = vmatpush.msra.mxu0 %v5940
        %v5942 = vand.u32 %v974, 4294901760
        %v5943 = vsub.f32 %v974, %v5942
        %v5944 = vand.u32 %v5943, 4294901760
        %v5945 = vsub.f32 %v5943, %v5944
        %v5946 = vand.u32 %v5945, 4294901760
        %5947 = vmatpush.msra.mxu0 %v5946
        %v5948 = vand.u32 %v973, 4294901760
        %v5949 = vsub.f32 %v973, %v5948
        %v5950 = vand.u32 %v5949, 4294901760
        %v5951 = vsub.f32 %v5949, %v5950
        %v5952 = vand.u32 %v5951, 4294901760
        %5953 = vmatpush.msra.mxu0 %v5952
        %v5954 = vand.u32 %v972, 4294901760
        %v5955 = vsub.f32 %v972, %v5954
        %v5956 = vand.u32 %v5955, 4294901760
        %v5957 = vsub.f32 %v5955, %v5956
        %v5958 = vand.u32 %v5957, 4294901760
        %5959 = vmatpush.msra.mxu0 %v5958
        %v5960 = vand.u32 %v971, 4294901760
        %v5961 = vsub.f32 %v971, %v5960
        %v5962 = vand.u32 %v5961, 4294901760
        %v5963 = vsub.f32 %v5961, %v5962
        %v5964 = vand.u32 %v5963, 4294901760
        %5965 = vmatpush.msra.mxu0 %v5964
        %v5966 = vand.u32 %v970, 4294901760
        %v5967 = vsub.f32 %v970, %v5966
        %v5968 = vand.u32 %v5967, 4294901760
        %v5969 = vsub.f32 %v5967, %v5968
        %v5970 = vand.u32 %v5969, 4294901760
        %5971 = vmatpush.msra.mxu0 %v5970
        %v5972 = vand.u32 %v969, 4294901760
        %v5973 = vsub.f32 %v969, %v5972
        %v5974 = vand.u32 %v5973, 4294901760
        %v5975 = vsub.f32 %v5973, %v5974
        %v5976 = vand.u32 %v5975, 4294901760
        %5977 = vmatpush.msra.mxu0 %v5976
        %v5978 = vand.u32 %v968, 4294901760
        %v5979 = vsub.f32 %v968, %v5978
        %v5980 = vand.u32 %v5979, 4294901760
        %v5981 = vsub.f32 %v5979, %v5980
        %v5982 = vand.u32 %v5981, 4294901760
        %5983 = vmatpush.msra.mxu0 %v5982
        %v5984 = vand.u32 %v967, 4294901760
        %v5985 = vsub.f32 %v967, %v5984
        %v5986 = vand.u32 %v5985, 4294901760
        %v5987 = vsub.f32 %v5985, %v5986
        %v5988 = vand.u32 %v5987, 4294901760
        %5989 = vmatpush.msra.mxu0 %v5988
        %v5990 = vand.u32 %v966, 4294901760
        %v5991 = vsub.f32 %v966, %v5990
        %v5992 = vand.u32 %v5991, 4294901760
        %v5993 = vsub.f32 %v5991, %v5992
        %v5994 = vand.u32 %v5993, 4294901760
        %5995 = vmatpush.msra.mxu0 %v5994
        %v5996 = vand.u32 %v965, 4294901760
        %v5997 = vsub.f32 %v965, %v5996
        %v5998 = vand.u32 %v5997, 4294901760
        %v5999 = vsub.f32 %v5997, %v5998
        %v6000 = vand.u32 %v5999, 4294901760
        %6001 = vmatpush.msra.mxu0 %v6000
        %v6002 = vand.u32 %v964, 4294901760
        %v6003 = vsub.f32 %v964, %v6002
        %v6004 = vand.u32 %v6003, 4294901760
        %v6005 = vsub.f32 %v6003, %v6004
        %v6006 = vand.u32 %v6005, 4294901760
        %6007 = vmatpush.msra.mxu0 %v6006
        %v6008 = vand.u32 %v963, 4294901760
        %v6009 = vsub.f32 %v963, %v6008
        %v6010 = vand.u32 %v6009, 4294901760
        %v6011 = vsub.f32 %v6009, %v6010
        %v6012 = vand.u32 %v6011, 4294901760
        %6013 = vmatpush.msra.mxu0 %v6012
        %v6014 = vand.u32 %v962, 4294901760
        %v6015 = vsub.f32 %v962, %v6014
        %v6016 = vand.u32 %v6015, 4294901760
        %v6017 = vsub.f32 %v6015, %v6016
        %v6018 = vand.u32 %v6017, 4294901760
        %6019 = vmatpush.msra.mxu0 %v6018
        %v6020 = vand.u32 %v961, 4294901760
        %v6021 = vsub.f32 %v961, %v6020
        %v6022 = vand.u32 %v6021, 4294901760
        %v6023 = vsub.f32 %v6021, %v6022
        %v6024 = vand.u32 %v6023, 4294901760
        %6025 = vmatpush.msra.mxu0 %v6024
        %v6026 = vand.u32 %v960, 4294901760
        %v6027 = vsub.f32 %v960, %v6026
        %v6028 = vand.u32 %v6027, 4294901760
        %v6029 = vsub.f32 %v6027, %v6028
        %v6030 = vand.u32 %v6029, 4294901760
        %6031 = vmatpush.msra.mxu0 %v6030
        %v6032 = vand.u32 %v729, 4294901760
        %6033 = vmatmul.f32.gmra.mxu0 %v6032
        %v6034 = vpop.f32.mrf.mxu0
        %v6035 = vadd.f32 %v5918, %v6034
        %v6036 = vand.u32 %v746, 4294901760
        %6037 = vmatmul.f32.gmra.mxu0 %v6036
        %v6038 = vpop.f32.mrf.mxu0
        %v6039 = vadd.f32 %v5926, %v6038
        %v6040 = vand.u32 %v763, 4294901760
        %6041 = vmatmul.f32.gmra.mxu0 %v6040
        %v6042 = vpop.f32.mrf.mxu0
        %v6043 = vadd.f32 %v5934, %v6042
        %6044 = vdwg.mxu0
        %v6045 = vand.u32 %v975, 4294901760
        %v6046 = vsub.f32 %v975, %v6045
        %6047 = vmatpush.msra.mxu0 %v6046
        %v6048 = vand.u32 %v974, 4294901760
        %v6049 = vsub.f32 %v974, %v6048
        %6050 = vmatpush.msra.mxu0 %v6049
        %v6051 = vand.u32 %v973, 4294901760
        %v6052 = vsub.f32 %v973, %v6051
        %6053 = vmatpush.msra.mxu0 %v6052
        %v6054 = vand.u32 %v972, 4294901760
        %v6055 = vsub.f32 %v972, %v6054
        %6056 = vmatpush.msra.mxu0 %v6055
        %v6057 = vand.u32 %v971, 4294901760
        %v6058 = vsub.f32 %v971, %v6057
        %6059 = vmatpush.msra.mxu0 %v6058
        %v6060 = vand.u32 %v970, 4294901760
        %v6061 = vsub.f32 %v970, %v6060
        %6062 = vmatpush.msra.mxu0 %v6061
        %v6063 = vand.u32 %v969, 4294901760
        %v6064 = vsub.f32 %v969, %v6063
        %6065 = vmatpush.msra.mxu0 %v6064
        %v6066 = vand.u32 %v968, 4294901760
        %v6067 = vsub.f32 %v968, %v6066
        %6068 = vmatpush.msra.mxu0 %v6067
        %v6069 = vand.u32 %v967, 4294901760
        %v6070 = vsub.f32 %v967, %v6069
        %6071 = vmatpush.msra.mxu0 %v6070
        %v6072 = vand.u32 %v966, 4294901760
        %v6073 = vsub.f32 %v966, %v6072
        %6074 = vmatpush.msra.mxu0 %v6073
        %v6075 = vand.u32 %v965, 4294901760
        %v6076 = vsub.f32 %v965, %v6075
        %6077 = vmatpush.msra.mxu0 %v6076
        %v6078 = vand.u32 %v964, 4294901760
        %v6079 = vsub.f32 %v964, %v6078
        %6080 = vmatpush.msra.mxu0 %v6079
        %v6081 = vand.u32 %v963, 4294901760
        %v6082 = vsub.f32 %v963, %v6081
        %6083 = vmatpush.msra.mxu0 %v6082
        %v6084 = vand.u32 %v962, 4294901760
        %v6085 = vsub.f32 %v962, %v6084
        %6086 = vmatpush.msra.mxu0 %v6085
        %v6087 = vand.u32 %v961, 4294901760
        %v6088 = vsub.f32 %v961, %v6087
        %6089 = vmatpush.msra.mxu0 %v6088
        %v6090 = vand.u32 %v960, 4294901760
        %v6091 = vsub.f32 %v960, %v6090
        %6092 = vmatpush.msra.mxu0 %v6091
        %v6093 = vand.u32 %v729, 4294901760
        %v6094 = vsub.f32 %v729, %v6093
        %6095 = vmatmul.f32.gmra.mxu0 %v6094
        %v6096 = vpop.f32.mrf.mxu0
        %v6097 = vadd.f32 %v6035, %v6096
        %v6098 = vand.u32 %v746, 4294901760
        %v6099 = vsub.f32 %v746, %v6098
        %6100 = vmatmul.f32.gmra.mxu0 %v6099
        %v6101 = vpop.f32.mrf.mxu0
        %v6102 = vadd.f32 %v6039, %v6101
        %v6103 = vand.u32 %v763, 4294901760
        %v6104 = vsub.f32 %v763, %v6103
        %6105 = vmatmul.f32.gmra.mxu0 %v6104
        %v6106 = vpop.f32.mrf.mxu0
        %v6107 = vadd.f32 %v6043, %v6106
        %6108 = vdwg.mxu0
        %v6109 = vand.u32 %v975, 4294901760
        %6110 = vmatpush.msra.mxu0 %v6109
        %v6111 = vand.u32 %v974, 4294901760
        %6112 = vmatpush.msra.mxu0 %v6111
        %v6113 = vand.u32 %v973, 4294901760
        %6114 = vmatpush.msra.mxu0 %v6113
        %v6115 = vand.u32 %v972, 4294901760
        %6116 = vmatpush.msra.mxu0 %v6115
        %v6117 = vand.u32 %v971, 4294901760
        %6118 = vmatpush.msra.mxu0 %v6117
        %v6119 = vand.u32 %v970, 4294901760
        %6120 = vmatpush.msra.mxu0 %v6119
        %v6121 = vand.u32 %v969, 4294901760
        %6122 = vmatpush.msra.mxu0 %v6121
        %v6123 = vand.u32 %v968, 4294901760
        %6124 = vmatpush.msra.mxu0 %v6123
        %v6125 = vand.u32 %v967, 4294901760
        %6126 = vmatpush.msra.mxu0 %v6125
        %v6127 = vand.u32 %v966, 4294901760
        %6128 = vmatpush.msra.mxu0 %v6127
        %v6129 = vand.u32 %v965, 4294901760
        %6130 = vmatpush.msra.mxu0 %v6129
        %v6131 = vand.u32 %v964, 4294901760
        %6132 = vmatpush.msra.mxu0 %v6131
        %v6133 = vand.u32 %v963, 4294901760
        %6134 = vmatpush.msra.mxu0 %v6133
        %v6135 = vand.u32 %v962, 4294901760
        %6136 = vmatpush.msra.mxu0 %v6135
        %v6137 = vand.u32 %v961, 4294901760
        %6138 = vmatpush.msra.mxu0 %v6137
        %v6139 = vand.u32 %v960, 4294901760
        %6140 = vmatpush.msra.mxu0 %v6139
        %v6141 = vand.u32 %v729, 4294901760
        %v6142 = vsub.f32 %v729, %v6141
        %v6143 = vand.u32 %v6142, 4294901760
        %6144 = vmatmul.f32.gmra.mxu0 %v6143
        %v6145 = vpop.f32.mrf.mxu0
        %v6146 = vadd.f32 %v6097, %v6145
        %v6147 = vand.u32 %v746, 4294901760
        %v6148 = vsub.f32 %v746, %v6147
        %v6149 = vand.u32 %v6148, 4294901760
        %6150 = vmatmul.f32.gmra.mxu0 %v6149
        %v6151 = vpop.f32.mrf.mxu0
        %v6152 = vadd.f32 %v6102, %v6151
        %v6153 = vand.u32 %v763, 4294901760
        %v6154 = vsub.f32 %v763, %v6153
        %v6155 = vand.u32 %v6154, 4294901760
        %6156 = vmatmul.f32.gmra.mxu0 %v6155
        %v6157 = vpop.f32.mrf.mxu0
        %v6158 = vadd.f32 %v6107, %v6157
        %6159 = vdwg.mxu0
        %v6160 = vand.u32 %v975, 4294901760
        %v6161 = vsub.f32 %v975, %v6160
        %v6162 = vand.u32 %v6161, 4294901760
        %6163 = vmatpush.msra.mxu0 %v6162
        %v6164 = vand.u32 %v974, 4294901760
        %v6165 = vsub.f32 %v974, %v6164
        %v6166 = vand.u32 %v6165, 4294901760
        %6167 = vmatpush.msra.mxu0 %v6166
        %v6168 = vand.u32 %v973, 4294901760
        %v6169 = vsub.f32 %v973, %v6168
        %v6170 = vand.u32 %v6169, 4294901760
        %6171 = vmatpush.msra.mxu0 %v6170
        %v6172 = vand.u32 %v972, 4294901760
        %v6173 = vsub.f32 %v972, %v6172
        %v6174 = vand.u32 %v6173, 4294901760
        %6175 = vmatpush.msra.mxu0 %v6174
        %v6176 = vand.u32 %v971, 4294901760
        %v6177 = vsub.f32 %v971, %v6176
        %v6178 = vand.u32 %v6177, 4294901760
        %6179 = vmatpush.msra.mxu0 %v6178
        %v6180 = vand.u32 %v970, 4294901760
        %v6181 = vsub.f32 %v970, %v6180
        %v6182 = vand.u32 %v6181, 4294901760
        %6183 = vmatpush.msra.mxu0 %v6182
        %v6184 = vand.u32 %v969, 4294901760
        %v6185 = vsub.f32 %v969, %v6184
        %v6186 = vand.u32 %v6185, 4294901760
        %6187 = vmatpush.msra.mxu0 %v6186
        %v6188 = vand.u32 %v968, 4294901760
        %v6189 = vsub.f32 %v968, %v6188
        %v6190 = vand.u32 %v6189, 4294901760
        %6191 = vmatpush.msra.mxu0 %v6190
        %v6192 = vand.u32 %v967, 4294901760
        %v6193 = vsub.f32 %v967, %v6192
        %v6194 = vand.u32 %v6193, 4294901760
        %6195 = vmatpush.msra.mxu0 %v6194
        %v6196 = vand.u32 %v966, 4294901760
        %v6197 = vsub.f32 %v966, %v6196
        %v6198 = vand.u32 %v6197, 4294901760
        %6199 = vmatpush.msra.mxu0 %v6198
        %v6200 = vand.u32 %v965, 4294901760
        %v6201 = vsub.f32 %v965, %v6200
        %v6202 = vand.u32 %v6201, 4294901760
        %6203 = vmatpush.msra.mxu0 %v6202
        %v6204 = vand.u32 %v964, 4294901760
        %v6205 = vsub.f32 %v964, %v6204
        %v6206 = vand.u32 %v6205, 4294901760
        %6207 = vmatpush.msra.mxu0 %v6206
        %v6208 = vand.u32 %v963, 4294901760
        %v6209 = vsub.f32 %v963, %v6208
        %v6210 = vand.u32 %v6209, 4294901760
        %6211 = vmatpush.msra.mxu0 %v6210
        %v6212 = vand.u32 %v962, 4294901760
        %v6213 = vsub.f32 %v962, %v6212
        %v6214 = vand.u32 %v6213, 4294901760
        %6215 = vmatpush.msra.mxu0 %v6214
        %v6216 = vand.u32 %v961, 4294901760
        %v6217 = vsub.f32 %v961, %v6216
        %v6218 = vand.u32 %v6217, 4294901760
        %6219 = vmatpush.msra.mxu0 %v6218
        %v6220 = vand.u32 %v960, 4294901760
        %v6221 = vsub.f32 %v960, %v6220
        %v6222 = vand.u32 %v6221, 4294901760
        %6223 = vmatpush.msra.mxu0 %v6222
        %v6224 = vand.u32 %v729, 4294901760
        %6225 = vmatmul.f32.gmra.mxu0 %v6224
        %v6226 = vpop.f32.mrf.mxu0
        %v6227 = vadd.f32 %v6146, %v6226
        %v6228 = vand.u32 %v746, 4294901760
        %6229 = vmatmul.f32.gmra.mxu0 %v6228
        %v6230 = vpop.f32.mrf.mxu0
        %v6231 = vadd.f32 %v6152, %v6230
        %v6232 = vand.u32 %v763, 4294901760
        %6233 = vmatmul.f32.gmra.mxu0 %v6232
        %v6234 = vpop.f32.mrf.mxu0
        %v6235 = vadd.f32 %v6158, %v6234
        %6236 = vdwg.mxu0
        %v6237 = vand.u32 %v975, 4294901760
        %6238 = vmatpush.msra.mxu0 %v6237
        %v6239 = vand.u32 %v974, 4294901760
        %6240 = vmatpush.msra.mxu0 %v6239
        %v6241 = vand.u32 %v973, 4294901760
        %6242 = vmatpush.msra.mxu0 %v6241
        %v6243 = vand.u32 %v972, 4294901760
        %6244 = vmatpush.msra.mxu0 %v6243
        %v6245 = vand.u32 %v971, 4294901760
        %6246 = vmatpush.msra.mxu0 %v6245
        %v6247 = vand.u32 %v970, 4294901760
        %6248 = vmatpush.msra.mxu0 %v6247
        %v6249 = vand.u32 %v969, 4294901760
        %6250 = vmatpush.msra.mxu0 %v6249
        %v6251 = vand.u32 %v968, 4294901760
        %6252 = vmatpush.msra.mxu0 %v6251
        %v6253 = vand.u32 %v967, 4294901760
        %6254 = vmatpush.msra.mxu0 %v6253
        %v6255 = vand.u32 %v966, 4294901760
        %6256 = vmatpush.msra.mxu0 %v6255
        %v6257 = vand.u32 %v965, 4294901760
        %6258 = vmatpush.msra.mxu0 %v6257
        %v6259 = vand.u32 %v964, 4294901760
        %6260 = vmatpush.msra.mxu0 %v6259
        %v6261 = vand.u32 %v963, 4294901760
        %6262 = vmatpush.msra.mxu0 %v6261
        %v6263 = vand.u32 %v962, 4294901760
        %6264 = vmatpush.msra.mxu0 %v6263
        %v6265 = vand.u32 %v961, 4294901760
        %6266 = vmatpush.msra.mxu0 %v6265
        %v6267 = vand.u32 %v960, 4294901760
        %6268 = vmatpush.msra.mxu0 %v6267
        %v6269 = vand.u32 %v729, 4294901760
        %6270 = vmatmul.f32.gmra.mxu0 %v6269
        %v6271 = vpop.f32.mrf.mxu0
        %v6272 = vadd.f32 %v6227, %v6271
        %v6273 = vand.u32 %v746, 4294901760
        %6274 = vmatmul.f32.gmra.mxu0 %v6273
        %v6275 = vpop.f32.mrf.mxu0
        %v6276 = vadd.f32 %v6231, %v6275
        %v6277 = vand.u32 %v763, 4294901760
        %6278 = vmatmul.f32.gmra.mxu0 %v6277
        %v6279 = vpop.f32.mrf.mxu0
        %v6280 = vadd.f32 %v6235, %v6279
        %6281 = vdwg.mxu0
        %v6282 = vand.u32 %v991, 4294901760
        %6283 = vmatpush.msra.mxu0 %v6282
        %v6284 = vand.u32 %v990, 4294901760
        %6285 = vmatpush.msra.mxu0 %v6284
        %v6286 = vand.u32 %v989, 4294901760
        %6287 = vmatpush.msra.mxu0 %v6286
        %v6288 = vand.u32 %v988, 4294901760
        %6289 = vmatpush.msra.mxu0 %v6288
        %v6290 = vand.u32 %v987, 4294901760
        %6291 = vmatpush.msra.mxu0 %v6290
        %v6292 = vand.u32 %v986, 4294901760
        %6293 = vmatpush.msra.mxu0 %v6292
        %v6294 = vand.u32 %v985, 4294901760
        %6295 = vmatpush.msra.mxu0 %v6294
        %v6296 = vand.u32 %v984, 4294901760
        %6297 = vmatpush.msra.mxu0 %v6296
        %v6298 = vand.u32 %v983, 4294901760
        %6299 = vmatpush.msra.mxu0 %v6298
        %v6300 = vand.u32 %v982, 4294901760
        %6301 = vmatpush.msra.mxu0 %v6300
        %v6302 = vand.u32 %v981, 4294901760
        %6303 = vmatpush.msra.mxu0 %v6302
        %v6304 = vand.u32 %v980, 4294901760
        %6305 = vmatpush.msra.mxu0 %v6304
        %v6306 = vand.u32 %v979, 4294901760
        %6307 = vmatpush.msra.mxu0 %v6306
        %v6308 = vand.u32 %v978, 4294901760
        %6309 = vmatpush.msra.mxu0 %v6308
        %v6310 = vand.u32 %v977, 4294901760
        %6311 = vmatpush.msra.mxu0 %v6310
        %v6312 = vand.u32 %v976, 4294901760
        %6313 = vmatpush.msra.mxu0 %v6312
        %v6314 = vand.u32 %v730, 4294901760
        %v6315 = vsub.f32 %v730, %v6314
        %v6316 = vand.u32 %v6315, 4294901760
        %v6317 = vsub.f32 %v6315, %v6316
        %v6318 = vand.u32 %v6317, 4294901760
        %6319 = vmatmul.f32.gmra.mxu0 %v6318
        %v6320 = vpop.f32.mrf.mxu0
        %v6321 = vadd.f32 %v6272, %v6320
        %v6322 = vand.u32 %v747, 4294901760
        %v6323 = vsub.f32 %v747, %v6322
        %v6324 = vand.u32 %v6323, 4294901760
        %v6325 = vsub.f32 %v6323, %v6324
        %v6326 = vand.u32 %v6325, 4294901760
        %6327 = vmatmul.f32.gmra.mxu0 %v6326
        %v6328 = vpop.f32.mrf.mxu0
        %v6329 = vadd.f32 %v6276, %v6328
        %v6330 = vand.u32 %v764, 4294901760
        %v6331 = vsub.f32 %v764, %v6330
        %v6332 = vand.u32 %v6331, 4294901760
        %v6333 = vsub.f32 %v6331, %v6332
        %v6334 = vand.u32 %v6333, 4294901760
        %6335 = vmatmul.f32.gmra.mxu0 %v6334
        %v6336 = vpop.f32.mrf.mxu0
        %v6337 = vadd.f32 %v6280, %v6336
        %6338 = vdwg.mxu0
        %v6339 = vand.u32 %v991, 4294901760
        %v6340 = vsub.f32 %v991, %v6339
        %v6341 = vand.u32 %v6340, 4294901760
        %v6342 = vsub.f32 %v6340, %v6341
        %v6343 = vand.u32 %v6342, 4294901760
        %6344 = vmatpush.msra.mxu0 %v6343
        %v6345 = vand.u32 %v990, 4294901760
        %v6346 = vsub.f32 %v990, %v6345
        %v6347 = vand.u32 %v6346, 4294901760
        %v6348 = vsub.f32 %v6346, %v6347
        %v6349 = vand.u32 %v6348, 4294901760
        %6350 = vmatpush.msra.mxu0 %v6349
        %v6351 = vand.u32 %v989, 4294901760
        %v6352 = vsub.f32 %v989, %v6351
        %v6353 = vand.u32 %v6352, 4294901760
        %v6354 = vsub.f32 %v6352, %v6353
        %v6355 = vand.u32 %v6354, 4294901760
        %6356 = vmatpush.msra.mxu0 %v6355
        %v6357 = vand.u32 %v988, 4294901760
        %v6358 = vsub.f32 %v988, %v6357
        %v6359 = vand.u32 %v6358, 4294901760
        %v6360 = vsub.f32 %v6358, %v6359
        %v6361 = vand.u32 %v6360, 4294901760
        %6362 = vmatpush.msra.mxu0 %v6361
        %v6363 = vand.u32 %v987, 4294901760
        %v6364 = vsub.f32 %v987, %v6363
        %v6365 = vand.u32 %v6364, 4294901760
        %v6366 = vsub.f32 %v6364, %v6365
        %v6367 = vand.u32 %v6366, 4294901760
        %6368 = vmatpush.msra.mxu0 %v6367
        %v6369 = vand.u32 %v986, 4294901760
        %v6370 = vsub.f32 %v986, %v6369
        %v6371 = vand.u32 %v6370, 4294901760
        %v6372 = vsub.f32 %v6370, %v6371
        %v6373 = vand.u32 %v6372, 4294901760
        %6374 = vmatpush.msra.mxu0 %v6373
        %v6375 = vand.u32 %v985, 4294901760
        %v6376 = vsub.f32 %v985, %v6375
        %v6377 = vand.u32 %v6376, 4294901760
        %v6378 = vsub.f32 %v6376, %v6377
        %v6379 = vand.u32 %v6378, 4294901760
        %6380 = vmatpush.msra.mxu0 %v6379
        %v6381 = vand.u32 %v984, 4294901760
        %v6382 = vsub.f32 %v984, %v6381
        %v6383 = vand.u32 %v6382, 4294901760
        %v6384 = vsub.f32 %v6382, %v6383
        %v6385 = vand.u32 %v6384, 4294901760
        %6386 = vmatpush.msra.mxu0 %v6385
        %v6387 = vand.u32 %v983, 4294901760
        %v6388 = vsub.f32 %v983, %v6387
        %v6389 = vand.u32 %v6388, 4294901760
        %v6390 = vsub.f32 %v6388, %v6389
        %v6391 = vand.u32 %v6390, 4294901760
        %6392 = vmatpush.msra.mxu0 %v6391
        %v6393 = vand.u32 %v982, 4294901760
        %v6394 = vsub.f32 %v982, %v6393
        %v6395 = vand.u32 %v6394, 4294901760
        %v6396 = vsub.f32 %v6394, %v6395
        %v6397 = vand.u32 %v6396, 4294901760
        %6398 = vmatpush.msra.mxu0 %v6397
        %v6399 = vand.u32 %v981, 4294901760
        %v6400 = vsub.f32 %v981, %v6399
        %v6401 = vand.u32 %v6400, 4294901760
        %v6402 = vsub.f32 %v6400, %v6401
        %v6403 = vand.u32 %v6402, 4294901760
        %6404 = vmatpush.msra.mxu0 %v6403
        %v6405 = vand.u32 %v980, 4294901760
        %v6406 = vsub.f32 %v980, %v6405
        %v6407 = vand.u32 %v6406, 4294901760
        %v6408 = vsub.f32 %v6406, %v6407
        %v6409 = vand.u32 %v6408, 4294901760
        %6410 = vmatpush.msra.mxu0 %v6409
        %v6411 = vand.u32 %v979, 4294901760
        %v6412 = vsub.f32 %v979, %v6411
        %v6413 = vand.u32 %v6412, 4294901760
        %v6414 = vsub.f32 %v6412, %v6413
        %v6415 = vand.u32 %v6414, 4294901760
        %6416 = vmatpush.msra.mxu0 %v6415
        %v6417 = vand.u32 %v978, 4294901760
        %v6418 = vsub.f32 %v978, %v6417
        %v6419 = vand.u32 %v6418, 4294901760
        %v6420 = vsub.f32 %v6418, %v6419
        %v6421 = vand.u32 %v6420, 4294901760
        %6422 = vmatpush.msra.mxu0 %v6421
        %v6423 = vand.u32 %v977, 4294901760
        %v6424 = vsub.f32 %v977, %v6423
        %v6425 = vand.u32 %v6424, 4294901760
        %v6426 = vsub.f32 %v6424, %v6425
        %v6427 = vand.u32 %v6426, 4294901760
        %6428 = vmatpush.msra.mxu0 %v6427
        %v6429 = vand.u32 %v976, 4294901760
        %v6430 = vsub.f32 %v976, %v6429
        %v6431 = vand.u32 %v6430, 4294901760
        %v6432 = vsub.f32 %v6430, %v6431
        %v6433 = vand.u32 %v6432, 4294901760
        %6434 = vmatpush.msra.mxu0 %v6433
        %v6435 = vand.u32 %v730, 4294901760
        %6436 = vmatmul.f32.gmra.mxu0 %v6435
        %v6437 = vpop.f32.mrf.mxu0
        %v6438 = vadd.f32 %v6321, %v6437
        %v6439 = vand.u32 %v747, 4294901760
        %6440 = vmatmul.f32.gmra.mxu0 %v6439
        %v6441 = vpop.f32.mrf.mxu0
        %v6442 = vadd.f32 %v6329, %v6441
        %v6443 = vand.u32 %v764, 4294901760
        %6444 = vmatmul.f32.gmra.mxu0 %v6443
        %v6445 = vpop.f32.mrf.mxu0
        %v6446 = vadd.f32 %v6337, %v6445
        %6447 = vdwg.mxu0
        %v6448 = vand.u32 %v991, 4294901760
        %v6449 = vsub.f32 %v991, %v6448
        %6450 = vmatpush.msra.mxu0 %v6449
        %v6451 = vand.u32 %v990, 4294901760
        %v6452 = vsub.f32 %v990, %v6451
        %6453 = vmatpush.msra.mxu0 %v6452
        %v6454 = vand.u32 %v989, 4294901760
        %v6455 = vsub.f32 %v989, %v6454
        %6456 = vmatpush.msra.mxu0 %v6455
        %v6457 = vand.u32 %v988, 4294901760
        %v6458 = vsub.f32 %v988, %v6457
        %6459 = vmatpush.msra.mxu0 %v6458
        %v6460 = vand.u32 %v987, 4294901760
        %v6461 = vsub.f32 %v987, %v6460
        %6462 = vmatpush.msra.mxu0 %v6461
        %v6463 = vand.u32 %v986, 4294901760
        %v6464 = vsub.f32 %v986, %v6463
        %6465 = vmatpush.msra.mxu0 %v6464
        %v6466 = vand.u32 %v985, 4294901760
        %v6467 = vsub.f32 %v985, %v6466
        %6468 = vmatpush.msra.mxu0 %v6467
        %v6469 = vand.u32 %v984, 4294901760
        %v6470 = vsub.f32 %v984, %v6469
        %6471 = vmatpush.msra.mxu0 %v6470
        %v6472 = vand.u32 %v983, 4294901760
        %v6473 = vsub.f32 %v983, %v6472
        %6474 = vmatpush.msra.mxu0 %v6473
        %v6475 = vand.u32 %v982, 4294901760
        %v6476 = vsub.f32 %v982, %v6475
        %6477 = vmatpush.msra.mxu0 %v6476
        %v6478 = vand.u32 %v981, 4294901760
        %v6479 = vsub.f32 %v981, %v6478
        %6480 = vmatpush.msra.mxu0 %v6479
        %v6481 = vand.u32 %v980, 4294901760
        %v6482 = vsub.f32 %v980, %v6481
        %6483 = vmatpush.msra.mxu0 %v6482
        %v6484 = vand.u32 %v979, 4294901760
        %v6485 = vsub.f32 %v979, %v6484
        %6486 = vmatpush.msra.mxu0 %v6485
        %v6487 = vand.u32 %v978, 4294901760
        %v6488 = vsub.f32 %v978, %v6487
        %6489 = vmatpush.msra.mxu0 %v6488
        %v6490 = vand.u32 %v977, 4294901760
        %v6491 = vsub.f32 %v977, %v6490
        %6492 = vmatpush.msra.mxu0 %v6491
        %v6493 = vand.u32 %v976, 4294901760
        %v6494 = vsub.f32 %v976, %v6493
        %6495 = vmatpush.msra.mxu0 %v6494
        %v6496 = vand.u32 %v730, 4294901760
        %v6497 = vsub.f32 %v730, %v6496
        %6498 = vmatmul.f32.gmra.mxu0 %v6497
        %v6499 = vpop.f32.mrf.mxu0
        %v6500 = vadd.f32 %v6438, %v6499
        %v6501 = vand.u32 %v747, 4294901760
        %v6502 = vsub.f32 %v747, %v6501
        %6503 = vmatmul.f32.gmra.mxu0 %v6502
        %v6504 = vpop.f32.mrf.mxu0
        %v6505 = vadd.f32 %v6442, %v6504
        %v6506 = vand.u32 %v764, 4294901760
        %v6507 = vsub.f32 %v764, %v6506
        %6508 = vmatmul.f32.gmra.mxu0 %v6507
        %v6509 = vpop.f32.mrf.mxu0
        %v6510 = vadd.f32 %v6446, %v6509
        %6511 = vdwg.mxu0
        %v6512 = vand.u32 %v991, 4294901760
        %6513 = vmatpush.msra.mxu0 %v6512
        %v6514 = vand.u32 %v990, 4294901760
        %6515 = vmatpush.msra.mxu0 %v6514
        %v6516 = vand.u32 %v989, 4294901760
        %6517 = vmatpush.msra.mxu0 %v6516
        %v6518 = vand.u32 %v988, 4294901760
        %6519 = vmatpush.msra.mxu0 %v6518
        %v6520 = vand.u32 %v987, 4294901760
        %6521 = vmatpush.msra.mxu0 %v6520
        %v6522 = vand.u32 %v986, 4294901760
        %6523 = vmatpush.msra.mxu0 %v6522
        %v6524 = vand.u32 %v985, 4294901760
        %6525 = vmatpush.msra.mxu0 %v6524
        %v6526 = vand.u32 %v984, 4294901760
        %6527 = vmatpush.msra.mxu0 %v6526
        %v6528 = vand.u32 %v983, 4294901760
        %6529 = vmatpush.msra.mxu0 %v6528
        %v6530 = vand.u32 %v982, 4294901760
        %6531 = vmatpush.msra.mxu0 %v6530
        %v6532 = vand.u32 %v981, 4294901760
        %6533 = vmatpush.msra.mxu0 %v6532
        %v6534 = vand.u32 %v980, 4294901760
        %6535 = vmatpush.msra.mxu0 %v6534
        %v6536 = vand.u32 %v979, 4294901760
        %6537 = vmatpush.msra.mxu0 %v6536
        %v6538 = vand.u32 %v978, 4294901760
        %6539 = vmatpush.msra.mxu0 %v6538
        %v6540 = vand.u32 %v977, 4294901760
        %6541 = vmatpush.msra.mxu0 %v6540
        %v6542 = vand.u32 %v976, 4294901760
        %6543 = vmatpush.msra.mxu0 %v6542
        %v6544 = vand.u32 %v730, 4294901760
        %v6545 = vsub.f32 %v730, %v6544
        %v6546 = vand.u32 %v6545, 4294901760
        %6547 = vmatmul.f32.gmra.mxu0 %v6546
        %v6548 = vpop.f32.mrf.mxu0
        %v6549 = vadd.f32 %v6500, %v6548
        %v6550 = vand.u32 %v747, 4294901760
        %v6551 = vsub.f32 %v747, %v6550
        %v6552 = vand.u32 %v6551, 4294901760
        %6553 = vmatmul.f32.gmra.mxu0 %v6552
        %v6554 = vpop.f32.mrf.mxu0
        %v6555 = vadd.f32 %v6505, %v6554
        %v6556 = vand.u32 %v764, 4294901760
        %v6557 = vsub.f32 %v764, %v6556
        %v6558 = vand.u32 %v6557, 4294901760
        %6559 = vmatmul.f32.gmra.mxu0 %v6558
        %v6560 = vpop.f32.mrf.mxu0
        %v6561 = vadd.f32 %v6510, %v6560
        %6562 = vdwg.mxu0
        %v6563 = vand.u32 %v991, 4294901760
        %v6564 = vsub.f32 %v991, %v6563
        %v6565 = vand.u32 %v6564, 4294901760
        %6566 = vmatpush.msra.mxu0 %v6565
        %v6567 = vand.u32 %v990, 4294901760
        %v6568 = vsub.f32 %v990, %v6567
        %v6569 = vand.u32 %v6568, 4294901760
        %6570 = vmatpush.msra.mxu0 %v6569
        %v6571 = vand.u32 %v989, 4294901760
        %v6572 = vsub.f32 %v989, %v6571
        %v6573 = vand.u32 %v6572, 4294901760
        %6574 = vmatpush.msra.mxu0 %v6573
        %v6575 = vand.u32 %v988, 4294901760
        %v6576 = vsub.f32 %v988, %v6575
        %v6577 = vand.u32 %v6576, 4294901760
        %6578 = vmatpush.msra.mxu0 %v6577
        %v6579 = vand.u32 %v987, 4294901760
        %v6580 = vsub.f32 %v987, %v6579
        %v6581 = vand.u32 %v6580, 4294901760
        %6582 = vmatpush.msra.mxu0 %v6581
        %v6583 = vand.u32 %v986, 4294901760
        %v6584 = vsub.f32 %v986, %v6583
        %v6585 = vand.u32 %v6584, 4294901760
        %6586 = vmatpush.msra.mxu0 %v6585
        %v6587 = vand.u32 %v985, 4294901760
        %v6588 = vsub.f32 %v985, %v6587
        %v6589 = vand.u32 %v6588, 4294901760
        %6590 = vmatpush.msra.mxu0 %v6589
        %v6591 = vand.u32 %v984, 4294901760
        %v6592 = vsub.f32 %v984, %v6591
        %v6593 = vand.u32 %v6592, 4294901760
        %6594 = vmatpush.msra.mxu0 %v6593
        %v6595 = vand.u32 %v983, 4294901760
        %v6596 = vsub.f32 %v983, %v6595
        %v6597 = vand.u32 %v6596, 4294901760
        %6598 = vmatpush.msra.mxu0 %v6597
        %v6599 = vand.u32 %v982, 4294901760
        %v6600 = vsub.f32 %v982, %v6599
        %v6601 = vand.u32 %v6600, 4294901760
        %6602 = vmatpush.msra.mxu0 %v6601
        %v6603 = vand.u32 %v981, 4294901760
        %v6604 = vsub.f32 %v981, %v6603
        %v6605 = vand.u32 %v6604, 4294901760
        %6606 = vmatpush.msra.mxu0 %v6605
        %v6607 = vand.u32 %v980, 4294901760
        %v6608 = vsub.f32 %v980, %v6607
        %v6609 = vand.u32 %v6608, 4294901760
        %6610 = vmatpush.msra.mxu0 %v6609
        %v6611 = vand.u32 %v979, 4294901760
        %v6612 = vsub.f32 %v979, %v6611
        %v6613 = vand.u32 %v6612, 4294901760
        %6614 = vmatpush.msra.mxu0 %v6613
        %v6615 = vand.u32 %v978, 4294901760
        %v6616 = vsub.f32 %v978, %v6615
        %v6617 = vand.u32 %v6616, 4294901760
        %6618 = vmatpush.msra.mxu0 %v6617
        %v6619 = vand.u32 %v977, 4294901760
        %v6620 = vsub.f32 %v977, %v6619
        %v6621 = vand.u32 %v6620, 4294901760
        %6622 = vmatpush.msra.mxu0 %v6621
        %v6623 = vand.u32 %v976, 4294901760
        %v6624 = vsub.f32 %v976, %v6623
        %v6625 = vand.u32 %v6624, 4294901760
        %6626 = vmatpush.msra.mxu0 %v6625
        %v6627 = vand.u32 %v730, 4294901760
        %6628 = vmatmul.f32.gmra.mxu0 %v6627
        %v6629 = vpop.f32.mrf.mxu0
        %v6630 = vadd.f32 %v6549, %v6629
        %v6631 = vand.u32 %v747, 4294901760
        %6632 = vmatmul.f32.gmra.mxu0 %v6631
        %v6633 = vpop.f32.mrf.mxu0
        %v6634 = vadd.f32 %v6555, %v6633
        %v6635 = vand.u32 %v764, 4294901760
        %6636 = vmatmul.f32.gmra.mxu0 %v6635
        %v6637 = vpop.f32.mrf.mxu0
        %v6638 = vadd.f32 %v6561, %v6637
        %6639 = vdwg.mxu0
        %v6640 = vand.u32 %v991, 4294901760
        %6641 = vmatpush.msra.mxu0 %v6640
        %v6642 = vand.u32 %v990, 4294901760
        %6643 = vmatpush.msra.mxu0 %v6642
        %v6644 = vand.u32 %v989, 4294901760
        %6645 = vmatpush.msra.mxu0 %v6644
        %v6646 = vand.u32 %v988, 4294901760
        %6647 = vmatpush.msra.mxu0 %v6646
        %v6648 = vand.u32 %v987, 4294901760
        %6649 = vmatpush.msra.mxu0 %v6648
        %v6650 = vand.u32 %v986, 4294901760
        %6651 = vmatpush.msra.mxu0 %v6650
        %v6652 = vand.u32 %v985, 4294901760
        %6653 = vmatpush.msra.mxu0 %v6652
        %v6654 = vand.u32 %v984, 4294901760
        %6655 = vmatpush.msra.mxu0 %v6654
        %v6656 = vand.u32 %v983, 4294901760
        %6657 = vmatpush.msra.mxu0 %v6656
        %v6658 = vand.u32 %v982, 4294901760
        %6659 = vmatpush.msra.mxu0 %v6658
        %v6660 = vand.u32 %v981, 4294901760
        %6661 = vmatpush.msra.mxu0 %v6660
        %v6662 = vand.u32 %v980, 4294901760
        %6663 = vmatpush.msra.mxu0 %v6662
        %v6664 = vand.u32 %v979, 4294901760
        %6665 = vmatpush.msra.mxu0 %v6664
        %v6666 = vand.u32 %v978, 4294901760
        %6667 = vmatpush.msra.mxu0 %v6666
        %v6668 = vand.u32 %v977, 4294901760
        %6669 = vmatpush.msra.mxu0 %v6668
        %v6670 = vand.u32 %v976, 4294901760
        %6671 = vmatpush.msra.mxu0 %v6670
        %v6672 = vand.u32 %v730, 4294901760
        %6673 = vmatmul.f32.gmra.mxu0 %v6672
        %v6674 = vpop.f32.mrf.mxu0
        %v6675 = vadd.f32 %v6630, %v6674
        %v6676 = vand.u32 %v747, 4294901760
        %6677 = vmatmul.f32.gmra.mxu0 %v6676
        %v6678 = vpop.f32.mrf.mxu0
        %v6679 = vadd.f32 %v6634, %v6678
        %v6680 = vand.u32 %v764, 4294901760
        %6681 = vmatmul.f32.gmra.mxu0 %v6680
        %v6682 = vpop.f32.mrf.mxu0
        %v6683 = vadd.f32 %v6638, %v6682
        %6684 = vdwg.mxu0
        %v6685 = vand.u32 %v1007, 4294901760
        %6686 = vmatpush.msra.mxu0 %v6685
        %v6687 = vand.u32 %v1006, 4294901760
        %6688 = vmatpush.msra.mxu0 %v6687
        %v6689 = vand.u32 %v1005, 4294901760
        %6690 = vmatpush.msra.mxu0 %v6689
        %v6691 = vand.u32 %v1004, 4294901760
        %6692 = vmatpush.msra.mxu0 %v6691
        %v6693 = vand.u32 %v1003, 4294901760
        %6694 = vmatpush.msra.mxu0 %v6693
        %v6695 = vand.u32 %v1002, 4294901760
        %6696 = vmatpush.msra.mxu0 %v6695
        %v6697 = vand.u32 %v1001, 4294901760
        %6698 = vmatpush.msra.mxu0 %v6697
        %v6699 = vand.u32 %v1000, 4294901760
        %6700 = vmatpush.msra.mxu0 %v6699
        %v6701 = vand.u32 %v999, 4294901760
        %6702 = vmatpush.msra.mxu0 %v6701
        %v6703 = vand.u32 %v998, 4294901760
        %6704 = vmatpush.msra.mxu0 %v6703
        %v6705 = vand.u32 %v997, 4294901760
        %6706 = vmatpush.msra.mxu0 %v6705
        %v6707 = vand.u32 %v996, 4294901760
        %6708 = vmatpush.msra.mxu0 %v6707
        %v6709 = vand.u32 %v995, 4294901760
        %6710 = vmatpush.msra.mxu0 %v6709
        %v6711 = vand.u32 %v994, 4294901760
        %6712 = vmatpush.msra.mxu0 %v6711
        %v6713 = vand.u32 %v993, 4294901760
        %6714 = vmatpush.msra.mxu0 %v6713
        %v6715 = vand.u32 %v992, 4294901760
        %6716 = vmatpush.msra.mxu0 %v6715
        %v6717 = vand.u32 %v731, 4294901760
        %v6718 = vsub.f32 %v731, %v6717
        %v6719 = vand.u32 %v6718, 4294901760
        %v6720 = vsub.f32 %v6718, %v6719
        %v6721 = vand.u32 %v6720, 4294901760
        %6722 = vmatmul.f32.gmra.mxu0 %v6721
        %v6723 = vpop.f32.mrf.mxu0
        %v6724 = vadd.f32 %v6675, %v6723
        %v6725 = vand.u32 %v748, 4294901760
        %v6726 = vsub.f32 %v748, %v6725
        %v6727 = vand.u32 %v6726, 4294901760
        %v6728 = vsub.f32 %v6726, %v6727
        %v6729 = vand.u32 %v6728, 4294901760
        %6730 = vmatmul.f32.gmra.mxu0 %v6729
        %v6731 = vpop.f32.mrf.mxu0
        %v6732 = vadd.f32 %v6679, %v6731
        %v6733 = vand.u32 %v765, 4294901760
        %v6734 = vsub.f32 %v765, %v6733
        %v6735 = vand.u32 %v6734, 4294901760
        %v6736 = vsub.f32 %v6734, %v6735
        %v6737 = vand.u32 %v6736, 4294901760
        %6738 = vmatmul.f32.gmra.mxu0 %v6737
        %v6739 = vpop.f32.mrf.mxu0
        %v6740 = vadd.f32 %v6683, %v6739
        %6741 = vdwg.mxu0
        %v6742 = vand.u32 %v1007, 4294901760
        %v6743 = vsub.f32 %v1007, %v6742
        %v6744 = vand.u32 %v6743, 4294901760
        %v6745 = vsub.f32 %v6743, %v6744
        %v6746 = vand.u32 %v6745, 4294901760
        %6747 = vmatpush.msra.mxu0 %v6746
        %v6748 = vand.u32 %v1006, 4294901760
        %v6749 = vsub.f32 %v1006, %v6748
        %v6750 = vand.u32 %v6749, 4294901760
        %v6751 = vsub.f32 %v6749, %v6750
        %v6752 = vand.u32 %v6751, 4294901760
        %6753 = vmatpush.msra.mxu0 %v6752
        %v6754 = vand.u32 %v1005, 4294901760
        %v6755 = vsub.f32 %v1005, %v6754
        %v6756 = vand.u32 %v6755, 4294901760
        %v6757 = vsub.f32 %v6755, %v6756
        %v6758 = vand.u32 %v6757, 4294901760
        %6759 = vmatpush.msra.mxu0 %v6758
        %v6760 = vand.u32 %v1004, 4294901760
        %v6761 = vsub.f32 %v1004, %v6760
        %v6762 = vand.u32 %v6761, 4294901760
        %v6763 = vsub.f32 %v6761, %v6762
        %v6764 = vand.u32 %v6763, 4294901760
        %6765 = vmatpush.msra.mxu0 %v6764
        %v6766 = vand.u32 %v1003, 4294901760
        %v6767 = vsub.f32 %v1003, %v6766
        %v6768 = vand.u32 %v6767, 4294901760
        %v6769 = vsub.f32 %v6767, %v6768
        %v6770 = vand.u32 %v6769, 4294901760
        %6771 = vmatpush.msra.mxu0 %v6770
        %v6772 = vand.u32 %v1002, 4294901760
        %v6773 = vsub.f32 %v1002, %v6772
        %v6774 = vand.u32 %v6773, 4294901760
        %v6775 = vsub.f32 %v6773, %v6774
        %v6776 = vand.u32 %v6775, 4294901760
        %6777 = vmatpush.msra.mxu0 %v6776
        %v6778 = vand.u32 %v1001, 4294901760
        %v6779 = vsub.f32 %v1001, %v6778
        %v6780 = vand.u32 %v6779, 4294901760
        %v6781 = vsub.f32 %v6779, %v6780
        %v6782 = vand.u32 %v6781, 4294901760
        %6783 = vmatpush.msra.mxu0 %v6782
        %v6784 = vand.u32 %v1000, 4294901760
        %v6785 = vsub.f32 %v1000, %v6784
        %v6786 = vand.u32 %v6785, 4294901760
        %v6787 = vsub.f32 %v6785, %v6786
        %v6788 = vand.u32 %v6787, 4294901760
        %6789 = vmatpush.msra.mxu0 %v6788
        %v6790 = vand.u32 %v999, 4294901760
        %v6791 = vsub.f32 %v999, %v6790
        %v6792 = vand.u32 %v6791, 4294901760
        %v6793 = vsub.f32 %v6791, %v6792
        %v6794 = vand.u32 %v6793, 4294901760
        %6795 = vmatpush.msra.mxu0 %v6794
        %v6796 = vand.u32 %v998, 4294901760
        %v6797 = vsub.f32 %v998, %v6796
        %v6798 = vand.u32 %v6797, 4294901760
        %v6799 = vsub.f32 %v6797, %v6798
        %v6800 = vand.u32 %v6799, 4294901760
        %6801 = vmatpush.msra.mxu0 %v6800
        %v6802 = vand.u32 %v997, 4294901760
        %v6803 = vsub.f32 %v997, %v6802
        %v6804 = vand.u32 %v6803, 4294901760
        %v6805 = vsub.f32 %v6803, %v6804
        %v6806 = vand.u32 %v6805, 4294901760
        %6807 = vmatpush.msra.mxu0 %v6806
        %v6808 = vand.u32 %v996, 4294901760
        %v6809 = vsub.f32 %v996, %v6808
        %v6810 = vand.u32 %v6809, 4294901760
        %v6811 = vsub.f32 %v6809, %v6810
        %v6812 = vand.u32 %v6811, 4294901760
        %6813 = vmatpush.msra.mxu0 %v6812
        %v6814 = vand.u32 %v995, 4294901760
        %v6815 = vsub.f32 %v995, %v6814
        %v6816 = vand.u32 %v6815, 4294901760
        %v6817 = vsub.f32 %v6815, %v6816
        %v6818 = vand.u32 %v6817, 4294901760
        %6819 = vmatpush.msra.mxu0 %v6818
        %v6820 = vand.u32 %v994, 4294901760
        %v6821 = vsub.f32 %v994, %v6820
        %v6822 = vand.u32 %v6821, 4294901760
        %v6823 = vsub.f32 %v6821, %v6822
        %v6824 = vand.u32 %v6823, 4294901760
        %6825 = vmatpush.msra.mxu0 %v6824
        %v6826 = vand.u32 %v993, 4294901760
        %v6827 = vsub.f32 %v993, %v6826
        %v6828 = vand.u32 %v6827, 4294901760
        %v6829 = vsub.f32 %v6827, %v6828
        %v6830 = vand.u32 %v6829, 4294901760
        %6831 = vmatpush.msra.mxu0 %v6830
        %v6832 = vand.u32 %v992, 4294901760
        %v6833 = vsub.f32 %v992, %v6832
        %v6834 = vand.u32 %v6833, 4294901760
        %v6835 = vsub.f32 %v6833, %v6834
        %v6836 = vand.u32 %v6835, 4294901760
        %6837 = vmatpush.msra.mxu0 %v6836
        %v6838 = vand.u32 %v731, 4294901760
        %6839 = vmatmul.f32.gmra.mxu0 %v6838
        %v6840 = vpop.f32.mrf.mxu0
        %v6841 = vadd.f32 %v6724, %v6840
        %v6842 = vand.u32 %v748, 4294901760
        %6843 = vmatmul.f32.gmra.mxu0 %v6842
        %v6844 = vpop.f32.mrf.mxu0
        %v6845 = vadd.f32 %v6732, %v6844
        %v6846 = vand.u32 %v765, 4294901760
        %6847 = vmatmul.f32.gmra.mxu0 %v6846
        %v6848 = vpop.f32.mrf.mxu0
        %v6849 = vadd.f32 %v6740, %v6848
        %6850 = vdwg.mxu0
        %v6851 = vand.u32 %v1007, 4294901760
        %v6852 = vsub.f32 %v1007, %v6851
        %6853 = vmatpush.msra.mxu0 %v6852
        %v6854 = vand.u32 %v1006, 4294901760
        %v6855 = vsub.f32 %v1006, %v6854
        %6856 = vmatpush.msra.mxu0 %v6855
        %v6857 = vand.u32 %v1005, 4294901760
        %v6858 = vsub.f32 %v1005, %v6857
        %6859 = vmatpush.msra.mxu0 %v6858
        %v6860 = vand.u32 %v1004, 4294901760
        %v6861 = vsub.f32 %v1004, %v6860
        %6862 = vmatpush.msra.mxu0 %v6861
        %v6863 = vand.u32 %v1003, 4294901760
        %v6864 = vsub.f32 %v1003, %v6863
        %6865 = vmatpush.msra.mxu0 %v6864
        %v6866 = vand.u32 %v1002, 4294901760
        %v6867 = vsub.f32 %v1002, %v6866
        %6868 = vmatpush.msra.mxu0 %v6867
        %v6869 = vand.u32 %v1001, 4294901760
        %v6870 = vsub.f32 %v1001, %v6869
        %6871 = vmatpush.msra.mxu0 %v6870
        %v6872 = vand.u32 %v1000, 4294901760
        %v6873 = vsub.f32 %v1000, %v6872
        %6874 = vmatpush.msra.mxu0 %v6873
        %v6875 = vand.u32 %v999, 4294901760
        %v6876 = vsub.f32 %v999, %v6875
        %6877 = vmatpush.msra.mxu0 %v6876
        %v6878 = vand.u32 %v998, 4294901760
        %v6879 = vsub.f32 %v998, %v6878
        %6880 = vmatpush.msra.mxu0 %v6879
        %v6881 = vand.u32 %v997, 4294901760
        %v6882 = vsub.f32 %v997, %v6881
        %6883 = vmatpush.msra.mxu0 %v6882
        %v6884 = vand.u32 %v996, 4294901760
        %v6885 = vsub.f32 %v996, %v6884
        %6886 = vmatpush.msra.mxu0 %v6885
        %v6887 = vand.u32 %v995, 4294901760
        %v6888 = vsub.f32 %v995, %v6887
        %6889 = vmatpush.msra.mxu0 %v6888
        %v6890 = vand.u32 %v994, 4294901760
        %v6891 = vsub.f32 %v994, %v6890
        %6892 = vmatpush.msra.mxu0 %v6891
        %v6893 = vand.u32 %v993, 4294901760
        %v6894 = vsub.f32 %v993, %v6893
        %6895 = vmatpush.msra.mxu0 %v6894
        %v6896 = vand.u32 %v992, 4294901760
        %v6897 = vsub.f32 %v992, %v6896
        %6898 = vmatpush.msra.mxu0 %v6897
        %v6899 = vand.u32 %v731, 4294901760
        %v6900 = vsub.f32 %v731, %v6899
        %6901 = vmatmul.f32.gmra.mxu0 %v6900
        %v6902 = vpop.f32.mrf.mxu0
        %v6903 = vadd.f32 %v6841, %v6902
        %v6904 = vand.u32 %v748, 4294901760
        %v6905 = vsub.f32 %v748, %v6904
        %6906 = vmatmul.f32.gmra.mxu0 %v6905
        %v6907 = vpop.f32.mrf.mxu0
        %v6908 = vadd.f32 %v6845, %v6907
        %v6909 = vand.u32 %v765, 4294901760
        %v6910 = vsub.f32 %v765, %v6909
        %6911 = vmatmul.f32.gmra.mxu0 %v6910
        %v6912 = vpop.f32.mrf.mxu0
        %v6913 = vadd.f32 %v6849, %v6912
        %6914 = vdwg.mxu0
        %v6915 = vand.u32 %v1007, 4294901760
        %6916 = vmatpush.msra.mxu0 %v6915
        %v6917 = vand.u32 %v1006, 4294901760
        %6918 = vmatpush.msra.mxu0 %v6917
        %v6919 = vand.u32 %v1005, 4294901760
        %6920 = vmatpush.msra.mxu0 %v6919
        %v6921 = vand.u32 %v1004, 4294901760
        %6922 = vmatpush.msra.mxu0 %v6921
        %v6923 = vand.u32 %v1003, 4294901760
        %6924 = vmatpush.msra.mxu0 %v6923
        %v6925 = vand.u32 %v1002, 4294901760
        %6926 = vmatpush.msra.mxu0 %v6925
        %v6927 = vand.u32 %v1001, 4294901760
        %6928 = vmatpush.msra.mxu0 %v6927
        %v6929 = vand.u32 %v1000, 4294901760
        %6930 = vmatpush.msra.mxu0 %v6929
        %v6931 = vand.u32 %v999, 4294901760
        %6932 = vmatpush.msra.mxu0 %v6931
        %v6933 = vand.u32 %v998, 4294901760
        %6934 = vmatpush.msra.mxu0 %v6933
        %v6935 = vand.u32 %v997, 4294901760
        %6936 = vmatpush.msra.mxu0 %v6935
        %v6937 = vand.u32 %v996, 4294901760
        %6938 = vmatpush.msra.mxu0 %v6937
        %v6939 = vand.u32 %v995, 4294901760
        %6940 = vmatpush.msra.mxu0 %v6939
        %v6941 = vand.u32 %v994, 4294901760
        %6942 = vmatpush.msra.mxu0 %v6941
        %v6943 = vand.u32 %v993, 4294901760
        %6944 = vmatpush.msra.mxu0 %v6943
        %v6945 = vand.u32 %v992, 4294901760
        %6946 = vmatpush.msra.mxu0 %v6945
        %v6947 = vand.u32 %v731, 4294901760
        %v6948 = vsub.f32 %v731, %v6947
        %v6949 = vand.u32 %v6948, 4294901760
        %6950 = vmatmul.f32.gmra.mxu0 %v6949
        %v6951 = vpop.f32.mrf.mxu0
        %v6952 = vadd.f32 %v6903, %v6951
        %v6953 = vand.u32 %v748, 4294901760
        %v6954 = vsub.f32 %v748, %v6953
        %v6955 = vand.u32 %v6954, 4294901760
        %6956 = vmatmul.f32.gmra.mxu0 %v6955
        %v6957 = vpop.f32.mrf.mxu0
        %v6958 = vadd.f32 %v6908, %v6957
        %v6959 = vand.u32 %v765, 4294901760
        %v6960 = vsub.f32 %v765, %v6959
        %v6961 = vand.u32 %v6960, 4294901760
        %6962 = vmatmul.f32.gmra.mxu0 %v6961
        %v6963 = vpop.f32.mrf.mxu0
        %v6964 = vadd.f32 %v6913, %v6963
        %6965 = vdwg.mxu0
        %v6966 = vand.u32 %v1007, 4294901760
        %v6967 = vsub.f32 %v1007, %v6966
        %v6968 = vand.u32 %v6967, 4294901760
        %6969 = vmatpush.msra.mxu0 %v6968
        %v6970 = vand.u32 %v1006, 4294901760
        %v6971 = vsub.f32 %v1006, %v6970
        %v6972 = vand.u32 %v6971, 4294901760
        %6973 = vmatpush.msra.mxu0 %v6972
        %v6974 = vand.u32 %v1005, 4294901760
        %v6975 = vsub.f32 %v1005, %v6974
        %v6976 = vand.u32 %v6975, 4294901760
        %6977 = vmatpush.msra.mxu0 %v6976
        %v6978 = vand.u32 %v1004, 4294901760
        %v6979 = vsub.f32 %v1004, %v6978
        %v6980 = vand.u32 %v6979, 4294901760
        %6981 = vmatpush.msra.mxu0 %v6980
        %v6982 = vand.u32 %v1003, 4294901760
        %v6983 = vsub.f32 %v1003, %v6982
        %v6984 = vand.u32 %v6983, 4294901760
        %6985 = vmatpush.msra.mxu0 %v6984
        %v6986 = vand.u32 %v1002, 4294901760
        %v6987 = vsub.f32 %v1002, %v6986
        %v6988 = vand.u32 %v6987, 4294901760
        %6989 = vmatpush.msra.mxu0 %v6988
        %v6990 = vand.u32 %v1001, 4294901760
        %v6991 = vsub.f32 %v1001, %v6990
        %v6992 = vand.u32 %v6991, 4294901760
        %6993 = vmatpush.msra.mxu0 %v6992
        %v6994 = vand.u32 %v1000, 4294901760
        %v6995 = vsub.f32 %v1000, %v6994
        %v6996 = vand.u32 %v6995, 4294901760
        %6997 = vmatpush.msra.mxu0 %v6996
        %v6998 = vand.u32 %v999, 4294901760
        %v6999 = vsub.f32 %v999, %v6998
        %v7000 = vand.u32 %v6999, 4294901760
        %7001 = vmatpush.msra.mxu0 %v7000
        %v7002 = vand.u32 %v998, 4294901760
        %v7003 = vsub.f32 %v998, %v7002
        %v7004 = vand.u32 %v7003, 4294901760
        %7005 = vmatpush.msra.mxu0 %v7004
        %v7006 = vand.u32 %v997, 4294901760
        %v7007 = vsub.f32 %v997, %v7006
        %v7008 = vand.u32 %v7007, 4294901760
        %7009 = vmatpush.msra.mxu0 %v7008
        %v7010 = vand.u32 %v996, 4294901760
        %v7011 = vsub.f32 %v996, %v7010
        %v7012 = vand.u32 %v7011, 4294901760
        %7013 = vmatpush.msra.mxu0 %v7012
        %v7014 = vand.u32 %v995, 4294901760
        %v7015 = vsub.f32 %v995, %v7014
        %v7016 = vand.u32 %v7015, 4294901760
        %7017 = vmatpush.msra.mxu0 %v7016
        %v7018 = vand.u32 %v994, 4294901760
        %v7019 = vsub.f32 %v994, %v7018
        %v7020 = vand.u32 %v7019, 4294901760
        %7021 = vmatpush.msra.mxu0 %v7020
        %v7022 = vand.u32 %v993, 4294901760
        %v7023 = vsub.f32 %v993, %v7022
        %v7024 = vand.u32 %v7023, 4294901760
        %7025 = vmatpush.msra.mxu0 %v7024
        %v7026 = vand.u32 %v992, 4294901760
        %v7027 = vsub.f32 %v992, %v7026
        %v7028 = vand.u32 %v7027, 4294901760
        %7029 = vmatpush.msra.mxu0 %v7028
        %v7030 = vand.u32 %v731, 4294901760
        %7031 = vmatmul.f32.gmra.mxu0 %v7030
        %v7032 = vpop.f32.mrf.mxu0
        %v7033 = vadd.f32 %v6952, %v7032
        %v7034 = vand.u32 %v748, 4294901760
        %7035 = vmatmul.f32.gmra.mxu0 %v7034
        %v7036 = vpop.f32.mrf.mxu0
        %v7037 = vadd.f32 %v6958, %v7036
        %v7038 = vand.u32 %v765, 4294901760
        %7039 = vmatmul.f32.gmra.mxu0 %v7038
        %v7040 = vpop.f32.mrf.mxu0
        %v7041 = vadd.f32 %v6964, %v7040
        %7042 = vdwg.mxu0
        %v7043 = vand.u32 %v1007, 4294901760
        %7044 = vmatpush.msra.mxu0 %v7043
        %v7045 = vand.u32 %v1006, 4294901760
        %7046 = vmatpush.msra.mxu0 %v7045
        %v7047 = vand.u32 %v1005, 4294901760
        %7048 = vmatpush.msra.mxu0 %v7047
        %v7049 = vand.u32 %v1004, 4294901760
        %7050 = vmatpush.msra.mxu0 %v7049
        %v7051 = vand.u32 %v1003, 4294901760
        %7052 = vmatpush.msra.mxu0 %v7051
        %v7053 = vand.u32 %v1002, 4294901760
        %7054 = vmatpush.msra.mxu0 %v7053
        %v7055 = vand.u32 %v1001, 4294901760
        %7056 = vmatpush.msra.mxu0 %v7055
        %v7057 = vand.u32 %v1000, 4294901760
        %7058 = vmatpush.msra.mxu0 %v7057
        %v7059 = vand.u32 %v999, 4294901760
        %7060 = vmatpush.msra.mxu0 %v7059
        %v7061 = vand.u32 %v998, 4294901760
        %7062 = vmatpush.msra.mxu0 %v7061
        %v7063 = vand.u32 %v997, 4294901760
        %7064 = vmatpush.msra.mxu0 %v7063
        %v7065 = vand.u32 %v996, 4294901760
        %7066 = vmatpush.msra.mxu0 %v7065
        %v7067 = vand.u32 %v995, 4294901760
        %7068 = vmatpush.msra.mxu0 %v7067
        %v7069 = vand.u32 %v994, 4294901760
        %7070 = vmatpush.msra.mxu0 %v7069
        %v7071 = vand.u32 %v993, 4294901760
        %7072 = vmatpush.msra.mxu0 %v7071
        %v7073 = vand.u32 %v992, 4294901760
        %7074 = vmatpush.msra.mxu0 %v7073
        %v7075 = vand.u32 %v731, 4294901760
        %7076 = vmatmul.f32.gmra.mxu0 %v7075
        %v7077 = vpop.f32.mrf.mxu0
        %v7078 = vadd.f32 %v7033, %v7077
        %v7079 = vand.u32 %v748, 4294901760
        %7080 = vmatmul.f32.gmra.mxu0 %v7079
        %v7081 = vpop.f32.mrf.mxu0
        %v7082 = vadd.f32 %v7037, %v7081
        %v7083 = vand.u32 %v765, 4294901760
        %7084 = vmatmul.f32.gmra.mxu0 %v7083
        %v7085 = vpop.f32.mrf.mxu0
        %v7086 = vadd.f32 %v7041, %v7085
        %7087 = vdwg.mxu0
        %v7088 = vand.u32 %v1023, 4294901760
        %7089 = vmatpush.msra.mxu0 %v7088
        %v7090 = vand.u32 %v1022, 4294901760
        %7091 = vmatpush.msra.mxu0 %v7090
        %v7092 = vand.u32 %v1021, 4294901760
        %7093 = vmatpush.msra.mxu0 %v7092
        %v7094 = vand.u32 %v1020, 4294901760
        %7095 = vmatpush.msra.mxu0 %v7094
        %v7096 = vand.u32 %v1019, 4294901760
        %7097 = vmatpush.msra.mxu0 %v7096
        %v7098 = vand.u32 %v1018, 4294901760
        %7099 = vmatpush.msra.mxu0 %v7098
        %v7100 = vand.u32 %v1017, 4294901760
        %7101 = vmatpush.msra.mxu0 %v7100
        %v7102 = vand.u32 %v1016, 4294901760
        %7103 = vmatpush.msra.mxu0 %v7102
        %v7104 = vand.u32 %v1015, 4294901760
        %7105 = vmatpush.msra.mxu0 %v7104
        %v7106 = vand.u32 %v1014, 4294901760
        %7107 = vmatpush.msra.mxu0 %v7106
        %v7108 = vand.u32 %v1013, 4294901760
        %7109 = vmatpush.msra.mxu0 %v7108
        %v7110 = vand.u32 %v1012, 4294901760
        %7111 = vmatpush.msra.mxu0 %v7110
        %v7112 = vand.u32 %v1011, 4294901760
        %7113 = vmatpush.msra.mxu0 %v7112
        %v7114 = vand.u32 %v1010, 4294901760
        %7115 = vmatpush.msra.mxu0 %v7114
        %v7116 = vand.u32 %v1009, 4294901760
        %7117 = vmatpush.msra.mxu0 %v7116
        %v7118 = vand.u32 %v1008, 4294901760
        %7119 = vmatpush.msra.mxu0 %v7118
        %v7120 = vand.u32 %v732, 4294901760
        %v7121 = vsub.f32 %v732, %v7120
        %v7122 = vand.u32 %v7121, 4294901760
        %v7123 = vsub.f32 %v7121, %v7122
        %v7124 = vand.u32 %v7123, 4294901760
        %7125 = vmatmul.f32.gmra.mxu0 %v7124
        %v7126 = vpop.f32.mrf.mxu0
        %v7127 = vadd.f32 %v7078, %v7126
        %v7128 = vand.u32 %v749, 4294901760
        %v7129 = vsub.f32 %v749, %v7128
        %v7130 = vand.u32 %v7129, 4294901760
        %v7131 = vsub.f32 %v7129, %v7130
        %v7132 = vand.u32 %v7131, 4294901760
        %7133 = vmatmul.f32.gmra.mxu0 %v7132
        %v7134 = vpop.f32.mrf.mxu0
        %v7135 = vadd.f32 %v7082, %v7134
        %v7136 = vand.u32 %v766, 4294901760
        %v7137 = vsub.f32 %v766, %v7136
        %v7138 = vand.u32 %v7137, 4294901760
        %v7139 = vsub.f32 %v7137, %v7138
        %v7140 = vand.u32 %v7139, 4294901760
        %7141 = vmatmul.f32.gmra.mxu0 %v7140
        %v7142 = vpop.f32.mrf.mxu0
        %v7143 = vadd.f32 %v7086, %v7142
        %7144 = vdwg.mxu0
        %v7145 = vand.u32 %v1023, 4294901760
        %v7146 = vsub.f32 %v1023, %v7145
        %v7147 = vand.u32 %v7146, 4294901760
        %v7148 = vsub.f32 %v7146, %v7147
        %v7149 = vand.u32 %v7148, 4294901760
        %7150 = vmatpush.msra.mxu0 %v7149
        %v7151 = vand.u32 %v1022, 4294901760
        %v7152 = vsub.f32 %v1022, %v7151
        %v7153 = vand.u32 %v7152, 4294901760
        %v7154 = vsub.f32 %v7152, %v7153
        %v7155 = vand.u32 %v7154, 4294901760
        %7156 = vmatpush.msra.mxu0 %v7155
        %v7157 = vand.u32 %v1021, 4294901760
        %v7158 = vsub.f32 %v1021, %v7157
        %v7159 = vand.u32 %v7158, 4294901760
        %v7160 = vsub.f32 %v7158, %v7159
        %v7161 = vand.u32 %v7160, 4294901760
        %7162 = vmatpush.msra.mxu0 %v7161
        %v7163 = vand.u32 %v1020, 4294901760
        %v7164 = vsub.f32 %v1020, %v7163
        %v7165 = vand.u32 %v7164, 4294901760
        %v7166 = vsub.f32 %v7164, %v7165
        %v7167 = vand.u32 %v7166, 4294901760
        %7168 = vmatpush.msra.mxu0 %v7167
        %v7169 = vand.u32 %v1019, 4294901760
        %v7170 = vsub.f32 %v1019, %v7169
        %v7171 = vand.u32 %v7170, 4294901760
        %v7172 = vsub.f32 %v7170, %v7171
        %v7173 = vand.u32 %v7172, 4294901760
        %7174 = vmatpush.msra.mxu0 %v7173
        %v7175 = vand.u32 %v1018, 4294901760
        %v7176 = vsub.f32 %v1018, %v7175
        %v7177 = vand.u32 %v7176, 4294901760
        %v7178 = vsub.f32 %v7176, %v7177
        %v7179 = vand.u32 %v7178, 4294901760
        %7180 = vmatpush.msra.mxu0 %v7179
        %v7181 = vand.u32 %v1017, 4294901760
        %v7182 = vsub.f32 %v1017, %v7181
        %v7183 = vand.u32 %v7182, 4294901760
        %v7184 = vsub.f32 %v7182, %v7183
        %v7185 = vand.u32 %v7184, 4294901760
        %7186 = vmatpush.msra.mxu0 %v7185
        %v7187 = vand.u32 %v1016, 4294901760
        %v7188 = vsub.f32 %v1016, %v7187
        %v7189 = vand.u32 %v7188, 4294901760
        %v7190 = vsub.f32 %v7188, %v7189
        %v7191 = vand.u32 %v7190, 4294901760
        %7192 = vmatpush.msra.mxu0 %v7191
        %v7193 = vand.u32 %v1015, 4294901760
        %v7194 = vsub.f32 %v1015, %v7193
        %v7195 = vand.u32 %v7194, 4294901760
        %v7196 = vsub.f32 %v7194, %v7195
        %v7197 = vand.u32 %v7196, 4294901760
        %7198 = vmatpush.msra.mxu0 %v7197
        %v7199 = vand.u32 %v1014, 4294901760
        %v7200 = vsub.f32 %v1014, %v7199
        %v7201 = vand.u32 %v7200, 4294901760
        %v7202 = vsub.f32 %v7200, %v7201
        %v7203 = vand.u32 %v7202, 4294901760
        %7204 = vmatpush.msra.mxu0 %v7203
        %v7205 = vand.u32 %v1013, 4294901760
        %v7206 = vsub.f32 %v1013, %v7205
        %v7207 = vand.u32 %v7206, 4294901760
        %v7208 = vsub.f32 %v7206, %v7207
        %v7209 = vand.u32 %v7208, 4294901760
        %7210 = vmatpush.msra.mxu0 %v7209
        %v7211 = vand.u32 %v1012, 4294901760
        %v7212 = vsub.f32 %v1012, %v7211
        %v7213 = vand.u32 %v7212, 4294901760
        %v7214 = vsub.f32 %v7212, %v7213
        %v7215 = vand.u32 %v7214, 4294901760
        %7216 = vmatpush.msra.mxu0 %v7215
        %v7217 = vand.u32 %v1011, 4294901760
        %v7218 = vsub.f32 %v1011, %v7217
        %v7219 = vand.u32 %v7218, 4294901760
        %v7220 = vsub.f32 %v7218, %v7219
        %v7221 = vand.u32 %v7220, 4294901760
        %7222 = vmatpush.msra.mxu0 %v7221
        %v7223 = vand.u32 %v1010, 4294901760
        %v7224 = vsub.f32 %v1010, %v7223
        %v7225 = vand.u32 %v7224, 4294901760
        %v7226 = vsub.f32 %v7224, %v7225
        %v7227 = vand.u32 %v7226, 4294901760
        %7228 = vmatpush.msra.mxu0 %v7227
        %v7229 = vand.u32 %v1009, 4294901760
        %v7230 = vsub.f32 %v1009, %v7229
        %v7231 = vand.u32 %v7230, 4294901760
        %v7232 = vsub.f32 %v7230, %v7231
        %v7233 = vand.u32 %v7232, 4294901760
        %7234 = vmatpush.msra.mxu0 %v7233
        %v7235 = vand.u32 %v1008, 4294901760
        %v7236 = vsub.f32 %v1008, %v7235
        %v7237 = vand.u32 %v7236, 4294901760
        %v7238 = vsub.f32 %v7236, %v7237
        %v7239 = vand.u32 %v7238, 4294901760
        %7240 = vmatpush.msra.mxu0 %v7239
        %v7241 = vand.u32 %v732, 4294901760
        %7242 = vmatmul.f32.gmra.mxu0 %v7241
        %v7243 = vpop.f32.mrf.mxu0
        %v7244 = vadd.f32 %v7127, %v7243
        %v7245 = vand.u32 %v749, 4294901760
        %7246 = vmatmul.f32.gmra.mxu0 %v7245
        %v7247 = vpop.f32.mrf.mxu0
        %v7248 = vadd.f32 %v7135, %v7247
        %v7249 = vand.u32 %v766, 4294901760
        %7250 = vmatmul.f32.gmra.mxu0 %v7249
        %v7251 = vpop.f32.mrf.mxu0
        %v7252 = vadd.f32 %v7143, %v7251
        %7253 = vdwg.mxu0
        %v7254 = vand.u32 %v1023, 4294901760
        %v7255 = vsub.f32 %v1023, %v7254
        %7256 = vmatpush.msra.mxu0 %v7255
        %v7257 = vand.u32 %v1022, 4294901760
        %v7258 = vsub.f32 %v1022, %v7257
        %7259 = vmatpush.msra.mxu0 %v7258
        %v7260 = vand.u32 %v1021, 4294901760
        %v7261 = vsub.f32 %v1021, %v7260
        %7262 = vmatpush.msra.mxu0 %v7261
        %v7263 = vand.u32 %v1020, 4294901760
        %v7264 = vsub.f32 %v1020, %v7263
        %7265 = vmatpush.msra.mxu0 %v7264
        %v7266 = vand.u32 %v1019, 4294901760
        %v7267 = vsub.f32 %v1019, %v7266
        %7268 = vmatpush.msra.mxu0 %v7267
        %v7269 = vand.u32 %v1018, 4294901760
        %v7270 = vsub.f32 %v1018, %v7269
        %7271 = vmatpush.msra.mxu0 %v7270
        %v7272 = vand.u32 %v1017, 4294901760
        %v7273 = vsub.f32 %v1017, %v7272
        %7274 = vmatpush.msra.mxu0 %v7273
        %v7275 = vand.u32 %v1016, 4294901760
        %v7276 = vsub.f32 %v1016, %v7275
        %7277 = vmatpush.msra.mxu0 %v7276
        %v7278 = vand.u32 %v1015, 4294901760
        %v7279 = vsub.f32 %v1015, %v7278
        %7280 = vmatpush.msra.mxu0 %v7279
        %v7281 = vand.u32 %v1014, 4294901760
        %v7282 = vsub.f32 %v1014, %v7281
        %7283 = vmatpush.msra.mxu0 %v7282
        %v7284 = vand.u32 %v1013, 4294901760
        %v7285 = vsub.f32 %v1013, %v7284
        %7286 = vmatpush.msra.mxu0 %v7285
        %v7287 = vand.u32 %v1012, 4294901760
        %v7288 = vsub.f32 %v1012, %v7287
        %7289 = vmatpush.msra.mxu0 %v7288
        %v7290 = vand.u32 %v1011, 4294901760
        %v7291 = vsub.f32 %v1011, %v7290
        %7292 = vmatpush.msra.mxu0 %v7291
        %v7293 = vand.u32 %v1010, 4294901760
        %v7294 = vsub.f32 %v1010, %v7293
        %7295 = vmatpush.msra.mxu0 %v7294
        %v7296 = vand.u32 %v1009, 4294901760
        %v7297 = vsub.f32 %v1009, %v7296
        %7298 = vmatpush.msra.mxu0 %v7297
        %v7299 = vand.u32 %v1008, 4294901760
        %v7300 = vsub.f32 %v1008, %v7299
        %7301 = vmatpush.msra.mxu0 %v7300
        %v7302 = vand.u32 %v732, 4294901760
        %v7303 = vsub.f32 %v732, %v7302
        %7304 = vmatmul.f32.gmra.mxu0 %v7303
        %v7305 = vpop.f32.mrf.mxu0
        %v7306 = vadd.f32 %v7244, %v7305
        %v7307 = vand.u32 %v749, 4294901760
        %v7308 = vsub.f32 %v749, %v7307
        %7309 = vmatmul.f32.gmra.mxu0 %v7308
        %v7310 = vpop.f32.mrf.mxu0
        %v7311 = vadd.f32 %v7248, %v7310
        %v7312 = vand.u32 %v766, 4294901760
        %v7313 = vsub.f32 %v766, %v7312
        %7314 = vmatmul.f32.gmra.mxu0 %v7313
        %v7315 = vpop.f32.mrf.mxu0
        %v7316 = vadd.f32 %v7252, %v7315
        %7317 = vdwg.mxu0
        %v7318 = vand.u32 %v1023, 4294901760
        %7319 = vmatpush.msra.mxu0 %v7318
        %v7320 = vand.u32 %v1022, 4294901760
        %7321 = vmatpush.msra.mxu0 %v7320
        %v7322 = vand.u32 %v1021, 4294901760
        %7323 = vmatpush.msra.mxu0 %v7322
        %v7324 = vand.u32 %v1020, 4294901760
        %7325 = vmatpush.msra.mxu0 %v7324
        %v7326 = vand.u32 %v1019, 4294901760
        %7327 = vmatpush.msra.mxu0 %v7326
        %v7328 = vand.u32 %v1018, 4294901760
        %7329 = vmatpush.msra.mxu0 %v7328
        %v7330 = vand.u32 %v1017, 4294901760
        %7331 = vmatpush.msra.mxu0 %v7330
        %v7332 = vand.u32 %v1016, 4294901760
        %7333 = vmatpush.msra.mxu0 %v7332
        %v7334 = vand.u32 %v1015, 4294901760
        %7335 = vmatpush.msra.mxu0 %v7334
        %v7336 = vand.u32 %v1014, 4294901760
        %7337 = vmatpush.msra.mxu0 %v7336
        %v7338 = vand.u32 %v1013, 4294901760
        %7339 = vmatpush.msra.mxu0 %v7338
        %v7340 = vand.u32 %v1012, 4294901760
        %7341 = vmatpush.msra.mxu0 %v7340
        %v7342 = vand.u32 %v1011, 4294901760
        %7343 = vmatpush.msra.mxu0 %v7342
        %v7344 = vand.u32 %v1010, 4294901760
        %7345 = vmatpush.msra.mxu0 %v7344
        %v7346 = vand.u32 %v1009, 4294901760
        %7347 = vmatpush.msra.mxu0 %v7346
        %v7348 = vand.u32 %v1008, 4294901760
        %7349 = vmatpush.msra.mxu0 %v7348
        %v7350 = vand.u32 %v732, 4294901760
        %v7351 = vsub.f32 %v732, %v7350
        %v7352 = vand.u32 %v7351, 4294901760
        %7353 = vmatmul.f32.gmra.mxu0 %v7352
        %v7354 = vpop.f32.mrf.mxu0
        %v7355 = vadd.f32 %v7306, %v7354
        %v7356 = vand.u32 %v749, 4294901760
        %v7357 = vsub.f32 %v749, %v7356
        %v7358 = vand.u32 %v7357, 4294901760
        %7359 = vmatmul.f32.gmra.mxu0 %v7358
        %v7360 = vpop.f32.mrf.mxu0
        %v7361 = vadd.f32 %v7311, %v7360
        %v7362 = vand.u32 %v766, 4294901760
        %v7363 = vsub.f32 %v766, %v7362
        %v7364 = vand.u32 %v7363, 4294901760
        %7365 = vmatmul.f32.gmra.mxu0 %v7364
        %v7366 = vpop.f32.mrf.mxu0
        %v7367 = vadd.f32 %v7316, %v7366
        %7368 = vdwg.mxu0
        %v7369 = vand.u32 %v1023, 4294901760
        %v7370 = vsub.f32 %v1023, %v7369
        %v7371 = vand.u32 %v7370, 4294901760
        %7372 = vmatpush.msra.mxu0 %v7371
        %v7373 = vand.u32 %v1022, 4294901760
        %v7374 = vsub.f32 %v1022, %v7373
        %v7375 = vand.u32 %v7374, 4294901760
        %7376 = vmatpush.msra.mxu0 %v7375
        %v7377 = vand.u32 %v1021, 4294901760
        %v7378 = vsub.f32 %v1021, %v7377
        %v7379 = vand.u32 %v7378, 4294901760
        %7380 = vmatpush.msra.mxu0 %v7379
        %v7381 = vand.u32 %v1020, 4294901760
        %v7382 = vsub.f32 %v1020, %v7381
        %v7383 = vand.u32 %v7382, 4294901760
        %7384 = vmatpush.msra.mxu0 %v7383
        %v7385 = vand.u32 %v1019, 4294901760
        %v7386 = vsub.f32 %v1019, %v7385
        %v7387 = vand.u32 %v7386, 4294901760
        %7388 = vmatpush.msra.mxu0 %v7387
        %v7389 = vand.u32 %v1018, 4294901760
        %v7390 = vsub.f32 %v1018, %v7389
        %v7391 = vand.u32 %v7390, 4294901760
        %7392 = vmatpush.msra.mxu0 %v7391
        %v7393 = vand.u32 %v1017, 4294901760
        %v7394 = vsub.f32 %v1017, %v7393
        %v7395 = vand.u32 %v7394, 4294901760
        %7396 = vmatpush.msra.mxu0 %v7395
        %v7397 = vand.u32 %v1016, 4294901760
        %v7398 = vsub.f32 %v1016, %v7397
        %v7399 = vand.u32 %v7398, 4294901760
        %7400 = vmatpush.msra.mxu0 %v7399
        %v7401 = vand.u32 %v1015, 4294901760
        %v7402 = vsub.f32 %v1015, %v7401
        %v7403 = vand.u32 %v7402, 4294901760
        %7404 = vmatpush.msra.mxu0 %v7403
        %v7405 = vand.u32 %v1014, 4294901760
        %v7406 = vsub.f32 %v1014, %v7405
        %v7407 = vand.u32 %v7406, 4294901760
        %7408 = vmatpush.msra.mxu0 %v7407
        %v7409 = vand.u32 %v1013, 4294901760
        %v7410 = vsub.f32 %v1013, %v7409
        %v7411 = vand.u32 %v7410, 4294901760
        %7412 = vmatpush.msra.mxu0 %v7411
        %v7413 = vand.u32 %v1012, 4294901760
        %v7414 = vsub.f32 %v1012, %v7413
        %v7415 = vand.u32 %v7414, 4294901760
        %7416 = vmatpush.msra.mxu0 %v7415
        %v7417 = vand.u32 %v1011, 4294901760
        %v7418 = vsub.f32 %v1011, %v7417
        %v7419 = vand.u32 %v7418, 4294901760
        %7420 = vmatpush.msra.mxu0 %v7419
        %v7421 = vand.u32 %v1010, 4294901760
        %v7422 = vsub.f32 %v1010, %v7421
        %v7423 = vand.u32 %v7422, 4294901760
        %7424 = vmatpush.msra.mxu0 %v7423
        %v7425 = vand.u32 %v1009, 4294901760
        %v7426 = vsub.f32 %v1009, %v7425
        %v7427 = vand.u32 %v7426, 4294901760
        %7428 = vmatpush.msra.mxu0 %v7427
        %v7429 = vand.u32 %v1008, 4294901760
        %v7430 = vsub.f32 %v1008, %v7429
        %v7431 = vand.u32 %v7430, 4294901760
        %7432 = vmatpush.msra.mxu0 %v7431
        %v7433 = vand.u32 %v732, 4294901760
        %7434 = vmatmul.f32.gmra.mxu0 %v7433
        %v7435 = vpop.f32.mrf.mxu0
        %v7436 = vadd.f32 %v7355, %v7435
        %v7437 = vand.u32 %v749, 4294901760
        %7438 = vmatmul.f32.gmra.mxu0 %v7437
        %v7439 = vpop.f32.mrf.mxu0
        %v7440 = vadd.f32 %v7361, %v7439
        %v7441 = vand.u32 %v766, 4294901760
        %7442 = vmatmul.f32.gmra.mxu0 %v7441
        %v7443 = vpop.f32.mrf.mxu0
        %v7444 = vadd.f32 %v7367, %v7443
        %7445 = vdwg.mxu0
        %v7446 = vand.u32 %v1023, 4294901760
        %7447 = vmatpush.msra.mxu0 %v7446
        %v7448 = vand.u32 %v1022, 4294901760
        %7449 = vmatpush.msra.mxu0 %v7448
        %v7450 = vand.u32 %v1021, 4294901760
        %7451 = vmatpush.msra.mxu0 %v7450
        %v7452 = vand.u32 %v1020, 4294901760
        %7453 = vmatpush.msra.mxu0 %v7452
        %v7454 = vand.u32 %v1019, 4294901760
        %7455 = vmatpush.msra.mxu0 %v7454
        %v7456 = vand.u32 %v1018, 4294901760
        %7457 = vmatpush.msra.mxu0 %v7456
        %v7458 = vand.u32 %v1017, 4294901760
        %7459 = vmatpush.msra.mxu0 %v7458
        %v7460 = vand.u32 %v1016, 4294901760
        %7461 = vmatpush.msra.mxu0 %v7460
        %v7462 = vand.u32 %v1015, 4294901760
        %7463 = vmatpush.msra.mxu0 %v7462
        %v7464 = vand.u32 %v1014, 4294901760
        %7465 = vmatpush.msra.mxu0 %v7464
        %v7466 = vand.u32 %v1013, 4294901760
        %7467 = vmatpush.msra.mxu0 %v7466
        %v7468 = vand.u32 %v1012, 4294901760
        %7469 = vmatpush.msra.mxu0 %v7468
        %v7470 = vand.u32 %v1011, 4294901760
        %7471 = vmatpush.msra.mxu0 %v7470
        %v7472 = vand.u32 %v1010, 4294901760
        %7473 = vmatpush.msra.mxu0 %v7472
        %v7474 = vand.u32 %v1009, 4294901760
        %7475 = vmatpush.msra.mxu0 %v7474
        %v7476 = vand.u32 %v1008, 4294901760
        %7477 = vmatpush.msra.mxu0 %v7476
        %v7478 = vand.u32 %v732, 4294901760
        %7479 = vmatmul.f32.gmra.mxu0 %v7478
        %v7480 = vpop.f32.mrf.mxu0
        %v7481 = vadd.f32 %v7436, %v7480
        %v7482 = vand.u32 %v749, 4294901760
        %7483 = vmatmul.f32.gmra.mxu0 %v7482
        %v7484 = vpop.f32.mrf.mxu0
        %v7485 = vadd.f32 %v7440, %v7484
        %v7486 = vand.u32 %v766, 4294901760
        %7487 = vmatmul.f32.gmra.mxu0 %v7486
        %v7488 = vpop.f32.mrf.mxu0
        %v7489 = vadd.f32 %v7444, %v7488
        %7490 = vdwg.mxu0
        %7491 = vmatpush.msra.mxu0 0.0
        %7492 = vmatpush.msra.mxu0 0.0
        %7493 = vmatpush.msra.mxu0 0.0
        %7494 = vmatpush.msra.mxu0 0.0
        %7495 = vmatpush.msra.mxu0 0.0
        %7496 = vmatpush.msra.mxu0 0.0
        %7497 = vmatpush.msra.mxu0 0.0
        %7498 = vmatpush.msra.mxu0 0.0
        %7499 = vmatpush.msra.mxu0 0.0
        %7500 = vmatpush.msra.mxu0 0.0
        %v7501 = vand.u32 %v1041, 4294901760
        %7502 = vmatpush.msra.mxu0 %v7501
        %v7503 = vand.u32 %v1028, 4294901760
        %7504 = vmatpush.msra.mxu0 %v7503
        %v7505 = vand.u32 %v1027, 4294901760
        %7506 = vmatpush.msra.mxu0 %v7505
        %v7507 = vand.u32 %v1026, 4294901760
        %7508 = vmatpush.msra.mxu0 %v7507
        %v7509 = vand.u32 %v1025, 4294901760
        %7510 = vmatpush.msra.mxu0 %v7509
        %v7511 = vand.u32 %v1024, 4294901760
        %7512 = vmatpush.msra.mxu0 %v7511
        %v7513 = vand.u32 %v1032, 4294901760
        %v7514 = vsub.f32 %v1032, %v7513
        %v7515 = vand.u32 %v7514, 4294901760
        %v7516 = vsub.f32 %v7514, %v7515
        %v7517 = vand.u32 %v7516, 4294901760
        %7518 = vmatmul.f32.gmra.mxu0 %v7517
        %v7519 = vpop.f32.mrf.mxu0
        %v7520 = vadd.f32 %v7481, %v7519
        %v7521 = vand.u32 %v1035, 4294901760
        %v7522 = vsub.f32 %v1035, %v7521
        %v7523 = vand.u32 %v7522, 4294901760
        %v7524 = vsub.f32 %v7522, %v7523
        %v7525 = vand.u32 %v7524, 4294901760
        %7526 = vmatmul.f32.gmra.mxu0 %v7525
        %v7527 = vpop.f32.mrf.mxu0
        %v7528 = vadd.f32 %v7485, %v7527
        %v7529 = vand.u32 %v1038, 4294901760
        %v7530 = vsub.f32 %v1038, %v7529
        %v7531 = vand.u32 %v7530, 4294901760
        %v7532 = vsub.f32 %v7530, %v7531
        %v7533 = vand.u32 %v7532, 4294901760
        %7534 = vmatmul.f32.gmra.mxu0 %v7533
        %v7535 = vpop.f32.mrf.mxu0
        %v7536 = vadd.f32 %v7489, %v7535
        %7537 = vdwg.mxu0
        %7538 = vmatpush.msra.mxu0 0.0
        %7539 = vmatpush.msra.mxu0 0.0
        %7540 = vmatpush.msra.mxu0 0.0
        %7541 = vmatpush.msra.mxu0 0.0
        %7542 = vmatpush.msra.mxu0 0.0
        %7543 = vmatpush.msra.mxu0 0.0
        %7544 = vmatpush.msra.mxu0 0.0
        %7545 = vmatpush.msra.mxu0 0.0
        %7546 = vmatpush.msra.mxu0 0.0
        %7547 = vmatpush.msra.mxu0 0.0
        %v7548 = vand.u32 %v1041, 4294901760
        %v7549 = vsub.f32 %v1041, %v7548
        %v7550 = vand.u32 %v7549, 4294901760
        %v7551 = vsub.f32 %v7549, %v7550
        %v7552 = vand.u32 %v7551, 4294901760
        %7553 = vmatpush.msra.mxu0 %v7552
        %v7554 = vand.u32 %v1028, 4294901760
        %v7555 = vsub.f32 %v1028, %v7554
        %v7556 = vand.u32 %v7555, 4294901760
        %v7557 = vsub.f32 %v7555, %v7556
        %v7558 = vand.u32 %v7557, 4294901760
        %7559 = vmatpush.msra.mxu0 %v7558
        %v7560 = vand.u32 %v1027, 4294901760
        %v7561 = vsub.f32 %v1027, %v7560
        %v7562 = vand.u32 %v7561, 4294901760
        %v7563 = vsub.f32 %v7561, %v7562
        %v7564 = vand.u32 %v7563, 4294901760
        %7565 = vmatpush.msra.mxu0 %v7564
        %v7566 = vand.u32 %v1026, 4294901760
        %v7567 = vsub.f32 %v1026, %v7566
        %v7568 = vand.u32 %v7567, 4294901760
        %v7569 = vsub.f32 %v7567, %v7568
        %v7570 = vand.u32 %v7569, 4294901760
        %7571 = vmatpush.msra.mxu0 %v7570
        %v7572 = vand.u32 %v1025, 4294901760
        %v7573 = vsub.f32 %v1025, %v7572
        %v7574 = vand.u32 %v7573, 4294901760
        %v7575 = vsub.f32 %v7573, %v7574
        %v7576 = vand.u32 %v7575, 4294901760
        %7577 = vmatpush.msra.mxu0 %v7576
        %v7578 = vand.u32 %v1024, 4294901760
        %v7579 = vsub.f32 %v1024, %v7578
        %v7580 = vand.u32 %v7579, 4294901760
        %v7581 = vsub.f32 %v7579, %v7580
        %v7582 = vand.u32 %v7581, 4294901760
        %7583 = vmatpush.msra.mxu0 %v7582
        %v7584 = vand.u32 %v1032, 4294901760
        %7585 = vmatmul.f32.gmra.mxu0 %v7584
        %v7586 = vpop.f32.mrf.mxu0
        %v7587 = vadd.f32 %v7520, %v7586
        %v7588 = vand.u32 %v1035, 4294901760
        %7589 = vmatmul.f32.gmra.mxu0 %v7588
        %v7590 = vpop.f32.mrf.mxu0
        %v7591 = vadd.f32 %v7528, %v7590
        %v7592 = vand.u32 %v1038, 4294901760
        %7593 = vmatmul.f32.gmra.mxu0 %v7592
        %v7594 = vpop.f32.mrf.mxu0
        %v7595 = vadd.f32 %v7536, %v7594
        %7596 = vdwg.mxu0
        %7597 = vmatpush.msra.mxu0 0.0
        %7598 = vmatpush.msra.mxu0 0.0
        %7599 = vmatpush.msra.mxu0 0.0
        %7600 = vmatpush.msra.mxu0 0.0
        %7601 = vmatpush.msra.mxu0 0.0
        %7602 = vmatpush.msra.mxu0 0.0
        %7603 = vmatpush.msra.mxu0 0.0
        %7604 = vmatpush.msra.mxu0 0.0
        %7605 = vmatpush.msra.mxu0 0.0
        %7606 = vmatpush.msra.mxu0 0.0
        %v7607 = vand.u32 %v1041, 4294901760
        %v7608 = vsub.f32 %v1041, %v7607
        %7609 = vmatpush.msra.mxu0 %v7608
        %v7610 = vand.u32 %v1028, 4294901760
        %v7611 = vsub.f32 %v1028, %v7610
        %7612 = vmatpush.msra.mxu0 %v7611
        %v7613 = vand.u32 %v1027, 4294901760
        %v7614 = vsub.f32 %v1027, %v7613
        %7615 = vmatpush.msra.mxu0 %v7614
        %v7616 = vand.u32 %v1026, 4294901760
        %v7617 = vsub.f32 %v1026, %v7616
        %7618 = vmatpush.msra.mxu0 %v7617
        %v7619 = vand.u32 %v1025, 4294901760
        %v7620 = vsub.f32 %v1025, %v7619
        %7621 = vmatpush.msra.mxu0 %v7620
        %v7622 = vand.u32 %v1024, 4294901760
        %v7623 = vsub.f32 %v1024, %v7622
        %7624 = vmatpush.msra.mxu0 %v7623
        %v7625 = vand.u32 %v1032, 4294901760
        %v7626 = vsub.f32 %v1032, %v7625
        %7627 = vmatmul.f32.gmra.mxu0 %v7626
        %v7628 = vpop.f32.mrf.mxu0
        %v7629 = vadd.f32 %v7587, %v7628
        %v7630 = vand.u32 %v1035, 4294901760
        %v7631 = vsub.f32 %v1035, %v7630
        %7632 = vmatmul.f32.gmra.mxu0 %v7631
        %v7633 = vpop.f32.mrf.mxu0
        %v7634 = vadd.f32 %v7591, %v7633
        %v7635 = vand.u32 %v1038, 4294901760
        %v7636 = vsub.f32 %v1038, %v7635
        %7637 = vmatmul.f32.gmra.mxu0 %v7636
        %v7638 = vpop.f32.mrf.mxu0
        %v7639 = vadd.f32 %v7595, %v7638
        %7640 = vdwg.mxu0
        %7641 = vmatpush.msra.mxu0 0.0
        %7642 = vmatpush.msra.mxu0 0.0
        %7643 = vmatpush.msra.mxu0 0.0
        %7644 = vmatpush.msra.mxu0 0.0
        %7645 = vmatpush.msra.mxu0 0.0
        %7646 = vmatpush.msra.mxu0 0.0
        %7647 = vmatpush.msra.mxu0 0.0
        %7648 = vmatpush.msra.mxu0 0.0
        %7649 = vmatpush.msra.mxu0 0.0
        %7650 = vmatpush.msra.mxu0 0.0
        %v7651 = vand.u32 %v1041, 4294901760
        %7652 = vmatpush.msra.mxu0 %v7651
        %v7653 = vand.u32 %v1028, 4294901760
        %7654 = vmatpush.msra.mxu0 %v7653
        %v7655 = vand.u32 %v1027, 4294901760
        %7656 = vmatpush.msra.mxu0 %v7655
        %v7657 = vand.u32 %v1026, 4294901760
        %7658 = vmatpush.msra.mxu0 %v7657
        %v7659 = vand.u32 %v1025, 4294901760
        %7660 = vmatpush.msra.mxu0 %v7659
        %v7661 = vand.u32 %v1024, 4294901760
        %7662 = vmatpush.msra.mxu0 %v7661
        %v7663 = vand.u32 %v1032, 4294901760
        %v7664 = vsub.f32 %v1032, %v7663
        %v7665 = vand.u32 %v7664, 4294901760
        %7666 = vmatmul.f32.gmra.mxu0 %v7665
        %v7667 = vpop.f32.mrf.mxu0
        %v7668 = vadd.f32 %v7629, %v7667
        %v7669 = vand.u32 %v1035, 4294901760
        %v7670 = vsub.f32 %v1035, %v7669
        %v7671 = vand.u32 %v7670, 4294901760
        %7672 = vmatmul.f32.gmra.mxu0 %v7671
        %v7673 = vpop.f32.mrf.mxu0
        %v7674 = vadd.f32 %v7634, %v7673
        %v7675 = vand.u32 %v1038, 4294901760
        %v7676 = vsub.f32 %v1038, %v7675
        %v7677 = vand.u32 %v7676, 4294901760
        %7678 = vmatmul.f32.gmra.mxu0 %v7677
        %v7679 = vpop.f32.mrf.mxu0
        %v7680 = vadd.f32 %v7639, %v7679
        %7681 = vdwg.mxu0
        %7682 = vmatpush.msra.mxu0 0.0
        %7683 = vmatpush.msra.mxu0 0.0
        %7684 = vmatpush.msra.mxu0 0.0
        %7685 = vmatpush.msra.mxu0 0.0
        %7686 = vmatpush.msra.mxu0 0.0
        %7687 = vmatpush.msra.mxu0 0.0
        %7688 = vmatpush.msra.mxu0 0.0
        %7689 = vmatpush.msra.mxu0 0.0
        %7690 = vmatpush.msra.mxu0 0.0
        %7691 = vmatpush.msra.mxu0 0.0
        %v7692 = vand.u32 %v1041, 4294901760
        %v7693 = vsub.f32 %v1041, %v7692
        %v7694 = vand.u32 %v7693, 4294901760
        %7695 = vmatpush.msra.mxu0 %v7694
        %v7696 = vand.u32 %v1028, 4294901760
        %v7697 = vsub.f32 %v1028, %v7696
        %v7698 = vand.u32 %v7697, 4294901760
        %7699 = vmatpush.msra.mxu0 %v7698
        %v7700 = vand.u32 %v1027, 4294901760
        %v7701 = vsub.f32 %v1027, %v7700
        %v7702 = vand.u32 %v7701, 4294901760
        %7703 = vmatpush.msra.mxu0 %v7702
        %v7704 = vand.u32 %v1026, 4294901760
        %v7705 = vsub.f32 %v1026, %v7704
        %v7706 = vand.u32 %v7705, 4294901760
        %7707 = vmatpush.msra.mxu0 %v7706
        %v7708 = vand.u32 %v1025, 4294901760
        %v7709 = vsub.f32 %v1025, %v7708
        %v7710 = vand.u32 %v7709, 4294901760
        %7711 = vmatpush.msra.mxu0 %v7710
        %v7712 = vand.u32 %v1024, 4294901760
        %v7713 = vsub.f32 %v1024, %v7712
        %v7714 = vand.u32 %v7713, 4294901760
        %7715 = vmatpush.msra.mxu0 %v7714
        %v7716 = vand.u32 %v1032, 4294901760
        %7717 = vmatmul.f32.gmra.mxu0 %v7716
        %v7718 = vpop.f32.mrf.mxu0
        %v7719 = vadd.f32 %v7668, %v7718
        %v7720 = vand.u32 %v1035, 4294901760
        %7721 = vmatmul.f32.gmra.mxu0 %v7720
        %v7722 = vpop.f32.mrf.mxu0
        %v7723 = vadd.f32 %v7674, %v7722
        %v7724 = vand.u32 %v1038, 4294901760
        %7725 = vmatmul.f32.gmra.mxu0 %v7724
        %v7726 = vpop.f32.mrf.mxu0
        %v7727 = vadd.f32 %v7680, %v7726
        %7728 = vdwg.mxu0
        %7729 = vmatpush.msra.mxu0 0.0
        %7730 = vmatpush.msra.mxu0 0.0
        %7731 = vmatpush.msra.mxu0 0.0
        %7732 = vmatpush.msra.mxu0 0.0
        %7733 = vmatpush.msra.mxu0 0.0
        %7734 = vmatpush.msra.mxu0 0.0
        %7735 = vmatpush.msra.mxu0 0.0
        %7736 = vmatpush.msra.mxu0 0.0
        %7737 = vmatpush.msra.mxu0 0.0
        %7738 = vmatpush.msra.mxu0 0.0
        %v7739 = vand.u32 %v1041, 4294901760
        %7740 = vmatpush.msra.mxu0 %v7739
        %v7741 = vand.u32 %v1028, 4294901760
        %7742 = vmatpush.msra.mxu0 %v7741
        %v7743 = vand.u32 %v1027, 4294901760
        %7744 = vmatpush.msra.mxu0 %v7743
        %v7745 = vand.u32 %v1026, 4294901760
        %7746 = vmatpush.msra.mxu0 %v7745
        %v7747 = vand.u32 %v1025, 4294901760
        %7748 = vmatpush.msra.mxu0 %v7747
        %v7749 = vand.u32 %v1024, 4294901760
        %7750 = vmatpush.msra.mxu0 %v7749
        %v7751 = vand.u32 %v1032, 4294901760
        %7752 = vmatmul.f32.gmra.mxu0 %v7751
        %v7753 = vpop.f32.mrf.mxu0
        %v7754 = vadd.f32 %v7719, %v7753
        %v7755 = vand.u32 %v1035, 4294901760
        %7756 = vmatmul.f32.gmra.mxu0 %v7755
        %v7757 = vpop.f32.mrf.mxu0
        %v7758 = vadd.f32 %v7723, %v7757
        %v7759 = vand.u32 %v1038, 4294901760
        %7760 = vmatmul.f32.gmra.mxu0 %v7759
        %v7761 = vpop.f32.mrf.mxu0
        %v7762 = vadd.f32 %v7727, %v7761
        %7763 = vdwg.mxu0
        %v7764 = vmul.f32 %v580, %v7754
        %v7765 = vmul.f32 %v584, %v7758
        %v7766 = vmul.f32 %v588, %v7762
        %7767 = vst [vmem:[%s255] sm:$0xff] %v7764
        %7768 = vst [vmem:[%s255 + $0x8] sm:$0xff] %v7765
        %7769 = vst [vmem:[%s255 + $0x10] sm:$0xff] %v7766
        %s7770 = smul.u32 3, %s17
        %p7771 = scmp.lt.s32.totalorder %s7770, 5
        %s7772 = scalar_select %p7771, %s7770, 5
        %s7773 = smul.addr %s7772, 8
        %s7774 = scalar_lea.vmem %s4, %s7773
        // Predicated region
        $region45: #{gmf_forward.1} parent=35 // pred_check
          %p7775 = pneg %p129
        $region46: #{gmf_forward.1} parent=35 // pred_check_branch
          %7777 = sbr.rel (%p7775) target = $region48
        $region47: #{gmf_forward.1} parent=35 // pred_region
          %s7778 = smul.u32 3, %s17
        $region48: #{gmf_forward.1} parent=35 // pred_fallthru
          _
      $region36: #{gmf_forward.1} parent=5 // pred_fallthru
        _
      %p7779 = scmp.le.s32.totalorder 2, %s12
      // Predicated region
      $region49: #{gmf_forward.1} parent=5 // pred_check
        %p7780 = pneg %p7779
      $region50: #{gmf_forward.1} parent=5 // pred_check_branch
        %7782 = sbr.rel (%p7780) target = $region52
      $region51: #{gmf_forward.1} parent=5 // pred_region
        %s7783 = ssub.s32 %s12, 2
        // Predicated region
        $region53: #{gmf_forward.1} parent=51 // pred_check
          %p7784 = pneg %p135
        $region54: #{gmf_forward.1} parent=51 // pred_check_branch
          %7786 = sbr.rel (%p7784) target = $region56
        $region55: #{gmf_forward.1} parent=51 // pred_region
          %s7787 = smul.u32 3, %s18
          %p7788 = scmp.lt.s32.totalorder %s7787, 5
          %s7789 = scalar_select %p7788, %s7787, 5
          %s7790 = smul.addr %s7789, 8
          %s7791 = scalar_lea.vmem %s4, %s7790
        $region56: #{gmf_forward.1} parent=51 // pred_fallthru
          _
      $region52: #{gmf_forward.1} parent=5 // pred_fallthru
        _
    $region6: #{gmf_forward.1} parent=1 // loop_footer
      %s16 = sadd.s32 1, %s12
    $region7: #{gmf_forward.1} parent=1 // loop_footer_branch
      %11 = sbr.rel target = $region3
    $region8: #{gmf_forward.1} parent=1 // loop_exit
      _
    %7792 = vsyncpa [#allocation3], 1
    %s7793 = scalar_lea.sflag [#allocation3], 1
    %7794 = vsyncpa %s7793, 1
    %7795 = vsyncpa [#allocation5], 1

</llo_original>
